<compile_context>
chip_gen: v7x
topology: tpu7x:2x2x1
jax: 0.10.0
libtpu: 0.0.40
codegen_flags: <defaults>
</compile_context>

<pallas_src>
import functools
import math

import jax
import jax.numpy as jnp
from jax.experimental import pallas as pl
from jax.experimental.pallas import tpu as pltpu

LANE = 128                        # output channels padded to lane width
TILE_K = 512                      # K tile if K cannot stay fully resident
VMEM_BUDGET = 20 * 1024 * 1024    # target double-buffered working set
VMEM_LIMIT = 32 * 1024 * 1024     # fits v7x's 64 MiB VMEM with headroom


def _round_up(x, m):
    return ((x + m - 1) // m) * m


# ----------------------------------------------------------------------------
# Pallas kernels
# ----------------------------------------------------------------------------
def _gemm_kernel_1blk(a_ref, w_ref, bias_ref, o_ref, *, apply_silu, w3d):
    """Whole K resident: o = act(a @ w + bias), no accumulator round-trip.

    a_ref: (1, tile_m, K) bf16; w_ref: (K, NP) or (1, K, NP) bf16;
    bias_ref: (1, 1, NP) f32; o_ref: (1, tile_m, NP) out_dtype.
    """
    w = w_ref[0] if w3d else w_ref[...]
    res = jnp.dot(a_ref[0], w, preferred_element_type=jnp.float32)
    res = res + bias_ref[0]                      # (tile_m, NP) + (1, NP)
    if apply_silu:
        res = res * jax.nn.sigmoid(res)          # f32 epilogue (v5e-safe)
    o_ref[0] = res.astype(o_ref.dtype)


def _gemm_kernel_acc(a_ref, w_ref, bias_ref, o_ref, acc_ref, *, apply_silu, w3d):
    """Fallback path: K tiled on the last grid axis, f32 VMEM accumulator."""
    k = pl.program_id(2)

    @pl.when(k == 0)
    def _init():
        acc_ref[...] = jnp.zeros_like(acc_ref)

    w = w_ref[0] if w3d else w_ref[...]
    acc_ref[...] += jnp.dot(a_ref[0], w, preferred_element_type=jnp.float32)

    @pl.when(k == pl.num_programs(2) - 1)
    def _finalize():
        res = acc_ref[...] + bias_ref[0]
        if apply_silu:
            res = res * jax.nn.sigmoid(res)
        o_ref[0] = res.astype(o_ref.dtype)


def _plan_tiles(M, K, NP, out_bytes):
    """Pick (tile_m, tk, use_acc) from an explicit VMEM footprint formula."""
    def fp(tm, tk, acc):
        f = 2 * tm * tk * 2          # A tiles, bf16, double-buffered
        f += 2 * tk * NP * 2         # W tiles, bf16, double-buffered
        f += 2 * tm * NP * out_bytes  # output tiles, double-buffered
        if acc:
            f += tm * NP * 4         # f32 accumulator scratch
        return f

    cands = ([M] if M <= 1024 else []) + \
            [m for m in (1024, 512, 256, 128, 64, 32, 16, 8) if m < M]
    # Prefer the whole K resident: no acc init/finalize, no W re-streaming.
    for tm in cands:
        if fp(tm, K, False) <= VMEM_BUDGET:
            return tm, K, False
    # Otherwise tile K with an accumulator.
    for tm in cands:
        if fp(tm, TILE_K, True) <= VMEM_BUDGET:
            return tm, TILE_K, True
    return cands[-1], TILE_K, True


def grouped_matmul_bias_act(a, w, bias, *, apply_silu, out_dtype=jnp.bfloat16):
    """out[g] = act(a[g] @ w[g?] + bias[g?]).

    a: (G, M, K); w: (K, Cout) shared or (G, K, Cout) per-group;
    bias: (Cout,) / (1, Cout) shared or (G, Cout) per-group.
    bf16 MXU operands, f32 bias/SiLU epilogue, lane-dense (128-padded)
    unmasked stores, results emitted as `out_dtype`.
    """
    G, M, K = a.shape
    w3d = (w.ndim == 3)
    Cout = w.shape[-1]
    NP = _round_up(Cout, LANE)
    if NP != Cout:
        pad = ((0, 0), (0, 0), (0, NP - Cout)) if w3d else ((0, 0), (0, NP - Cout))
        w = jnp.pad(w, pad)

    if bias.ndim == 1:
        bias = bias[None, :]
    bias = bias.astype(jnp.float32)
    if NP != Cout:
        bias = jnp.pad(bias, ((0, 0), (0, NP - Cout)))
    bias = jnp.broadcast_to(bias, (G, NP)).reshape(G, 1, NP)

    a = a.astype(jnp.bfloat16)
    w = w.astype(jnp.bfloat16)

    out_bytes = jnp.dtype(out_dtype).itemsize
    tile_m, tk, use_acc = _plan_tiles(M, K, NP, out_bytes)
    n_m = pl.cdiv(M, tile_m)
    # Keep >=2 programs on the parallel part of the grid (feeds both v7x TCs,
    # and lets the pipeline overlap DMA with compute on all gens).
    if G * n_m < 2 and M >= 16:
        tile_m = min(tile_m, _round_up(pl.cdiv(M, 2), 8))
        n_m = pl.cdiv(M, tile_m)

    if not use_acc:
        grid = (G, n_m)
        in_specs = [
            pl.BlockSpec((1, tile_m, K), lambda g, m: (g, m, 0)),
            (pl.BlockSpec((1, K, NP), lambda g, m: (g, 0, 0)) if w3d
             else pl.BlockSpec((K, NP), lambda g, m: (0, 0))),
            pl.BlockSpec((1, 1, NP), lambda g, m: (g, 0, 0)),
        ]
        out_specs = pl.BlockSpec((1, tile_m, NP), lambda g, m: (g, m, 0))
        scratch_shapes = []
        kernel = functools.partial(_gemm_kernel_1blk, apply_silu=apply_silu, w3d=w3d)
        dims = ("parallel", "parallel")
    else:
        KP = _round_up(K, tk)
        if KP != K:
            a = jnp.pad(a, ((0, 0), (0, 0), (0, KP - K)))
            wpad = ((0, 0), (0, KP - K), (0, 0)) if w3d else ((0, KP - K), (0, 0))
            w = jnp.pad(w, wpad)
        n_k = KP // tk
        grid = (G, n_m, n_k)
        in_specs = [
            pl.BlockSpec((1, tile_m, tk), lambda g, m, k: (g, m, k)),
            (pl.BlockSpec((1, tk, NP), lambda g, m, k: (g, k, 0)) if w3d
             else pl.BlockSpec((tk, NP), lambda g, m, k: (k, 0))),
            pl.BlockSpec((1, 1, NP), lambda g, m, k: (g, 0, 0)),
        ]
        out_specs = pl.BlockSpec((1, tile_m, NP), lambda g, m, k: (g, m, 0))
        scratch_shapes = [pltpu.VMEM((tile_m, NP), jnp.float32)]
        kernel = functools.partial(_gemm_kernel_acc, apply_silu=apply_silu, w3d=w3d)
        dims = ("parallel", "parallel", "arbitrary")

    out = pl.pallas_call(
        kernel,
        out_shape=jax.ShapeDtypeStruct((G, M, NP), out_dtype),
        grid_spec=pltpu.PrefetchScalarGridSpec(
            num_scalar_prefetch=0,
            grid=grid,
            in_specs=in_specs,
            out_specs=out_specs,
            scratch_shapes=scratch_shapes),
        compiler_params=pltpu.CompilerParams(
            dimension_semantics=dims,
            vmem_limit_bytes=VMEM_LIMIT),
    )(a, w, bias)

    if NP != Cout:
        out = out[..., :Cout]
    return out


# ----------------------------------------------------------------------------
# Conv3d / ConvTranspose3d built on the grouped Pallas GEMM.
# ----------------------------------------------------------------------------
def conv3d(x, w, b, *, stride=1, padding=1, apply_silu=False,
           extra_bias=None, out_dtype=jnp.bfloat16):
    """3-D convolution as one Pallas GEMM call.

    x: channels-last (N, D, H, W, Ci) array, or a tuple of such arrays that
       are consumed as if channel-concatenated (skip concat never hits HBM).
    w: PyTorch layout (Cout, Cin, kD, kH, kW).  b: (Cout,).
    extra_bias: optional (N, Cout) per-sample bias fused before the SiLU.
    """
    xs = tuple(x) if isinstance(x, (list, tuple)) else (x,)
    # Cast to bf16 BEFORE building the kD*kH*kW-times-expanded im2col patch.
    xs = tuple(xi.astype(jnp.bfloat16) for xi in xs)
    N, D, H, W = xs[0].shape[:4]
    Cout, Cin, kD, kH, kW = w.shape
    assert Cin == sum(xi.shape[-1] for xi in xs)
    pads = ((0, 0), (padding, padding), (padding, padding),
            (padding, padding), (0, 0))
    xps = tuple(jnp.pad(xi, pads) for xi in xs)
    Do = (D + 2 * padding - kD) // stride + 1
    Ho = (H + 2 * padding - kH) // stride + 1
    Wo = (W + 2 * padding - kW) // stride + 1
    # TODO(synk): the im2col tap gather stays in XLA glue — the per-tap
    # element-shifted windows are not expressible with rectangular BlockSpec
    # index_maps; fully fusing it needs manual in-kernel DMA halo gathers.
    cols = []
    for kd in range(kD):
        for kh in range(kH):
            for kw in range(kW):
                for xp in xps:
                    cols.append(xp[:, kd:kd + stride * Do:stride,
                                   kh:kh + stride * Ho:stride,
                                   kw:kw + stride * Wo:stride, :])
    Kc = kD * kH * kW * Cin
    patch = jnp.concatenate(cols, axis=-1)              # (N, Do, Ho, Wo, Kc)
    w_mat = jnp.transpose(w, (2, 3, 4, 1, 0)).reshape(Kc, Cout)
    Mo = Do * Ho * Wo
    if extra_bias is not None:
        # mid1: t_emb folded into a per-sample bias -> batch is the group axis.
        a = patch.reshape(N, Mo, Kc)
        bias = b[None, :].astype(jnp.float32) + extra_bias.astype(jnp.float32)
    else:
        # Flatten batch into M: bigger MXU tiles, weight slab streamed once.
        a = patch.reshape(1, N * Mo, Kc)
        bias = b
    out = grouped_matmul_bias_act(a, w_mat, bias, apply_silu=apply_silu,
                                  out_dtype=out_dtype)
    return out.reshape(N, Do, Ho, Wo, Cout)


def conv_transpose3d(x, w_t, b, *, apply_silu=False, out_dtype=jnp.bfloat16):
    """Phase-decomposed ConvTranspose3d with kernel=4, stride=2, padding=1.

    x: (N, D, H, W, Cin); w_t: (Cin, Cout, 4, 4, 4) (PyTorch layout).
    The 8 output phases (2x2x2 taps each, no zero-stuffed MACs) run in one
    grouped pallas_call (phase = group axis, per-phase weight slab); the
    phase interleave is one dense transpose instead of 8 strided scatters.
    """
    N, D, H, W, Cin = x.shape
    Cin_w, Cout, kD, kH, kW = w_t.shape
    assert (kD, kH, kW) == (4, 4, 4) and Cin_w == Cin
    x = x.astype(jnp.bfloat16)
    xp = jnp.pad(x, ((0, 0), (1, 1), (1, 1), (1, 1), (0, 0)))
    # per-dim: even output phase reads padded offsets (0,1) with taps (3,1);
    #          odd  output phase reads padded offsets (1,2) with taps (2,0).
    offs = {0: (0, 1), 1: (1, 2)}
    kidx = {0: (3, 1), 1: (2, 0)}
    M = N * D * H * W
    patches, wmats = [], []
    for pd in (0, 1):
        for ph in (0, 1):
            for pw in (0, 1):
                cols, wrows = [], []
                for od, kd in zip(offs[pd], kidx[pd]):
                    for oh, kh in zip(offs[ph], kidx[ph]):
                        for ow, kw in zip(offs[pw], kidx[pw]):
                            cols.append(xp[:, od:od + D, oh:oh + H,
                                           ow:ow + W, :])
                            wrows.append(w_t[:, :, kd, kh, kw])   # (Cin, Cout)
                patches.append(jnp.concatenate(cols, axis=-1).reshape(M, 8 * Cin))
                wmats.append(jnp.concatenate(wrows, axis=0))       # (8*Cin, Cout)
    a = jnp.stack(patches, axis=0)           # (8, M, 8*Cin)
    wg = jnp.stack(wmats, axis=0)            # (8, 8*Cin, Cout) per-phase weights
    out = grouped_matmul_bias_act(a, wg, b, apply_silu=apply_silu,
                                  out_dtype=out_dtype)              # (8, M, Cout)
    out = out.reshape(2, 2, 2, N, D, H, W, Cout)
    out = jnp.transpose(out, (3, 4, 0, 5, 1, 6, 2, 7))   # (N, D,pd, H,ph, W,pw, C)
    return out.reshape(N, 2 * D, 2 * H, 2 * W, Cout)


# ----------------------------------------------------------------------------
# SimpleVideoUNet (time_dim / feature_dim shrunk for a small synthetic run)
# ----------------------------------------------------------------------------
def noise_level_embedding(timesteps, embedding_dim):
    half = embedding_dim // 2
    scale = math.log(10000.0) / max(half - 1, 1)
    freqs = jnp.exp(jnp.arange(half, dtype=jnp.float32) * -scale)
    emb = timesteps.astype(jnp.float32)[:, None] * freqs[None, :]
    emb = jnp.concatenate([jnp.sin(emb), jnp.cos(emb)], axis=1)
    if embedding_dim % 2 == 1:
        emb = jnp.pad(emb, ((0, 0), (0, 1)))
    return emb


def time_mlp(params, timesteps, time_dim):
    # M = batch rows, K <= 2F: a pallas_call's fixed cost exceeds the compute,
    # so the 3 tiny Linears run as plain f32 jnp.dot (per perf review).
    t = noise_level_embedding(timesteps, time_dim)
    t = jax.nn.silu(t @ params['te_w1'] + params['te_b1'])
    t = jax.nn.silu(t @ params['te_w2'] + params['te_b2'])
    return t @ params['te_w3'] + params['te_b3']          # (N, 2F) f32


def init_params(key, in_channels, out_channels, time_dim, feature_dim):
    F = feature_dim
    keys = iter(jax.random.split(key, 32))

    def uni(k, shape, fan_in):
        lim = 1.0 / math.sqrt(fan_in)
        return jax.random.uniform(k, shape, jnp.float32, -lim, lim)

    p = {}
    # time-embedding MLP, weights stored (in, out)
    p['te_w1'] = uni(next(keys), (time_dim, F), time_dim)
    p['te_b1'] = uni(next(keys), (F,), time_dim)
    p['te_w2'] = uni(next(keys), (F, F), F)
    p['te_b2'] = uni(next(keys), (F,), F)
    p['te_w3'] = uni(next(keys), (F, 2 * F), F)
    p['te_b3'] = uni(next(keys), (2 * F,), F)
    # conv weights in PyTorch layouts
    p['down1_w'] = uni(next(keys), (F, in_channels, 3, 3, 3), in_channels * 27)
    p['down1_b'] = uni(next(keys), (F,), in_channels * 27)
    p['down2_w'] = uni(next(keys), (2 * F, F, 3, 3, 3), F * 27)
    p['down2_b'] = uni(next(keys), (2 * F,), F * 27)
    p['mid1_w'] = uni(next(keys), (2 * F, 2 * F, 3, 3, 3), 2 * F * 27)
    p['mid1_b'] = uni(next(keys), (2 * F,), 2 * F * 27)
    p['mid2_w'] = uni(next(keys), (2 * F, 2 * F, 3, 3, 3), 2 * F * 27)
    p['mid2_b'] = uni(next(keys), (2 * F,), 2 * F * 27)
    p['up1_w'] = uni(next(keys), (2 * F, F, 4, 4, 4), 2 * F * 64)  # ConvTranspose layout
    p['up1_b'] = uni(next(keys), (F,), 2 * F * 64)
    p['up2_w'] = uni(next(keys), (F, 2 * F, 3, 3, 3), 2 * F * 27)
    p['up2_b'] = uni(next(keys), (F,), 2 * F * 27)
    p['out_w'] = uni(next(keys), (out_channels, F, 3, 3, 3), F * 27)
    p['out_b'] = uni(next(keys), (out_channels,), F * 27)
    return p


def simple_video_unet_forward(params, x_ncthw, timesteps, *, time_dim, feature_dim):
    x = jnp.transpose(x_ncthw, (0, 2, 3, 4, 1))  # -> (N, T, H, W, C)

    t_emb = time_mlp(params, timesteps, time_dim)             # (N, 2F) f32

    x1 = conv3d(x, params['down1_w'], params['down1_b'],
                stride=1, padding=1, apply_silu=True)
    x2 = conv3d(x1, params['down2_w'], params['down2_b'],
                stride=2, padding=1, apply_silu=True)

    # mid1(x2) + t_emb then SiLU (matches PyTorch: silu(mid1(x) + t_emb)).
    # t_emb is folded into a per-sample bias row so add + SiLU stay fused.
    x2 = conv3d(x2, params['mid1_w'], params['mid1_b'],
                stride=1, padding=1, apply_silu=True, extra_bias=t_emb)

    x2 = conv3d(x2, params['mid2_w'], params['mid2_b'],
                stride=1, padding=1, apply_silu=True)
    xu = conv_transpose3d(x2, params['up1_w'], params['up1_b'], apply_silu=True)
    # up2 consumes [up1 output, skip x1] without materializing the channel concat.
    xo = conv3d((xu, x1), params['up2_w'], params['up2_b'],
                stride=1, padding=1, apply_silu=True)
    out = conv3d(xo, params['out_w'], params['out_b'],
                 stride=1, padding=1, apply_silu=False, out_dtype=jnp.float32)
    return jnp.transpose(out, (0, 4, 1, 2, 3))         # back to (N, C, T, H, W)


if __name__ == "__main__":
    # small shapes consistent with the module: video batch (N, C, T, H, W)
    N, C_IN, C_OUT, T, H, W = 2, 3, 3, 4, 8, 8
    TIME_DIM, FEATURE_DIM = 16, 32

    key = jax.random.PRNGKey(0)
    k_param, k_x, k_t = jax.random.split(key, 3)
    params = init_params(k_param, C_IN, C_OUT, TIME_DIM, FEATURE_DIM)
    x = jax.random.normal(k_x, (N, C_IN, T, H, W), jnp.float32)
    timesteps = jax.random.uniform(k_t, (N,), jnp.float32)

    fwd = jax.jit(functools.partial(simple_video_unet_forward,
                                    time_dim=TIME_DIM, feature_dim=FEATURE_DIM))
    y = jax.block_until_ready(fwd(params, x, timesteps))
    assert y.shape == (N, C_OUT, T, H, W), y.shape
    assert bool(jnp.all(jnp.isfinite(y)))
    print("KERNEL_OK")
</pallas_src>

<mosaic_0001>
module attributes {stable_mosaic.version = 11 : i64} {
  func.func @_gemm_kernel_1blk(%arg0: i32, %arg1: i32, %arg2: memref<1x256x81xbf16, #tpu.memory_space<vmem>>, %arg3: memref<81x128xbf16, #tpu.memory_space<vmem>>, %arg4: memref<1x1x128xf32, #tpu.memory_space<vmem>>, %arg5: memref<1x256x128xbf16, #tpu.memory_space<vmem>>) attributes {dimension_semantics = [#tpu.dimension_semantics<parallel>, #tpu.dimension_semantics<parallel>], iteration_bounds = array<i64: 1, 2>, scalar_prefetch = 0 : i64, scratch_operands = 0 : i64, tpu.core_type = #tpu.core_type<tc>, window_params = [{transform_indices = @transform_0, window_bounds = array<i64: 1, 256, 81>}, {pipeline_mode = #tpu.pipeline_mode<synchronous>, transform_indices = @transform_1, window_bounds = array<i64: 81, 128>}, {transform_indices = @transform_2, window_bounds = array<i64: 1, 1, 128>}, {transform_indices = @transform_3, window_bounds = array<i64: 1, 256, 128>}]} {
    %c0 = arith.constant 0 : index
    %c0_0 = arith.constant 0 : index
    %0 = vector.load %arg3[%c0, %c0_0] : memref<81x128xbf16, #tpu.memory_space<vmem>>, vector<81x128xbf16>
    %c0_1 = arith.constant 0 : index
    %c0_2 = arith.constant 0 : index
    %c0_3 = arith.constant 0 : index
    %1 = vector.load %arg2[%c0_1, %c0_2, %c0_3] : memref<1x256x81xbf16, #tpu.memory_space<vmem>>, vector<1x256x81xbf16>
    %2 = vector.shape_cast %1 : vector<1x256x81xbf16> to vector<256x81xbf16>
    %cst = arith.constant dense<0.000000e+00> : vector<256x128xf32>
    %3 = tpu.matmul %2, %0, %cst {dimension_numbers = #tpu.dot_dimension_numbers<[1], [0], [0], [1], [0, 0, 1, 1], [], []>} : vector<256x81xbf16>, vector<81x128xbf16>, vector<256x128xf32> -> vector<256x128xf32>
    %c0_4 = arith.constant 0 : index
    %c0_5 = arith.constant 0 : index
    %c0_6 = arith.constant 0 : index
    %4 = vector.load %arg4[%c0_4, %c0_5, %c0_6] : memref<1x1x128xf32, #tpu.memory_space<vmem>>, vector<1x1x128xf32>
    %5 = vector.shape_cast %4 : vector<1x1x128xf32> to vector<1x128xf32>
    %6 = vector.broadcast %5 : vector<1x128xf32> to vector<256x128xf32>
    %7 = arith.addf %3, %6 : vector<256x128xf32>
    %8 = arith.negf %7 : vector<256x128xf32>
    %9 = math.exp %8 : vector<256x128xf32>
    %cst_7 = arith.constant 1.000000e+00 : f32
    %10 = vector.broadcast %cst_7 : f32 to vector<256x128xf32>
    %11 = arith.addf %10, %9 : vector<256x128xf32>
    %12 = arith.divf %10, %11 : vector<256x128xf32>
    %13 = arith.mulf %7, %12 : vector<256x128xf32>
    %14 = arith.truncf %13 : vector<256x128xf32> to vector<256x128xbf16>
    %c0_8 = arith.constant 0 : index
    %c0_9 = arith.constant 0 : index
    %c0_10 = arith.constant 0 : index
    %15 = vector.load %arg5[%c0_8, %c0_9, %c0_10] : memref<1x256x128xbf16, #tpu.memory_space<vmem>>, vector<1x256x128xbf16>
    %16 = vector.shape_cast %15 : vector<1x256x128xbf16> to vector<256x128xbf16>
    %17 = vector.shape_cast %14 : vector<256x128xbf16> to vector<1x256x128xbf16>
    tpu.vector_store %arg5[%c0_8, %c0_9, %c0_10], %17 {strides = array<i32>} : memref<1x256x128xbf16, #tpu.memory_space<vmem>>, vector<1x256x128xbf16>,
    return
  }
  func.func @transform_0(%arg0: i32, %arg1: i32) -> (i32, i32, i32) {
    %c0_i32 = arith.constant 0 : i32
    %c0_i32_0 = arith.constant 0 : i32
    return %arg0, %arg1, %c0_i32 : i32, i32, i32
  }
  func.func @transform_1(%arg0: i32, %arg1: i32) -> (i32, i32) {
    %c0_i32 = arith.constant 0 : i32
    %c0_i32_0 = arith.constant 0 : i32
    %c0_i32_1 = arith.constant 0 : i32
    return %c0_i32, %c0_i32_0 : i32, i32
  }
  func.func @transform_2(%arg0: i32, %arg1: i32) -> (i32, i32, i32) {
    %c0_i32 = arith.constant 0 : i32
    %c0_i32_0 = arith.constant 0 : i32
    %c0_i32_1 = arith.constant 0 : i32
    return %arg0, %c0_i32, %c0_i32_0 : i32, i32, i32
  }
  func.func @transform_3(%arg0: i32, %arg1: i32) -> (i32, i32, i32) {
    %c0_i32 = arith.constant 0 : i32
    %c0_i32_0 = arith.constant 0 : i32
    return %arg0, %arg1, %c0_i32 : i32, i32, i32
  }
}

module attributes {stable_mosaic.version = 11 : i64} {
  func.func @_gemm_kernel_1blk(%arg0: i32, %arg1: i32, %arg2: memref<1x32x864xbf16, #tpu.memory_space<vmem>>, %arg3: memref<864x128xbf16, #tpu.memory_space<vmem>>, %arg4: memref<1x1x128xf32, #tpu.memory_space<vmem>>, %arg5: memref<1x32x128xbf16, #tpu.memory_space<vmem>>) attributes {dimension_semantics = [#tpu.dimension_semantics<parallel>, #tpu.dimension_semantics<parallel>], iteration_bounds = array<i64: 1, 2>, scalar_prefetch = 0 : i64, scratch_operands = 0 : i64, tpu.core_type = #tpu.core_type<tc>, window_params = [{transform_indices = @transform_0, window_bounds = array<i64: 1, 32, 864>}, {pipeline_mode = #tpu.pipeline_mode<synchronous>, transform_indices = @transform_1, window_bounds = array<i64: 864, 128>}, {transform_indices = @transform_2, window_bounds = array<i64: 1, 1, 128>}, {transform_indices = @transform_3, window_bounds = array<i64: 1, 32, 128>}]} {
    %c0 = arith.constant 0 : index
    %c0_0 = arith.constant 0 : index
    %0 = vector.load %arg3[%c0, %c0_0] : memref<864x128xbf16, #tpu.memory_space<vmem>>, vector<864x128xbf16>
    %c0_1 = arith.constant 0 : index
    %c0_2 = arith.constant 0 : index
    %c0_3 = arith.constant 0 : index
    %1 = vector.load %arg2[%c0_1, %c0_2, %c0_3] : memref<1x32x864xbf16, #tpu.memory_space<vmem>>, vector<1x32x864xbf16>
    %2 = vector.shape_cast %1 : vector<1x32x864xbf16> to vector<32x864xbf16>
    %cst = arith.constant dense<0.000000e+00> : vector<32x128xf32>
    %3 = tpu.matmul %2, %0, %cst {dimension_numbers = #tpu.dot_dimension_numbers<[1], [0], [0], [1], [0, 0, 1, 1], [], []>} : vector<32x864xbf16>, vector<864x128xbf16>, vector<32x128xf32> -> vector<32x128xf32>
    %c0_4 = arith.constant 0 : index
    %c0_5 = arith.constant 0 : index
    %c0_6 = arith.constant 0 : index
    %4 = vector.load %arg4[%c0_4, %c0_5, %c0_6] : memref<1x1x128xf32, #tpu.memory_space<vmem>>, vector<1x1x128xf32>
    %5 = vector.shape_cast %4 : vector<1x1x128xf32> to vector<1x128xf32>
    %6 = vector.broadcast %5 : vector<1x128xf32> to vector<32x128xf32>
    %7 = arith.addf %3, %6 : vector<32x128xf32>
    %8 = arith.negf %7 : vector<32x128xf32>
    %9 = math.exp %8 : vector<32x128xf32>
    %cst_7 = arith.constant 1.000000e+00 : f32
    %10 = vector.broadcast %cst_7 : f32 to vector<32x128xf32>
    %11 = arith.addf %10, %9 : vector<32x128xf32>
    %12 = arith.divf %10, %11 : vector<32x128xf32>
    %13 = arith.mulf %7, %12 : vector<32x128xf32>
    %14 = arith.truncf %13 : vector<32x128xf32> to vector<32x128xbf16>
    %c0_8 = arith.constant 0 : index
    %c0_9 = arith.constant 0 : index
    %c0_10 = arith.constant 0 : index
    %15 = vector.load %arg5[%c0_8, %c0_9, %c0_10] : memref<1x32x128xbf16, #tpu.memory_space<vmem>>, vector<1x32x128xbf16>
    %16 = vector.shape_cast %15 : vector<1x32x128xbf16> to vector<32x128xbf16>
    %17 = vector.shape_cast %14 : vector<32x128xbf16> to vector<1x32x128xbf16>
    tpu.vector_store %arg5[%c0_8, %c0_9, %c0_10], %17 {strides = array<i32>} : memref<1x32x128xbf16, #tpu.memory_space<vmem>>, vector<1x32x128xbf16>,
    return
  }
  func.func @transform_0(%arg0: i32, %arg1: i32) -> (i32, i32, i32) {
    %c0_i32 = arith.constant 0 : i32
    %c0_i32_0 = arith.constant 0 : i32
    return %arg0, %arg1, %c0_i32 : i32, i32, i32
  }
  func.func @transform_1(%arg0: i32, %arg1: i32) -> (i32, i32) {
    %c0_i32 = arith.constant 0 : i32
    %c0_i32_0 = arith.constant 0 : i32
    %c0_i32_1 = arith.constant 0 : i32
    return %c0_i32, %c0_i32_0 : i32, i32
  }
  func.func @transform_2(%arg0: i32, %arg1: i32) -> (i32, i32, i32) {
    %c0_i32 = arith.constant 0 : i32
    %c0_i32_0 = arith.constant 0 : i32
    %c0_i32_1 = arith.constant 0 : i32
    return %arg0, %c0_i32, %c0_i32_0 : i32, i32, i32
  }
  func.func @transform_3(%arg0: i32, %arg1: i32) -> (i32, i32, i32) {
    %c0_i32 = arith.constant 0 : i32
    %c0_i32_0 = arith.constant 0 : i32
    return %arg0, %arg1, %c0_i32 : i32, i32, i32
  }
}

module attributes {stable_mosaic.version = 11 : i64} {
  func.func @_gemm_kernel_1blk(%arg0: i32, %arg1: i32, %arg2: memref<1x32x1728xbf16, #tpu.memory_space<vmem>>, %arg3: memref<1728x128xbf16, #tpu.memory_space<vmem>>, %arg4: memref<1x1x128xf32, #tpu.memory_space<vmem>>, %arg5: memref<1x32x128xbf16, #tpu.memory_space<vmem>>) attributes {dimension_semantics = [#tpu.dimension_semantics<parallel>, #tpu.dimension_semantics<parallel>], iteration_bounds = array<i64: 2, 1>, scalar_prefetch = 0 : i64, scratch_operands = 0 : i64, tpu.core_type = #tpu.core_type<tc>, window_params = [{transform_indices = @transform_0, window_bounds = array<i64: 1, 32, 1728>}, {pipeline_mode = #tpu.pipeline_mode<synchronous>, transform_indices = @transform_1, window_bounds = array<i64: 1728, 128>}, {transform_indices = @transform_2, window_bounds = array<i64: 1, 1, 128>}, {transform_indices = @transform_3, window_bounds = array<i64: 1, 32, 128>}]} {
    %c0 = arith.constant 0 : index
    %c0_0 = arith.constant 0 : index
    %0 = vector.load %arg3[%c0, %c0_0] : memref<1728x128xbf16, #tpu.memory_space<vmem>>, vector<1728x128xbf16>
    %c0_1 = arith.constant 0 : index
    %c0_2 = arith.constant 0 : index
    %c0_3 = arith.constant 0 : index
    %1 = vector.load %arg2[%c0_1, %c0_2, %c0_3] : memref<1x32x1728xbf16, #tpu.memory_space<vmem>>, vector<1x32x1728xbf16>
    %2 = vector.shape_cast %1 : vector<1x32x1728xbf16> to vector<32x1728xbf16>
    %cst = arith.constant dense<0.000000e+00> : vector<32x128xf32>
    %3 = tpu.matmul %2, %0, %cst {dimension_numbers = #tpu.dot_dimension_numbers<[1], [0], [0], [1], [0, 0, 1, 1], [], []>} : vector<32x1728xbf16>, vector<1728x128xbf16>, vector<32x128xf32> -> vector<32x128xf32>
    %c0_4 = arith.constant 0 : index
    %c0_5 = arith.constant 0 : index
    %c0_6 = arith.constant 0 : index
    %4 = vector.load %arg4[%c0_4, %c0_5, %c0_6] : memref<1x1x128xf32, #tpu.memory_space<vmem>>, vector<1x1x128xf32>
    %5 = vector.shape_cast %4 : vector<1x1x128xf32> to vector<1x128xf32>
    %6 = vector.broadcast %5 : vector<1x128xf32> to vector<32x128xf32>
    %7 = arith.addf %3, %6 : vector<32x128xf32>
    %8 = arith.negf %7 : vector<32x128xf32>
    %9 = math.exp %8 : vector<32x128xf32>
    %cst_7 = arith.constant 1.000000e+00 : f32
    %10 = vector.broadcast %cst_7 : f32 to vector<32x128xf32>
    %11 = arith.addf %10, %9 : vector<32x128xf32>
    %12 = arith.divf %10, %11 : vector<32x128xf32>
    %13 = arith.mulf %7, %12 : vector<32x128xf32>
    %14 = arith.truncf %13 : vector<32x128xf32> to vector<32x128xbf16>
    %c0_8 = arith.constant 0 : index
    %c0_9 = arith.constant 0 : index
    %c0_10 = arith.constant 0 : index
    %15 = vector.load %arg5[%c0_8, %c0_9, %c0_10] : memref<1x32x128xbf16, #tpu.memory_space<vmem>>, vector<1x32x128xbf16>
    %16 = vector.shape_cast %15 : vector<1x32x128xbf16> to vector<32x128xbf16>
    %17 = vector.shape_cast %14 : vector<32x128xbf16> to vector<1x32x128xbf16>
    tpu.vector_store %arg5[%c0_8, %c0_9, %c0_10], %17 {strides = array<i32>} : memref<1x32x128xbf16, #tpu.memory_space<vmem>>, vector<1x32x128xbf16>,
    return
  }
  func.func @transform_0(%arg0: i32, %arg1: i32) -> (i32, i32, i32) {
    %c0_i32 = arith.constant 0 : i32
    %c0_i32_0 = arith.constant 0 : i32
    return %arg0, %arg1, %c0_i32 : i32, i32, i32
  }
  func.func @transform_1(%arg0: i32, %arg1: i32) -> (i32, i32) {
    %c0_i32 = arith.constant 0 : i32
    %c0_i32_0 = arith.constant 0 : i32
    %c0_i32_1 = arith.constant 0 : i32
    return %c0_i32, %c0_i32_0 : i32, i32
  }
  func.func @transform_2(%arg0: i32, %arg1: i32) -> (i32, i32, i32) {
    %c0_i32 = arith.constant 0 : i32
    %c0_i32_0 = arith.constant 0 : i32
    %c0_i32_1 = arith.constant 0 : i32
    return %arg0, %c0_i32, %c0_i32_0 : i32, i32, i32
  }
  func.func @transform_3(%arg0: i32, %arg1: i32) -> (i32, i32, i32) {
    %c0_i32 = arith.constant 0 : i32
    %c0_i32_0 = arith.constant 0 : i32
    return %arg0, %arg1, %c0_i32 : i32, i32, i32
  }
}

module attributes {stable_mosaic.version = 11 : i64} {
  func.func @_gemm_kernel_1blk(%arg0: i32, %arg1: i32, %arg2: memref<1x32x1728xbf16, #tpu.memory_space<vmem>>, %arg3: memref<1728x128xbf16, #tpu.memory_space<vmem>>, %arg4: memref<1x1x128xf32, #tpu.memory_space<vmem>>, %arg5: memref<1x32x128xbf16, #tpu.memory_space<vmem>>) attributes {dimension_semantics = [#tpu.dimension_semantics<parallel>, #tpu.dimension_semantics<parallel>], iteration_bounds = array<i64: 1, 2>, scalar_prefetch = 0 : i64, scratch_operands = 0 : i64, tpu.core_type = #tpu.core_type<tc>, window_params = [{transform_indices = @transform_0, window_bounds = array<i64: 1, 32, 1728>}, {pipeline_mode = #tpu.pipeline_mode<synchronous>, transform_indices = @transform_1, window_bounds = array<i64: 1728, 128>}, {transform_indices = @transform_2, window_bounds = array<i64: 1, 1, 128>}, {transform_indices = @transform_3, window_bounds = array<i64: 1, 32, 128>}]} {
    %c0 = arith.constant 0 : index
    %c0_0 = arith.constant 0 : index
    %0 = vector.load %arg3[%c0, %c0_0] : memref<1728x128xbf16, #tpu.memory_space<vmem>>, vector<1728x128xbf16>
    %c0_1 = arith.constant 0 : index
    %c0_2 = arith.constant 0 : index
    %c0_3 = arith.constant 0 : index
    %1 = vector.load %arg2[%c0_1, %c0_2, %c0_3] : memref<1x32x1728xbf16, #tpu.memory_space<vmem>>, vector<1x32x1728xbf16>
    %2 = vector.shape_cast %1 : vector<1x32x1728xbf16> to vector<32x1728xbf16>
    %cst = arith.constant dense<0.000000e+00> : vector<32x128xf32>
    %3 = tpu.matmul %2, %0, %cst {dimension_numbers = #tpu.dot_dimension_numbers<[1], [0], [0], [1], [0, 0, 1, 1], [], []>} : vector<32x1728xbf16>, vector<1728x128xbf16>, vector<32x128xf32> -> vector<32x128xf32>
    %c0_4 = arith.constant 0 : index
    %c0_5 = arith.constant 0 : index
    %c0_6 = arith.constant 0 : index
    %4 = vector.load %arg4[%c0_4, %c0_5, %c0_6] : memref<1x1x128xf32, #tpu.memory_space<vmem>>, vector<1x1x128xf32>
    %5 = vector.shape_cast %4 : vector<1x1x128xf32> to vector<1x128xf32>
    %6 = vector.broadcast %5 : vector<1x128xf32> to vector<32x128xf32>
    %7 = arith.addf %3, %6 : vector<32x128xf32>
    %8 = arith.negf %7 : vector<32x128xf32>
    %9 = math.exp %8 : vector<32x128xf32>
    %cst_7 = arith.constant 1.000000e+00 : f32
    %10 = vector.broadcast %cst_7 : f32 to vector<32x128xf32>
    %11 = arith.addf %10, %9 : vector<32x128xf32>
    %12 = arith.divf %10, %11 : vector<32x128xf32>
    %13 = arith.mulf %7, %12 : vector<32x128xf32>
    %14 = arith.truncf %13 : vector<32x128xf32> to vector<32x128xbf16>
    %c0_8 = arith.constant 0 : index
    %c0_9 = arith.constant 0 : index
    %c0_10 = arith.constant 0 : index
    %15 = vector.load %arg5[%c0_8, %c0_9, %c0_10] : memref<1x32x128xbf16, #tpu.memory_space<vmem>>, vector<1x32x128xbf16>
    %16 = vector.shape_cast %15 : vector<1x32x128xbf16> to vector<32x128xbf16>
    %17 = vector.shape_cast %14 : vector<32x128xbf16> to vector<1x32x128xbf16>
    tpu.vector_store %arg5[%c0_8, %c0_9, %c0_10], %17 {strides = array<i32>} : memref<1x32x128xbf16, #tpu.memory_space<vmem>>, vector<1x32x128xbf16>,
    return
  }
  func.func @transform_0(%arg0: i32, %arg1: i32) -> (i32, i32, i32) {
    %c0_i32 = arith.constant 0 : i32
    %c0_i32_0 = arith.constant 0 : i32
    return %arg0, %arg1, %c0_i32 : i32, i32, i32
  }
  func.func @transform_1(%arg0: i32, %arg1: i32) -> (i32, i32) {
    %c0_i32 = arith.constant 0 : i32
    %c0_i32_0 = arith.constant 0 : i32
    %c0_i32_1 = arith.constant 0 : i32
    return %c0_i32, %c0_i32_0 : i32, i32
  }
  func.func @transform_2(%arg0: i32, %arg1: i32) -> (i32, i32, i32) {
    %c0_i32 = arith.constant 0 : i32
    %c0_i32_0 = arith.constant 0 : i32
    %c0_i32_1 = arith.constant 0 : i32
    return %arg0, %c0_i32, %c0_i32_0 : i32, i32, i32
  }
  func.func @transform_3(%arg0: i32, %arg1: i32) -> (i32, i32, i32) {
    %c0_i32 = arith.constant 0 : i32
    %c0_i32_0 = arith.constant 0 : i32
    return %arg0, %arg1, %c0_i32 : i32, i32, i32
  }
}

module attributes {stable_mosaic.version = 11 : i64} {
  func.func @_gemm_kernel_1blk(%arg0: i32, %arg1: i32, %arg2: memref<1x64x512xbf16, #tpu.memory_space<vmem>>, %arg3: memref<1x512x128xbf16, #tpu.memory_space<vmem>>, %arg4: memref<1x1x128xf32, #tpu.memory_space<vmem>>, %arg5: memref<1x64x128xbf16, #tpu.memory_space<vmem>>) attributes {dimension_semantics = [#tpu.dimension_semantics<parallel>, #tpu.dimension_semantics<parallel>], iteration_bounds = array<i64: 8, 1>, scalar_prefetch = 0 : i64, scratch_operands = 0 : i64, tpu.core_type = #tpu.core_type<tc>, window_params = [{transform_indices = @transform_0, window_bounds = array<i64: 1, 64, 512>}, {transform_indices = @transform_1, window_bounds = array<i64: 1, 512, 128>}, {transform_indices = @transform_2, window_bounds = array<i64: 1, 1, 128>}, {transform_indices = @transform_3, window_bounds = array<i64: 1, 64, 128>}]} {
    %c0 = arith.constant 0 : index
    %c0_0 = arith.constant 0 : index
    %c0_1 = arith.constant 0 : index
    %0 = vector.load %arg3[%c0, %c0_0, %c0_1] : memref<1x512x128xbf16, #tpu.memory_space<vmem>>, vector<1x512x128xbf16>
    %1 = vector.shape_cast %0 : vector<1x512x128xbf16> to vector<512x128xbf16>
    %c0_2 = arith.constant 0 : index
    %c0_3 = arith.constant 0 : index
    %c0_4 = arith.constant 0 : index
    %2 = vector.load %arg2[%c0_2, %c0_3, %c0_4] : memref<1x64x512xbf16, #tpu.memory_space<vmem>>, vector<1x64x512xbf16>
    %3 = vector.shape_cast %2 : vector<1x64x512xbf16> to vector<64x512xbf16>
    %cst = arith.constant dense<0.000000e+00> : vector<64x128xf32>
    %4 = tpu.matmul %3, %1, %cst {dimension_numbers = #tpu.dot_dimension_numbers<[1], [0], [0], [1], [0, 0, 1, 1], [], []>} : vector<64x512xbf16>, vector<512x128xbf16>, vector<64x128xf32> -> vector<64x128xf32>
    %c0_5 = arith.constant 0 : index
    %c0_6 = arith.constant 0 : index
    %c0_7 = arith.constant 0 : index
    %5 = vector.load %arg4[%c0_5, %c0_6, %c0_7] : memref<1x1x128xf32, #tpu.memory_space<vmem>>, vector<1x1x128xf32>
    %6 = vector.shape_cast %5 : vector<1x1x128xf32> to vector<1x128xf32>
    %7 = vector.broadcast %6 : vector<1x128xf32> to vector<64x128xf32>
    %8 = arith.addf %4, %7 : vector<64x128xf32>
    %9 = arith.negf %8 : vector<64x128xf32>
    %10 = math.exp %9 : vector<64x128xf32>
    %cst_8 = arith.constant 1.000000e+00 : f32
    %11 = vector.broadcast %cst_8 : f32 to vector<64x128xf32>
    %12 = arith.addf %11, %10 : vector<64x128xf32>
    %13 = arith.divf %11, %12 : vector<64x128xf32>
    %14 = arith.mulf %8, %13 : vector<64x128xf32>
    %15 = arith.truncf %14 : vector<64x128xf32> to vector<64x128xbf16>
    %c0_9 = arith.constant 0 : index
    %c0_10 = arith.constant 0 : index
    %c0_11 = arith.constant 0 : index
    %16 = vector.load %arg5[%c0_9, %c0_10, %c0_11] : memref<1x64x128xbf16, #tpu.memory_space<vmem>>, vector<1x64x128xbf16>
    %17 = vector.shape_cast %16 : vector<1x64x128xbf16> to vector<64x128xbf16>
    %18 = vector.shape_cast %15 : vector<64x128xbf16> to vector<1x64x128xbf16>
    tpu.vector_store %arg5[%c0_9, %c0_10, %c0_11], %18 {strides = array<i32>} : memref<1x64x128xbf16, #tpu.memory_space<vmem>>, vector<1x64x128xbf16>,
    return
  }
  func.func @transform_0(%arg0: i32, %arg1: i32) -> (i32, i32, i32) {
    %c0_i32 = arith.constant 0 : i32
    %c0_i32_0 = arith.constant 0 : i32
    return %arg0, %arg1, %c0_i32 : i32, i32, i32
  }
  func.func @transform_1(%arg0: i32, %arg1: i32) -> (i32, i32, i32) {
    %c0_i32 = arith.constant 0 : i32
    %c0_i32_0 = arith.constant 0 : i32
    %c0_i32_1 = arith.constant 0 : i32
    return %arg0, %c0_i32, %c0_i32_0 : i32, i32, i32
  }
  func.func @transform_2(%arg0: i32, %arg1: i32) -> (i32, i32, i32) {
    %c0_i32 = arith.constant 0 : i32
    %c0_i32_0 = arith.constant 0 : i32
    %c0_i32_1 = arith.constant 0 : i32
    return %arg0, %c0_i32, %c0_i32_0 : i32, i32, i32
  }
  func.func @transform_3(%arg0: i32, %arg1: i32) -> (i32, i32, i32) {
    %c0_i32 = arith.constant 0 : i32
    %c0_i32_0 = arith.constant 0 : i32
    return %arg0, %arg1, %c0_i32 : i32, i32, i32
  }
}

module attributes {stable_mosaic.version = 11 : i64} {
  func.func @_gemm_kernel_1blk(%arg0: i32, %arg1: i32, %arg2: memref<1x256x1728xbf16, #tpu.memory_space<vmem>>, %arg3: memref<1728x128xbf16, #tpu.memory_space<vmem>>, %arg4: memref<1x1x128xf32, #tpu.memory_space<vmem>>, %arg5: memref<1x256x128xbf16, #tpu.memory_space<vmem>>) attributes {dimension_semantics = [#tpu.dimension_semantics<parallel>, #tpu.dimension_semantics<parallel>], iteration_bounds = array<i64: 1, 2>, scalar_prefetch = 0 : i64, scratch_operands = 0 : i64, tpu.core_type = #tpu.core_type<tc>, window_params = [{transform_indices = @transform_0, window_bounds = array<i64: 1, 256, 1728>}, {pipeline_mode = #tpu.pipeline_mode<synchronous>, transform_indices = @transform_1, window_bounds = array<i64: 1728, 128>}, {transform_indices = @transform_2, window_bounds = array<i64: 1, 1, 128>}, {transform_indices = @transform_3, window_bounds = array<i64: 1, 256, 128>}]} {
    %c0 = arith.constant 0 : index
    %c0_0 = arith.constant 0 : index
    %0 = vector.load %arg3[%c0, %c0_0] : memref<1728x128xbf16, #tpu.memory_space<vmem>>, vector<1728x128xbf16>
    %c0_1 = arith.constant 0 : index
    %c0_2 = arith.constant 0 : index
    %c0_3 = arith.constant 0 : index
    %1 = vector.load %arg2[%c0_1, %c0_2, %c0_3] : memref<1x256x1728xbf16, #tpu.memory_space<vmem>>, vector<1x256x1728xbf16>
    %2 = vector.shape_cast %1 : vector<1x256x1728xbf16> to vector<256x1728xbf16>
    %cst = arith.constant dense<0.000000e+00> : vector<256x128xf32>
    %3 = tpu.matmul %2, %0, %cst {dimension_numbers = #tpu.dot_dimension_numbers<[1], [0], [0], [1], [0, 0, 1, 1], [], []>} : vector<256x1728xbf16>, vector<1728x128xbf16>, vector<256x128xf32> -> vector<256x128xf32>
    %c0_4 = arith.constant 0 : index
    %c0_5 = arith.constant 0 : index
    %c0_6 = arith.constant 0 : index
    %4 = vector.load %arg4[%c0_4, %c0_5, %c0_6] : memref<1x1x128xf32, #tpu.memory_space<vmem>>, vector<1x1x128xf32>
    %5 = vector.shape_cast %4 : vector<1x1x128xf32> to vector<1x128xf32>
    %6 = vector.broadcast %5 : vector<1x128xf32> to vector<256x128xf32>
    %7 = arith.addf %3, %6 : vector<256x128xf32>
    %8 = arith.negf %7 : vector<256x128xf32>
    %9 = math.exp %8 : vector<256x128xf32>
    %cst_7 = arith.constant 1.000000e+00 : f32
    %10 = vector.broadcast %cst_7 : f32 to vector<256x128xf32>
    %11 = arith.addf %10, %9 : vector<256x128xf32>
    %12 = arith.divf %10, %11 : vector<256x128xf32>
    %13 = arith.mulf %7, %12 : vector<256x128xf32>
    %14 = arith.truncf %13 : vector<256x128xf32> to vector<256x128xbf16>
    %c0_8 = arith.constant 0 : index
    %c0_9 = arith.constant 0 : index
    %c0_10 = arith.constant 0 : index
    %15 = vector.load %arg5[%c0_8, %c0_9, %c0_10] : memref<1x256x128xbf16, #tpu.memory_space<vmem>>, vector<1x256x128xbf16>
    %16 = vector.shape_cast %15 : vector<1x256x128xbf16> to vector<256x128xbf16>
    %17 = vector.shape_cast %14 : vector<256x128xbf16> to vector<1x256x128xbf16>
    tpu.vector_store %arg5[%c0_8, %c0_9, %c0_10], %17 {strides = array<i32>} : memref<1x256x128xbf16, #tpu.memory_space<vmem>>, vector<1x256x128xbf16>,
    return
  }
  func.func @transform_0(%arg0: i32, %arg1: i32) -> (i32, i32, i32) {
    %c0_i32 = arith.constant 0 : i32
    %c0_i32_0 = arith.constant 0 : i32
    return %arg0, %arg1, %c0_i32 : i32, i32, i32
  }
  func.func @transform_1(%arg0: i32, %arg1: i32) -> (i32, i32) {
    %c0_i32 = arith.constant 0 : i32
    %c0_i32_0 = arith.constant 0 : i32
    %c0_i32_1 = arith.constant 0 : i32
    return %c0_i32, %c0_i32_0 : i32, i32
  }
  func.func @transform_2(%arg0: i32, %arg1: i32) -> (i32, i32, i32) {
    %c0_i32 = arith.constant 0 : i32
    %c0_i32_0 = arith.constant 0 : i32
    %c0_i32_1 = arith.constant 0 : i32
    return %arg0, %c0_i32, %c0_i32_0 : i32, i32, i32
  }
  func.func @transform_3(%arg0: i32, %arg1: i32) -> (i32, i32, i32) {
    %c0_i32 = arith.constant 0 : i32
    %c0_i32_0 = arith.constant 0 : i32
    return %arg0, %arg1, %c0_i32 : i32, i32, i32
  }
}

module attributes {stable_mosaic.version = 11 : i64} {
  func.func @_gemm_kernel_1blk(%arg0: i32, %arg1: i32, %arg2: memref<1x256x864xbf16, #tpu.memory_space<vmem>>, %arg3: memref<864x128xbf16, #tpu.memory_space<vmem>>, %arg4: memref<1x1x128xf32, #tpu.memory_space<vmem>>, %arg5: memref<1x256x128xf32, #tpu.memory_space<vmem>>) attributes {dimension_semantics = [#tpu.dimension_semantics<parallel>, #tpu.dimension_semantics<parallel>], iteration_bounds = array<i64: 1, 2>, scalar_prefetch = 0 : i64, scratch_operands = 0 : i64, tpu.core_type = #tpu.core_type<tc>, window_params = [{transform_indices = @transform_0, window_bounds = array<i64: 1, 256, 864>}, {pipeline_mode = #tpu.pipeline_mode<synchronous>, transform_indices = @transform_1, window_bounds = array<i64: 864, 128>}, {transform_indices = @transform_2, window_bounds = array<i64: 1, 1, 128>}, {transform_indices = @transform_3, window_bounds = array<i64: 1, 256, 128>}]} {
    %c0 = arith.constant 0 : index
    %c0_0 = arith.constant 0 : index
    %0 = vector.load %arg3[%c0, %c0_0] : memref<864x128xbf16, #tpu.memory_space<vmem>>, vector<864x128xbf16>
    %c0_1 = arith.constant 0 : index
    %c0_2 = arith.constant 0 : index
    %c0_3 = arith.constant 0 : index
    %1 = vector.load %arg2[%c0_1, %c0_2, %c0_3] : memref<1x256x864xbf16, #tpu.memory_space<vmem>>, vector<1x256x864xbf16>
    %2 = vector.shape_cast %1 : vector<1x256x864xbf16> to vector<256x864xbf16>
    %cst = arith.constant dense<0.000000e+00> : vector<256x128xf32>
    %3 = tpu.matmul %2, %0, %cst {dimension_numbers = #tpu.dot_dimension_numbers<[1], [0], [0], [1], [0, 0, 1, 1], [], []>} : vector<256x864xbf16>, vector<864x128xbf16>, vector<256x128xf32> -> vector<256x128xf32>
    %c0_4 = arith.constant 0 : index
    %c0_5 = arith.constant 0 : index
    %c0_6 = arith.constant 0 : index
    %4 = vector.load %arg4[%c0_4, %c0_5, %c0_6] : memref<1x1x128xf32, #tpu.memory_space<vmem>>, vector<1x1x128xf32>
    %5 = vector.shape_cast %4 : vector<1x1x128xf32> to vector<1x128xf32>
    %6 = vector.broadcast %5 : vector<1x128xf32> to vector<256x128xf32>
    %7 = arith.addf %3, %6 : vector<256x128xf32>
    %c0_7 = arith.constant 0 : index
    %c0_8 = arith.constant 0 : index
    %c0_9 = arith.constant 0 : index
    %8 = vector.load %arg5[%c0_7, %c0_8, %c0_9] : memref<1x256x128xf32, #tpu.memory_space<vmem>>, vector<1x256x128xf32>
    %9 = vector.shape_cast %8 : vector<1x256x128xf32> to vector<256x128xf32>
    %10 = vector.shape_cast %7 : vector<256x128xf32> to vector<1x256x128xf32>
    tpu.vector_store %arg5[%c0_7, %c0_8, %c0_9], %10 {strides = array<i32>} : memref<1x256x128xf32, #tpu.memory_space<vmem>>, vector<1x256x128xf32>,
    return
  }
  func.func @transform_0(%arg0: i32, %arg1: i32) -> (i32, i32, i32) {
    %c0_i32 = arith.constant 0 : i32
    %c0_i32_0 = arith.constant 0 : i32
    return %arg0, %arg1, %c0_i32 : i32, i32, i32
  }
  func.func @transform_1(%arg0: i32, %arg1: i32) -> (i32, i32) {
    %c0_i32 = arith.constant 0 : i32
    %c0_i32_0 = arith.constant 0 : i32
    %c0_i32_1 = arith.constant 0 : i32
    return %c0_i32, %c0_i32_0 : i32, i32
  }
  func.func @transform_2(%arg0: i32, %arg1: i32) -> (i32, i32, i32) {
    %c0_i32 = arith.constant 0 : i32
    %c0_i32_0 = arith.constant 0 : i32
    %c0_i32_1 = arith.constant 0 : i32
    return %arg0, %c0_i32, %c0_i32_0 : i32, i32, i32
  }
  func.func @transform_3(%arg0: i32, %arg1: i32) -> (i32, i32, i32) {
    %c0_i32 = arith.constant 0 : i32
    %c0_i32_0 = arith.constant 0 : i32
    return %arg0, %arg1, %c0_i32 : i32, i32, i32
  }
}

</mosaic_0001>

<llo_original>
// kernel: simple_video_unet_forward.7
$region0: #{simple_video_unet_forward.7}
  #allocation0 [shape = 'u32[]', space=smem, size = 0x4, offset = 0x4, fixed_abs, tag = 'smem constant byte address 0x4 - core index']
  #allocation1 [shape = 'u32[144,128]{1,0:T(1,128)}', space=vmem, size = 0x12000, scoped, tag = 'internal scratch']
  %s0 = inlined_call_operand.vmem [shape: bf16[1,512,81], index: 0, kind: input, shape index: {}]
  %s1 = inlined_call_operand.vmem [shape: bf16[81,128], index: 1, kind: input, shape index: {}]
  %s2 = inlined_call_operand.vmem [shape: f32[1,1,128], index: 2, kind: input, shape index: {}]
  %s3 = inlined_call_operand.vmem [shape: bf16[1,512,128], index: 3, kind: output, shape index: {}]
  %s4 = sld [smem:[#allocation0]]
  $region45: #{simple_video_unet_forward.7} parent=0
    _
  %s6 = ssub.s32 1, %s4
  %s7 = scalar_select 0, %s6, %s4
  loop: start=0, step=1, limit=4
  $region2: #{simple_video_unet_forward.7} parent=0 // loop_pre_header
    _
  $region3: #{simple_video_unet_forward.7} parent=0 // loop_header
    %s9 = sphi 0, %s13
    %p10 = scmp.ge.s32.totalorder %s9, 4
    %s16 = sphi 0, %s28
    %s17 = sphi 0, %s24
    %s18 = sphi 0, %s16
    %s19 = sphi 0, %s17
    %s20 = sphi 0, %s18
    %s21 = sphi 0, %s19
    %s33 = sphi 0, %s35
    %s36 = sphi 0, %s33
    %s37 = sphi 0, %s36
    %s53 = sphi 0, %s37
    %s57 = sphi 0, %s57
    %s59 = sphi 0, %s57
    %s60 = sphi 0, %s59
    %s74 = sphi 0, %s60
    %s80 = sphi 0, %s82
    %s83 = sphi 0, %s80
    %s84 = sphi 0, %s83
    %s100 = sphi 0, %s84
    %s108 = sphi 0, %s110
    %s111 = sphi 0, %s108
    %s112 = sphi 0, %s111
    %s128 = sphi 0, %s112
  $region4: #{simple_video_unet_forward.7} parent=0 // loop_header_branch
    %12 = sbr.rel (%p10) target = $region8
  $region5: #{simple_video_unet_forward.7} parent=0 // loop_body
    %s14 = ssub.s32 %s9, 1
    %s15 = ssub.s32 %s9, 2
    %s22 = sadd.s32 1, %s17
    %p23 = scmp.ge.s32.totalorder %s22, 2
    %s24 = scalar_select %p23, 0, %s22
    %s25 = sadd.s32 1, %s16
    %s26 = scalar_select %p23, %s25, %s16
    %p27 = scmp.ge.s32.totalorder %s26, 1
    %s28 = scalar_select %p27, 0, %s26
    %s29 = ssub.s32 %s16, %s28
    %s30 = ssub.s32 %s17, %s24
    %s31 = sor.u32 %s29, %s30
    %p32 = scmp.eq.s32.totalorder %s31, 0
    %s34 = sadd.s32 %s33, 1
    %s35 = scalar_select %p32, %s33, %s34
    %p38 = pneg %p32
    %p39 = scmp.eq.s32.totalorder %s9, 1
    %p40 = por %p38, %p39
    %p41 = scmp.ne.s32.totalorder %s33, %s36
    %p42 = scmp.eq.s32.totalorder %s9, 0
    %p43 = por %p41, %p42
    %p44 = scmp.ne.s32.totalorder %s33, %s36
    %p45 = scmp.eq.s32.totalorder %s14, 1
    %p46 = por %p44, %p45
    %p47 = scmp.ne.s32.totalorder %s36, %s37
    %p48 = scmp.eq.s32.totalorder %s14, 0
    %p49 = por %p47, %p48
    %p50 = scmp.ne.s32.totalorder %s36, %s37
    %p51 = scmp.eq.s32.totalorder %s15, 1
    %p52 = por %p50, %p51
    %p54 = scmp.ne.s32.totalorder %s37, %s53
    %p55 = scmp.eq.s32.totalorder %s15, 0
    %p56 = por %p54, %p55
    %s58 = sadd.s32 %s57, 1
    %p61 = scmp.eq.s32.totalorder %s9, 1
    %p62 = scmp.ne.s32.totalorder %s57, %s59
    %p63 = scmp.eq.s32.totalorder %s9, 0
    %p64 = por %p62, %p63
    %p65 = scmp.ne.s32.totalorder %s57, %s59
    %p66 = scmp.eq.s32.totalorder %s14, 1
    %p67 = por %p65, %p66
    %p68 = scmp.ne.s32.totalorder %s59, %s60
    %p69 = scmp.eq.s32.totalorder %s14, 0
    %p70 = por %p68, %p69
    %p71 = scmp.ne.s32.totalorder %s59, %s60
    %p72 = scmp.eq.s32.totalorder %s15, 1
    %p73 = por %p71, %p72
    %p75 = scmp.ne.s32.totalorder %s60, %s74
    %p76 = scmp.eq.s32.totalorder %s15, 0
    %p77 = por %p75, %p76
    %s78 = ssub.s32 %s16, %s28
    %p79 = scmp.eq.s32.totalorder %s78, 0
    %s81 = sadd.s32 %s80, 1
    %s82 = scalar_select %p79, %s80, %s81
    %p85 = pneg %p79
    %p86 = scmp.eq.s32.totalorder %s9, 1
    %p87 = por %p85, %p86
    %p88 = scmp.ne.s32.totalorder %s80, %s83
    %p89 = scmp.eq.s32.totalorder %s9, 0
    %p90 = por %p88, %p89
    %p91 = scmp.ne.s32.totalorder %s80, %s83
    %p92 = scmp.eq.s32.totalorder %s14, 1
    %p93 = por %p91, %p92
    %p94 = scmp.ne.s32.totalorder %s83, %s84
    %p95 = scmp.eq.s32.totalorder %s14, 0
    %p96 = por %p94, %p95
    %p97 = scmp.ne.s32.totalorder %s83, %s84
    %p98 = scmp.eq.s32.totalorder %s15, 1
    %p99 = por %p97, %p98
    %p101 = scmp.ne.s32.totalorder %s84, %s100
    %p102 = scmp.eq.s32.totalorder %s15, 0
    %p103 = por %p101, %p102
    %s104 = ssub.s32 %s16, %s28
    %s105 = ssub.s32 %s17, %s24
    %s106 = sor.u32 %s104, %s105
    %p107 = scmp.eq.s32.totalorder %s106, 0
    %s109 = sadd.s32 %s108, 1
    %s110 = scalar_select %p107, %s108, %s109
    %p113 = pneg %p107
    %p114 = scmp.eq.s32.totalorder %s9, 1
    %p115 = por %p113, %p114
    %p116 = scmp.ne.s32.totalorder %s108, %s111
    %p117 = scmp.eq.s32.totalorder %s9, 0
    %p118 = por %p116, %p117
    %p119 = scmp.ne.s32.totalorder %s108, %s111
    %p120 = scmp.eq.s32.totalorder %s14, 1
    %p121 = por %p119, %p120
    %p122 = scmp.ne.s32.totalorder %s111, %s112
    %p123 = scmp.eq.s32.totalorder %s14, 0
    %p124 = por %p122, %p123
    %p125 = scmp.ne.s32.totalorder %s111, %s112
    %p126 = scmp.eq.s32.totalorder %s15, 1
    %p127 = por %p125, %p126
    %p129 = scmp.ne.s32.totalorder %s112, %s128
    %p130 = scmp.eq.s32.totalorder %s15, 0
    %p131 = por %p129, %p130
    %p132 = scmp.le.s32.totalorder 1, %s9
    %p133 = scmp.lt.s32.totalorder %s9, 3
    %p134 = pnand %p132, %p133
    %p135 = pneg %p134
    // Predicated region
    $region9: #{simple_video_unet_forward.7} parent=5 // pred_check
      _
    $region10: #{simple_video_unet_forward.7} parent=5 // pred_check_branch
      %137 = sbr.rel (%p134) target = $region12
    $region11: #{simple_video_unet_forward.7} parent=5 // pred_region
      %s138 = ssub.s32 %s9, 1
      // Predicated region
      $region13: #{simple_video_unet_forward.7} parent=11 // pred_check
        %p139 = pneg %p70
      $region14: #{simple_video_unet_forward.7} parent=11 // pred_check_branch
        %141 = sbr.rel (%p139) target = $region16
      $region15: #{simple_video_unet_forward.7} parent=11 // pred_region
        _
      $region16: #{simple_video_unet_forward.7} parent=11 // pred_fallthru
        _
      // Predicated region
      $region17: #{simple_video_unet_forward.7} parent=11 // pred_check
        %p142 = pneg %p96
      $region18: #{simple_video_unet_forward.7} parent=11 // pred_check_branch
        %144 = sbr.rel (%p142) target = $region20
      $region19: #{simple_video_unet_forward.7} parent=11 // pred_region
        %p145 = scmp.lt.s32.totalorder %s18, 0
        %s146 = scalar_select %p145, %s18, 0
        %s147 = scalar_lea.vmem %s2, %s146
      $region20: #{simple_video_unet_forward.7} parent=11 // pred_fallthru
        _
    $region12: #{simple_video_unet_forward.7} parent=5 // pred_fallthru
      _
    %p148 = scmp.lt.s32.totalorder %s9, 2
    // Predicated region
    $region21: #{simple_video_unet_forward.7} parent=5 // pred_check
      %p149 = pneg %p148
    $region22: #{simple_video_unet_forward.7} parent=5 // pred_check_branch
      %151 = sbr.rel (%p149) target = $region24
    $region23: #{simple_video_unet_forward.7} parent=5 // pred_region
      // Predicated region
      $region25: #{simple_video_unet_forward.7} parent=23 // pred_check
        %p152 = pneg %p43
      $region26: #{simple_video_unet_forward.7} parent=23 // pred_check_branch
        %154 = sbr.rel (%p152) target = $region28
      $region27: #{simple_video_unet_forward.7} parent=23 // pred_region
        %s155 = smul.u32 32, %s17
        %p156 = scmp.lt.s32.totalorder %s16, 0
        %s157 = scalar_select %p156, %s16, 0
        %p158 = scmp.lt.s32.totalorder %s155, 63
        %s159 = scalar_select %p158, %s155, 63
        %s160 = smul.addr %s157, 64
        %s161 = sadd.s32 %s159, %s160
        %s162 = smul.addr %s161, 4
        %s163 = scalar_lea.vmem %s0, %s162
        %s164 = smul.u32 32, %s17
      $region28: #{simple_video_unet_forward.7} parent=23 // pred_fallthru
        _
    $region24: #{simple_video_unet_forward.7} parent=5 // pred_fallthru
      _
    %p165 = scmp.le.s32.totalorder 1, %s9
    %p166 = scmp.lt.s32.totalorder %s9, 3
    %p167 = pnand %p165, %p166
    %p168 = pneg %p167
    // Predicated region
    $region29: #{simple_video_unet_forward.7} parent=5 // pred_check
      _
    $region30: #{simple_video_unet_forward.7} parent=5 // pred_check_branch
      %170 = sbr.rel (%p167) target = $region32
    $region31: #{simple_video_unet_forward.7} parent=5 // pred_region
      %s171 = ssub.s32 %s9, 1
      %s172 = smul.u32 32, %s19
      %p173 = scmp.lt.s32.totalorder %s18, 0
      %s174 = scalar_select %p173, %s18, 0
      %p175 = scmp.lt.s32.totalorder %s172, 63
      %s176 = scalar_select %p175, %s172, 63
      %s177 = smul.addr %s174, 64
      %s178 = sadd.s32 %s176, %s177
      %s179 = smul.addr %s178, 4
      %s180 = scalar_lea.vmem %s0, %s179
      %p181 = pneg %p49
      %p182 = pneg %p46
      %p183 = pneg %p70
      %p184 = pneg %p67
      %p185 = scmp.lt.s32.totalorder %s18, 0
      %s186 = scalar_select %p185, %s18, 0
      %s187 = scalar_lea.vmem %s2, %s186
      %p188 = pneg %p96
      %p189 = pneg %p93
      %p190 = pneg %p124
      %p191 = pneg %p121
      %s192 = smul.u32 32, %s19
      %p193 = scmp.lt.s32.totalorder %s18, 0
      %s194 = scalar_select %p193, %s18, 0
      %p195 = scmp.lt.s32.totalorder %s192, 63
      %s196 = scalar_select %p195, %s192, 63
      %s197 = smul.addr %s194, 64
      %s198 = sadd.s32 %s196, %s197
      %s199 = smul.addr %s198, 4
      %s200 = scalar_lea.vmem %s3, %s199
      %s201 = smul.u32 32, %s19
      %p202 = scmp.lt.s32.totalorder %s18, 0
      %s203 = scalar_select %p202, %s18, 0
      %p204 = scmp.lt.s32.totalorder %s201, 63
      %s205 = scalar_select %p204, %s201, 63
      %s206 = smul.addr %s203, 64
      %s207 = sadd.s32 %s205, %s206
      %s208 = smul.addr %s207, 4
      %s209 = scalar_lea.vmem %s0, %s208
      %s210 = smul.u32 32, %s19
      %p211 = scmp.lt.s32.totalorder %s18, 0
      %s212 = scalar_select %p211, %s18, 0
      %s213 = scalar_lea.vmem %s2, %s212
      %s214 = smul.u32 32, %s19
      %p215 = scmp.lt.s32.totalorder %s18, 0
      %s216 = scalar_select %p215, %s18, 0
      %p217 = scmp.lt.s32.totalorder %s214, 63
      %s218 = scalar_select %p217, %s214, 63
      %s219 = smul.addr %s216, 64
      %s220 = sadd.s32 %s218, %s219
      %s221 = smul.addr %s220, 4
      %s222 = scalar_lea.vmem %s3, %s221
      %s223 = smul.u32 32, %s19
      %v225 = vld [vmem:[%s1] sm:$0xf]
      %v226 = vld [vmem:[%s1 + $0x4] sm:$0xf]
      %v227 = vld [vmem:[%s1 + $0x8] sm:$0xf]
      %v228 = vld [vmem:[%s1 + $0xc] sm:$0xf]
      %v229 = vld [vmem:[%s1 + $0x10] sm:$0xf]
      %v230 = vld [vmem:[%s1 + $0x14] sm:$0xf]
      %v231 = vld [vmem:[%s1 + $0x18] sm:$0xf]
      %v232 = vld [vmem:[%s1 + $0x1c] sm:$0xf]
      %v233 = vld [vmem:[%s1 + $0x20] sm:$0xf]
      %v234 = vld [vmem:[%s1 + $0x24] sm:$0xf]
      %v235 = vld [vmem:[%s1 + $0x28] sm:$0x1]
      %v236 = vld [vmem:[%s209] sm:$0xf]
      %v237 = vld [vmem:[%s209 + $0x4] sm:$0xf]
      %v238 = vld [vmem:[%s209 + $0x8] sm:$0xf]
      %v239 = vld [vmem:[%s209 + $0xc] sm:$0xf]
      %v240 = vld [vmem:[%s209 + $0x10] sm:$0xf]
      %v241 = vld [vmem:[%s209 + $0x14] sm:$0xf]
      %v242 = vld [vmem:[%s209 + $0x18] sm:$0xf]
      %v243 = vld [vmem:[%s209 + $0x1c] sm:$0xf]
      %v244 = vld [vmem:[%s209 + $0x20] sm:$0xf]
      %v245 = vld [vmem:[%s209 + $0x24] sm:$0xf]
      %v246 = vld [vmem:[%s209 + $0x28] sm:$0xf]
      %v247 = vld [vmem:[%s209 + $0x2c] sm:$0xf]
      %v248 = vld [vmem:[%s209 + $0x30] sm:$0xf]
      %v249 = vld [vmem:[%s209 + $0x34] sm:$0xf]
      %v250 = vld [vmem:[%s209 + $0x38] sm:$0xf]
      %v251 = vld [vmem:[%s209 + $0x3c] sm:$0xf]
      %v252 = vld [vmem:[%s209 + $0x40] sm:$0xf]
      %v253 = vld [vmem:[%s209 + $0x44] sm:$0xf]
      %v254 = vld [vmem:[%s209 + $0x48] sm:$0xf]
      %v255 = vld [vmem:[%s209 + $0x4c] sm:$0xf]
      %v256 = vld [vmem:[%s209 + $0x50] sm:$0xf]
      %v257 = vld [vmem:[%s209 + $0x54] sm:$0xf]
      %v258 = vld [vmem:[%s209 + $0x58] sm:$0xf]
      %v259 = vld [vmem:[%s209 + $0x5c] sm:$0xf]
      %v260 = vld [vmem:[%s209 + $0x60] sm:$0xf]
      %v261 = vld [vmem:[%s209 + $0x64] sm:$0xf]
      %v262 = vld [vmem:[%s209 + $0x68] sm:$0xf]
      %v263 = vld [vmem:[%s209 + $0x6c] sm:$0xf]
      %v264 = vld [vmem:[%s209 + $0x70] sm:$0xf]
      %v265 = vld [vmem:[%s209 + $0x74] sm:$0xf]
      %v266 = vld [vmem:[%s209 + $0x78] sm:$0xf]
      %v267 = vld [vmem:[%s209 + $0x7c] sm:$0xf]
      %v268 = vld [vmem:[%s213] sm:$0x1]
      %v270 = vlaneseq
      %v271 = vshrl.u32 %v270, 7
      %v272 = vsub.s32 0, %v271
      %v273 = vrot.slane %v268, %v272
      %v307 = vunpack.c.l.b16 %v236
      %v308 = vunpack.c.l.b16 %v237
      %v309 = vunpack.c.l.b16 %v238
      %v310 = vunpack.c.l.b16 %v239
      %v311 = vunpack.c.l.b16 %v240
      %v312 = vunpack.c.l.b16 %v241
      %v313 = vunpack.c.l.b16 %v242
      %v314 = vunpack.c.l.b16 %v243
      %v315 = vunpack.c.l.b16 %v244
      %v316 = vunpack.c.l.b16 %v245
      %v317 = vunpack.c.l.b16 %v246
      %v318 = vunpack.c.l.b16 %v247
      %v319 = vunpack.c.l.b16 %v248
      %v320 = vunpack.c.l.b16 %v249
      %v321 = vunpack.c.l.b16 %v250
      %v322 = vunpack.c.l.b16 %v251
      %v323 = vunpack.c.l.b16 %v252
      %v324 = vunpack.c.l.b16 %v253
      %v325 = vunpack.c.l.b16 %v254
      %v326 = vunpack.c.l.b16 %v255
      %v327 = vunpack.c.l.b16 %v256
      %v328 = vunpack.c.l.b16 %v257
      %v329 = vunpack.c.l.b16 %v258
      %v330 = vunpack.c.l.b16 %v259
      %v331 = vunpack.c.l.b16 %v260
      %v332 = vunpack.c.l.b16 %v261
      %v333 = vunpack.c.l.b16 %v262
      %v334 = vunpack.c.l.b16 %v263
      %v335 = vunpack.c.l.b16 %v264
      %v336 = vunpack.c.l.b16 %v265
      %v337 = vunpack.c.l.b16 %v266
      %v338 = vunpack.c.l.b16 %v267
      %v339 = vpack.c.b16 %v308, %v307
      %v340 = vpack.c.b16 %v310, %v309
      %v341 = vpack.c.b16 %v312, %v311
      %v342 = vpack.c.b16 %v314, %v313
      %v343 = vpack.c.b16 %v316, %v315
      %v344 = vpack.c.b16 %v318, %v317
      %v345 = vpack.c.b16 %v320, %v319
      %v346 = vpack.c.b16 %v322, %v321
      %v347 = vpack.c.b16 %v324, %v323
      %v348 = vpack.c.b16 %v326, %v325
      %v349 = vpack.c.b16 %v328, %v327
      %v350 = vpack.c.b16 %v330, %v329
      %v351 = vpack.c.b16 %v332, %v331
      %v352 = vpack.c.b16 %v334, %v333
      %v353 = vpack.c.b16 %v336, %v335
      %v354 = vpack.c.b16 %v338, %v337
      %v366 = vunpack.c.l.b16 %v225
      %v367 = vunpack.c.l.b16 %v226
      %v368 = vunpack.c.l.b16 %v227
      %v369 = vunpack.c.l.b16 %v228
      %v370 = vunpack.c.l.b16 %v229
      %v371 = vunpack.c.l.b16 %v230
      %v372 = vunpack.c.l.b16 %v231
      %v373 = vunpack.c.l.b16 %v232
      %v374 = vunpack.c.l.b16 %v233
      %v375 = vunpack.c.l.b16 %v234
      %v376 = vunpack.c.l.b16 %v235
      %v377 = vpack.c.b16 %v367, %v366
      %v378 = vpack.c.b16 %v369, %v368
      %v379 = vpack.c.b16 %v371, %v370
      %v380 = vpack.c.b16 %v373, %v372
      %v381 = vpack.c.b16 %v375, %v374
      %v382 = vpack.c.b16 %v376, %v376
      %vm388 = vcmask 662528
      %v390 = vsel %vm388, %v339, 0
      %v393 = vsel %vm388, %v340, 0
      %v396 = vsel %vm388, %v341, 0
      %v399 = vsel %vm388, %v342, 0
      %v402 = vsel %vm388, %v343, 0
      %v405 = vsel %vm388, %v344, 0
      %v408 = vsel %vm388, %v345, 0
      %v411 = vsel %vm388, %v346, 0
      %v414 = vsel %vm388, %v347, 0
      %v417 = vsel %vm388, %v348, 0
      %v420 = vsel %vm388, %v349, 0
      %v423 = vsel %vm388, %v350, 0
      %v426 = vsel %vm388, %v351, 0
      %v429 = vsel %vm388, %v352, 0
      %v432 = vsel %vm388, %v353, 0
      %v435 = vsel %vm388, %v354, 0
      %vm437 = vcmask 1040384
      %v438 = vsel 0, 4294967295, 65535
      %v439 = vsel %vm437, %v438, 0
      %v441 = vand.u32 %v382, %v439
      %443 = vmatprep.subr.bf16.mxu0 0
      %444 = vmatpush1.bf16.msra.mxu0 %v377
      %445 = vmatprep.subr.bf16.mxu0 0
      %446 = vmatpush1.bf16.msra.mxu0 %v378
      %447 = vmatprep.subr.bf16.mxu0 0
      %448 = vmatpush1.bf16.msra.mxu0 %v379
      %449 = vmatprep.subr.bf16.mxu0 0
      %450 = vmatpush1.bf16.msra.mxu0 %v380
      %451 = vmatprep.subr.bf16.mxu0 0
      %452 = vmatpush1.bf16.msra.mxu0 %v381
      %453 = vmatprep.subr.bf16.mxu0 0
      %454 = vmatpush1.bf16.msra.mxu0 %v441
      %455 = vmatprep.subr.bf16.mxu0 0
      %456 = vmatpush1.bf16.msra.mxu0 0
      %457 = vmatprep.subr.bf16.mxu0 0
      %458 = vmatpush1.bf16.msra.mxu0 0
      %459 = vmatprep.subr.bf16.mxu0 0
      %460 = vmatpush1.bf16.msra.mxu0 0
      %461 = vmatprep.subr.bf16.mxu0 0
      %462 = vmatpush1.bf16.msra.mxu0 0
      %463 = vmatprep.subr.bf16.mxu0 0
      %464 = vmatpush1.bf16.msra.mxu0 0
      %465 = vmatprep.subr.bf16.mxu0 0
      %466 = vmatpush1.bf16.msra.mxu0 0
      %467 = vmatprep.subr.bf16.mxu0 0
      %468 = vmatpush1.bf16.msra.mxu0 0
      %469 = vmatprep.subr.bf16.mxu0 0
      %470 = vmatpush1.bf16.msra.mxu0 0
      %471 = vmatprep.subr.bf16.mxu0 0
      %472 = vmatpush1.bf16.msra.mxu0 0
      %473 = vmatprep.subr.bf16.mxu0 0
      %474 = vmatpush1.bf16.msra.mxu0 0
      %475 = vmatprep.mubr.bf16.mxu0 0
      %476 = vmatmul.mubr.bf16.gmra.mrb[0].mxu0 %v390
      %v477 = vpop.f32.mrb[0].mxu0
      %v478 = vadd.f32 %v273, %v477
      %v479 = vpop.f32.mrb[0].mxu0
      %v480 = vpop.f32.mrb[0].mxu0
      %v481 = vadd.f32 %v273, %v480
      %v482 = vpop.f32.mrb[0].mxu0
      %483 = vmatprep.mubr.bf16.mxu0 0
      %484 = vmatmul.mubr.bf16.gmra.mrb[0].mxu0 %v393
      %v485 = vpop.f32.mrb[0].mxu0
      %v486 = vadd.f32 %v273, %v485
      %v487 = vpop.f32.mrb[0].mxu0
      %v488 = vpop.f32.mrb[0].mxu0
      %v489 = vadd.f32 %v273, %v488
      %v490 = vpop.f32.mrb[0].mxu0
      %491 = vmatprep.mubr.bf16.mxu0 0
      %492 = vmatmul.mubr.bf16.gmra.mrb[0].mxu0 %v396
      %v493 = vpop.f32.mrb[0].mxu0
      %v494 = vadd.f32 %v273, %v493
      %v495 = vpop.f32.mrb[0].mxu0
      %v496 = vpop.f32.mrb[0].mxu0
      %v497 = vadd.f32 %v273, %v496
      %v498 = vpop.f32.mrb[0].mxu0
      %499 = vmatprep.mubr.bf16.mxu0 0
      %500 = vmatmul.mubr.bf16.gmra.mrb[0].mxu0 %v399
      %v501 = vpop.f32.mrb[0].mxu0
      %v502 = vadd.f32 %v273, %v501
      %v503 = vpop.f32.mrb[0].mxu0
      %v504 = vpop.f32.mrb[0].mxu0
      %v505 = vadd.f32 %v273, %v504
      %v506 = vpop.f32.mrb[0].mxu0
      %507 = vmatprep.mubr.bf16.mxu0 0
      %508 = vmatmul.mubr.bf16.gmra.mrb[0].mxu0 %v402
      %v509 = vpop.f32.mrb[0].mxu0
      %v510 = vadd.f32 %v273, %v509
      %v511 = vpop.f32.mrb[0].mxu0
      %v512 = vpop.f32.mrb[0].mxu0
      %v513 = vadd.f32 %v273, %v512
      %v514 = vpop.f32.mrb[0].mxu0
      %515 = vmatprep.mubr.bf16.mxu0 0
      %516 = vmatmul.mubr.bf16.gmra.mrb[0].mxu0 %v405
      %v517 = vpop.f32.mrb[0].mxu0
      %v518 = vadd.f32 %v273, %v517
      %v519 = vpop.f32.mrb[0].mxu0
      %v520 = vpop.f32.mrb[0].mxu0
      %v521 = vadd.f32 %v273, %v520
      %v522 = vpop.f32.mrb[0].mxu0
      %523 = vmatprep.mubr.bf16.mxu0 0
      %524 = vmatmul.mubr.bf16.gmra.mrb[0].mxu0 %v408
      %v525 = vpop.f32.mrb[0].mxu0
      %v526 = vadd.f32 %v273, %v525
      %v527 = vpop.f32.mrb[0].mxu0
      %v528 = vpop.f32.mrb[0].mxu0
      %v529 = vadd.f32 %v273, %v528
      %v530 = vpop.f32.mrb[0].mxu0
      %531 = vmatprep.mubr.bf16.mxu0 0
      %532 = vmatmul.mubr.bf16.gmra.mrb[0].mxu0 %v411
      %v533 = vpop.f32.mrb[0].mxu0
      %v534 = vadd.f32 %v273, %v533
      %v535 = vpop.f32.mrb[0].mxu0
      %v536 = vpop.f32.mrb[0].mxu0
      %v537 = vadd.f32 %v273, %v536
      %v538 = vpop.f32.mrb[0].mxu0
      %539 = vmatprep.mubr.bf16.mxu0 0
      %540 = vmatmul.mubr.bf16.gmra.mrb[0].mxu0 %v414
      %v541 = vpop.f32.mrb[0].mxu0
      %v542 = vadd.f32 %v273, %v541
      %v543 = vpop.f32.mrb[0].mxu0
      %v544 = vpop.f32.mrb[0].mxu0
      %v545 = vadd.f32 %v273, %v544
      %v546 = vpop.f32.mrb[0].mxu0
      %547 = vmatprep.mubr.bf16.mxu0 0
      %548 = vmatmul.mubr.bf16.gmra.mrb[0].mxu0 %v417
      %v549 = vpop.f32.mrb[0].mxu0
      %v550 = vadd.f32 %v273, %v549
      %v551 = vpop.f32.mrb[0].mxu0
      %v552 = vpop.f32.mrb[0].mxu0
      %v553 = vadd.f32 %v273, %v552
      %v554 = vpop.f32.mrb[0].mxu0
      %555 = vmatprep.mubr.bf16.mxu0 0
      %556 = vmatmul.mubr.bf16.gmra.mrb[0].mxu0 %v420
      %v557 = vpop.f32.mrb[0].mxu0
      %v558 = vadd.f32 %v273, %v557
      %v559 = vpop.f32.mrb[0].mxu0
      %v560 = vpop.f32.mrb[0].mxu0
      %v561 = vadd.f32 %v273, %v560
      %v562 = vpop.f32.mrb[0].mxu0
      %563 = vmatprep.mubr.bf16.mxu0 0
      %564 = vmatmul.mubr.bf16.gmra.mrb[0].mxu0 %v423
      %v565 = vpop.f32.mrb[0].mxu0
      %v566 = vadd.f32 %v273, %v565
      %v567 = vpop.f32.mrb[0].mxu0
      %v568 = vpop.f32.mrb[0].mxu0
      %v569 = vadd.f32 %v273, %v568
      %v570 = vpop.f32.mrb[0].mxu0
      %571 = vmatprep.mubr.bf16.mxu0 0
      %572 = vmatmul.mubr.bf16.gmra.mrb[0].mxu0 %v426
      %v573 = vpop.f32.mrb[0].mxu0
      %v574 = vadd.f32 %v273, %v573
      %v575 = vpop.f32.mrb[0].mxu0
      %v576 = vpop.f32.mrb[0].mxu0
      %v577 = vadd.f32 %v273, %v576
      %v578 = vpop.f32.mrb[0].mxu0
      %579 = vmatprep.mubr.bf16.mxu0 0
      %580 = vmatmul.mubr.bf16.gmra.mrb[0].mxu0 %v429
      %v581 = vpop.f32.mrb[0].mxu0
      %v582 = vadd.f32 %v273, %v581
      %v583 = vpop.f32.mrb[0].mxu0
      %v584 = vpop.f32.mrb[0].mxu0
      %v585 = vadd.f32 %v273, %v584
      %v586 = vpop.f32.mrb[0].mxu0
      %587 = vmatprep.mubr.bf16.mxu0 0
      %588 = vmatmul.mubr.bf16.gmra.mrb[0].mxu0 %v432
      %v589 = vpop.f32.mrb[0].mxu0
      %v590 = vadd.f32 %v273, %v589
      %v591 = vpop.f32.mrb[0].mxu0
      %v592 = vpop.f32.mrb[0].mxu0
      %v593 = vadd.f32 %v273, %v592
      %v594 = vpop.f32.mrb[0].mxu0
      %595 = vmatprep.mubr.bf16.mxu0 0
      %596 = vmatmul.mubr.bf16.gmra.mrb[0].mxu0 %v435
      %v597 = vpop.f32.mrb[0].mxu0
      %v598 = vadd.f32 %v273, %v597
      %v599 = vpop.f32.mrb[0].mxu0
      %v600 = vpop.f32.mrb[0].mxu0
      %v601 = vadd.f32 %v273, %v600
      %v602 = vpop.f32.mrb[0].mxu0
      %603 = vdwg.mxu0
      %v604 = vxor.u32 %v478, 2147483648
      %v605 = vxor.u32 %v481, 2147483648
      %v606 = vxor.u32 %v486, 2147483648
      %v607 = vxor.u32 %v489, 2147483648
      %v608 = vxor.u32 %v494, 2147483648
      %v609 = vxor.u32 %v497, 2147483648
      %v610 = vxor.u32 %v502, 2147483648
      %v611 = vxor.u32 %v505, 2147483648
      %v612 = vxor.u32 %v510, 2147483648
      %v613 = vxor.u32 %v513, 2147483648
      %v614 = vxor.u32 %v518, 2147483648
      %v615 = vxor.u32 %v521, 2147483648
      %v616 = vxor.u32 %v526, 2147483648
      %v617 = vxor.u32 %v529, 2147483648
      %v618 = vxor.u32 %v534, 2147483648
      %v619 = vxor.u32 %v537, 2147483648
      %v620 = vxor.u32 %v542, 2147483648
      %v621 = vxor.u32 %v545, 2147483648
      %v622 = vxor.u32 %v550, 2147483648
      %v623 = vxor.u32 %v553, 2147483648
      %v624 = vxor.u32 %v558, 2147483648
      %v625 = vxor.u32 %v561, 2147483648
      %v626 = vxor.u32 %v566, 2147483648
      %v627 = vxor.u32 %v569, 2147483648
      %v628 = vxor.u32 %v574, 2147483648
      %v629 = vxor.u32 %v577, 2147483648
      %v630 = vxor.u32 %v582, 2147483648
      %v631 = vxor.u32 %v585, 2147483648
      %v632 = vxor.u32 %v590, 2147483648
      %v633 = vxor.u32 %v593, 2147483648
      %v634 = vxor.u32 %v598, 2147483648
      %v635 = vxor.u32 %v601, 2147483648
      %v636 = vmul.f32 %v604, 1.442695
      %v637 = vpow.pop %v636
      %v638 = vmul.f32 %v605, 1.442695
      %v639 = vpow.pop %v638
      %v640 = vmul.f32 %v606, 1.442695
      %v641 = vpow.pop %v640
      %v642 = vmul.f32 %v607, 1.442695
      %v643 = vpow.pop %v642
      %v644 = vmul.f32 %v608, 1.442695
      %v645 = vpow.pop %v644
      %v646 = vmul.f32 %v609, 1.442695
      %v647 = vpow.pop %v646
      %v648 = vmul.f32 %v610, 1.442695
      %v649 = vpow.pop %v648
      %v650 = vmul.f32 %v611, 1.442695
      %v651 = vpow.pop %v650
      %v652 = vmul.f32 %v612, 1.442695
      %v653 = vpow.pop %v652
      %v654 = vmul.f32 %v613, 1.442695
      %v655 = vpow.pop %v654
      %v656 = vmul.f32 %v614, 1.442695
      %v657 = vpow.pop %v656
      %v658 = vmul.f32 %v615, 1.442695
      %v659 = vpow.pop %v658
      %v660 = vmul.f32 %v616, 1.442695
      %v661 = vpow.pop %v660
      %v662 = vmul.f32 %v617, 1.442695
      %v663 = vpow.pop %v662
      %v664 = vmul.f32 %v618, 1.442695
      %v665 = vpow.pop %v664
      %v666 = vmul.f32 %v619, 1.442695
      %v667 = vpow.pop %v666
      %v668 = vmul.f32 %v620, 1.442695
      %v669 = vpow.pop %v668
      %v670 = vmul.f32 %v621, 1.442695
      %v671 = vpow.pop %v670
      %v672 = vmul.f32 %v622, 1.442695
      %v673 = vpow.pop %v672
      %v674 = vmul.f32 %v623, 1.442695
      %v675 = vpow.pop %v674
      %v676 = vmul.f32 %v624, 1.442695
      %v677 = vpow.pop %v676
      %v678 = vmul.f32 %v625, 1.442695
      %v679 = vpow.pop %v678
      %v680 = vmul.f32 %v626, 1.442695
      %v681 = vpow.pop %v680
      %v682 = vmul.f32 %v627, 1.442695
      %v683 = vpow.pop %v682
      %v684 = vmul.f32 %v628, 1.442695
      %v685 = vpow.pop %v684
      %v686 = vmul.f32 %v629, 1.442695
      %v687 = vpow.pop %v686
      %v688 = vmul.f32 %v630, 1.442695
      %v689 = vpow.pop %v688
      %v690 = vmul.f32 %v631, 1.442695
      %v691 = vpow.pop %v690
      %v692 = vmul.f32 %v632, 1.442695
      %v693 = vpow.pop %v692
      %v694 = vmul.f32 %v633, 1.442695
      %v695 = vpow.pop %v694
      %v696 = vmul.f32 %v634, 1.442695
      %v697 = vpow.pop %v696
      %v698 = vmul.f32 %v635, 1.442695
      %v699 = vpow.pop %v698
      %v700 = vadd.f32 %v637, 1.0
      %v701 = vadd.f32 %v639, 1.0
      %v702 = vadd.f32 %v641, 1.0
      %v703 = vadd.f32 %v643, 1.0
      %v704 = vadd.f32 %v645, 1.0
      %v705 = vadd.f32 %v647, 1.0
      %v706 = vadd.f32 %v649, 1.0
      %v707 = vadd.f32 %v651, 1.0
      %v708 = vadd.f32 %v653, 1.0
      %v709 = vadd.f32 %v655, 1.0
      %v710 = vadd.f32 %v657, 1.0
      %v711 = vadd.f32 %v659, 1.0
      %v712 = vadd.f32 %v661, 1.0
      %v713 = vadd.f32 %v663, 1.0
      %v714 = vadd.f32 %v665, 1.0
      %v715 = vadd.f32 %v667, 1.0
      %v716 = vadd.f32 %v669, 1.0
      %v717 = vadd.f32 %v671, 1.0
      %v718 = vadd.f32 %v673, 1.0
      %v719 = vadd.f32 %v675, 1.0
      %v720 = vadd.f32 %v677, 1.0
      %v721 = vadd.f32 %v679, 1.0
      %v722 = vadd.f32 %v681, 1.0
      %v723 = vadd.f32 %v683, 1.0
      %v724 = vadd.f32 %v685, 1.0
      %v725 = vadd.f32 %v687, 1.0
      %v726 = vadd.f32 %v689, 1.0
      %v727 = vadd.f32 %v691, 1.0
      %v728 = vadd.f32 %v693, 1.0
      %v729 = vadd.f32 %v695, 1.0
      %v730 = vadd.f32 %v697, 1.0
      %v731 = vadd.f32 %v699, 1.0
      %v732 = vrcp.pop %v700
      %v733 = vmul.f32 1.0, %v732
      %v734 = vrcp.pop %v701
      %v735 = vmul.f32 1.0, %v734
      %v736 = vrcp.pop %v702
      %v737 = vmul.f32 1.0, %v736
      %v738 = vrcp.pop %v703
      %v739 = vmul.f32 1.0, %v738
      %v740 = vrcp.pop %v704
      %v741 = vmul.f32 1.0, %v740
      %v742 = vrcp.pop %v705
      %v743 = vmul.f32 1.0, %v742
      %v744 = vrcp.pop %v706
      %v745 = vmul.f32 1.0, %v744
      %v746 = vrcp.pop %v707
      %v747 = vmul.f32 1.0, %v746
      %v748 = vrcp.pop %v708
      %v749 = vmul.f32 1.0, %v748
      %v750 = vrcp.pop %v709
      %v751 = vmul.f32 1.0, %v750
      %v752 = vrcp.pop %v710
      %v753 = vmul.f32 1.0, %v752
      %v754 = vrcp.pop %v711
      %v755 = vmul.f32 1.0, %v754
      %v756 = vrcp.pop %v712
      %v757 = vmul.f32 1.0, %v756
      %v758 = vrcp.pop %v713
      %v759 = vmul.f32 1.0, %v758
      %v760 = vrcp.pop %v714
      %v761 = vmul.f32 1.0, %v760
      %v762 = vrcp.pop %v715
      %v763 = vmul.f32 1.0, %v762
      %v764 = vrcp.pop %v716
      %v765 = vmul.f32 1.0, %v764
      %v766 = vrcp.pop %v717
      %v767 = vmul.f32 1.0, %v766
      %v768 = vrcp.pop %v718
      %v769 = vmul.f32 1.0, %v768
      %v770 = vrcp.pop %v719
      %v771 = vmul.f32 1.0, %v770
      %v772 = vrcp.pop %v720
      %v773 = vmul.f32 1.0, %v772
      %v774 = vrcp.pop %v721
      %v775 = vmul.f32 1.0, %v774
      %v776 = vrcp.pop %v722
      %v777 = vmul.f32 1.0, %v776
      %v778 = vrcp.pop %v723
      %v779 = vmul.f32 1.0, %v778
      %v780 = vrcp.pop %v724
      %v781 = vmul.f32 1.0, %v780
      %v782 = vrcp.pop %v725
      %v783 = vmul.f32 1.0, %v782
      %v784 = vrcp.pop %v726
      %v785 = vmul.f32 1.0, %v784
      %v786 = vrcp.pop %v727
      %v787 = vmul.f32 1.0, %v786
      %v788 = vrcp.pop %v728
      %v789 = vmul.f32 1.0, %v788
      %v790 = vrcp.pop %v729
      %v791 = vmul.f32 1.0, %v790
      %v792 = vrcp.pop %v730
      %v793 = vmul.f32 1.0, %v792
      %v794 = vrcp.pop %v731
      %v795 = vmul.f32 1.0, %v794
      %v796 = vmul.f32 %v478, %v733
      %v797 = vmul.f32 %v481, %v735
      %v798 = vmul.f32 %v486, %v737
      %v799 = vmul.f32 %v489, %v739
      %v800 = vmul.f32 %v494, %v741
      %v801 = vmul.f32 %v497, %v743
      %v802 = vmul.f32 %v502, %v745
      %v803 = vmul.f32 %v505, %v747
      %v804 = vmul.f32 %v510, %v749
      %v805 = vmul.f32 %v513, %v751
      %v806 = vmul.f32 %v518, %v753
      %v807 = vmul.f32 %v521, %v755
      %v808 = vmul.f32 %v526, %v757
      %v809 = vmul.f32 %v529, %v759
      %v810 = vmul.f32 %v534, %v761
      %v811 = vmul.f32 %v537, %v763
      %v812 = vmul.f32 %v542, %v765
      %v813 = vmul.f32 %v545, %v767
      %v814 = vmul.f32 %v550, %v769
      %v815 = vmul.f32 %v553, %v771
      %v816 = vmul.f32 %v558, %v773
      %v817 = vmul.f32 %v561, %v775
      %v818 = vmul.f32 %v566, %v777
      %v819 = vmul.f32 %v569, %v779
      %v820 = vmul.f32 %v574, %v781
      %v821 = vmul.f32 %v577, %v783
      %v822 = vmul.f32 %v582, %v785
      %v823 = vmul.f32 %v585, %v787
      %v824 = vmul.f32 %v590, %v789
      %v825 = vmul.f32 %v593, %v791
      %v826 = vmul.f32 %v598, %v793
      %v827 = vmul.f32 %v601, %v795
      %v828 = vpack.c.bf16 %v797, %v796
      %v829 = vpack.c.bf16 %v799, %v798
      %v830 = vpack.c.bf16 %v801, %v800
      %v831 = vpack.c.bf16 %v803, %v802
      %v832 = vpack.c.bf16 %v805, %v804
      %v833 = vpack.c.bf16 %v807, %v806
      %v834 = vpack.c.bf16 %v809, %v808
      %v835 = vpack.c.bf16 %v811, %v810
      %v836 = vpack.c.bf16 %v813, %v812
      %v837 = vpack.c.bf16 %v815, %v814
      %v838 = vpack.c.bf16 %v817, %v816
      %v839 = vpack.c.bf16 %v819, %v818
      %v840 = vpack.c.bf16 %v821, %v820
      %v841 = vpack.c.bf16 %v823, %v822
      %v842 = vpack.c.bf16 %v825, %v824
      %v843 = vpack.c.bf16 %v827, %v826
      %v860 = vunpack.c.l.b16 %v828
      %v861 = vunpack.c.h.b16 %v828
      %v862 = vunpack.c.l.b16 %v829
      %v863 = vunpack.c.h.b16 %v829
      %v864 = vunpack.c.l.b16 %v830
      %v865 = vunpack.c.h.b16 %v830
      %v866 = vunpack.c.l.b16 %v831
      %v867 = vunpack.c.h.b16 %v831
      %v868 = vunpack.c.l.b16 %v832
      %v869 = vunpack.c.h.b16 %v832
      %v870 = vunpack.c.l.b16 %v833
      %v871 = vunpack.c.h.b16 %v833
      %v872 = vunpack.c.l.b16 %v834
      %v873 = vunpack.c.h.b16 %v834
      %v874 = vunpack.c.l.b16 %v835
      %v875 = vunpack.c.h.b16 %v835
      %v876 = vunpack.c.l.b16 %v836
      %v877 = vunpack.c.h.b16 %v836
      %v878 = vunpack.c.l.b16 %v837
      %v879 = vunpack.c.h.b16 %v837
      %v880 = vunpack.c.l.b16 %v838
      %v881 = vunpack.c.h.b16 %v838
      %v882 = vunpack.c.l.b16 %v839
      %v883 = vunpack.c.h.b16 %v839
      %v884 = vunpack.c.l.b16 %v840
      %v885 = vunpack.c.h.b16 %v840
      %v886 = vunpack.c.l.b16 %v841
      %v887 = vunpack.c.h.b16 %v841
      %v888 = vunpack.c.l.b16 %v842
      %v889 = vunpack.c.h.b16 %v842
      %v890 = vunpack.c.l.b16 %v843
      %v891 = vunpack.c.h.b16 %v843
      %v892 = vpack.c.b16 %v860, %v860
      %v893 = vpack.c.b16 %v861, %v861
      %v894 = vpack.c.b16 %v862, %v862
      %v895 = vpack.c.b16 %v863, %v863
      %v896 = vpack.c.b16 %v864, %v864
      %v897 = vpack.c.b16 %v865, %v865
      %v898 = vpack.c.b16 %v866, %v866
      %v899 = vpack.c.b16 %v867, %v867
      %v900 = vpack.c.b16 %v868, %v868
      %v901 = vpack.c.b16 %v869, %v869
      %v902 = vpack.c.b16 %v870, %v870
      %v903 = vpack.c.b16 %v871, %v871
      %v904 = vpack.c.b16 %v872, %v872
      %v905 = vpack.c.b16 %v873, %v873
      %v906 = vpack.c.b16 %v874, %v874
      %v907 = vpack.c.b16 %v875, %v875
      %v908 = vpack.c.b16 %v876, %v876
      %v909 = vpack.c.b16 %v877, %v877
      %v910 = vpack.c.b16 %v878, %v878
      %v911 = vpack.c.b16 %v879, %v879
      %v912 = vpack.c.b16 %v880, %v880
      %v913 = vpack.c.b16 %v881, %v881
      %v914 = vpack.c.b16 %v882, %v882
      %v915 = vpack.c.b16 %v883, %v883
      %v916 = vpack.c.b16 %v884, %v884
      %v917 = vpack.c.b16 %v885, %v885
      %v918 = vpack.c.b16 %v886, %v886
      %v919 = vpack.c.b16 %v887, %v887
      %v920 = vpack.c.b16 %v888, %v888
      %v921 = vpack.c.b16 %v889, %v889
      %v922 = vpack.c.b16 %v890, %v890
      %v923 = vpack.c.b16 %v891, %v891
      %956 = vst [vmem:[%s222] sm:$0xf] %v892
      %957 = vst [vmem:[%s222 + $0x4] sm:$0xf] %v893
      %958 = vst [vmem:[%s222 + $0x8] sm:$0xf] %v894
      %959 = vst [vmem:[%s222 + $0xc] sm:$0xf] %v895
      %960 = vst [vmem:[%s222 + $0x10] sm:$0xf] %v896
      %961 = vst [vmem:[%s222 + $0x14] sm:$0xf] %v897
      %962 = vst [vmem:[%s222 + $0x18] sm:$0xf] %v898
      %963 = vst [vmem:[%s222 + $0x1c] sm:$0xf] %v899
      %964 = vst [vmem:[%s222 + $0x20] sm:$0xf] %v900
      %965 = vst [vmem:[%s222 + $0x24] sm:$0xf] %v901
      %966 = vst [vmem:[%s222 + $0x28] sm:$0xf] %v902
      %967 = vst [vmem:[%s222 + $0x2c] sm:$0xf] %v903
      %968 = vst [vmem:[%s222 + $0x30] sm:$0xf] %v904
      %969 = vst [vmem:[%s222 + $0x34] sm:$0xf] %v905
      %970 = vst [vmem:[%s222 + $0x38] sm:$0xf] %v906
      %971 = vst [vmem:[%s222 + $0x3c] sm:$0xf] %v907
      %972 = vst [vmem:[%s222 + $0x40] sm:$0xf] %v908
      %973 = vst [vmem:[%s222 + $0x44] sm:$0xf] %v909
      %974 = vst [vmem:[%s222 + $0x48] sm:$0xf] %v910
      %975 = vst [vmem:[%s222 + $0x4c] sm:$0xf] %v911
      %976 = vst [vmem:[%s222 + $0x50] sm:$0xf] %v912
      %977 = vst [vmem:[%s222 + $0x54] sm:$0xf] %v913
      %978 = vst [vmem:[%s222 + $0x58] sm:$0xf] %v914
      %979 = vst [vmem:[%s222 + $0x5c] sm:$0xf] %v915
      %980 = vst [vmem:[%s222 + $0x60] sm:$0xf] %v916
      %981 = vst [vmem:[%s222 + $0x64] sm:$0xf] %v917
      %982 = vst [vmem:[%s222 + $0x68] sm:$0xf] %v918
      %983 = vst [vmem:[%s222 + $0x6c] sm:$0xf] %v919
      %984 = vst [vmem:[%s222 + $0x70] sm:$0xf] %v920
      %985 = vst [vmem:[%s222 + $0x74] sm:$0xf] %v921
      %986 = vst [vmem:[%s222 + $0x78] sm:$0xf] %v922
      %987 = vst [vmem:[%s222 + $0x7c] sm:$0xf] %v923
      %s988 = smul.u32 32, %s19
      %p989 = scmp.lt.s32.totalorder %s18, 0
      %s990 = scalar_select %p989, %s18, 0
      %p991 = scmp.lt.s32.totalorder %s988, 63
      %s992 = scalar_select %p991, %s988, 63
      %s993 = smul.addr %s990, 64
      %s994 = sadd.s32 %s992, %s993
      %s995 = smul.addr %s994, 4
      %s996 = scalar_lea.vmem %s3, %s995
      // Predicated region
      $region33: #{simple_video_unet_forward.7} parent=31 // pred_check
        %p997 = pneg %p121
      $region34: #{simple_video_unet_forward.7} parent=31 // pred_check_branch
        %999 = sbr.rel (%p997) target = $region36
      $region35: #{simple_video_unet_forward.7} parent=31 // pred_region
        %s1000 = smul.u32 32, %s19
      $region36: #{simple_video_unet_forward.7} parent=31 // pred_fallthru
        _
    $region32: #{simple_video_unet_forward.7} parent=5 // pred_fallthru
      _
    %p1001 = scmp.le.s32.totalorder 2, %s9
    // Predicated region
    $region37: #{simple_video_unet_forward.7} parent=5 // pred_check
      %p1002 = pneg %p1001
    $region38: #{simple_video_unet_forward.7} parent=5 // pred_check_branch
      %1004 = sbr.rel (%p1002) target = $region40
    $region39: #{simple_video_unet_forward.7} parent=5 // pred_region
      %s1005 = ssub.s32 %s9, 2
      // Predicated region
      $region41: #{simple_video_unet_forward.7} parent=39 // pred_check
        %p1006 = pneg %p127
      $region42: #{simple_video_unet_forward.7} parent=39 // pred_check_branch
        %1008 = sbr.rel (%p1006) target = $region44
      $region43: #{simple_video_unet_forward.7} parent=39 // pred_region
        %s1009 = smul.u32 32, %s21
        %p1010 = scmp.lt.s32.totalorder %s20, 0
        %s1011 = scalar_select %p1010, %s20, 0
        %p1012 = scmp.lt.s32.totalorder %s1009, 63
        %s1013 = scalar_select %p1012, %s1009, 63
        %s1014 = smul.addr %s1011, 64
        %s1015 = sadd.s32 %s1013, %s1014
        %s1016 = smul.addr %s1015, 4
        %s1017 = scalar_lea.vmem %s3, %s1016
      $region44: #{simple_video_unet_forward.7} parent=39 // pred_fallthru
        _
    $region40: #{simple_video_unet_forward.7} parent=5 // pred_fallthru
      _
  $region6: #{simple_video_unet_forward.7} parent=0 // loop_footer
    %s13 = sadd.s32 1, %s9
  $region7: #{simple_video_unet_forward.7} parent=0 // loop_footer_branch
    %8 = sbr.rel target = $region3
  $region8: #{simple_video_unet_forward.7} parent=0 // loop_exit
    _

// kernel: simple_video_unet_forward.8
$region0: #{simple_video_unet_forward.8}
  #allocation0 [shape = 'u32[]', space=smem, size = 0x4, offset = 0x4, fixed_abs, tag = 'smem constant byte address 0x4 - core index']
  #allocation1 [shape = 'u32[144,128]{1,0:T(1,128)}', space=vmem, size = 0x12000, scoped, tag = 'internal scratch']
  %s0 = inlined_call_operand.vmem [shape: bf16[1,64,864], index: 0, kind: input, shape index: {}]
  %s1 = inlined_call_operand.vmem [shape: bf16[864,128], index: 1, kind: input, shape index: {}]
  %s2 = inlined_call_operand.vmem [shape: f32[1,1,128], index: 2, kind: input, shape index: {}]
  %s3 = inlined_call_operand.vmem [shape: bf16[1,64,128], index: 3, kind: output, shape index: {}]
  %s4 = sld [smem:[#allocation0]]
  $region45: #{simple_video_unet_forward.8} parent=0
    _
  %s6 = ssub.s32 1, %s4
  %s7 = scalar_select 0, %s6, %s4
  loop: start=0, step=1, limit=4
  $region2: #{simple_video_unet_forward.8} parent=0 // loop_pre_header
    _
  $region3: #{simple_video_unet_forward.8} parent=0 // loop_header
    %s9 = sphi 0, %s13
    %p10 = scmp.ge.s32.totalorder %s9, 4
    %s16 = sphi 0, %s28
    %s17 = sphi 0, %s24
    %s18 = sphi 0, %s16
    %s19 = sphi 0, %s17
    %s20 = sphi 0, %s18
    %s21 = sphi 0, %s19
    %s33 = sphi 0, %s35
    %s36 = sphi 0, %s33
    %s37 = sphi 0, %s36
    %s53 = sphi 0, %s37
    %s57 = sphi 0, %s57
    %s59 = sphi 0, %s57
    %s60 = sphi 0, %s59
    %s74 = sphi 0, %s60
    %s80 = sphi 0, %s82
    %s83 = sphi 0, %s80
    %s84 = sphi 0, %s83
    %s100 = sphi 0, %s84
    %s108 = sphi 0, %s110
    %s111 = sphi 0, %s108
    %s112 = sphi 0, %s111
    %s128 = sphi 0, %s112
  $region4: #{simple_video_unet_forward.8} parent=0 // loop_header_branch
    %12 = sbr.rel (%p10) target = $region8
  $region5: #{simple_video_unet_forward.8} parent=0 // loop_body
    %s14 = ssub.s32 %s9, 1
    %s15 = ssub.s32 %s9, 2
    %s22 = sadd.s32 1, %s17
    %p23 = scmp.ge.s32.totalorder %s22, 2
    %s24 = scalar_select %p23, 0, %s22
    %s25 = sadd.s32 1, %s16
    %s26 = scalar_select %p23, %s25, %s16
    %p27 = scmp.ge.s32.totalorder %s26, 1
    %s28 = scalar_select %p27, 0, %s26
    %s29 = ssub.s32 %s16, %s28
    %s30 = ssub.s32 %s17, %s24
    %s31 = sor.u32 %s29, %s30
    %p32 = scmp.eq.s32.totalorder %s31, 0
    %s34 = sadd.s32 %s33, 1
    %s35 = scalar_select %p32, %s33, %s34
    %p38 = pneg %p32
    %p39 = scmp.eq.s32.totalorder %s9, 1
    %p40 = por %p38, %p39
    %p41 = scmp.ne.s32.totalorder %s33, %s36
    %p42 = scmp.eq.s32.totalorder %s9, 0
    %p43 = por %p41, %p42
    %p44 = scmp.ne.s32.totalorder %s33, %s36
    %p45 = scmp.eq.s32.totalorder %s14, 1
    %p46 = por %p44, %p45
    %p47 = scmp.ne.s32.totalorder %s36, %s37
    %p48 = scmp.eq.s32.totalorder %s14, 0
    %p49 = por %p47, %p48
    %p50 = scmp.ne.s32.totalorder %s36, %s37
    %p51 = scmp.eq.s32.totalorder %s15, 1
    %p52 = por %p50, %p51
    %p54 = scmp.ne.s32.totalorder %s37, %s53
    %p55 = scmp.eq.s32.totalorder %s15, 0
    %p56 = por %p54, %p55
    %s58 = sadd.s32 %s57, 1
    %p61 = scmp.eq.s32.totalorder %s9, 1
    %p62 = scmp.ne.s32.totalorder %s57, %s59
    %p63 = scmp.eq.s32.totalorder %s9, 0
    %p64 = por %p62, %p63
    %p65 = scmp.ne.s32.totalorder %s57, %s59
    %p66 = scmp.eq.s32.totalorder %s14, 1
    %p67 = por %p65, %p66
    %p68 = scmp.ne.s32.totalorder %s59, %s60
    %p69 = scmp.eq.s32.totalorder %s14, 0
    %p70 = por %p68, %p69
    %p71 = scmp.ne.s32.totalorder %s59, %s60
    %p72 = scmp.eq.s32.totalorder %s15, 1
    %p73 = por %p71, %p72
    %p75 = scmp.ne.s32.totalorder %s60, %s74
    %p76 = scmp.eq.s32.totalorder %s15, 0
    %p77 = por %p75, %p76
    %s78 = ssub.s32 %s16, %s28
    %p79 = scmp.eq.s32.totalorder %s78, 0
    %s81 = sadd.s32 %s80, 1
    %s82 = scalar_select %p79, %s80, %s81
    %p85 = pneg %p79
    %p86 = scmp.eq.s32.totalorder %s9, 1
    %p87 = por %p85, %p86
    %p88 = scmp.ne.s32.totalorder %s80, %s83
    %p89 = scmp.eq.s32.totalorder %s9, 0
    %p90 = por %p88, %p89
    %p91 = scmp.ne.s32.totalorder %s80, %s83
    %p92 = scmp.eq.s32.totalorder %s14, 1
    %p93 = por %p91, %p92
    %p94 = scmp.ne.s32.totalorder %s83, %s84
    %p95 = scmp.eq.s32.totalorder %s14, 0
    %p96 = por %p94, %p95
    %p97 = scmp.ne.s32.totalorder %s83, %s84
    %p98 = scmp.eq.s32.totalorder %s15, 1
    %p99 = por %p97, %p98
    %p101 = scmp.ne.s32.totalorder %s84, %s100
    %p102 = scmp.eq.s32.totalorder %s15, 0
    %p103 = por %p101, %p102
    %s104 = ssub.s32 %s16, %s28
    %s105 = ssub.s32 %s17, %s24
    %s106 = sor.u32 %s104, %s105
    %p107 = scmp.eq.s32.totalorder %s106, 0
    %s109 = sadd.s32 %s108, 1
    %s110 = scalar_select %p107, %s108, %s109
    %p113 = pneg %p107
    %p114 = scmp.eq.s32.totalorder %s9, 1
    %p115 = por %p113, %p114
    %p116 = scmp.ne.s32.totalorder %s108, %s111
    %p117 = scmp.eq.s32.totalorder %s9, 0
    %p118 = por %p116, %p117
    %p119 = scmp.ne.s32.totalorder %s108, %s111
    %p120 = scmp.eq.s32.totalorder %s14, 1
    %p121 = por %p119, %p120
    %p122 = scmp.ne.s32.totalorder %s111, %s112
    %p123 = scmp.eq.s32.totalorder %s14, 0
    %p124 = por %p122, %p123
    %p125 = scmp.ne.s32.totalorder %s111, %s112
    %p126 = scmp.eq.s32.totalorder %s15, 1
    %p127 = por %p125, %p126
    %p129 = scmp.ne.s32.totalorder %s112, %s128
    %p130 = scmp.eq.s32.totalorder %s15, 0
    %p131 = por %p129, %p130
    %p132 = scmp.le.s32.totalorder 1, %s9
    %p133 = scmp.lt.s32.totalorder %s9, 3
    %p134 = pnand %p132, %p133
    %p135 = pneg %p134
    // Predicated region
    $region9: #{simple_video_unet_forward.8} parent=5 // pred_check
      _
    $region10: #{simple_video_unet_forward.8} parent=5 // pred_check_branch
      %137 = sbr.rel (%p134) target = $region12
    $region11: #{simple_video_unet_forward.8} parent=5 // pred_region
      %s138 = ssub.s32 %s9, 1
      // Predicated region
      $region13: #{simple_video_unet_forward.8} parent=11 // pred_check
        %p139 = pneg %p70
      $region14: #{simple_video_unet_forward.8} parent=11 // pred_check_branch
        %141 = sbr.rel (%p139) target = $region16
      $region15: #{simple_video_unet_forward.8} parent=11 // pred_region
        _
      $region16: #{simple_video_unet_forward.8} parent=11 // pred_fallthru
        _
      // Predicated region
      $region17: #{simple_video_unet_forward.8} parent=11 // pred_check
        %p142 = pneg %p96
      $region18: #{simple_video_unet_forward.8} parent=11 // pred_check_branch
        %144 = sbr.rel (%p142) target = $region20
      $region19: #{simple_video_unet_forward.8} parent=11 // pred_region
        %p145 = scmp.lt.s32.totalorder %s18, 0
        %s146 = scalar_select %p145, %s18, 0
        %s147 = scalar_lea.vmem %s2, %s146
      $region20: #{simple_video_unet_forward.8} parent=11 // pred_fallthru
        _
    $region12: #{simple_video_unet_forward.8} parent=5 // pred_fallthru
      _
    %p148 = scmp.lt.s32.totalorder %s9, 2
    // Predicated region
    $region21: #{simple_video_unet_forward.8} parent=5 // pred_check
      %p149 = pneg %p148
    $region22: #{simple_video_unet_forward.8} parent=5 // pred_check_branch
      %151 = sbr.rel (%p149) target = $region24
    $region23: #{simple_video_unet_forward.8} parent=5 // pred_region
      // Predicated region
      $region25: #{simple_video_unet_forward.8} parent=23 // pred_check
        %p152 = pneg %p43
      $region26: #{simple_video_unet_forward.8} parent=23 // pred_check_branch
        %154 = sbr.rel (%p152) target = $region28
      $region27: #{simple_video_unet_forward.8} parent=23 // pred_region
        %s155 = smul.u32 4, %s17
        %p156 = scmp.lt.s32.totalorder %s16, 0
        %s157 = scalar_select %p156, %s16, 0
        %p158 = scmp.lt.s32.totalorder %s155, 7
        %s159 = scalar_select %p158, %s155, 7
        %s160 = smul.addr %s159, 7
        %s161 = smul.addr %s157, 56
        %s162 = sadd.s32 %s160, %s161
        %s163 = smul.addr %s162, 4
        %s164 = scalar_lea.vmem %s0, %s163
        %s165 = smul.u32 4, %s17
      $region28: #{simple_video_unet_forward.8} parent=23 // pred_fallthru
        _
    $region24: #{simple_video_unet_forward.8} parent=5 // pred_fallthru
      _
    %p166 = scmp.le.s32.totalorder 1, %s9
    %p167 = scmp.lt.s32.totalorder %s9, 3
    %p168 = pnand %p166, %p167
    %p169 = pneg %p168
    // Predicated region
    $region29: #{simple_video_unet_forward.8} parent=5 // pred_check
      _
    $region30: #{simple_video_unet_forward.8} parent=5 // pred_check_branch
      %171 = sbr.rel (%p168) target = $region32
    $region31: #{simple_video_unet_forward.8} parent=5 // pred_region
      %s172 = ssub.s32 %s9, 1
      %s173 = smul.u32 4, %s19
      %p174 = scmp.lt.s32.totalorder %s18, 0
      %s175 = scalar_select %p174, %s18, 0
      %p176 = scmp.lt.s32.totalorder %s173, 7
      %s177 = scalar_select %p176, %s173, 7
      %s178 = smul.addr %s177, 7
      %s179 = smul.addr %s175, 56
      %s180 = sadd.s32 %s178, %s179
      %s181 = smul.addr %s180, 4
      %s182 = scalar_lea.vmem %s0, %s181
      %p183 = pneg %p49
      %p184 = pneg %p46
      %p185 = pneg %p70
      %p186 = pneg %p67
      %p187 = scmp.lt.s32.totalorder %s18, 0
      %s188 = scalar_select %p187, %s18, 0
      %s189 = scalar_lea.vmem %s2, %s188
      %p190 = pneg %p96
      %p191 = pneg %p93
      %p192 = pneg %p124
      %p193 = pneg %p121
      %s194 = smul.u32 4, %s19
      %p195 = scmp.lt.s32.totalorder %s18, 0
      %s196 = scalar_select %p195, %s18, 0
      %p197 = scmp.lt.s32.totalorder %s194, 7
      %s198 = scalar_select %p197, %s194, 7
      %s199 = smul.addr %s196, 8
      %s200 = sadd.s32 %s198, %s199
      %s201 = smul.addr %s200, 4
      %s202 = scalar_lea.vmem %s3, %s201
      %s203 = smul.u32 4, %s19
      %p204 = scmp.lt.s32.totalorder %s18, 0
      %s205 = scalar_select %p204, %s18, 0
      %p206 = scmp.lt.s32.totalorder %s203, 7
      %s207 = scalar_select %p206, %s203, 7
      %s208 = smul.addr %s207, 7
      %s209 = smul.addr %s205, 56
      %s210 = sadd.s32 %s208, %s209
      %s211 = smul.addr %s210, 4
      %s212 = scalar_lea.vmem %s0, %s211
      %s213 = smul.u32 4, %s19
      %p214 = scmp.lt.s32.totalorder %s18, 0
      %s215 = scalar_select %p214, %s18, 0
      %s216 = scalar_lea.vmem %s2, %s215
      %s217 = smul.u32 4, %s19
      %p218 = scmp.lt.s32.totalorder %s18, 0
      %s219 = scalar_select %p218, %s18, 0
      %p220 = scmp.lt.s32.totalorder %s217, 7
      %s221 = scalar_select %p220, %s217, 7
      %s222 = smul.addr %s219, 8
      %s223 = sadd.s32 %s221, %s222
      %s224 = smul.addr %s223, 4
      %s225 = scalar_lea.vmem %s3, %s224
      %s226 = smul.u32 4, %s19
      %v228 = vld [vmem:[%s1] sm:$0xf]
      %v229 = vld [vmem:[%s1 + $0x4] sm:$0xf]
      %v230 = vld [vmem:[%s1 + $0x8] sm:$0xf]
      %v231 = vld [vmem:[%s1 + $0xc] sm:$0xf]
      %v232 = vld [vmem:[%s1 + $0x10] sm:$0xf]
      %v233 = vld [vmem:[%s1 + $0x14] sm:$0xf]
      %v234 = vld [vmem:[%s1 + $0x18] sm:$0xf]
      %v235 = vld [vmem:[%s1 + $0x1c] sm:$0xf]
      %v236 = vld [vmem:[%s1 + $0x20] sm:$0xf]
      %v237 = vld [vmem:[%s1 + $0x24] sm:$0xf]
      %v238 = vld [vmem:[%s1 + $0x28] sm:$0xf]
      %v239 = vld [vmem:[%s1 + $0x2c] sm:$0xf]
      %v240 = vld [vmem:[%s1 + $0x30] sm:$0xf]
      %v241 = vld [vmem:[%s1 + $0x34] sm:$0xf]
      %v242 = vld [vmem:[%s1 + $0x38] sm:$0xf]
      %v243 = vld [vmem:[%s1 + $0x3c] sm:$0xf]
      %v244 = vld [vmem:[%s1 + $0x40] sm:$0xf]
      %v245 = vld [vmem:[%s1 + $0x44] sm:$0xf]
      %v246 = vld [vmem:[%s1 + $0x48] sm:$0xf]
      %v247 = vld [vmem:[%s1 + $0x4c] sm:$0xf]
      %v248 = vld [vmem:[%s1 + $0x50] sm:$0xf]
      %v249 = vld [vmem:[%s1 + $0x54] sm:$0xf]
      %v250 = vld [vmem:[%s1 + $0x58] sm:$0xf]
      %v251 = vld [vmem:[%s1 + $0x5c] sm:$0xf]
      %v252 = vld [vmem:[%s1 + $0x60] sm:$0xf]
      %v253 = vld [vmem:[%s1 + $0x64] sm:$0xf]
      %v254 = vld [vmem:[%s1 + $0x68] sm:$0xf]
      %v255 = vld [vmem:[%s1 + $0x6c] sm:$0xf]
      %v256 = vld [vmem:[%s1 + $0x70] sm:$0xf]
      %v257 = vld [vmem:[%s1 + $0x74] sm:$0xf]
      %v258 = vld [vmem:[%s1 + $0x78] sm:$0xf]
      %v259 = vld [vmem:[%s1 + $0x7c] sm:$0xf]
      %v260 = vld [vmem:[%s1 + $0x80] sm:$0xf]
      %v261 = vld [vmem:[%s1 + $0x84] sm:$0xf]
      %v262 = vld [vmem:[%s1 + $0x88] sm:$0xf]
      %v263 = vld [vmem:[%s1 + $0x8c] sm:$0xf]
      %v264 = vld [vmem:[%s1 + $0x90] sm:$0xf]
      %v265 = vld [vmem:[%s1 + $0x94] sm:$0xf]
      %v266 = vld [vmem:[%s1 + $0x98] sm:$0xf]
      %v267 = vld [vmem:[%s1 + $0x9c] sm:$0xf]
      %v268 = vld [vmem:[%s1 + $0xa0] sm:$0xf]
      %v269 = vld [vmem:[%s1 + $0xa4] sm:$0xf]
      %v270 = vld [vmem:[%s1 + $0xa8] sm:$0xf]
      %v271 = vld [vmem:[%s1 + $0xac] sm:$0xf]
      %v272 = vld [vmem:[%s1 + $0xb0] sm:$0xf]
      %v273 = vld [vmem:[%s1 + $0xb4] sm:$0xf]
      %v274 = vld [vmem:[%s1 + $0xb8] sm:$0xf]
      %v275 = vld [vmem:[%s1 + $0xbc] sm:$0xf]
      %v276 = vld [vmem:[%s1 + $0xc0] sm:$0xf]
      %v277 = vld [vmem:[%s1 + $0xc4] sm:$0xf]
      %v278 = vld [vmem:[%s1 + $0xc8] sm:$0xf]
      %v279 = vld [vmem:[%s1 + $0xcc] sm:$0xf]
      %v280 = vld [vmem:[%s1 + $0xd0] sm:$0xf]
      %v281 = vld [vmem:[%s1 + $0xd4] sm:$0xf]
      %v282 = vld [vmem:[%s1 + $0xd8] sm:$0xf]
      %v283 = vld [vmem:[%s1 + $0xdc] sm:$0xf]
      %v284 = vld [vmem:[%s1 + $0xe0] sm:$0xf]
      %v285 = vld [vmem:[%s1 + $0xe4] sm:$0xf]
      %v286 = vld [vmem:[%s1 + $0xe8] sm:$0xf]
      %v287 = vld [vmem:[%s1 + $0xec] sm:$0xf]
      %v288 = vld [vmem:[%s1 + $0xf0] sm:$0xf]
      %v289 = vld [vmem:[%s1 + $0xf4] sm:$0xf]
      %v290 = vld [vmem:[%s1 + $0xf8] sm:$0xf]
      %v291 = vld [vmem:[%s1 + $0xfc] sm:$0xf]
      %v292 = vld [vmem:[%s1 + $0x100] sm:$0xf]
      %v293 = vld [vmem:[%s1 + $0x104] sm:$0xf]
      %v294 = vld [vmem:[%s1 + $0x108] sm:$0xf]
      %v295 = vld [vmem:[%s1 + $0x10c] sm:$0xf]
      %v296 = vld [vmem:[%s1 + $0x110] sm:$0xf]
      %v297 = vld [vmem:[%s1 + $0x114] sm:$0xf]
      %v298 = vld [vmem:[%s1 + $0x118] sm:$0xf]
      %v299 = vld [vmem:[%s1 + $0x11c] sm:$0xf]
      %v300 = vld [vmem:[%s1 + $0x120] sm:$0xf]
      %v301 = vld [vmem:[%s1 + $0x124] sm:$0xf]
      %v302 = vld [vmem:[%s1 + $0x128] sm:$0xf]
      %v303 = vld [vmem:[%s1 + $0x12c] sm:$0xf]
      %v304 = vld [vmem:[%s1 + $0x130] sm:$0xf]
      %v305 = vld [vmem:[%s1 + $0x134] sm:$0xf]
      %v306 = vld [vmem:[%s1 + $0x138] sm:$0xf]
      %v307 = vld [vmem:[%s1 + $0x13c] sm:$0xf]
      %v308 = vld [vmem:[%s1 + $0x140] sm:$0xf]
      %v309 = vld [vmem:[%s1 + $0x144] sm:$0xf]
      %v310 = vld [vmem:[%s1 + $0x148] sm:$0xf]
      %v311 = vld [vmem:[%s1 + $0x14c] sm:$0xf]
      %v312 = vld [vmem:[%s1 + $0x150] sm:$0xf]
      %v313 = vld [vmem:[%s1 + $0x154] sm:$0xf]
      %v314 = vld [vmem:[%s1 + $0x158] sm:$0xf]
      %v315 = vld [vmem:[%s1 + $0x15c] sm:$0xf]
      %v316 = vld [vmem:[%s1 + $0x160] sm:$0xf]
      %v317 = vld [vmem:[%s1 + $0x164] sm:$0xf]
      %v318 = vld [vmem:[%s1 + $0x168] sm:$0xf]
      %v319 = vld [vmem:[%s1 + $0x16c] sm:$0xf]
      %v320 = vld [vmem:[%s1 + $0x170] sm:$0xf]
      %v321 = vld [vmem:[%s1 + $0x174] sm:$0xf]
      %v322 = vld [vmem:[%s1 + $0x178] sm:$0xf]
      %v323 = vld [vmem:[%s1 + $0x17c] sm:$0xf]
      %v324 = vld [vmem:[%s1 + $0x180] sm:$0xf]
      %v325 = vld [vmem:[%s1 + $0x184] sm:$0xf]
      %v326 = vld [vmem:[%s1 + $0x188] sm:$0xf]
      %v327 = vld [vmem:[%s1 + $0x18c] sm:$0xf]
      %v328 = vld [vmem:[%s1 + $0x190] sm:$0xf]
      %v329 = vld [vmem:[%s1 + $0x194] sm:$0xf]
      %v330 = vld [vmem:[%s1 + $0x198] sm:$0xf]
      %v331 = vld [vmem:[%s1 + $0x19c] sm:$0xf]
      %v332 = vld [vmem:[%s1 + $0x1a0] sm:$0xf]
      %v333 = vld [vmem:[%s1 + $0x1a4] sm:$0xf]
      %v334 = vld [vmem:[%s1 + $0x1a8] sm:$0xf]
      %v335 = vld [vmem:[%s1 + $0x1ac] sm:$0xf]
      %v336 = vld [vmem:[%s212] sm:$0xff]
      %v337 = vld [vmem:[%s212 + $0x8] sm:$0xff]
      %v338 = vld [vmem:[%s212 + $0x10] sm:$0xff]
      %v339 = vld [vmem:[%s212 + $0x18] sm:$0xf]
      %v340 = vld [vmem:[%s212 + $0x1c] sm:$0xff]
      %v341 = vld [vmem:[%s212 + $0x24] sm:$0xff]
      %v342 = vld [vmem:[%s212 + $0x2c] sm:$0xff]
      %v343 = vld [vmem:[%s212 + $0x34] sm:$0xf]
      %v344 = vld [vmem:[%s212 + $0x38] sm:$0xff]
      %v345 = vld [vmem:[%s212 + $0x40] sm:$0xff]
      %v346 = vld [vmem:[%s212 + $0x48] sm:$0xff]
      %v347 = vld [vmem:[%s212 + $0x50] sm:$0xf]
      %v348 = vld [vmem:[%s212 + $0x54] sm:$0xff]
      %v349 = vld [vmem:[%s212 + $0x5c] sm:$0xff]
      %v350 = vld [vmem:[%s212 + $0x64] sm:$0xff]
      %v351 = vld [vmem:[%s212 + $0x6c] sm:$0xf]
      %v352 = vld [vmem:[%s216] sm:$0x1]
      %v354 = vlaneseq
      %v355 = vshrl.u32 %v354, 7
      %v356 = vsub.s32 0, %v355
      %v357 = vrot.slane %v352, %v356
      %v375 = vunpack.c.l.b16 %v336
      %v376 = vunpack.c.h.b16 %v336
      %v377 = vunpack.c.l.b16 %v337
      %v378 = vunpack.c.h.b16 %v337
      %v379 = vunpack.c.l.b16 %v338
      %v380 = vunpack.c.h.b16 %v338
      %v381 = vunpack.c.l.b16 %v339
      %v382 = vunpack.c.l.b16 %v340
      %v383 = vunpack.c.h.b16 %v340
      %v384 = vunpack.c.l.b16 %v341
      %v385 = vunpack.c.h.b16 %v341
      %v386 = vunpack.c.l.b16 %v342
      %v387 = vunpack.c.h.b16 %v342
      %v388 = vunpack.c.l.b16 %v343
      %v389 = vunpack.c.l.b16 %v344
      %v390 = vunpack.c.h.b16 %v344
      %v391 = vunpack.c.l.b16 %v345
      %v392 = vunpack.c.h.b16 %v345
      %v393 = vunpack.c.l.b16 %v346
      %v394 = vunpack.c.h.b16 %v346
      %v395 = vunpack.c.l.b16 %v347
      %v396 = vunpack.c.l.b16 %v348
      %v397 = vunpack.c.h.b16 %v348
      %v398 = vunpack.c.l.b16 %v349
      %v399 = vunpack.c.h.b16 %v349
      %v400 = vunpack.c.l.b16 %v350
      %v401 = vunpack.c.h.b16 %v350
      %v402 = vunpack.c.l.b16 %v351
      %v403 = vpack.c.b16 %v382, %v375
      %v404 = vpack.c.b16 %v383, %v376
      %v405 = vpack.c.b16 %v384, %v377
      %v406 = vpack.c.b16 %v385, %v378
      %v407 = vpack.c.b16 %v386, %v379
      %v408 = vpack.c.b16 %v387, %v380
      %v409 = vpack.c.b16 %v388, %v381
      %v410 = vpack.c.b16 %v396, %v389
      %v411 = vpack.c.b16 %v397, %v390
      %v412 = vpack.c.b16 %v398, %v391
      %v413 = vpack.c.b16 %v399, %v392
      %v414 = vpack.c.b16 %v400, %v393
      %v415 = vpack.c.b16 %v401, %v394
      %v416 = vpack.c.b16 %v402, %v395
      %v537 = vunpack.c.l.b16 %v228
      %v538 = vunpack.c.l.b16 %v229
      %v539 = vunpack.c.l.b16 %v230
      %v540 = vunpack.c.l.b16 %v231
      %v541 = vunpack.c.l.b16 %v232
      %v542 = vunpack.c.l.b16 %v233
      %v543 = vunpack.c.l.b16 %v234
      %v544 = vunpack.c.l.b16 %v235
      %v545 = vunpack.c.l.b16 %v236
      %v546 = vunpack.c.l.b16 %v237
      %v547 = vunpack.c.l.b16 %v238
      %v548 = vunpack.c.l.b16 %v239
      %v549 = vunpack.c.l.b16 %v240
      %v550 = vunpack.c.l.b16 %v241
      %v551 = vunpack.c.l.b16 %v242
      %v552 = vunpack.c.l.b16 %v243
      %v553 = vunpack.c.l.b16 %v244
      %v554 = vunpack.c.l.b16 %v245
      %v555 = vunpack.c.l.b16 %v246
      %v556 = vunpack.c.l.b16 %v247
      %v557 = vunpack.c.l.b16 %v248
      %v558 = vunpack.c.l.b16 %v249
      %v559 = vunpack.c.l.b16 %v250
      %v560 = vunpack.c.l.b16 %v251
      %v561 = vunpack.c.l.b16 %v252
      %v562 = vunpack.c.l.b16 %v253
      %v563 = vunpack.c.l.b16 %v254
      %v564 = vunpack.c.l.b16 %v255
      %v565 = vunpack.c.l.b16 %v256
      %v566 = vunpack.c.l.b16 %v257
      %v567 = vunpack.c.l.b16 %v258
      %v568 = vunpack.c.l.b16 %v259
      %v569 = vunpack.c.l.b16 %v260
      %v570 = vunpack.c.l.b16 %v261
      %v571 = vunpack.c.l.b16 %v262
      %v572 = vunpack.c.l.b16 %v263
      %v573 = vunpack.c.l.b16 %v264
      %v574 = vunpack.c.l.b16 %v265
      %v575 = vunpack.c.l.b16 %v266
      %v576 = vunpack.c.l.b16 %v267
      %v577 = vunpack.c.l.b16 %v268
      %v578 = vunpack.c.l.b16 %v269
      %v579 = vunpack.c.l.b16 %v270
      %v580 = vunpack.c.l.b16 %v271
      %v581 = vunpack.c.l.b16 %v272
      %v582 = vunpack.c.l.b16 %v273
      %v583 = vunpack.c.l.b16 %v274
      %v584 = vunpack.c.l.b16 %v275
      %v585 = vunpack.c.l.b16 %v276
      %v586 = vunpack.c.l.b16 %v277
      %v587 = vunpack.c.l.b16 %v278
      %v588 = vunpack.c.l.b16 %v279
      %v589 = vunpack.c.l.b16 %v280
      %v590 = vunpack.c.l.b16 %v281
      %v591 = vunpack.c.l.b16 %v282
      %v592 = vunpack.c.l.b16 %v283
      %v593 = vunpack.c.l.b16 %v284
      %v594 = vunpack.c.l.b16 %v285
      %v595 = vunpack.c.l.b16 %v286
      %v596 = vunpack.c.l.b16 %v287
      %v597 = vunpack.c.l.b16 %v288
      %v598 = vunpack.c.l.b16 %v289
      %v599 = vunpack.c.l.b16 %v290
      %v600 = vunpack.c.l.b16 %v291
      %v601 = vunpack.c.l.b16 %v292
      %v602 = vunpack.c.l.b16 %v293
      %v603 = vunpack.c.l.b16 %v294
      %v604 = vunpack.c.l.b16 %v295
      %v605 = vunpack.c.l.b16 %v296
      %v606 = vunpack.c.l.b16 %v297
      %v607 = vunpack.c.l.b16 %v298
      %v608 = vunpack.c.l.b16 %v299
      %v609 = vunpack.c.l.b16 %v300
      %v610 = vunpack.c.l.b16 %v301
      %v611 = vunpack.c.l.b16 %v302
      %v612 = vunpack.c.l.b16 %v303
      %v613 = vunpack.c.l.b16 %v304
      %v614 = vunpack.c.l.b16 %v305
      %v615 = vunpack.c.l.b16 %v306
      %v616 = vunpack.c.l.b16 %v307
      %v617 = vunpack.c.l.b16 %v308
      %v618 = vunpack.c.l.b16 %v309
      %v619 = vunpack.c.l.b16 %v310
      %v620 = vunpack.c.l.b16 %v311
      %v621 = vunpack.c.l.b16 %v312
      %v622 = vunpack.c.l.b16 %v313
      %v623 = vunpack.c.l.b16 %v314
      %v624 = vunpack.c.l.b16 %v315
      %v625 = vunpack.c.l.b16 %v316
      %v626 = vunpack.c.l.b16 %v317
      %v627 = vunpack.c.l.b16 %v318
      %v628 = vunpack.c.l.b16 %v319
      %v629 = vunpack.c.l.b16 %v320
      %v630 = vunpack.c.l.b16 %v321
      %v631 = vunpack.c.l.b16 %v322
      %v632 = vunpack.c.l.b16 %v323
      %v633 = vunpack.c.l.b16 %v324
      %v634 = vunpack.c.l.b16 %v325
      %v635 = vunpack.c.l.b16 %v326
      %v636 = vunpack.c.l.b16 %v327
      %v637 = vunpack.c.l.b16 %v328
      %v638 = vunpack.c.l.b16 %v329
      %v639 = vunpack.c.l.b16 %v330
      %v640 = vunpack.c.l.b16 %v331
      %v641 = vunpack.c.l.b16 %v332
      %v642 = vunpack.c.l.b16 %v333
      %v643 = vunpack.c.l.b16 %v334
      %v644 = vunpack.c.l.b16 %v335
      %v645 = vpack.c.b16 %v538, %v537
      %v646 = vpack.c.b16 %v540, %v539
      %v647 = vpack.c.b16 %v542, %v541
      %v648 = vpack.c.b16 %v544, %v543
      %v649 = vpack.c.b16 %v546, %v545
      %v650 = vpack.c.b16 %v548, %v547
      %v651 = vpack.c.b16 %v550, %v549
      %v652 = vpack.c.b16 %v552, %v551
      %v653 = vpack.c.b16 %v554, %v553
      %v654 = vpack.c.b16 %v556, %v555
      %v655 = vpack.c.b16 %v558, %v557
      %v656 = vpack.c.b16 %v560, %v559
      %v657 = vpack.c.b16 %v562, %v561
      %v658 = vpack.c.b16 %v564, %v563
      %v659 = vpack.c.b16 %v566, %v565
      %v660 = vpack.c.b16 %v568, %v567
      %v661 = vpack.c.b16 %v570, %v569
      %v662 = vpack.c.b16 %v572, %v571
      %v663 = vpack.c.b16 %v574, %v573
      %v664 = vpack.c.b16 %v576, %v575
      %v665 = vpack.c.b16 %v578, %v577
      %v666 = vpack.c.b16 %v580, %v579
      %v667 = vpack.c.b16 %v582, %v581
      %v668 = vpack.c.b16 %v584, %v583
      %v669 = vpack.c.b16 %v586, %v585
      %v670 = vpack.c.b16 %v588, %v587
      %v671 = vpack.c.b16 %v590, %v589
      %v672 = vpack.c.b16 %v592, %v591
      %v673 = vpack.c.b16 %v594, %v593
      %v674 = vpack.c.b16 %v596, %v595
      %v675 = vpack.c.b16 %v598, %v597
      %v676 = vpack.c.b16 %v600, %v599
      %v677 = vpack.c.b16 %v602, %v601
      %v678 = vpack.c.b16 %v604, %v603
      %v679 = vpack.c.b16 %v606, %v605
      %v680 = vpack.c.b16 %v608, %v607
      %v681 = vpack.c.b16 %v610, %v609
      %v682 = vpack.c.b16 %v612, %v611
      %v683 = vpack.c.b16 %v614, %v613
      %v684 = vpack.c.b16 %v616, %v615
      %v685 = vpack.c.b16 %v618, %v617
      %v686 = vpack.c.b16 %v620, %v619
      %v687 = vpack.c.b16 %v622, %v621
      %v688 = vpack.c.b16 %v624, %v623
      %v689 = vpack.c.b16 %v626, %v625
      %v690 = vpack.c.b16 %v628, %v627
      %v691 = vpack.c.b16 %v630, %v629
      %v692 = vpack.c.b16 %v632, %v631
      %v693 = vpack.c.b16 %v634, %v633
      %v694 = vpack.c.b16 %v636, %v635
      %v695 = vpack.c.b16 %v638, %v637
      %v696 = vpack.c.b16 %v640, %v639
      %v697 = vpack.c.b16 %v642, %v641
      %v698 = vpack.c.b16 %v644, %v643
      %vm753 = vcmask 785408
      %v755 = vsel %vm753, %v409, 0
      %v758 = vsel %vm753, %v416, 0
      %760 = vmatprep.subr.bf16.mxu0 0
      %761 = vmatpush1.bf16.msra.mxu0 %v645
      %762 = vmatprep.subr.bf16.mxu0 0
      %763 = vmatpush1.bf16.msra.mxu0 %v646
      %764 = vmatprep.subr.bf16.mxu0 0
      %765 = vmatpush1.bf16.msra.mxu0 %v647
      %766 = vmatprep.subr.bf16.mxu0 0
      %767 = vmatpush1.bf16.msra.mxu0 %v648
      %768 = vmatprep.subr.bf16.mxu0 0
      %769 = vmatpush1.bf16.msra.mxu0 %v649
      %770 = vmatprep.subr.bf16.mxu0 0
      %771 = vmatpush1.bf16.msra.mxu0 %v650
      %772 = vmatprep.subr.bf16.mxu0 0
      %773 = vmatpush1.bf16.msra.mxu0 %v651
      %774 = vmatprep.subr.bf16.mxu0 0
      %775 = vmatpush1.bf16.msra.mxu0 %v652
      %776 = vmatprep.subr.bf16.mxu0 0
      %777 = vmatpush1.bf16.msra.mxu0 %v653
      %778 = vmatprep.subr.bf16.mxu0 0
      %779 = vmatpush1.bf16.msra.mxu0 %v654
      %780 = vmatprep.subr.bf16.mxu0 0
      %781 = vmatpush1.bf16.msra.mxu0 %v655
      %782 = vmatprep.subr.bf16.mxu0 0
      %783 = vmatpush1.bf16.msra.mxu0 %v656
      %784 = vmatprep.subr.bf16.mxu0 0
      %785 = vmatpush1.bf16.msra.mxu0 %v657
      %786 = vmatprep.subr.bf16.mxu0 0
      %787 = vmatpush1.bf16.msra.mxu0 %v658
      %788 = vmatprep.subr.bf16.mxu0 0
      %789 = vmatpush1.bf16.msra.mxu0 %v659
      %790 = vmatprep.subr.bf16.mxu0 0
      %791 = vmatpush1.bf16.msra.mxu0 %v660
      %792 = vmatprep.mubr.bf16.mxu0 %v404
      %793 = vmatmul.mubr.bf16.gmra.mrb[0].mxu0 %v403
      %v794 = vpop.f32.mrb[0].mxu0
      %v795 = vadd.f32 %v357, %v794
      %v796 = vpop.f32.mrb[0].mxu0
      %v797 = vpop.f32.mrb[0].mxu0
      %v798 = vadd.f32 %v357, %v797
      %v799 = vpop.f32.mrb[0].mxu0
      %800 = vmatprep.mubr.bf16.mxu0 %v411
      %801 = vmatmul.mubr.bf16.gmra.mrb[0].mxu0 %v410
      %v802 = vpop.f32.mrb[0].mxu0
      %v803 = vadd.f32 %v357, %v802
      %v804 = vpop.f32.mrb[0].mxu0
      %v805 = vpop.f32.mrb[0].mxu0
      %v806 = vadd.f32 %v357, %v805
      %v807 = vpop.f32.mrb[0].mxu0
      %808 = vdwg.mxu0
      %809 = vmatprep.subr.bf16.mxu0 0
      %810 = vmatpush1.bf16.msra.mxu0 %v661
      %811 = vmatprep.subr.bf16.mxu0 0
      %812 = vmatpush1.bf16.msra.mxu0 %v662
      %813 = vmatprep.subr.bf16.mxu0 0
      %814 = vmatpush1.bf16.msra.mxu0 %v663
      %815 = vmatprep.subr.bf16.mxu0 0
      %816 = vmatpush1.bf16.msra.mxu0 %v664
      %817 = vmatprep.subr.bf16.mxu0 0
      %818 = vmatpush1.bf16.msra.mxu0 %v665
      %819 = vmatprep.subr.bf16.mxu0 0
      %820 = vmatpush1.bf16.msra.mxu0 %v666
      %821 = vmatprep.subr.bf16.mxu0 0
      %822 = vmatpush1.bf16.msra.mxu0 %v667
      %823 = vmatprep.subr.bf16.mxu0 0
      %824 = vmatpush1.bf16.msra.mxu0 %v668
      %825 = vmatprep.subr.bf16.mxu0 0
      %826 = vmatpush1.bf16.msra.mxu0 %v669
      %827 = vmatprep.subr.bf16.mxu0 0
      %828 = vmatpush1.bf16.msra.mxu0 %v670
      %829 = vmatprep.subr.bf16.mxu0 0
      %830 = vmatpush1.bf16.msra.mxu0 %v671
      %831 = vmatprep.subr.bf16.mxu0 0
      %832 = vmatpush1.bf16.msra.mxu0 %v672
      %833 = vmatprep.subr.bf16.mxu0 0
      %834 = vmatpush1.bf16.msra.mxu0 %v673
      %835 = vmatprep.subr.bf16.mxu0 0
      %836 = vmatpush1.bf16.msra.mxu0 %v674
      %837 = vmatprep.subr.bf16.mxu0 0
      %838 = vmatpush1.bf16.msra.mxu0 %v675
      %839 = vmatprep.subr.bf16.mxu0 0
      %840 = vmatpush1.bf16.msra.mxu0 %v676
      %841 = vmatprep.mubr.bf16.mxu0 %v406
      %842 = vmatmul.mubr.bf16.gmra.mrb[0].mxu0 %v405
      %v843 = vpop.f32.mrb[0].mxu0
      %v844 = vadd.f32 %v795, %v843
      %v845 = vpop.f32.mrb[0].mxu0
      %v846 = vpop.f32.mrb[0].mxu0
      %v847 = vadd.f32 %v798, %v846
      %v848 = vpop.f32.mrb[0].mxu0
      %849 = vmatprep.mubr.bf16.mxu0 %v413
      %850 = vmatmul.mubr.bf16.gmra.mrb[0].mxu0 %v412
      %v851 = vpop.f32.mrb[0].mxu0
      %v852 = vadd.f32 %v803, %v851
      %v853 = vpop.f32.mrb[0].mxu0
      %v854 = vpop.f32.mrb[0].mxu0
      %v855 = vadd.f32 %v806, %v854
      %v856 = vpop.f32.mrb[0].mxu0
      %857 = vdwg.mxu0
      %858 = vmatprep.subr.bf16.mxu0 0
      %859 = vmatpush1.bf16.msra.mxu0 %v677
      %860 = vmatprep.subr.bf16.mxu0 0
      %861 = vmatpush1.bf16.msra.mxu0 %v678
      %862 = vmatprep.subr.bf16.mxu0 0
      %863 = vmatpush1.bf16.msra.mxu0 %v679
      %864 = vmatprep.subr.bf16.mxu0 0
      %865 = vmatpush1.bf16.msra.mxu0 %v680
      %866 = vmatprep.subr.bf16.mxu0 0
      %867 = vmatpush1.bf16.msra.mxu0 %v681
      %868 = vmatprep.subr.bf16.mxu0 0
      %869 = vmatpush1.bf16.msra.mxu0 %v682
      %870 = vmatprep.subr.bf16.mxu0 0
      %871 = vmatpush1.bf16.msra.mxu0 %v683
      %872 = vmatprep.subr.bf16.mxu0 0
      %873 = vmatpush1.bf16.msra.mxu0 %v684
      %874 = vmatprep.subr.bf16.mxu0 0
      %875 = vmatpush1.bf16.msra.mxu0 %v685
      %876 = vmatprep.subr.bf16.mxu0 0
      %877 = vmatpush1.bf16.msra.mxu0 %v686
      %878 = vmatprep.subr.bf16.mxu0 0
      %879 = vmatpush1.bf16.msra.mxu0 %v687
      %880 = vmatprep.subr.bf16.mxu0 0
      %881 = vmatpush1.bf16.msra.mxu0 %v688
      %882 = vmatprep.subr.bf16.mxu0 0
      %883 = vmatpush1.bf16.msra.mxu0 %v689
      %884 = vmatprep.subr.bf16.mxu0 0
      %885 = vmatpush1.bf16.msra.mxu0 %v690
      %886 = vmatprep.subr.bf16.mxu0 0
      %887 = vmatpush1.bf16.msra.mxu0 %v691
      %888 = vmatprep.subr.bf16.mxu0 0
      %889 = vmatpush1.bf16.msra.mxu0 %v692
      %890 = vmatprep.mubr.bf16.mxu0 %v408
      %891 = vmatmul.mubr.bf16.gmra.mrb[0].mxu0 %v407
      %v892 = vpop.f32.mrb[0].mxu0
      %v893 = vadd.f32 %v844, %v892
      %v894 = vpop.f32.mrb[0].mxu0
      %v895 = vpop.f32.mrb[0].mxu0
      %v896 = vadd.f32 %v847, %v895
      %v897 = vpop.f32.mrb[0].mxu0
      %898 = vmatprep.mubr.bf16.mxu0 %v415
      %899 = vmatmul.mubr.bf16.gmra.mrb[0].mxu0 %v414
      %v900 = vpop.f32.mrb[0].mxu0
      %v901 = vadd.f32 %v852, %v900
      %v902 = vpop.f32.mrb[0].mxu0
      %v903 = vpop.f32.mrb[0].mxu0
      %v904 = vadd.f32 %v855, %v903
      %v905 = vpop.f32.mrb[0].mxu0
      %906 = vdwg.mxu0
      %907 = vmatprep.subr.bf16.mxu0 0
      %908 = vmatpush1.bf16.msra.mxu0 %v693
      %909 = vmatprep.subr.bf16.mxu0 0
      %910 = vmatpush1.bf16.msra.mxu0 %v694
      %911 = vmatprep.subr.bf16.mxu0 0
      %912 = vmatpush1.bf16.msra.mxu0 %v695
      %913 = vmatprep.subr.bf16.mxu0 0
      %914 = vmatpush1.bf16.msra.mxu0 %v696
      %915 = vmatprep.subr.bf16.mxu0 0
      %916 = vmatpush1.bf16.msra.mxu0 %v697
      %917 = vmatprep.subr.bf16.mxu0 0
      %918 = vmatpush1.bf16.msra.mxu0 %v698
      %919 = vmatprep.subr.bf16.mxu0 0
      %920 = vmatpush1.bf16.msra.mxu0 0
      %921 = vmatprep.subr.bf16.mxu0 0
      %922 = vmatpush1.bf16.msra.mxu0 0
      %923 = vmatprep.subr.bf16.mxu0 0
      %924 = vmatpush1.bf16.msra.mxu0 0
      %925 = vmatprep.subr.bf16.mxu0 0
      %926 = vmatpush1.bf16.msra.mxu0 0
      %927 = vmatprep.subr.bf16.mxu0 0
      %928 = vmatpush1.bf16.msra.mxu0 0
      %929 = vmatprep.subr.bf16.mxu0 0
      %930 = vmatpush1.bf16.msra.mxu0 0
      %931 = vmatprep.subr.bf16.mxu0 0
      %932 = vmatpush1.bf16.msra.mxu0 0
      %933 = vmatprep.subr.bf16.mxu0 0
      %934 = vmatpush1.bf16.msra.mxu0 0
      %935 = vmatprep.subr.bf16.mxu0 0
      %936 = vmatpush1.bf16.msra.mxu0 0
      %937 = vmatprep.subr.bf16.mxu0 0
      %938 = vmatpush1.bf16.msra.mxu0 0
      %939 = vmatprep.mubr.bf16.mxu0 0
      %940 = vmatmul.mubr.bf16.gmra.mrb[0].mxu0 %v755
      %v941 = vpop.f32.mrb[0].mxu0
      %v942 = vadd.f32 %v893, %v941
      %v943 = vpop.f32.mrb[0].mxu0
      %v944 = vpop.f32.mrb[0].mxu0
      %v945 = vadd.f32 %v896, %v944
      %v946 = vpop.f32.mrb[0].mxu0
      %947 = vmatprep.mubr.bf16.mxu0 0
      %948 = vmatmul.mubr.bf16.gmra.mrb[0].mxu0 %v758
      %v949 = vpop.f32.mrb[0].mxu0
      %v950 = vadd.f32 %v901, %v949
      %v951 = vpop.f32.mrb[0].mxu0
      %v952 = vpop.f32.mrb[0].mxu0
      %v953 = vadd.f32 %v904, %v952
      %v954 = vpop.f32.mrb[0].mxu0
      %955 = vdwg.mxu0
      %v956 = vxor.u32 %v942, 2147483648
      %v957 = vxor.u32 %v945, 2147483648
      %v958 = vxor.u32 %v950, 2147483648
      %v959 = vxor.u32 %v953, 2147483648
      %v960 = vmul.f32 %v956, 1.442695
      %v961 = vpow.pop %v960
      %v962 = vmul.f32 %v957, 1.442695
      %v963 = vpow.pop %v962
      %v964 = vmul.f32 %v958, 1.442695
      %v965 = vpow.pop %v964
      %v966 = vmul.f32 %v959, 1.442695
      %v967 = vpow.pop %v966
      %v968 = vadd.f32 %v961, 1.0
      %v969 = vadd.f32 %v963, 1.0
      %v970 = vadd.f32 %v965, 1.0
      %v971 = vadd.f32 %v967, 1.0
      %v972 = vrcp.pop %v968
      %v973 = vmul.f32 1.0, %v972
      %v974 = vrcp.pop %v969
      %v975 = vmul.f32 1.0, %v974
      %v976 = vrcp.pop %v970
      %v977 = vmul.f32 1.0, %v976
      %v978 = vrcp.pop %v971
      %v979 = vmul.f32 1.0, %v978
      %v980 = vmul.f32 %v942, %v973
      %v981 = vmul.f32 %v945, %v975
      %v982 = vmul.f32 %v950, %v977
      %v983 = vmul.f32 %v953, %v979
      %v984 = vpack.c.bf16 %v981, %v980
      %v985 = vpack.c.bf16 %v983, %v982
      %v988 = vunpack.c.l.b16 %v984
      %v989 = vunpack.c.h.b16 %v984
      %v990 = vunpack.c.l.b16 %v985
      %v991 = vunpack.c.h.b16 %v985
      %v992 = vpack.c.b16 %v988, %v988
      %v993 = vpack.c.b16 %v989, %v989
      %v994 = vpack.c.b16 %v990, %v990
      %v995 = vpack.c.b16 %v991, %v991
      %1000 = vst [vmem:[%s225] sm:$0xf] %v992
      %1001 = vst [vmem:[%s225 + $0x4] sm:$0xf] %v993
      %1002 = vst [vmem:[%s225 + $0x8] sm:$0xf] %v994
      %1003 = vst [vmem:[%s225 + $0xc] sm:$0xf] %v995
      %s1004 = smul.u32 4, %s19
      %p1005 = scmp.lt.s32.totalorder %s18, 0
      %s1006 = scalar_select %p1005, %s18, 0
      %p1007 = scmp.lt.s32.totalorder %s1004, 7
      %s1008 = scalar_select %p1007, %s1004, 7
      %s1009 = smul.addr %s1006, 8
      %s1010 = sadd.s32 %s1008, %s1009
      %s1011 = smul.addr %s1010, 4
      %s1012 = scalar_lea.vmem %s3, %s1011
      // Predicated region
      $region33: #{simple_video_unet_forward.8} parent=31 // pred_check
        %p1013 = pneg %p121
      $region34: #{simple_video_unet_forward.8} parent=31 // pred_check_branch
        %1015 = sbr.rel (%p1013) target = $region36
      $region35: #{simple_video_unet_forward.8} parent=31 // pred_region
        %s1016 = smul.u32 4, %s19
      $region36: #{simple_video_unet_forward.8} parent=31 // pred_fallthru
        _
    $region32: #{simple_video_unet_forward.8} parent=5 // pred_fallthru
      _
    %p1017 = scmp.le.s32.totalorder 2, %s9
    // Predicated region
    $region37: #{simple_video_unet_forward.8} parent=5 // pred_check
      %p1018 = pneg %p1017
    $region38: #{simple_video_unet_forward.8} parent=5 // pred_check_branch
      %1020 = sbr.rel (%p1018) target = $region40
    $region39: #{simple_video_unet_forward.8} parent=5 // pred_region
      %s1021 = ssub.s32 %s9, 2
      // Predicated region
      $region41: #{simple_video_unet_forward.8} parent=39 // pred_check
        %p1022 = pneg %p127
      $region42: #{simple_video_unet_forward.8} parent=39 // pred_check_branch
        %1024 = sbr.rel (%p1022) target = $region44
      $region43: #{simple_video_unet_forward.8} parent=39 // pred_region
        %s1025 = smul.u32 4, %s21
        %p1026 = scmp.lt.s32.totalorder %s20, 0
        %s1027 = scalar_select %p1026, %s20, 0
        %p1028 = scmp.lt.s32.totalorder %s1025, 7
        %s1029 = scalar_select %p1028, %s1025, 7
        %s1030 = smul.addr %s1027, 8
        %s1031 = sadd.s32 %s1029, %s1030
        %s1032 = smul.addr %s1031, 4
        %s1033 = scalar_lea.vmem %s3, %s1032
      $region44: #{simple_video_unet_forward.8} parent=39 // pred_fallthru
        _
    $region40: #{simple_video_unet_forward.8} parent=5 // pred_fallthru
      _
  $region6: #{simple_video_unet_forward.8} parent=0 // loop_footer
    %s13 = sadd.s32 1, %s9
  $region7: #{simple_video_unet_forward.8} parent=0 // loop_footer_branch
    %8 = sbr.rel target = $region3
  $region8: #{simple_video_unet_forward.8} parent=0 // loop_exit
    _

// kernel: simple_video_unet_forward.9
$region0: #{simple_video_unet_forward.9}
  #allocation0 [shape = 'u32[]', space=smem, size = 0x4, offset = 0x4, fixed_abs, tag = 'smem constant byte address 0x4 - core index']
  #allocation1 [shape = 'u32[144,128]{1,0:T(1,128)}', space=vmem, size = 0x12000, scoped, tag = 'internal scratch']
  %s0 = inlined_call_operand.vmem [shape: bf16[2,32,1728], index: 0, kind: input, shape index: {}]
  %s1 = inlined_call_operand.vmem [shape: bf16[1728,128], index: 1, kind: input, shape index: {}]
  %s2 = inlined_call_operand.vmem [shape: f32[2,1,128], index: 2, kind: input, shape index: {}]
  %s3 = inlined_call_operand.vmem [shape: bf16[2,32,128], index: 3, kind: output, shape index: {}]
  %s4 = sld [smem:[#allocation0]]
  $region45: #{simple_video_unet_forward.9} parent=0
    _
  %s6 = ssub.s32 1, %s4
  %s7 = scalar_select 0, %s6, %s4
  loop: start=0, step=1, limit=4
  $region2: #{simple_video_unet_forward.9} parent=0 // loop_pre_header
    _
  $region3: #{simple_video_unet_forward.9} parent=0 // loop_header
    %s9 = sphi 0, %s13
    %p10 = scmp.ge.s32.totalorder %s9, 4
    %s16 = sphi 0, %s28
    %s17 = sphi 0, %s24
    %s18 = sphi 0, %s16
    %s19 = sphi 0, %s17
    %s20 = sphi 0, %s18
    %s21 = sphi 0, %s19
    %s33 = sphi 0, %s35
    %s36 = sphi 0, %s33
    %s37 = sphi 0, %s36
    %s53 = sphi 0, %s37
    %s57 = sphi 0, %s57
    %s59 = sphi 0, %s57
    %s60 = sphi 0, %s59
    %s74 = sphi 0, %s60
    %s80 = sphi 0, %s82
    %s83 = sphi 0, %s80
    %s84 = sphi 0, %s83
    %s100 = sphi 0, %s84
    %s108 = sphi 0, %s110
    %s111 = sphi 0, %s108
    %s112 = sphi 0, %s111
    %s128 = sphi 0, %s112
  $region4: #{simple_video_unet_forward.9} parent=0 // loop_header_branch
    %12 = sbr.rel (%p10) target = $region8
  $region5: #{simple_video_unet_forward.9} parent=0 // loop_body
    %s14 = ssub.s32 %s9, 1
    %s15 = ssub.s32 %s9, 2
    %s22 = sadd.s32 1, %s17
    %p23 = scmp.ge.s32.totalorder %s22, 1
    %s24 = scalar_select %p23, 0, %s22
    %s25 = sadd.s32 1, %s16
    %s26 = scalar_select %p23, %s25, %s16
    %p27 = scmp.ge.s32.totalorder %s26, 2
    %s28 = scalar_select %p27, 0, %s26
    %s29 = ssub.s32 %s16, %s28
    %s30 = ssub.s32 %s17, %s24
    %s31 = sor.u32 %s29, %s30
    %p32 = scmp.eq.s32.totalorder %s31, 0
    %s34 = sadd.s32 %s33, 1
    %s35 = scalar_select %p32, %s33, %s34
    %p38 = pneg %p32
    %p39 = scmp.eq.s32.totalorder %s9, 1
    %p40 = por %p38, %p39
    %p41 = scmp.ne.s32.totalorder %s33, %s36
    %p42 = scmp.eq.s32.totalorder %s9, 0
    %p43 = por %p41, %p42
    %p44 = scmp.ne.s32.totalorder %s33, %s36
    %p45 = scmp.eq.s32.totalorder %s14, 1
    %p46 = por %p44, %p45
    %p47 = scmp.ne.s32.totalorder %s36, %s37
    %p48 = scmp.eq.s32.totalorder %s14, 0
    %p49 = por %p47, %p48
    %p50 = scmp.ne.s32.totalorder %s36, %s37
    %p51 = scmp.eq.s32.totalorder %s15, 1
    %p52 = por %p50, %p51
    %p54 = scmp.ne.s32.totalorder %s37, %s53
    %p55 = scmp.eq.s32.totalorder %s15, 0
    %p56 = por %p54, %p55
    %s58 = sadd.s32 %s57, 1
    %p61 = scmp.eq.s32.totalorder %s9, 1
    %p62 = scmp.ne.s32.totalorder %s57, %s59
    %p63 = scmp.eq.s32.totalorder %s9, 0
    %p64 = por %p62, %p63
    %p65 = scmp.ne.s32.totalorder %s57, %s59
    %p66 = scmp.eq.s32.totalorder %s14, 1
    %p67 = por %p65, %p66
    %p68 = scmp.ne.s32.totalorder %s59, %s60
    %p69 = scmp.eq.s32.totalorder %s14, 0
    %p70 = por %p68, %p69
    %p71 = scmp.ne.s32.totalorder %s59, %s60
    %p72 = scmp.eq.s32.totalorder %s15, 1
    %p73 = por %p71, %p72
    %p75 = scmp.ne.s32.totalorder %s60, %s74
    %p76 = scmp.eq.s32.totalorder %s15, 0
    %p77 = por %p75, %p76
    %s78 = ssub.s32 %s16, %s28
    %p79 = scmp.eq.s32.totalorder %s78, 0
    %s81 = sadd.s32 %s80, 1
    %s82 = scalar_select %p79, %s80, %s81
    %p85 = pneg %p79
    %p86 = scmp.eq.s32.totalorder %s9, 1
    %p87 = por %p85, %p86
    %p88 = scmp.ne.s32.totalorder %s80, %s83
    %p89 = scmp.eq.s32.totalorder %s9, 0
    %p90 = por %p88, %p89
    %p91 = scmp.ne.s32.totalorder %s80, %s83
    %p92 = scmp.eq.s32.totalorder %s14, 1
    %p93 = por %p91, %p92
    %p94 = scmp.ne.s32.totalorder %s83, %s84
    %p95 = scmp.eq.s32.totalorder %s14, 0
    %p96 = por %p94, %p95
    %p97 = scmp.ne.s32.totalorder %s83, %s84
    %p98 = scmp.eq.s32.totalorder %s15, 1
    %p99 = por %p97, %p98
    %p101 = scmp.ne.s32.totalorder %s84, %s100
    %p102 = scmp.eq.s32.totalorder %s15, 0
    %p103 = por %p101, %p102
    %s104 = ssub.s32 %s16, %s28
    %s105 = ssub.s32 %s17, %s24
    %s106 = sor.u32 %s104, %s105
    %p107 = scmp.eq.s32.totalorder %s106, 0
    %s109 = sadd.s32 %s108, 1
    %s110 = scalar_select %p107, %s108, %s109
    %p113 = pneg %p107
    %p114 = scmp.eq.s32.totalorder %s9, 1
    %p115 = por %p113, %p114
    %p116 = scmp.ne.s32.totalorder %s108, %s111
    %p117 = scmp.eq.s32.totalorder %s9, 0
    %p118 = por %p116, %p117
    %p119 = scmp.ne.s32.totalorder %s108, %s111
    %p120 = scmp.eq.s32.totalorder %s14, 1
    %p121 = por %p119, %p120
    %p122 = scmp.ne.s32.totalorder %s111, %s112
    %p123 = scmp.eq.s32.totalorder %s14, 0
    %p124 = por %p122, %p123
    %p125 = scmp.ne.s32.totalorder %s111, %s112
    %p126 = scmp.eq.s32.totalorder %s15, 1
    %p127 = por %p125, %p126
    %p129 = scmp.ne.s32.totalorder %s112, %s128
    %p130 = scmp.eq.s32.totalorder %s15, 0
    %p131 = por %p129, %p130
    %p132 = scmp.le.s32.totalorder 1, %s9
    %p133 = scmp.lt.s32.totalorder %s9, 3
    %p134 = pnand %p132, %p133
    %p135 = pneg %p134
    // Predicated region
    $region9: #{simple_video_unet_forward.9} parent=5 // pred_check
      _
    $region10: #{simple_video_unet_forward.9} parent=5 // pred_check_branch
      %137 = sbr.rel (%p134) target = $region12
    $region11: #{simple_video_unet_forward.9} parent=5 // pred_region
      %s138 = ssub.s32 %s9, 1
      // Predicated region
      $region13: #{simple_video_unet_forward.9} parent=11 // pred_check
        %p139 = pneg %p70
      $region14: #{simple_video_unet_forward.9} parent=11 // pred_check_branch
        %141 = sbr.rel (%p139) target = $region16
      $region15: #{simple_video_unet_forward.9} parent=11 // pred_region
        _
      $region16: #{simple_video_unet_forward.9} parent=11 // pred_fallthru
        _
    $region12: #{simple_video_unet_forward.9} parent=5 // pred_fallthru
      _
    %p142 = scmp.lt.s32.totalorder %s9, 2
    // Predicated region
    $region17: #{simple_video_unet_forward.9} parent=5 // pred_check
      %p143 = pneg %p142
    $region18: #{simple_video_unet_forward.9} parent=5 // pred_check_branch
      %145 = sbr.rel (%p143) target = $region20
    $region19: #{simple_video_unet_forward.9} parent=5 // pred_region
      // Predicated region
      $region21: #{simple_video_unet_forward.9} parent=19 // pred_check
        %p146 = pneg %p43
      $region22: #{simple_video_unet_forward.9} parent=19 // pred_check_branch
        %148 = sbr.rel (%p146) target = $region24
      $region23: #{simple_video_unet_forward.9} parent=19 // pred_region
        %s149 = smul.u32 4, %s17
        %p150 = scmp.lt.s32.totalorder %s16, 1
        %s151 = scalar_select %p150, %s16, 1
        %p152 = scmp.lt.s32.totalorder %s149, 3
        %s153 = scalar_select %p152, %s149, 3
        %s154 = smul.addr %s153, 14
        %s155 = smul.addr %s151, 56
        %s156 = sadd.s32 %s154, %s155
        %s157 = smul.addr %s156, 4
        %s158 = scalar_lea.vmem %s0, %s157
        %s159 = smul.u32 4, %s17
      $region24: #{simple_video_unet_forward.9} parent=19 // pred_fallthru
        _
      // Predicated region
      $region25: #{simple_video_unet_forward.9} parent=19 // pred_check
        %p160 = pneg %p90
      $region26: #{simple_video_unet_forward.9} parent=19 // pred_check_branch
        %162 = sbr.rel (%p160) target = $region28
      $region27: #{simple_video_unet_forward.9} parent=19 // pred_region
        %p163 = scmp.lt.s32.totalorder %s16, 1
        %s164 = scalar_select %p163, %s16, 1
        %s165 = scalar_lea.vmem %s2, %s164
      $region28: #{simple_video_unet_forward.9} parent=19 // pred_fallthru
        _
    $region20: #{simple_video_unet_forward.9} parent=5 // pred_fallthru
      _
    %p166 = scmp.le.s32.totalorder 1, %s9
    %p167 = scmp.lt.s32.totalorder %s9, 3
    %p168 = pnand %p166, %p167
    %p169 = pneg %p168
    // Predicated region
    $region29: #{simple_video_unet_forward.9} parent=5 // pred_check
      _
    $region30: #{simple_video_unet_forward.9} parent=5 // pred_check_branch
      %171 = sbr.rel (%p168) target = $region32
    $region31: #{simple_video_unet_forward.9} parent=5 // pred_region
      %s172 = ssub.s32 %s9, 1
      %s173 = smul.u32 4, %s19
      %p174 = scmp.lt.s32.totalorder %s18, 1
      %s175 = scalar_select %p174, %s18, 1
      %p176 = scmp.lt.s32.totalorder %s173, 3
      %s177 = scalar_select %p176, %s173, 3
      %s178 = smul.addr %s177, 14
      %s179 = smul.addr %s175, 56
      %s180 = sadd.s32 %s178, %s179
      %s181 = smul.addr %s180, 4
      %s182 = scalar_lea.vmem %s0, %s181
      %p183 = pneg %p49
      %p184 = pneg %p46
      %p185 = pneg %p70
      %p186 = pneg %p67
      %p187 = scmp.lt.s32.totalorder %s18, 1
      %s188 = scalar_select %p187, %s18, 1
      %s189 = scalar_lea.vmem %s2, %s188
      %p190 = pneg %p96
      %p191 = pneg %p93
      %p192 = pneg %p124
      %p193 = pneg %p121
      %s194 = smul.u32 4, %s19
      %p195 = scmp.lt.s32.totalorder %s18, 1
      %s196 = scalar_select %p195, %s18, 1
      %p197 = scmp.lt.s32.totalorder %s194, 3
      %s198 = scalar_select %p197, %s194, 3
      %s199 = smul.addr %s196, 4
      %s200 = sadd.s32 %s198, %s199
      %s201 = smul.addr %s200, 4
      %s202 = scalar_lea.vmem %s3, %s201
      %s203 = smul.u32 4, %s19
      %p204 = scmp.lt.s32.totalorder %s18, 1
      %s205 = scalar_select %p204, %s18, 1
      %p206 = scmp.lt.s32.totalorder %s203, 3
      %s207 = scalar_select %p206, %s203, 3
      %s208 = smul.addr %s207, 14
      %s209 = smul.addr %s205, 56
      %s210 = sadd.s32 %s208, %s209
      %s211 = smul.addr %s210, 4
      %s212 = scalar_lea.vmem %s0, %s211
      %s213 = smul.u32 4, %s19
      %p214 = scmp.lt.s32.totalorder %s18, 1
      %s215 = scalar_select %p214, %s18, 1
      %s216 = scalar_lea.vmem %s2, %s215
      %s217 = smul.u32 4, %s19
      %p218 = scmp.lt.s32.totalorder %s18, 1
      %s219 = scalar_select %p218, %s18, 1
      %p220 = scmp.lt.s32.totalorder %s217, 3
      %s221 = scalar_select %p220, %s217, 3
      %s222 = smul.addr %s219, 4
      %s223 = sadd.s32 %s221, %s222
      %s224 = smul.addr %s223, 4
      %s225 = scalar_lea.vmem %s3, %s224
      %s226 = smul.u32 4, %s19
      %v228 = vld [vmem:[%s1] sm:$0xf]
      %v229 = vld [vmem:[%s1 + $0x4] sm:$0xf]
      %v230 = vld [vmem:[%s1 + $0x8] sm:$0xf]
      %v231 = vld [vmem:[%s1 + $0xc] sm:$0xf]
      %v232 = vld [vmem:[%s1 + $0x10] sm:$0xf]
      %v233 = vld [vmem:[%s1 + $0x14] sm:$0xf]
      %v234 = vld [vmem:[%s1 + $0x18] sm:$0xf]
      %v235 = vld [vmem:[%s1 + $0x1c] sm:$0xf]
      %v236 = vld [vmem:[%s1 + $0x20] sm:$0xf]
      %v237 = vld [vmem:[%s1 + $0x24] sm:$0xf]
      %v238 = vld [vmem:[%s1 + $0x28] sm:$0xf]
      %v239 = vld [vmem:[%s1 + $0x2c] sm:$0xf]
      %v240 = vld [vmem:[%s1 + $0x30] sm:$0xf]
      %v241 = vld [vmem:[%s1 + $0x34] sm:$0xf]
      %v242 = vld [vmem:[%s1 + $0x38] sm:$0xf]
      %v243 = vld [vmem:[%s1 + $0x3c] sm:$0xf]
      %v244 = vld [vmem:[%s1 + $0x40] sm:$0xf]
      %v245 = vld [vmem:[%s1 + $0x44] sm:$0xf]
      %v246 = vld [vmem:[%s1 + $0x48] sm:$0xf]
      %v247 = vld [vmem:[%s1 + $0x4c] sm:$0xf]
      %v248 = vld [vmem:[%s1 + $0x50] sm:$0xf]
      %v249 = vld [vmem:[%s1 + $0x54] sm:$0xf]
      %v250 = vld [vmem:[%s1 + $0x58] sm:$0xf]
      %v251 = vld [vmem:[%s1 + $0x5c] sm:$0xf]
      %v252 = vld [vmem:[%s1 + $0x60] sm:$0xf]
      %v253 = vld [vmem:[%s1 + $0x64] sm:$0xf]
      %v254 = vld [vmem:[%s1 + $0x68] sm:$0xf]
      %v255 = vld [vmem:[%s1 + $0x6c] sm:$0xf]
      %v256 = vld [vmem:[%s1 + $0x70] sm:$0xf]
      %v257 = vld [vmem:[%s1 + $0x74] sm:$0xf]
      %v258 = vld [vmem:[%s1 + $0x78] sm:$0xf]
      %v259 = vld [vmem:[%s1 + $0x7c] sm:$0xf]
      %v260 = vld [vmem:[%s1 + $0x80] sm:$0xf]
      %v261 = vld [vmem:[%s1 + $0x84] sm:$0xf]
      %v262 = vld [vmem:[%s1 + $0x88] sm:$0xf]
      %v263 = vld [vmem:[%s1 + $0x8c] sm:$0xf]
      %v264 = vld [vmem:[%s1 + $0x90] sm:$0xf]
      %v265 = vld [vmem:[%s1 + $0x94] sm:$0xf]
      %v266 = vld [vmem:[%s1 + $0x98] sm:$0xf]
      %v267 = vld [vmem:[%s1 + $0x9c] sm:$0xf]
      %v268 = vld [vmem:[%s1 + $0xa0] sm:$0xf]
      %v269 = vld [vmem:[%s1 + $0xa4] sm:$0xf]
      %v270 = vld [vmem:[%s1 + $0xa8] sm:$0xf]
      %v271 = vld [vmem:[%s1 + $0xac] sm:$0xf]
      %v272 = vld [vmem:[%s1 + $0xb0] sm:$0xf]
      %v273 = vld [vmem:[%s1 + $0xb4] sm:$0xf]
      %v274 = vld [vmem:[%s1 + $0xb8] sm:$0xf]
      %v275 = vld [vmem:[%s1 + $0xbc] sm:$0xf]
      %v276 = vld [vmem:[%s1 + $0xc0] sm:$0xf]
      %v277 = vld [vmem:[%s1 + $0xc4] sm:$0xf]
      %v278 = vld [vmem:[%s1 + $0xc8] sm:$0xf]
      %v279 = vld [vmem:[%s1 + $0xcc] sm:$0xf]
      %v280 = vld [vmem:[%s1 + $0xd0] sm:$0xf]
      %v281 = vld [vmem:[%s1 + $0xd4] sm:$0xf]
      %v282 = vld [vmem:[%s1 + $0xd8] sm:$0xf]
      %v283 = vld [vmem:[%s1 + $0xdc] sm:$0xf]
      %v284 = vld [vmem:[%s1 + $0xe0] sm:$0xf]
      %v285 = vld [vmem:[%s1 + $0xe4] sm:$0xf]
      %v286 = vld [vmem:[%s1 + $0xe8] sm:$0xf]
      %v287 = vld [vmem:[%s1 + $0xec] sm:$0xf]
      %v288 = vld [vmem:[%s1 + $0xf0] sm:$0xf]
      %v289 = vld [vmem:[%s1 + $0xf4] sm:$0xf]
      %v290 = vld [vmem:[%s1 + $0xf8] sm:$0xf]
      %v291 = vld [vmem:[%s1 + $0xfc] sm:$0xf]
      %v292 = vld [vmem:[%s1 + $0x100] sm:$0xf]
      %v293 = vld [vmem:[%s1 + $0x104] sm:$0xf]
      %v294 = vld [vmem:[%s1 + $0x108] sm:$0xf]
      %v295 = vld [vmem:[%s1 + $0x10c] sm:$0xf]
      %v296 = vld [vmem:[%s1 + $0x110] sm:$0xf]
      %v297 = vld [vmem:[%s1 + $0x114] sm:$0xf]
      %v298 = vld [vmem:[%s1 + $0x118] sm:$0xf]
      %v299 = vld [vmem:[%s1 + $0x11c] sm:$0xf]
      %v300 = vld [vmem:[%s1 + $0x120] sm:$0xf]
      %v301 = vld [vmem:[%s1 + $0x124] sm:$0xf]
      %v302 = vld [vmem:[%s1 + $0x128] sm:$0xf]
      %v303 = vld [vmem:[%s1 + $0x12c] sm:$0xf]
      %v304 = vld [vmem:[%s1 + $0x130] sm:$0xf]
      %v305 = vld [vmem:[%s1 + $0x134] sm:$0xf]
      %v306 = vld [vmem:[%s1 + $0x138] sm:$0xf]
      %v307 = vld [vmem:[%s1 + $0x13c] sm:$0xf]
      %v308 = vld [vmem:[%s1 + $0x140] sm:$0xf]
      %v309 = vld [vmem:[%s1 + $0x144] sm:$0xf]
      %v310 = vld [vmem:[%s1 + $0x148] sm:$0xf]
      %v311 = vld [vmem:[%s1 + $0x14c] sm:$0xf]
      %v312 = vld [vmem:[%s1 + $0x150] sm:$0xf]
      %v313 = vld [vmem:[%s1 + $0x154] sm:$0xf]
      %v314 = vld [vmem:[%s1 + $0x158] sm:$0xf]
      %v315 = vld [vmem:[%s1 + $0x15c] sm:$0xf]
      %v316 = vld [vmem:[%s1 + $0x160] sm:$0xf]
      %v317 = vld [vmem:[%s1 + $0x164] sm:$0xf]
      %v318 = vld [vmem:[%s1 + $0x168] sm:$0xf]
      %v319 = vld [vmem:[%s1 + $0x16c] sm:$0xf]
      %v320 = vld [vmem:[%s1 + $0x170] sm:$0xf]
      %v321 = vld [vmem:[%s1 + $0x174] sm:$0xf]
      %v322 = vld [vmem:[%s1 + $0x178] sm:$0xf]
      %v323 = vld [vmem:[%s1 + $0x17c] sm:$0xf]
      %v324 = vld [vmem:[%s1 + $0x180] sm:$0xf]
      %v325 = vld [vmem:[%s1 + $0x184] sm:$0xf]
      %v326 = vld [vmem:[%s1 + $0x188] sm:$0xf]
      %v327 = vld [vmem:[%s1 + $0x18c] sm:$0xf]
      %v328 = vld [vmem:[%s1 + $0x190] sm:$0xf]
      %v329 = vld [vmem:[%s1 + $0x194] sm:$0xf]
      %v330 = vld [vmem:[%s1 + $0x198] sm:$0xf]
      %v331 = vld [vmem:[%s1 + $0x19c] sm:$0xf]
      %v332 = vld [vmem:[%s1 + $0x1a0] sm:$0xf]
      %v333 = vld [vmem:[%s1 + $0x1a4] sm:$0xf]
      %v334 = vld [vmem:[%s1 + $0x1a8] sm:$0xf]
      %v335 = vld [vmem:[%s1 + $0x1ac] sm:$0xf]
      %v336 = vld [vmem:[%s1 + $0x1b0] sm:$0xf]
      %v337 = vld [vmem:[%s1 + $0x1b4] sm:$0xf]
      %v338 = vld [vmem:[%s1 + $0x1b8] sm:$0xf]
      %v339 = vld [vmem:[%s1 + $0x1bc] sm:$0xf]
      %v340 = vld [vmem:[%s1 + $0x1c0] sm:$0xf]
      %v341 = vld [vmem:[%s1 + $0x1c4] sm:$0xf]
      %v342 = vld [vmem:[%s1 + $0x1c8] sm:$0xf]
      %v343 = vld [vmem:[%s1 + $0x1cc] sm:$0xf]
      %v344 = vld [vmem:[%s1 + $0x1d0] sm:$0xf]
      %v345 = vld [vmem:[%s1 + $0x1d4] sm:$0xf]
      %v346 = vld [vmem:[%s1 + $0x1d8] sm:$0xf]
      %v347 = vld [vmem:[%s1 + $0x1dc] sm:$0xf]
      %v348 = vld [vmem:[%s1 + $0x1e0] sm:$0xf]
      %v349 = vld [vmem:[%s1 + $0x1e4] sm:$0xf]
      %v350 = vld [vmem:[%s1 + $0x1e8] sm:$0xf]
      %v351 = vld [vmem:[%s1 + $0x1ec] sm:$0xf]
      %v352 = vld [vmem:[%s1 + $0x1f0] sm:$0xf]
      %v353 = vld [vmem:[%s1 + $0x1f4] sm:$0xf]
      %v354 = vld [vmem:[%s1 + $0x1f8] sm:$0xf]
      %v355 = vld [vmem:[%s1 + $0x1fc] sm:$0xf]
      %v356 = vld [vmem:[%s1 + $0x200] sm:$0xf]
      %v357 = vld [vmem:[%s1 + $0x204] sm:$0xf]
      %v358 = vld [vmem:[%s1 + $0x208] sm:$0xf]
      %v359 = vld [vmem:[%s1 + $0x20c] sm:$0xf]
      %v360 = vld [vmem:[%s1 + $0x210] sm:$0xf]
      %v361 = vld [vmem:[%s1 + $0x214] sm:$0xf]
      %v362 = vld [vmem:[%s1 + $0x218] sm:$0xf]
      %v363 = vld [vmem:[%s1 + $0x21c] sm:$0xf]
      %v364 = vld [vmem:[%s1 + $0x220] sm:$0xf]
      %v365 = vld [vmem:[%s1 + $0x224] sm:$0xf]
      %v366 = vld [vmem:[%s1 + $0x228] sm:$0xf]
      %v367 = vld [vmem:[%s1 + $0x22c] sm:$0xf]
      %v368 = vld [vmem:[%s1 + $0x230] sm:$0xf]
      %v369 = vld [vmem:[%s1 + $0x234] sm:$0xf]
      %v370 = vld [vmem:[%s1 + $0x238] sm:$0xf]
      %v371 = vld [vmem:[%s1 + $0x23c] sm:$0xf]
      %v372 = vld [vmem:[%s1 + $0x240] sm:$0xf]
      %v373 = vld [vmem:[%s1 + $0x244] sm:$0xf]
      %v374 = vld [vmem:[%s1 + $0x248] sm:$0xf]
      %v375 = vld [vmem:[%s1 + $0x24c] sm:$0xf]
      %v376 = vld [vmem:[%s1 + $0x250] sm:$0xf]
      %v377 = vld [vmem:[%s1 + $0x254] sm:$0xf]
      %v378 = vld [vmem:[%s1 + $0x258] sm:$0xf]
      %v379 = vld [vmem:[%s1 + $0x25c] sm:$0xf]
      %v380 = vld [vmem:[%s1 + $0x260] sm:$0xf]
      %v381 = vld [vmem:[%s1 + $0x264] sm:$0xf]
      %v382 = vld [vmem:[%s1 + $0x268] sm:$0xf]
      %v383 = vld [vmem:[%s1 + $0x26c] sm:$0xf]
      %v384 = vld [vmem:[%s1 + $0x270] sm:$0xf]
      %v385 = vld [vmem:[%s1 + $0x274] sm:$0xf]
      %v386 = vld [vmem:[%s1 + $0x278] sm:$0xf]
      %v387 = vld [vmem:[%s1 + $0x27c] sm:$0xf]
      %v388 = vld [vmem:[%s1 + $0x280] sm:$0xf]
      %v389 = vld [vmem:[%s1 + $0x284] sm:$0xf]
      %v390 = vld [vmem:[%s1 + $0x288] sm:$0xf]
      %v391 = vld [vmem:[%s1 + $0x28c] sm:$0xf]
      %v392 = vld [vmem:[%s1 + $0x290] sm:$0xf]
      %v393 = vld [vmem:[%s1 + $0x294] sm:$0xf]
      %v394 = vld [vmem:[%s1 + $0x298] sm:$0xf]
      %v395 = vld [vmem:[%s1 + $0x29c] sm:$0xf]
      %v396 = vld [vmem:[%s1 + $0x2a0] sm:$0xf]
      %v397 = vld [vmem:[%s1 + $0x2a4] sm:$0xf]
      %v398 = vld [vmem:[%s1 + $0x2a8] sm:$0xf]
      %v399 = vld [vmem:[%s1 + $0x2ac] sm:$0xf]
      %v400 = vld [vmem:[%s1 + $0x2b0] sm:$0xf]
      %v401 = vld [vmem:[%s1 + $0x2b4] sm:$0xf]
      %v402 = vld [vmem:[%s1 + $0x2b8] sm:$0xf]
      %v403 = vld [vmem:[%s1 + $0x2bc] sm:$0xf]
      %v404 = vld [vmem:[%s1 + $0x2c0] sm:$0xf]
      %v405 = vld [vmem:[%s1 + $0x2c4] sm:$0xf]
      %v406 = vld [vmem:[%s1 + $0x2c8] sm:$0xf]
      %v407 = vld [vmem:[%s1 + $0x2cc] sm:$0xf]
      %v408 = vld [vmem:[%s1 + $0x2d0] sm:$0xf]
      %v409 = vld [vmem:[%s1 + $0x2d4] sm:$0xf]
      %v410 = vld [vmem:[%s1 + $0x2d8] sm:$0xf]
      %v411 = vld [vmem:[%s1 + $0x2dc] sm:$0xf]
      %v412 = vld [vmem:[%s1 + $0x2e0] sm:$0xf]
      %v413 = vld [vmem:[%s1 + $0x2e4] sm:$0xf]
      %v414 = vld [vmem:[%s1 + $0x2e8] sm:$0xf]
      %v415 = vld [vmem:[%s1 + $0x2ec] sm:$0xf]
      %v416 = vld [vmem:[%s1 + $0x2f0] sm:$0xf]
      %v417 = vld [vmem:[%s1 + $0x2f4] sm:$0xf]
      %v418 = vld [vmem:[%s1 + $0x2f8] sm:$0xf]
      %v419 = vld [vmem:[%s1 + $0x2fc] sm:$0xf]
      %v420 = vld [vmem:[%s1 + $0x300] sm:$0xf]
      %v421 = vld [vmem:[%s1 + $0x304] sm:$0xf]
      %v422 = vld [vmem:[%s1 + $0x308] sm:$0xf]
      %v423 = vld [vmem:[%s1 + $0x30c] sm:$0xf]
      %v424 = vld [vmem:[%s1 + $0x310] sm:$0xf]
      %v425 = vld [vmem:[%s1 + $0x314] sm:$0xf]
      %v426 = vld [vmem:[%s1 + $0x318] sm:$0xf]
      %v427 = vld [vmem:[%s1 + $0x31c] sm:$0xf]
      %v428 = vld [vmem:[%s1 + $0x320] sm:$0xf]
      %v429 = vld [vmem:[%s1 + $0x324] sm:$0xf]
      %v430 = vld [vmem:[%s1 + $0x328] sm:$0xf]
      %v431 = vld [vmem:[%s1 + $0x32c] sm:$0xf]
      %v432 = vld [vmem:[%s1 + $0x330] sm:$0xf]
      %v433 = vld [vmem:[%s1 + $0x334] sm:$0xf]
      %v434 = vld [vmem:[%s1 + $0x338] sm:$0xf]
      %v435 = vld [vmem:[%s1 + $0x33c] sm:$0xf]
      %v436 = vld [vmem:[%s1 + $0x340] sm:$0xf]
      %v437 = vld [vmem:[%s1 + $0x344] sm:$0xf]
      %v438 = vld [vmem:[%s1 + $0x348] sm:$0xf]
      %v439 = vld [vmem:[%s1 + $0x34c] sm:$0xf]
      %v440 = vld [vmem:[%s1 + $0x350] sm:$0xf]
      %v441 = vld [vmem:[%s1 + $0x354] sm:$0xf]
      %v442 = vld [vmem:[%s1 + $0x358] sm:$0xf]
      %v443 = vld [vmem:[%s1 + $0x35c] sm:$0xf]
      %v444 = vld [vmem:[%s212] sm:$0xff]
      %v445 = vld [vmem:[%s212 + $0x8] sm:$0xff]
      %v446 = vld [vmem:[%s212 + $0x10] sm:$0xff]
      %v447 = vld [vmem:[%s212 + $0x18] sm:$0xff]
      %v448 = vld [vmem:[%s212 + $0x20] sm:$0xff]
      %v449 = vld [vmem:[%s212 + $0x28] sm:$0xff]
      %v450 = vld [vmem:[%s212 + $0x30] sm:$0xff]
      %v451 = vld [vmem:[%s212 + $0x38] sm:$0xff]
      %v452 = vld [vmem:[%s212 + $0x40] sm:$0xff]
      %v453 = vld [vmem:[%s212 + $0x48] sm:$0xff]
      %v454 = vld [vmem:[%s212 + $0x50] sm:$0xff]
      %v455 = vld [vmem:[%s212 + $0x58] sm:$0xff]
      %v456 = vld [vmem:[%s212 + $0x60] sm:$0xff]
      %v457 = vld [vmem:[%s212 + $0x68] sm:$0xff]
      %v458 = vld [vmem:[%s212 + $0x70] sm:$0xff]
      %v459 = vld [vmem:[%s212 + $0x78] sm:$0xff]
      %v460 = vld [vmem:[%s212 + $0x80] sm:$0xff]
      %v461 = vld [vmem:[%s212 + $0x88] sm:$0xff]
      %v462 = vld [vmem:[%s212 + $0x90] sm:$0xff]
      %v463 = vld [vmem:[%s212 + $0x98] sm:$0xff]
      %v464 = vld [vmem:[%s212 + $0xa0] sm:$0xff]
      %v465 = vld [vmem:[%s212 + $0xa8] sm:$0xff]
      %v466 = vld [vmem:[%s212 + $0xb0] sm:$0xff]
      %v467 = vld [vmem:[%s212 + $0xb8] sm:$0xff]
      %v468 = vld [vmem:[%s212 + $0xc0] sm:$0xff]
      %v469 = vld [vmem:[%s212 + $0xc8] sm:$0xff]
      %v470 = vld [vmem:[%s212 + $0xd0] sm:$0xff]
      %v471 = vld [vmem:[%s212 + $0xd8] sm:$0xff]
      %v472 = vld [vmem:[%s216] sm:$0x1]
      %v474 = vlaneseq
      %v475 = vshrl.u32 %v474, 7
      %v476 = vsub.s32 0, %v475
      %v477 = vrot.slane %v472, %v476
      %v507 = vunpack.c.l.b16 %v444
      %v508 = vunpack.c.h.b16 %v444
      %v509 = vunpack.c.l.b16 %v445
      %v510 = vunpack.c.h.b16 %v445
      %v511 = vunpack.c.l.b16 %v446
      %v512 = vunpack.c.h.b16 %v446
      %v513 = vunpack.c.l.b16 %v447
      %v514 = vunpack.c.h.b16 %v447
      %v515 = vunpack.c.l.b16 %v448
      %v516 = vunpack.c.h.b16 %v448
      %v517 = vunpack.c.l.b16 %v449
      %v518 = vunpack.c.h.b16 %v449
      %v519 = vunpack.c.l.b16 %v450
      %v520 = vunpack.c.h.b16 %v450
      %v521 = vunpack.c.l.b16 %v451
      %v522 = vunpack.c.h.b16 %v451
      %v523 = vunpack.c.l.b16 %v452
      %v524 = vunpack.c.h.b16 %v452
      %v525 = vunpack.c.l.b16 %v453
      %v526 = vunpack.c.h.b16 %v453
      %v527 = vunpack.c.l.b16 %v454
      %v528 = vunpack.c.h.b16 %v454
      %v529 = vunpack.c.l.b16 %v455
      %v530 = vunpack.c.h.b16 %v455
      %v531 = vunpack.c.l.b16 %v456
      %v532 = vunpack.c.h.b16 %v456
      %v533 = vunpack.c.l.b16 %v457
      %v534 = vunpack.c.h.b16 %v457
      %v535 = vunpack.c.l.b16 %v458
      %v536 = vunpack.c.h.b16 %v458
      %v537 = vunpack.c.l.b16 %v459
      %v538 = vunpack.c.h.b16 %v459
      %v539 = vunpack.c.l.b16 %v460
      %v540 = vunpack.c.h.b16 %v460
      %v541 = vunpack.c.l.b16 %v461
      %v542 = vunpack.c.h.b16 %v461
      %v543 = vunpack.c.l.b16 %v462
      %v544 = vunpack.c.h.b16 %v462
      %v545 = vunpack.c.l.b16 %v463
      %v546 = vunpack.c.h.b16 %v463
      %v547 = vunpack.c.l.b16 %v464
      %v548 = vunpack.c.h.b16 %v464
      %v549 = vunpack.c.l.b16 %v465
      %v550 = vunpack.c.h.b16 %v465
      %v551 = vunpack.c.l.b16 %v466
      %v552 = vunpack.c.h.b16 %v466
      %v553 = vunpack.c.l.b16 %v467
      %v554 = vunpack.c.h.b16 %v467
      %v555 = vunpack.c.l.b16 %v468
      %v556 = vunpack.c.h.b16 %v468
      %v557 = vunpack.c.l.b16 %v469
      %v558 = vunpack.c.h.b16 %v469
      %v559 = vunpack.c.l.b16 %v470
      %v560 = vunpack.c.h.b16 %v470
      %v561 = vunpack.c.l.b16 %v471
      %v562 = vunpack.c.h.b16 %v471
      %v563 = vpack.c.b16 %v521, %v507
      %v564 = vpack.c.b16 %v522, %v508
      %v565 = vpack.c.b16 %v523, %v509
      %v566 = vpack.c.b16 %v524, %v510
      %v567 = vpack.c.b16 %v525, %v511
      %v568 = vpack.c.b16 %v526, %v512
      %v569 = vpack.c.b16 %v527, %v513
      %v570 = vpack.c.b16 %v528, %v514
      %v571 = vpack.c.b16 %v529, %v515
      %v572 = vpack.c.b16 %v530, %v516
      %v573 = vpack.c.b16 %v531, %v517
      %v574 = vpack.c.b16 %v532, %v518
      %v575 = vpack.c.b16 %v533, %v519
      %v576 = vpack.c.b16 %v534, %v520
      %v577 = vpack.c.b16 %v549, %v535
      %v578 = vpack.c.b16 %v550, %v536
      %v579 = vpack.c.b16 %v551, %v537
      %v580 = vpack.c.b16 %v552, %v538
      %v581 = vpack.c.b16 %v553, %v539
      %v582 = vpack.c.b16 %v554, %v540
      %v583 = vpack.c.b16 %v555, %v541
      %v584 = vpack.c.b16 %v556, %v542
      %v585 = vpack.c.b16 %v557, %v543
      %v586 = vpack.c.b16 %v558, %v544
      %v587 = vpack.c.b16 %v559, %v545
      %v588 = vpack.c.b16 %v560, %v546
      %v589 = vpack.c.b16 %v561, %v547
      %v590 = vpack.c.b16 %v562, %v548
      %v833 = vunpack.c.l.b16 %v228
      %v834 = vunpack.c.l.b16 %v229
      %v835 = vunpack.c.l.b16 %v230
      %v836 = vunpack.c.l.b16 %v231
      %v837 = vunpack.c.l.b16 %v232
      %v838 = vunpack.c.l.b16 %v233
      %v839 = vunpack.c.l.b16 %v234
      %v840 = vunpack.c.l.b16 %v235
      %v841 = vunpack.c.l.b16 %v236
      %v842 = vunpack.c.l.b16 %v237
      %v843 = vunpack.c.l.b16 %v238
      %v844 = vunpack.c.l.b16 %v239
      %v845 = vunpack.c.l.b16 %v240
      %v846 = vunpack.c.l.b16 %v241
      %v847 = vunpack.c.l.b16 %v242
      %v848 = vunpack.c.l.b16 %v243
      %v849 = vunpack.c.l.b16 %v244
      %v850 = vunpack.c.l.b16 %v245
      %v851 = vunpack.c.l.b16 %v246
      %v852 = vunpack.c.l.b16 %v247
      %v853 = vunpack.c.l.b16 %v248
      %v854 = vunpack.c.l.b16 %v249
      %v855 = vunpack.c.l.b16 %v250
      %v856 = vunpack.c.l.b16 %v251
      %v857 = vunpack.c.l.b16 %v252
      %v858 = vunpack.c.l.b16 %v253
      %v859 = vunpack.c.l.b16 %v254
      %v860 = vunpack.c.l.b16 %v255
      %v861 = vunpack.c.l.b16 %v256
      %v862 = vunpack.c.l.b16 %v257
      %v863 = vunpack.c.l.b16 %v258
      %v864 = vunpack.c.l.b16 %v259
      %v865 = vunpack.c.l.b16 %v260
      %v866 = vunpack.c.l.b16 %v261
      %v867 = vunpack.c.l.b16 %v262
      %v868 = vunpack.c.l.b16 %v263
      %v869 = vunpack.c.l.b16 %v264
      %v870 = vunpack.c.l.b16 %v265
      %v871 = vunpack.c.l.b16 %v266
      %v872 = vunpack.c.l.b16 %v267
      %v873 = vunpack.c.l.b16 %v268
      %v874 = vunpack.c.l.b16 %v269
      %v875 = vunpack.c.l.b16 %v270
      %v876 = vunpack.c.l.b16 %v271
      %v877 = vunpack.c.l.b16 %v272
      %v878 = vunpack.c.l.b16 %v273
      %v879 = vunpack.c.l.b16 %v274
      %v880 = vunpack.c.l.b16 %v275
      %v881 = vunpack.c.l.b16 %v276
      %v882 = vunpack.c.l.b16 %v277
      %v883 = vunpack.c.l.b16 %v278
      %v884 = vunpack.c.l.b16 %v279
      %v885 = vunpack.c.l.b16 %v280
      %v886 = vunpack.c.l.b16 %v281
      %v887 = vunpack.c.l.b16 %v282
      %v888 = vunpack.c.l.b16 %v283
      %v889 = vunpack.c.l.b16 %v284
      %v890 = vunpack.c.l.b16 %v285
      %v891 = vunpack.c.l.b16 %v286
      %v892 = vunpack.c.l.b16 %v287
      %v893 = vunpack.c.l.b16 %v288
      %v894 = vunpack.c.l.b16 %v289
      %v895 = vunpack.c.l.b16 %v290
      %v896 = vunpack.c.l.b16 %v291
      %v897 = vunpack.c.l.b16 %v292
      %v898 = vunpack.c.l.b16 %v293
      %v899 = vunpack.c.l.b16 %v294
      %v900 = vunpack.c.l.b16 %v295
      %v901 = vunpack.c.l.b16 %v296
      %v902 = vunpack.c.l.b16 %v297
      %v903 = vunpack.c.l.b16 %v298
      %v904 = vunpack.c.l.b16 %v299
      %v905 = vunpack.c.l.b16 %v300
      %v906 = vunpack.c.l.b16 %v301
      %v907 = vunpack.c.l.b16 %v302
      %v908 = vunpack.c.l.b16 %v303
      %v909 = vunpack.c.l.b16 %v304
      %v910 = vunpack.c.l.b16 %v305
      %v911 = vunpack.c.l.b16 %v306
      %v912 = vunpack.c.l.b16 %v307
      %v913 = vunpack.c.l.b16 %v308
      %v914 = vunpack.c.l.b16 %v309
      %v915 = vunpack.c.l.b16 %v310
      %v916 = vunpack.c.l.b16 %v311
      %v917 = vunpack.c.l.b16 %v312
      %v918 = vunpack.c.l.b16 %v313
      %v919 = vunpack.c.l.b16 %v314
      %v920 = vunpack.c.l.b16 %v315
      %v921 = vunpack.c.l.b16 %v316
      %v922 = vunpack.c.l.b16 %v317
      %v923 = vunpack.c.l.b16 %v318
      %v924 = vunpack.c.l.b16 %v319
      %v925 = vunpack.c.l.b16 %v320
      %v926 = vunpack.c.l.b16 %v321
      %v927 = vunpack.c.l.b16 %v322
      %v928 = vunpack.c.l.b16 %v323
      %v929 = vunpack.c.l.b16 %v324
      %v930 = vunpack.c.l.b16 %v325
      %v931 = vunpack.c.l.b16 %v326
      %v932 = vunpack.c.l.b16 %v327
      %v933 = vunpack.c.l.b16 %v328
      %v934 = vunpack.c.l.b16 %v329
      %v935 = vunpack.c.l.b16 %v330
      %v936 = vunpack.c.l.b16 %v331
      %v937 = vunpack.c.l.b16 %v332
      %v938 = vunpack.c.l.b16 %v333
      %v939 = vunpack.c.l.b16 %v334
      %v940 = vunpack.c.l.b16 %v335
      %v941 = vunpack.c.l.b16 %v336
      %v942 = vunpack.c.l.b16 %v337
      %v943 = vunpack.c.l.b16 %v338
      %v944 = vunpack.c.l.b16 %v339
      %v945 = vunpack.c.l.b16 %v340
      %v946 = vunpack.c.l.b16 %v341
      %v947 = vunpack.c.l.b16 %v342
      %v948 = vunpack.c.l.b16 %v343
      %v949 = vunpack.c.l.b16 %v344
      %v950 = vunpack.c.l.b16 %v345
      %v951 = vunpack.c.l.b16 %v346
      %v952 = vunpack.c.l.b16 %v347
      %v953 = vunpack.c.l.b16 %v348
      %v954 = vunpack.c.l.b16 %v349
      %v955 = vunpack.c.l.b16 %v350
      %v956 = vunpack.c.l.b16 %v351
      %v957 = vunpack.c.l.b16 %v352
      %v958 = vunpack.c.l.b16 %v353
      %v959 = vunpack.c.l.b16 %v354
      %v960 = vunpack.c.l.b16 %v355
      %v961 = vunpack.c.l.b16 %v356
      %v962 = vunpack.c.l.b16 %v357
      %v963 = vunpack.c.l.b16 %v358
      %v964 = vunpack.c.l.b16 %v359
      %v965 = vunpack.c.l.b16 %v360
      %v966 = vunpack.c.l.b16 %v361
      %v967 = vunpack.c.l.b16 %v362
      %v968 = vunpack.c.l.b16 %v363
      %v969 = vunpack.c.l.b16 %v364
      %v970 = vunpack.c.l.b16 %v365
      %v971 = vunpack.c.l.b16 %v366
      %v972 = vunpack.c.l.b16 %v367
      %v973 = vunpack.c.l.b16 %v368
      %v974 = vunpack.c.l.b16 %v369
      %v975 = vunpack.c.l.b16 %v370
      %v976 = vunpack.c.l.b16 %v371
      %v977 = vunpack.c.l.b16 %v372
      %v978 = vunpack.c.l.b16 %v373
      %v979 = vunpack.c.l.b16 %v374
      %v980 = vunpack.c.l.b16 %v375
      %v981 = vunpack.c.l.b16 %v376
      %v982 = vunpack.c.l.b16 %v377
      %v983 = vunpack.c.l.b16 %v378
      %v984 = vunpack.c.l.b16 %v379
      %v985 = vunpack.c.l.b16 %v380
      %v986 = vunpack.c.l.b16 %v381
      %v987 = vunpack.c.l.b16 %v382
      %v988 = vunpack.c.l.b16 %v383
      %v989 = vunpack.c.l.b16 %v384
      %v990 = vunpack.c.l.b16 %v385
      %v991 = vunpack.c.l.b16 %v386
      %v992 = vunpack.c.l.b16 %v387
      %v993 = vunpack.c.l.b16 %v388
      %v994 = vunpack.c.l.b16 %v389
      %v995 = vunpack.c.l.b16 %v390
      %v996 = vunpack.c.l.b16 %v391
      %v997 = vunpack.c.l.b16 %v392
      %v998 = vunpack.c.l.b16 %v393
      %v999 = vunpack.c.l.b16 %v394
      %v1000 = vunpack.c.l.b16 %v395
      %v1001 = vunpack.c.l.b16 %v396
      %v1002 = vunpack.c.l.b16 %v397
      %v1003 = vunpack.c.l.b16 %v398
      %v1004 = vunpack.c.l.b16 %v399
      %v1005 = vunpack.c.l.b16 %v400
      %v1006 = vunpack.c.l.b16 %v401
      %v1007 = vunpack.c.l.b16 %v402
      %v1008 = vunpack.c.l.b16 %v403
      %v1009 = vunpack.c.l.b16 %v404
      %v1010 = vunpack.c.l.b16 %v405
      %v1011 = vunpack.c.l.b16 %v406
      %v1012 = vunpack.c.l.b16 %v407
      %v1013 = vunpack.c.l.b16 %v408
      %v1014 = vunpack.c.l.b16 %v409
      %v1015 = vunpack.c.l.b16 %v410
      %v1016 = vunpack.c.l.b16 %v411
      %v1017 = vunpack.c.l.b16 %v412
      %v1018 = vunpack.c.l.b16 %v413
      %v1019 = vunpack.c.l.b16 %v414
      %v1020 = vunpack.c.l.b16 %v415
      %v1021 = vunpack.c.l.b16 %v416
      %v1022 = vunpack.c.l.b16 %v417
      %v1023 = vunpack.c.l.b16 %v418
      %v1024 = vunpack.c.l.b16 %v419
      %v1025 = vunpack.c.l.b16 %v420
      %v1026 = vunpack.c.l.b16 %v421
      %v1027 = vunpack.c.l.b16 %v422
      %v1028 = vunpack.c.l.b16 %v423
      %v1029 = vunpack.c.l.b16 %v424
      %v1030 = vunpack.c.l.b16 %v425
      %v1031 = vunpack.c.l.b16 %v426
      %v1032 = vunpack.c.l.b16 %v427
      %v1033 = vunpack.c.l.b16 %v428
      %v1034 = vunpack.c.l.b16 %v429
      %v1035 = vunpack.c.l.b16 %v430
      %v1036 = vunpack.c.l.b16 %v431
      %v1037 = vunpack.c.l.b16 %v432
      %v1038 = vunpack.c.l.b16 %v433
      %v1039 = vunpack.c.l.b16 %v434
      %v1040 = vunpack.c.l.b16 %v435
      %v1041 = vunpack.c.l.b16 %v436
      %v1042 = vunpack.c.l.b16 %v437
      %v1043 = vunpack.c.l.b16 %v438
      %v1044 = vunpack.c.l.b16 %v439
      %v1045 = vunpack.c.l.b16 %v440
      %v1046 = vunpack.c.l.b16 %v441
      %v1047 = vunpack.c.l.b16 %v442
      %v1048 = vunpack.c.l.b16 %v443
      %v1049 = vpack.c.b16 %v834, %v833
      %v1050 = vpack.c.b16 %v836, %v835
      %v1051 = vpack.c.b16 %v838, %v837
      %v1052 = vpack.c.b16 %v840, %v839
      %v1053 = vpack.c.b16 %v842, %v841
      %v1054 = vpack.c.b16 %v844, %v843
      %v1055 = vpack.c.b16 %v846, %v845
      %v1056 = vpack.c.b16 %v848, %v847
      %v1057 = vpack.c.b16 %v850, %v849
      %v1058 = vpack.c.b16 %v852, %v851
      %v1059 = vpack.c.b16 %v854, %v853
      %v1060 = vpack.c.b16 %v856, %v855
      %v1061 = vpack.c.b16 %v858, %v857
      %v1062 = vpack.c.b16 %v860, %v859
      %v1063 = vpack.c.b16 %v862, %v861
      %v1064 = vpack.c.b16 %v864, %v863
      %v1065 = vpack.c.b16 %v866, %v865
      %v1066 = vpack.c.b16 %v868, %v867
      %v1067 = vpack.c.b16 %v870, %v869
      %v1068 = vpack.c.b16 %v872, %v871
      %v1069 = vpack.c.b16 %v874, %v873
      %v1070 = vpack.c.b16 %v876, %v875
      %v1071 = vpack.c.b16 %v878, %v877
      %v1072 = vpack.c.b16 %v880, %v879
      %v1073 = vpack.c.b16 %v882, %v881
      %v1074 = vpack.c.b16 %v884, %v883
      %v1075 = vpack.c.b16 %v886, %v885
      %v1076 = vpack.c.b16 %v888, %v887
      %v1077 = vpack.c.b16 %v890, %v889
      %v1078 = vpack.c.b16 %v892, %v891
      %v1079 = vpack.c.b16 %v894, %v893
      %v1080 = vpack.c.b16 %v896, %v895
      %v1081 = vpack.c.b16 %v898, %v897
      %v1082 = vpack.c.b16 %v900, %v899
      %v1083 = vpack.c.b16 %v902, %v901
      %v1084 = vpack.c.b16 %v904, %v903
      %v1085 = vpack.c.b16 %v906, %v905
      %v1086 = vpack.c.b16 %v908, %v907
      %v1087 = vpack.c.b16 %v910, %v909
      %v1088 = vpack.c.b16 %v912, %v911
      %v1089 = vpack.c.b16 %v914, %v913
      %v1090 = vpack.c.b16 %v916, %v915
      %v1091 = vpack.c.b16 %v918, %v917
      %v1092 = vpack.c.b16 %v920, %v919
      %v1093 = vpack.c.b16 %v922, %v921
      %v1094 = vpack.c.b16 %v924, %v923
      %v1095 = vpack.c.b16 %v926, %v925
      %v1096 = vpack.c.b16 %v928, %v927
      %v1097 = vpack.c.b16 %v930, %v929
      %v1098 = vpack.c.b16 %v932, %v931
      %v1099 = vpack.c.b16 %v934, %v933
      %v1100 = vpack.c.b16 %v936, %v935
      %v1101 = vpack.c.b16 %v938, %v937
      %v1102 = vpack.c.b16 %v940, %v939
      %v1103 = vpack.c.b16 %v942, %v941
      %v1104 = vpack.c.b16 %v944, %v943
      %v1105 = vpack.c.b16 %v946, %v945
      %v1106 = vpack.c.b16 %v948, %v947
      %v1107 = vpack.c.b16 %v950, %v949
      %v1108 = vpack.c.b16 %v952, %v951
      %v1109 = vpack.c.b16 %v954, %v953
      %v1110 = vpack.c.b16 %v956, %v955
      %v1111 = vpack.c.b16 %v958, %v957
      %v1112 = vpack.c.b16 %v960, %v959
      %v1113 = vpack.c.b16 %v962, %v961
      %v1114 = vpack.c.b16 %v964, %v963
      %v1115 = vpack.c.b16 %v966, %v965
      %v1116 = vpack.c.b16 %v968, %v967
      %v1117 = vpack.c.b16 %v970, %v969
      %v1118 = vpack.c.b16 %v972, %v971
      %v1119 = vpack.c.b16 %v974, %v973
      %v1120 = vpack.c.b16 %v976, %v975
      %v1121 = vpack.c.b16 %v978, %v977
      %v1122 = vpack.c.b16 %v980, %v979
      %v1123 = vpack.c.b16 %v982, %v981
      %v1124 = vpack.c.b16 %v984, %v983
      %v1125 = vpack.c.b16 %v986, %v985
      %v1126 = vpack.c.b16 %v988, %v987
      %v1127 = vpack.c.b16 %v990, %v989
      %v1128 = vpack.c.b16 %v992, %v991
      %v1129 = vpack.c.b16 %v994, %v993
      %v1130 = vpack.c.b16 %v996, %v995
      %v1131 = vpack.c.b16 %v998, %v997
      %v1132 = vpack.c.b16 %v1000, %v999
      %v1133 = vpack.c.b16 %v1002, %v1001
      %v1134 = vpack.c.b16 %v1004, %v1003
      %v1135 = vpack.c.b16 %v1006, %v1005
      %v1136 = vpack.c.b16 %v1008, %v1007
      %v1137 = vpack.c.b16 %v1010, %v1009
      %v1138 = vpack.c.b16 %v1012, %v1011
      %v1139 = vpack.c.b16 %v1014, %v1013
      %v1140 = vpack.c.b16 %v1016, %v1015
      %v1141 = vpack.c.b16 %v1018, %v1017
      %v1142 = vpack.c.b16 %v1020, %v1019
      %v1143 = vpack.c.b16 %v1022, %v1021
      %v1144 = vpack.c.b16 %v1024, %v1023
      %v1145 = vpack.c.b16 %v1026, %v1025
      %v1146 = vpack.c.b16 %v1028, %v1027
      %v1147 = vpack.c.b16 %v1030, %v1029
      %v1148 = vpack.c.b16 %v1032, %v1031
      %v1149 = vpack.c.b16 %v1034, %v1033
      %v1150 = vpack.c.b16 %v1036, %v1035
      %v1151 = vpack.c.b16 %v1038, %v1037
      %v1152 = vpack.c.b16 %v1040, %v1039
      %v1153 = vpack.c.b16 %v1042, %v1041
      %v1154 = vpack.c.b16 %v1044, %v1043
      %v1155 = vpack.c.b16 %v1046, %v1045
      %v1156 = vpack.c.b16 %v1048, %v1047
      %vm1265 = vcmask 523264
      %v1267 = vsel %vm1265, %v576, 0
      %v1270 = vsel %vm1265, %v590, 0
      %1272 = vmatprep.subr.bf16.mxu0 0
      %1273 = vmatpush1.bf16.msra.mxu0 %v1049
      %1274 = vmatprep.subr.bf16.mxu0 0
      %1275 = vmatpush1.bf16.msra.mxu0 %v1050
      %1276 = vmatprep.subr.bf16.mxu0 0
      %1277 = vmatpush1.bf16.msra.mxu0 %v1051
      %1278 = vmatprep.subr.bf16.mxu0 0
      %1279 = vmatpush1.bf16.msra.mxu0 %v1052
      %1280 = vmatprep.subr.bf16.mxu0 0
      %1281 = vmatpush1.bf16.msra.mxu0 %v1053
      %1282 = vmatprep.subr.bf16.mxu0 0
      %1283 = vmatpush1.bf16.msra.mxu0 %v1054
      %1284 = vmatprep.subr.bf16.mxu0 0
      %1285 = vmatpush1.bf16.msra.mxu0 %v1055
      %1286 = vmatprep.subr.bf16.mxu0 0
      %1287 = vmatpush1.bf16.msra.mxu0 %v1056
      %1288 = vmatprep.subr.bf16.mxu0 0
      %1289 = vmatpush1.bf16.msra.mxu0 %v1057
      %1290 = vmatprep.subr.bf16.mxu0 0
      %1291 = vmatpush1.bf16.msra.mxu0 %v1058
      %1292 = vmatprep.subr.bf16.mxu0 0
      %1293 = vmatpush1.bf16.msra.mxu0 %v1059
      %1294 = vmatprep.subr.bf16.mxu0 0
      %1295 = vmatpush1.bf16.msra.mxu0 %v1060
      %1296 = vmatprep.subr.bf16.mxu0 0
      %1297 = vmatpush1.bf16.msra.mxu0 %v1061
      %1298 = vmatprep.subr.bf16.mxu0 0
      %1299 = vmatpush1.bf16.msra.mxu0 %v1062
      %1300 = vmatprep.subr.bf16.mxu0 0
      %1301 = vmatpush1.bf16.msra.mxu0 %v1063
      %1302 = vmatprep.subr.bf16.mxu0 0
      %1303 = vmatpush1.bf16.msra.mxu0 %v1064
      %1304 = vmatprep.mubr.bf16.mxu0 %v564
      %1305 = vmatmul.mubr.bf16.gmra.mrb[0].mxu0 %v563
      %v1306 = vpop.f32.mrb[0].mxu0
      %v1307 = vadd.f32 %v477, %v1306
      %v1308 = vpop.f32.mrb[0].mxu0
      %v1309 = vpop.f32.mrb[0].mxu0
      %v1310 = vadd.f32 %v477, %v1309
      %v1311 = vpop.f32.mrb[0].mxu0
      %1312 = vmatprep.mubr.bf16.mxu0 %v578
      %1313 = vmatmul.mubr.bf16.gmra.mrb[0].mxu0 %v577
      %v1314 = vpop.f32.mrb[0].mxu0
      %v1315 = vadd.f32 %v477, %v1314
      %v1316 = vpop.f32.mrb[0].mxu0
      %v1317 = vpop.f32.mrb[0].mxu0
      %v1318 = vadd.f32 %v477, %v1317
      %v1319 = vpop.f32.mrb[0].mxu0
      %1320 = vdwg.mxu0
      %1321 = vmatprep.subr.bf16.mxu0 0
      %1322 = vmatpush1.bf16.msra.mxu0 %v1065
      %1323 = vmatprep.subr.bf16.mxu0 0
      %1324 = vmatpush1.bf16.msra.mxu0 %v1066
      %1325 = vmatprep.subr.bf16.mxu0 0
      %1326 = vmatpush1.bf16.msra.mxu0 %v1067
      %1327 = vmatprep.subr.bf16.mxu0 0
      %1328 = vmatpush1.bf16.msra.mxu0 %v1068
      %1329 = vmatprep.subr.bf16.mxu0 0
      %1330 = vmatpush1.bf16.msra.mxu0 %v1069
      %1331 = vmatprep.subr.bf16.mxu0 0
      %1332 = vmatpush1.bf16.msra.mxu0 %v1070
      %1333 = vmatprep.subr.bf16.mxu0 0
      %1334 = vmatpush1.bf16.msra.mxu0 %v1071
      %1335 = vmatprep.subr.bf16.mxu0 0
      %1336 = vmatpush1.bf16.msra.mxu0 %v1072
      %1337 = vmatprep.subr.bf16.mxu0 0
      %1338 = vmatpush1.bf16.msra.mxu0 %v1073
      %1339 = vmatprep.subr.bf16.mxu0 0
      %1340 = vmatpush1.bf16.msra.mxu0 %v1074
      %1341 = vmatprep.subr.bf16.mxu0 0
      %1342 = vmatpush1.bf16.msra.mxu0 %v1075
      %1343 = vmatprep.subr.bf16.mxu0 0
      %1344 = vmatpush1.bf16.msra.mxu0 %v1076
      %1345 = vmatprep.subr.bf16.mxu0 0
      %1346 = vmatpush1.bf16.msra.mxu0 %v1077
      %1347 = vmatprep.subr.bf16.mxu0 0
      %1348 = vmatpush1.bf16.msra.mxu0 %v1078
      %1349 = vmatprep.subr.bf16.mxu0 0
      %1350 = vmatpush1.bf16.msra.mxu0 %v1079
      %1351 = vmatprep.subr.bf16.mxu0 0
      %1352 = vmatpush1.bf16.msra.mxu0 %v1080
      %1353 = vmatprep.mubr.bf16.mxu0 %v566
      %1354 = vmatmul.mubr.bf16.gmra.mrb[0].mxu0 %v565
      %v1355 = vpop.f32.mrb[0].mxu0
      %v1356 = vadd.f32 %v1307, %v1355
      %v1357 = vpop.f32.mrb[0].mxu0
      %v1358 = vpop.f32.mrb[0].mxu0
      %v1359 = vadd.f32 %v1310, %v1358
      %v1360 = vpop.f32.mrb[0].mxu0
      %1361 = vmatprep.mubr.bf16.mxu0 %v580
      %1362 = vmatmul.mubr.bf16.gmra.mrb[0].mxu0 %v579
      %v1363 = vpop.f32.mrb[0].mxu0
      %v1364 = vadd.f32 %v1315, %v1363
      %v1365 = vpop.f32.mrb[0].mxu0
      %v1366 = vpop.f32.mrb[0].mxu0
      %v1367 = vadd.f32 %v1318, %v1366
      %v1368 = vpop.f32.mrb[0].mxu0
      %1369 = vdwg.mxu0
      %1370 = vmatprep.subr.bf16.mxu0 0
      %1371 = vmatpush1.bf16.msra.mxu0 %v1081
      %1372 = vmatprep.subr.bf16.mxu0 0
      %1373 = vmatpush1.bf16.msra.mxu0 %v1082
      %1374 = vmatprep.subr.bf16.mxu0 0
      %1375 = vmatpush1.bf16.msra.mxu0 %v1083
      %1376 = vmatprep.subr.bf16.mxu0 0
      %1377 = vmatpush1.bf16.msra.mxu0 %v1084
      %1378 = vmatprep.subr.bf16.mxu0 0
      %1379 = vmatpush1.bf16.msra.mxu0 %v1085
      %1380 = vmatprep.subr.bf16.mxu0 0
      %1381 = vmatpush1.bf16.msra.mxu0 %v1086
      %1382 = vmatprep.subr.bf16.mxu0 0
      %1383 = vmatpush1.bf16.msra.mxu0 %v1087
      %1384 = vmatprep.subr.bf16.mxu0 0
      %1385 = vmatpush1.bf16.msra.mxu0 %v1088
      %1386 = vmatprep.subr.bf16.mxu0 0
      %1387 = vmatpush1.bf16.msra.mxu0 %v1089
      %1388 = vmatprep.subr.bf16.mxu0 0
      %1389 = vmatpush1.bf16.msra.mxu0 %v1090
      %1390 = vmatprep.subr.bf16.mxu0 0
      %1391 = vmatpush1.bf16.msra.mxu0 %v1091
      %1392 = vmatprep.subr.bf16.mxu0 0
      %1393 = vmatpush1.bf16.msra.mxu0 %v1092
      %1394 = vmatprep.subr.bf16.mxu0 0
      %1395 = vmatpush1.bf16.msra.mxu0 %v1093
      %1396 = vmatprep.subr.bf16.mxu0 0
      %1397 = vmatpush1.bf16.msra.mxu0 %v1094
      %1398 = vmatprep.subr.bf16.mxu0 0
      %1399 = vmatpush1.bf16.msra.mxu0 %v1095
      %1400 = vmatprep.subr.bf16.mxu0 0
      %1401 = vmatpush1.bf16.msra.mxu0 %v1096
      %1402 = vmatprep.mubr.bf16.mxu0 %v568
      %1403 = vmatmul.mubr.bf16.gmra.mrb[0].mxu0 %v567
      %v1404 = vpop.f32.mrb[0].mxu0
      %v1405 = vadd.f32 %v1356, %v1404
      %v1406 = vpop.f32.mrb[0].mxu0
      %v1407 = vpop.f32.mrb[0].mxu0
      %v1408 = vadd.f32 %v1359, %v1407
      %v1409 = vpop.f32.mrb[0].mxu0
      %1410 = vmatprep.mubr.bf16.mxu0 %v582
      %1411 = vmatmul.mubr.bf16.gmra.mrb[0].mxu0 %v581
      %v1412 = vpop.f32.mrb[0].mxu0
      %v1413 = vadd.f32 %v1364, %v1412
      %v1414 = vpop.f32.mrb[0].mxu0
      %v1415 = vpop.f32.mrb[0].mxu0
      %v1416 = vadd.f32 %v1367, %v1415
      %v1417 = vpop.f32.mrb[0].mxu0
      %1418 = vdwg.mxu0
      %1419 = vmatprep.subr.bf16.mxu0 0
      %1420 = vmatpush1.bf16.msra.mxu0 %v1097
      %1421 = vmatprep.subr.bf16.mxu0 0
      %1422 = vmatpush1.bf16.msra.mxu0 %v1098
      %1423 = vmatprep.subr.bf16.mxu0 0
      %1424 = vmatpush1.bf16.msra.mxu0 %v1099
      %1425 = vmatprep.subr.bf16.mxu0 0
      %1426 = vmatpush1.bf16.msra.mxu0 %v1100
      %1427 = vmatprep.subr.bf16.mxu0 0
      %1428 = vmatpush1.bf16.msra.mxu0 %v1101
      %1429 = vmatprep.subr.bf16.mxu0 0
      %1430 = vmatpush1.bf16.msra.mxu0 %v1102
      %1431 = vmatprep.subr.bf16.mxu0 0
      %1432 = vmatpush1.bf16.msra.mxu0 %v1103
      %1433 = vmatprep.subr.bf16.mxu0 0
      %1434 = vmatpush1.bf16.msra.mxu0 %v1104
      %1435 = vmatprep.subr.bf16.mxu0 0
      %1436 = vmatpush1.bf16.msra.mxu0 %v1105
      %1437 = vmatprep.subr.bf16.mxu0 0
      %1438 = vmatpush1.bf16.msra.mxu0 %v1106
      %1439 = vmatprep.subr.bf16.mxu0 0
      %1440 = vmatpush1.bf16.msra.mxu0 %v1107
      %1441 = vmatprep.subr.bf16.mxu0 0
      %1442 = vmatpush1.bf16.msra.mxu0 %v1108
      %1443 = vmatprep.subr.bf16.mxu0 0
      %1444 = vmatpush1.bf16.msra.mxu0 %v1109
      %1445 = vmatprep.subr.bf16.mxu0 0
      %1446 = vmatpush1.bf16.msra.mxu0 %v1110
      %1447 = vmatprep.subr.bf16.mxu0 0
      %1448 = vmatpush1.bf16.msra.mxu0 %v1111
      %1449 = vmatprep.subr.bf16.mxu0 0
      %1450 = vmatpush1.bf16.msra.mxu0 %v1112
      %1451 = vmatprep.mubr.bf16.mxu0 %v570
      %1452 = vmatmul.mubr.bf16.gmra.mrb[0].mxu0 %v569
      %v1453 = vpop.f32.mrb[0].mxu0
      %v1454 = vadd.f32 %v1405, %v1453
      %v1455 = vpop.f32.mrb[0].mxu0
      %v1456 = vpop.f32.mrb[0].mxu0
      %v1457 = vadd.f32 %v1408, %v1456
      %v1458 = vpop.f32.mrb[0].mxu0
      %1459 = vmatprep.mubr.bf16.mxu0 %v584
      %1460 = vmatmul.mubr.bf16.gmra.mrb[0].mxu0 %v583
      %v1461 = vpop.f32.mrb[0].mxu0
      %v1462 = vadd.f32 %v1413, %v1461
      %v1463 = vpop.f32.mrb[0].mxu0
      %v1464 = vpop.f32.mrb[0].mxu0
      %v1465 = vadd.f32 %v1416, %v1464
      %v1466 = vpop.f32.mrb[0].mxu0
      %1467 = vdwg.mxu0
      %1468 = vmatprep.subr.bf16.mxu0 0
      %1469 = vmatpush1.bf16.msra.mxu0 %v1113
      %1470 = vmatprep.subr.bf16.mxu0 0
      %1471 = vmatpush1.bf16.msra.mxu0 %v1114
      %1472 = vmatprep.subr.bf16.mxu0 0
      %1473 = vmatpush1.bf16.msra.mxu0 %v1115
      %1474 = vmatprep.subr.bf16.mxu0 0
      %1475 = vmatpush1.bf16.msra.mxu0 %v1116
      %1476 = vmatprep.subr.bf16.mxu0 0
      %1477 = vmatpush1.bf16.msra.mxu0 %v1117
      %1478 = vmatprep.subr.bf16.mxu0 0
      %1479 = vmatpush1.bf16.msra.mxu0 %v1118
      %1480 = vmatprep.subr.bf16.mxu0 0
      %1481 = vmatpush1.bf16.msra.mxu0 %v1119
      %1482 = vmatprep.subr.bf16.mxu0 0
      %1483 = vmatpush1.bf16.msra.mxu0 %v1120
      %1484 = vmatprep.subr.bf16.mxu0 0
      %1485 = vmatpush1.bf16.msra.mxu0 %v1121
      %1486 = vmatprep.subr.bf16.mxu0 0
      %1487 = vmatpush1.bf16.msra.mxu0 %v1122
      %1488 = vmatprep.subr.bf16.mxu0 0
      %1489 = vmatpush1.bf16.msra.mxu0 %v1123
      %1490 = vmatprep.subr.bf16.mxu0 0
      %1491 = vmatpush1.bf16.msra.mxu0 %v1124
      %1492 = vmatprep.subr.bf16.mxu0 0
      %1493 = vmatpush1.bf16.msra.mxu0 %v1125
      %1494 = vmatprep.subr.bf16.mxu0 0
      %1495 = vmatpush1.bf16.msra.mxu0 %v1126
      %1496 = vmatprep.subr.bf16.mxu0 0
      %1497 = vmatpush1.bf16.msra.mxu0 %v1127
      %1498 = vmatprep.subr.bf16.mxu0 0
      %1499 = vmatpush1.bf16.msra.mxu0 %v1128
      %1500 = vmatprep.mubr.bf16.mxu0 %v572
      %1501 = vmatmul.mubr.bf16.gmra.mrb[0].mxu0 %v571
      %v1502 = vpop.f32.mrb[0].mxu0
      %v1503 = vadd.f32 %v1454, %v1502
      %v1504 = vpop.f32.mrb[0].mxu0
      %v1505 = vpop.f32.mrb[0].mxu0
      %v1506 = vadd.f32 %v1457, %v1505
      %v1507 = vpop.f32.mrb[0].mxu0
      %1508 = vmatprep.mubr.bf16.mxu0 %v586
      %1509 = vmatmul.mubr.bf16.gmra.mrb[0].mxu0 %v585
      %v1510 = vpop.f32.mrb[0].mxu0
      %v1511 = vadd.f32 %v1462, %v1510
      %v1512 = vpop.f32.mrb[0].mxu0
      %v1513 = vpop.f32.mrb[0].mxu0
      %v1514 = vadd.f32 %v1465, %v1513
      %v1515 = vpop.f32.mrb[0].mxu0
      %1516 = vdwg.mxu0
      %1517 = vmatprep.subr.bf16.mxu0 0
      %1518 = vmatpush1.bf16.msra.mxu0 %v1129
      %1519 = vmatprep.subr.bf16.mxu0 0
      %1520 = vmatpush1.bf16.msra.mxu0 %v1130
      %1521 = vmatprep.subr.bf16.mxu0 0
      %1522 = vmatpush1.bf16.msra.mxu0 %v1131
      %1523 = vmatprep.subr.bf16.mxu0 0
      %1524 = vmatpush1.bf16.msra.mxu0 %v1132
      %1525 = vmatprep.subr.bf16.mxu0 0
      %1526 = vmatpush1.bf16.msra.mxu0 %v1133
      %1527 = vmatprep.subr.bf16.mxu0 0
      %1528 = vmatpush1.bf16.msra.mxu0 %v1134
      %1529 = vmatprep.subr.bf16.mxu0 0
      %1530 = vmatpush1.bf16.msra.mxu0 %v1135
      %1531 = vmatprep.subr.bf16.mxu0 0
      %1532 = vmatpush1.bf16.msra.mxu0 %v1136
      %1533 = vmatprep.subr.bf16.mxu0 0
      %1534 = vmatpush1.bf16.msra.mxu0 %v1137
      %1535 = vmatprep.subr.bf16.mxu0 0
      %1536 = vmatpush1.bf16.msra.mxu0 %v1138
      %1537 = vmatprep.subr.bf16.mxu0 0
      %1538 = vmatpush1.bf16.msra.mxu0 %v1139
      %1539 = vmatprep.subr.bf16.mxu0 0
      %1540 = vmatpush1.bf16.msra.mxu0 %v1140
      %1541 = vmatprep.subr.bf16.mxu0 0
      %1542 = vmatpush1.bf16.msra.mxu0 %v1141
      %1543 = vmatprep.subr.bf16.mxu0 0
      %1544 = vmatpush1.bf16.msra.mxu0 %v1142
      %1545 = vmatprep.subr.bf16.mxu0 0
      %1546 = vmatpush1.bf16.msra.mxu0 %v1143
      %1547 = vmatprep.subr.bf16.mxu0 0
      %1548 = vmatpush1.bf16.msra.mxu0 %v1144
      %1549 = vmatprep.mubr.bf16.mxu0 %v574
      %1550 = vmatmul.mubr.bf16.gmra.mrb[0].mxu0 %v573
      %v1551 = vpop.f32.mrb[0].mxu0
      %v1552 = vadd.f32 %v1503, %v1551
      %v1553 = vpop.f32.mrb[0].mxu0
      %v1554 = vpop.f32.mrb[0].mxu0
      %v1555 = vadd.f32 %v1506, %v1554
      %v1556 = vpop.f32.mrb[0].mxu0
      %1557 = vmatprep.mubr.bf16.mxu0 %v588
      %1558 = vmatmul.mubr.bf16.gmra.mrb[0].mxu0 %v587
      %v1559 = vpop.f32.mrb[0].mxu0
      %v1560 = vadd.f32 %v1511, %v1559
      %v1561 = vpop.f32.mrb[0].mxu0
      %v1562 = vpop.f32.mrb[0].mxu0
      %v1563 = vadd.f32 %v1514, %v1562
      %v1564 = vpop.f32.mrb[0].mxu0
      %1565 = vdwg.mxu0
      %1566 = vmatprep.subr.bf16.mxu0 0
      %1567 = vmatpush1.bf16.msra.mxu0 %v1145
      %1568 = vmatprep.subr.bf16.mxu0 0
      %1569 = vmatpush1.bf16.msra.mxu0 %v1146
      %1570 = vmatprep.subr.bf16.mxu0 0
      %1571 = vmatpush1.bf16.msra.mxu0 %v1147
      %1572 = vmatprep.subr.bf16.mxu0 0
      %1573 = vmatpush1.bf16.msra.mxu0 %v1148
      %1574 = vmatprep.subr.bf16.mxu0 0
      %1575 = vmatpush1.bf16.msra.mxu0 %v1149
      %1576 = vmatprep.subr.bf16.mxu0 0
      %1577 = vmatpush1.bf16.msra.mxu0 %v1150
      %1578 = vmatprep.subr.bf16.mxu0 0
      %1579 = vmatpush1.bf16.msra.mxu0 %v1151
      %1580 = vmatprep.subr.bf16.mxu0 0
      %1581 = vmatpush1.bf16.msra.mxu0 %v1152
      %1582 = vmatprep.subr.bf16.mxu0 0
      %1583 = vmatpush1.bf16.msra.mxu0 %v1153
      %1584 = vmatprep.subr.bf16.mxu0 0
      %1585 = vmatpush1.bf16.msra.mxu0 %v1154
      %1586 = vmatprep.subr.bf16.mxu0 0
      %1587 = vmatpush1.bf16.msra.mxu0 %v1155
      %1588 = vmatprep.subr.bf16.mxu0 0
      %1589 = vmatpush1.bf16.msra.mxu0 %v1156
      %1590 = vmatprep.subr.bf16.mxu0 0
      %1591 = vmatpush1.bf16.msra.mxu0 0
      %1592 = vmatprep.subr.bf16.mxu0 0
      %1593 = vmatpush1.bf16.msra.mxu0 0
      %1594 = vmatprep.subr.bf16.mxu0 0
      %1595 = vmatpush1.bf16.msra.mxu0 0
      %1596 = vmatprep.subr.bf16.mxu0 0
      %1597 = vmatpush1.bf16.msra.mxu0 0
      %1598 = vmatprep.mubr.bf16.mxu0 %v1267
      %1599 = vmatmul.mubr.bf16.gmra.mrb[0].mxu0 %v575
      %v1600 = vpop.f32.mrb[0].mxu0
      %v1601 = vadd.f32 %v1552, %v1600
      %v1602 = vpop.f32.mrb[0].mxu0
      %v1603 = vpop.f32.mrb[0].mxu0
      %v1604 = vadd.f32 %v1555, %v1603
      %v1605 = vpop.f32.mrb[0].mxu0
      %1606 = vmatprep.mubr.bf16.mxu0 %v1270
      %1607 = vmatmul.mubr.bf16.gmra.mrb[0].mxu0 %v589
      %v1608 = vpop.f32.mrb[0].mxu0
      %v1609 = vadd.f32 %v1560, %v1608
      %v1610 = vpop.f32.mrb[0].mxu0
      %v1611 = vpop.f32.mrb[0].mxu0
      %v1612 = vadd.f32 %v1563, %v1611
      %v1613 = vpop.f32.mrb[0].mxu0
      %1614 = vdwg.mxu0
      %v1615 = vxor.u32 %v1601, 2147483648
      %v1616 = vxor.u32 %v1604, 2147483648
      %v1617 = vxor.u32 %v1609, 2147483648
      %v1618 = vxor.u32 %v1612, 2147483648
      %v1619 = vmul.f32 %v1615, 1.442695
      %v1620 = vpow.pop %v1619
      %v1621 = vmul.f32 %v1616, 1.442695
      %v1622 = vpow.pop %v1621
      %v1623 = vmul.f32 %v1617, 1.442695
      %v1624 = vpow.pop %v1623
      %v1625 = vmul.f32 %v1618, 1.442695
      %v1626 = vpow.pop %v1625
      %v1627 = vadd.f32 %v1620, 1.0
      %v1628 = vadd.f32 %v1622, 1.0
      %v1629 = vadd.f32 %v1624, 1.0
      %v1630 = vadd.f32 %v1626, 1.0
      %v1631 = vrcp.pop %v1627
      %v1632 = vmul.f32 1.0, %v1631
      %v1633 = vrcp.pop %v1628
      %v1634 = vmul.f32 1.0, %v1633
      %v1635 = vrcp.pop %v1629
      %v1636 = vmul.f32 1.0, %v1635
      %v1637 = vrcp.pop %v1630
      %v1638 = vmul.f32 1.0, %v1637
      %v1639 = vmul.f32 %v1601, %v1632
      %v1640 = vmul.f32 %v1604, %v1634
      %v1641 = vmul.f32 %v1609, %v1636
      %v1642 = vmul.f32 %v1612, %v1638
      %v1643 = vpack.c.bf16 %v1640, %v1639
      %v1644 = vpack.c.bf16 %v1642, %v1641
      %v1647 = vunpack.c.l.b16 %v1643
      %v1648 = vunpack.c.h.b16 %v1643
      %v1649 = vunpack.c.l.b16 %v1644
      %v1650 = vunpack.c.h.b16 %v1644
      %v1651 = vpack.c.b16 %v1647, %v1647
      %v1652 = vpack.c.b16 %v1648, %v1648
      %v1653 = vpack.c.b16 %v1649, %v1649
      %v1654 = vpack.c.b16 %v1650, %v1650
      %1659 = vst [vmem:[%s225] sm:$0xf] %v1651
      %1660 = vst [vmem:[%s225 + $0x4] sm:$0xf] %v1652
      %1661 = vst [vmem:[%s225 + $0x8] sm:$0xf] %v1653
      %1662 = vst [vmem:[%s225 + $0xc] sm:$0xf] %v1654
      %s1663 = smul.u32 4, %s19
      %p1664 = scmp.lt.s32.totalorder %s18, 1
      %s1665 = scalar_select %p1664, %s18, 1
      %p1666 = scmp.lt.s32.totalorder %s1663, 3
      %s1667 = scalar_select %p1666, %s1663, 3
      %s1668 = smul.addr %s1665, 4
      %s1669 = sadd.s32 %s1667, %s1668
      %s1670 = smul.addr %s1669, 4
      %s1671 = scalar_lea.vmem %s3, %s1670
      // Predicated region
      $region33: #{simple_video_unet_forward.9} parent=31 // pred_check
        %p1672 = pneg %p121
      $region34: #{simple_video_unet_forward.9} parent=31 // pred_check_branch
        %1674 = sbr.rel (%p1672) target = $region36
      $region35: #{simple_video_unet_forward.9} parent=31 // pred_region
        %s1675 = smul.u32 4, %s19
      $region36: #{simple_video_unet_forward.9} parent=31 // pred_fallthru
        _
    $region32: #{simple_video_unet_forward.9} parent=5 // pred_fallthru
      _
    %p1676 = scmp.le.s32.totalorder 2, %s9
    // Predicated region
    $region37: #{simple_video_unet_forward.9} parent=5 // pred_check
      %p1677 = pneg %p1676
    $region38: #{simple_video_unet_forward.9} parent=5 // pred_check_branch
      %1679 = sbr.rel (%p1677) target = $region40
    $region39: #{simple_video_unet_forward.9} parent=5 // pred_region
      %s1680 = ssub.s32 %s9, 2
      // Predicated region
      $region41: #{simple_video_unet_forward.9} parent=39 // pred_check
        %p1681 = pneg %p127
      $region42: #{simple_video_unet_forward.9} parent=39 // pred_check_branch
        %1683 = sbr.rel (%p1681) target = $region44
      $region43: #{simple_video_unet_forward.9} parent=39 // pred_region
        %s1684 = smul.u32 4, %s21
        %p1685 = scmp.lt.s32.totalorder %s20, 1
        %s1686 = scalar_select %p1685, %s20, 1
        %p1687 = scmp.lt.s32.totalorder %s1684, 3
        %s1688 = scalar_select %p1687, %s1684, 3
        %s1689 = smul.addr %s1686, 4
        %s1690 = sadd.s32 %s1688, %s1689
        %s1691 = smul.addr %s1690, 4
        %s1692 = scalar_lea.vmem %s3, %s1691
      $region44: #{simple_video_unet_forward.9} parent=39 // pred_fallthru
        _
    $region40: #{simple_video_unet_forward.9} parent=5 // pred_fallthru
      _
  $region6: #{simple_video_unet_forward.9} parent=0 // loop_footer
    %s13 = sadd.s32 1, %s9
  $region7: #{simple_video_unet_forward.9} parent=0 // loop_footer_branch
    %8 = sbr.rel target = $region3
  $region8: #{simple_video_unet_forward.9} parent=0 // loop_exit
    _

// kernel: simple_video_unet_forward.10
$region0: #{simple_video_unet_forward.10}
  #allocation0 [shape = 'u32[]', space=smem, size = 0x4, offset = 0x4, fixed_abs, tag = 'smem constant byte address 0x4 - core index']
  #allocation1 [shape = 'u32[144,128]{1,0:T(1,128)}', space=vmem, size = 0x12000, scoped, tag = 'internal scratch']
  %s0 = inlined_call_operand.vmem [shape: bf16[1,64,1728], index: 0, kind: input, shape index: {}]
  %s1 = inlined_call_operand.vmem [shape: bf16[1728,128], index: 1, kind: input, shape index: {}]
  %s2 = inlined_call_operand.vmem [shape: f32[1,1,128], index: 2, kind: input, shape index: {}]
  %s3 = inlined_call_operand.vmem [shape: bf16[1,64,128], index: 3, kind: output, shape index: {}]
  %s4 = sld [smem:[#allocation0]]
  $region45: #{simple_video_unet_forward.10} parent=0
    _
  %s6 = ssub.s32 1, %s4
  %s7 = scalar_select 0, %s6, %s4
  loop: start=0, step=1, limit=4
  $region2: #{simple_video_unet_forward.10} parent=0 // loop_pre_header
    _
  $region3: #{simple_video_unet_forward.10} parent=0 // loop_header
    %s9 = sphi 0, %s13
    %p10 = scmp.ge.s32.totalorder %s9, 4
    %s16 = sphi 0, %s28
    %s17 = sphi 0, %s24
    %s18 = sphi 0, %s16
    %s19 = sphi 0, %s17
    %s20 = sphi 0, %s18
    %s21 = sphi 0, %s19
    %s33 = sphi 0, %s35
    %s36 = sphi 0, %s33
    %s37 = sphi 0, %s36
    %s53 = sphi 0, %s37
    %s57 = sphi 0, %s57
    %s59 = sphi 0, %s57
    %s60 = sphi 0, %s59
    %s74 = sphi 0, %s60
    %s80 = sphi 0, %s82
    %s83 = sphi 0, %s80
    %s84 = sphi 0, %s83
    %s100 = sphi 0, %s84
    %s108 = sphi 0, %s110
    %s111 = sphi 0, %s108
    %s112 = sphi 0, %s111
    %s128 = sphi 0, %s112
  $region4: #{simple_video_unet_forward.10} parent=0 // loop_header_branch
    %12 = sbr.rel (%p10) target = $region8
  $region5: #{simple_video_unet_forward.10} parent=0 // loop_body
    %s14 = ssub.s32 %s9, 1
    %s15 = ssub.s32 %s9, 2
    %s22 = sadd.s32 1, %s17
    %p23 = scmp.ge.s32.totalorder %s22, 2
    %s24 = scalar_select %p23, 0, %s22
    %s25 = sadd.s32 1, %s16
    %s26 = scalar_select %p23, %s25, %s16
    %p27 = scmp.ge.s32.totalorder %s26, 1
    %s28 = scalar_select %p27, 0, %s26
    %s29 = ssub.s32 %s16, %s28
    %s30 = ssub.s32 %s17, %s24
    %s31 = sor.u32 %s29, %s30
    %p32 = scmp.eq.s32.totalorder %s31, 0
    %s34 = sadd.s32 %s33, 1
    %s35 = scalar_select %p32, %s33, %s34
    %p38 = pneg %p32
    %p39 = scmp.eq.s32.totalorder %s9, 1
    %p40 = por %p38, %p39
    %p41 = scmp.ne.s32.totalorder %s33, %s36
    %p42 = scmp.eq.s32.totalorder %s9, 0
    %p43 = por %p41, %p42
    %p44 = scmp.ne.s32.totalorder %s33, %s36
    %p45 = scmp.eq.s32.totalorder %s14, 1
    %p46 = por %p44, %p45
    %p47 = scmp.ne.s32.totalorder %s36, %s37
    %p48 = scmp.eq.s32.totalorder %s14, 0
    %p49 = por %p47, %p48
    %p50 = scmp.ne.s32.totalorder %s36, %s37
    %p51 = scmp.eq.s32.totalorder %s15, 1
    %p52 = por %p50, %p51
    %p54 = scmp.ne.s32.totalorder %s37, %s53
    %p55 = scmp.eq.s32.totalorder %s15, 0
    %p56 = por %p54, %p55
    %s58 = sadd.s32 %s57, 1
    %p61 = scmp.eq.s32.totalorder %s9, 1
    %p62 = scmp.ne.s32.totalorder %s57, %s59
    %p63 = scmp.eq.s32.totalorder %s9, 0
    %p64 = por %p62, %p63
    %p65 = scmp.ne.s32.totalorder %s57, %s59
    %p66 = scmp.eq.s32.totalorder %s14, 1
    %p67 = por %p65, %p66
    %p68 = scmp.ne.s32.totalorder %s59, %s60
    %p69 = scmp.eq.s32.totalorder %s14, 0
    %p70 = por %p68, %p69
    %p71 = scmp.ne.s32.totalorder %s59, %s60
    %p72 = scmp.eq.s32.totalorder %s15, 1
    %p73 = por %p71, %p72
    %p75 = scmp.ne.s32.totalorder %s60, %s74
    %p76 = scmp.eq.s32.totalorder %s15, 0
    %p77 = por %p75, %p76
    %s78 = ssub.s32 %s16, %s28
    %p79 = scmp.eq.s32.totalorder %s78, 0
    %s81 = sadd.s32 %s80, 1
    %s82 = scalar_select %p79, %s80, %s81
    %p85 = pneg %p79
    %p86 = scmp.eq.s32.totalorder %s9, 1
    %p87 = por %p85, %p86
    %p88 = scmp.ne.s32.totalorder %s80, %s83
    %p89 = scmp.eq.s32.totalorder %s9, 0
    %p90 = por %p88, %p89
    %p91 = scmp.ne.s32.totalorder %s80, %s83
    %p92 = scmp.eq.s32.totalorder %s14, 1
    %p93 = por %p91, %p92
    %p94 = scmp.ne.s32.totalorder %s83, %s84
    %p95 = scmp.eq.s32.totalorder %s14, 0
    %p96 = por %p94, %p95
    %p97 = scmp.ne.s32.totalorder %s83, %s84
    %p98 = scmp.eq.s32.totalorder %s15, 1
    %p99 = por %p97, %p98
    %p101 = scmp.ne.s32.totalorder %s84, %s100
    %p102 = scmp.eq.s32.totalorder %s15, 0
    %p103 = por %p101, %p102
    %s104 = ssub.s32 %s16, %s28
    %s105 = ssub.s32 %s17, %s24
    %s106 = sor.u32 %s104, %s105
    %p107 = scmp.eq.s32.totalorder %s106, 0
    %s109 = sadd.s32 %s108, 1
    %s110 = scalar_select %p107, %s108, %s109
    %p113 = pneg %p107
    %p114 = scmp.eq.s32.totalorder %s9, 1
    %p115 = por %p113, %p114
    %p116 = scmp.ne.s32.totalorder %s108, %s111
    %p117 = scmp.eq.s32.totalorder %s9, 0
    %p118 = por %p116, %p117
    %p119 = scmp.ne.s32.totalorder %s108, %s111
    %p120 = scmp.eq.s32.totalorder %s14, 1
    %p121 = por %p119, %p120
    %p122 = scmp.ne.s32.totalorder %s111, %s112
    %p123 = scmp.eq.s32.totalorder %s14, 0
    %p124 = por %p122, %p123
    %p125 = scmp.ne.s32.totalorder %s111, %s112
    %p126 = scmp.eq.s32.totalorder %s15, 1
    %p127 = por %p125, %p126
    %p129 = scmp.ne.s32.totalorder %s112, %s128
    %p130 = scmp.eq.s32.totalorder %s15, 0
    %p131 = por %p129, %p130
    %p132 = scmp.le.s32.totalorder 1, %s9
    %p133 = scmp.lt.s32.totalorder %s9, 3
    %p134 = pnand %p132, %p133
    %p135 = pneg %p134
    // Predicated region
    $region9: #{simple_video_unet_forward.10} parent=5 // pred_check
      _
    $region10: #{simple_video_unet_forward.10} parent=5 // pred_check_branch
      %137 = sbr.rel (%p134) target = $region12
    $region11: #{simple_video_unet_forward.10} parent=5 // pred_region
      %s138 = ssub.s32 %s9, 1
      // Predicated region
      $region13: #{simple_video_unet_forward.10} parent=11 // pred_check
        %p139 = pneg %p70
      $region14: #{simple_video_unet_forward.10} parent=11 // pred_check_branch
        %141 = sbr.rel (%p139) target = $region16
      $region15: #{simple_video_unet_forward.10} parent=11 // pred_region
        _
      $region16: #{simple_video_unet_forward.10} parent=11 // pred_fallthru
        _
      // Predicated region
      $region17: #{simple_video_unet_forward.10} parent=11 // pred_check
        %p142 = pneg %p96
      $region18: #{simple_video_unet_forward.10} parent=11 // pred_check_branch
        %144 = sbr.rel (%p142) target = $region20
      $region19: #{simple_video_unet_forward.10} parent=11 // pred_region
        %p145 = scmp.lt.s32.totalorder %s18, 0
        %s146 = scalar_select %p145, %s18, 0
        %s147 = scalar_lea.vmem %s2, %s146
      $region20: #{simple_video_unet_forward.10} parent=11 // pred_fallthru
        _
    $region12: #{simple_video_unet_forward.10} parent=5 // pred_fallthru
      _
    %p148 = scmp.lt.s32.totalorder %s9, 2
    // Predicated region
    $region21: #{simple_video_unet_forward.10} parent=5 // pred_check
      %p149 = pneg %p148
    $region22: #{simple_video_unet_forward.10} parent=5 // pred_check_branch
      %151 = sbr.rel (%p149) target = $region24
    $region23: #{simple_video_unet_forward.10} parent=5 // pred_region
      // Predicated region
      $region25: #{simple_video_unet_forward.10} parent=23 // pred_check
        %p152 = pneg %p43
      $region26: #{simple_video_unet_forward.10} parent=23 // pred_check_branch
        %154 = sbr.rel (%p152) target = $region28
      $region27: #{simple_video_unet_forward.10} parent=23 // pred_region
        %s155 = smul.u32 4, %s17
        %p156 = scmp.lt.s32.totalorder %s16, 0
        %s157 = scalar_select %p156, %s16, 0
        %p158 = scmp.lt.s32.totalorder %s155, 7
        %s159 = scalar_select %p158, %s155, 7
        %s160 = smul.addr %s159, 14
        %s161 = smul.addr %s157, 112
        %s162 = sadd.s32 %s160, %s161
        %s163 = smul.addr %s162, 4
        %s164 = scalar_lea.vmem %s0, %s163
        %s165 = smul.u32 4, %s17
      $region28: #{simple_video_unet_forward.10} parent=23 // pred_fallthru
        _
    $region24: #{simple_video_unet_forward.10} parent=5 // pred_fallthru
      _
    %p166 = scmp.le.s32.totalorder 1, %s9
    %p167 = scmp.lt.s32.totalorder %s9, 3
    %p168 = pnand %p166, %p167
    %p169 = pneg %p168
    // Predicated region
    $region29: #{simple_video_unet_forward.10} parent=5 // pred_check
      _
    $region30: #{simple_video_unet_forward.10} parent=5 // pred_check_branch
      %171 = sbr.rel (%p168) target = $region32
    $region31: #{simple_video_unet_forward.10} parent=5 // pred_region
      %s172 = ssub.s32 %s9, 1
      %s173 = smul.u32 4, %s19
      %p174 = scmp.lt.s32.totalorder %s18, 0
      %s175 = scalar_select %p174, %s18, 0
      %p176 = scmp.lt.s32.totalorder %s173, 7
      %s177 = scalar_select %p176, %s173, 7
      %s178 = smul.addr %s177, 14
      %s179 = smul.addr %s175, 112
      %s180 = sadd.s32 %s178, %s179
      %s181 = smul.addr %s180, 4
      %s182 = scalar_lea.vmem %s0, %s181
      %p183 = pneg %p49
      %p184 = pneg %p46
      %p185 = pneg %p70
      %p186 = pneg %p67
      %p187 = scmp.lt.s32.totalorder %s18, 0
      %s188 = scalar_select %p187, %s18, 0
      %s189 = scalar_lea.vmem %s2, %s188
      %p190 = pneg %p96
      %p191 = pneg %p93
      %p192 = pneg %p124
      %p193 = pneg %p121
      %s194 = smul.u32 4, %s19
      %p195 = scmp.lt.s32.totalorder %s18, 0
      %s196 = scalar_select %p195, %s18, 0
      %p197 = scmp.lt.s32.totalorder %s194, 7
      %s198 = scalar_select %p197, %s194, 7
      %s199 = smul.addr %s196, 8
      %s200 = sadd.s32 %s198, %s199
      %s201 = smul.addr %s200, 4
      %s202 = scalar_lea.vmem %s3, %s201
      %s203 = smul.u32 4, %s19
      %p204 = scmp.lt.s32.totalorder %s18, 0
      %s205 = scalar_select %p204, %s18, 0
      %p206 = scmp.lt.s32.totalorder %s203, 7
      %s207 = scalar_select %p206, %s203, 7
      %s208 = smul.addr %s207, 14
      %s209 = smul.addr %s205, 112
      %s210 = sadd.s32 %s208, %s209
      %s211 = smul.addr %s210, 4
      %s212 = scalar_lea.vmem %s0, %s211
      %s213 = smul.u32 4, %s19
      %p214 = scmp.lt.s32.totalorder %s18, 0
      %s215 = scalar_select %p214, %s18, 0
      %s216 = scalar_lea.vmem %s2, %s215
      %s217 = smul.u32 4, %s19
      %p218 = scmp.lt.s32.totalorder %s18, 0
      %s219 = scalar_select %p218, %s18, 0
      %p220 = scmp.lt.s32.totalorder %s217, 7
      %s221 = scalar_select %p220, %s217, 7
      %s222 = smul.addr %s219, 8
      %s223 = sadd.s32 %s221, %s222
      %s224 = smul.addr %s223, 4
      %s225 = scalar_lea.vmem %s3, %s224
      %s226 = smul.u32 4, %s19
      %v228 = vld [vmem:[%s1] sm:$0xf]
      %v229 = vld [vmem:[%s1 + $0x4] sm:$0xf]
      %v230 = vld [vmem:[%s1 + $0x8] sm:$0xf]
      %v231 = vld [vmem:[%s1 + $0xc] sm:$0xf]
      %v232 = vld [vmem:[%s1 + $0x10] sm:$0xf]
      %v233 = vld [vmem:[%s1 + $0x14] sm:$0xf]
      %v234 = vld [vmem:[%s1 + $0x18] sm:$0xf]
      %v235 = vld [vmem:[%s1 + $0x1c] sm:$0xf]
      %v236 = vld [vmem:[%s1 + $0x20] sm:$0xf]
      %v237 = vld [vmem:[%s1 + $0x24] sm:$0xf]
      %v238 = vld [vmem:[%s1 + $0x28] sm:$0xf]
      %v239 = vld [vmem:[%s1 + $0x2c] sm:$0xf]
      %v240 = vld [vmem:[%s1 + $0x30] sm:$0xf]
      %v241 = vld [vmem:[%s1 + $0x34] sm:$0xf]
      %v242 = vld [vmem:[%s1 + $0x38] sm:$0xf]
      %v243 = vld [vmem:[%s1 + $0x3c] sm:$0xf]
      %v244 = vld [vmem:[%s1 + $0x40] sm:$0xf]
      %v245 = vld [vmem:[%s1 + $0x44] sm:$0xf]
      %v246 = vld [vmem:[%s1 + $0x48] sm:$0xf]
      %v247 = vld [vmem:[%s1 + $0x4c] sm:$0xf]
      %v248 = vld [vmem:[%s1 + $0x50] sm:$0xf]
      %v249 = vld [vmem:[%s1 + $0x54] sm:$0xf]
      %v250 = vld [vmem:[%s1 + $0x58] sm:$0xf]
      %v251 = vld [vmem:[%s1 + $0x5c] sm:$0xf]
      %v252 = vld [vmem:[%s1 + $0x60] sm:$0xf]
      %v253 = vld [vmem:[%s1 + $0x64] sm:$0xf]
      %v254 = vld [vmem:[%s1 + $0x68] sm:$0xf]
      %v255 = vld [vmem:[%s1 + $0x6c] sm:$0xf]
      %v256 = vld [vmem:[%s1 + $0x70] sm:$0xf]
      %v257 = vld [vmem:[%s1 + $0x74] sm:$0xf]
      %v258 = vld [vmem:[%s1 + $0x78] sm:$0xf]
      %v259 = vld [vmem:[%s1 + $0x7c] sm:$0xf]
      %v260 = vld [vmem:[%s1 + $0x80] sm:$0xf]
      %v261 = vld [vmem:[%s1 + $0x84] sm:$0xf]
      %v262 = vld [vmem:[%s1 + $0x88] sm:$0xf]
      %v263 = vld [vmem:[%s1 + $0x8c] sm:$0xf]
      %v264 = vld [vmem:[%s1 + $0x90] sm:$0xf]
      %v265 = vld [vmem:[%s1 + $0x94] sm:$0xf]
      %v266 = vld [vmem:[%s1 + $0x98] sm:$0xf]
      %v267 = vld [vmem:[%s1 + $0x9c] sm:$0xf]
      %v268 = vld [vmem:[%s1 + $0xa0] sm:$0xf]
      %v269 = vld [vmem:[%s1 + $0xa4] sm:$0xf]
      %v270 = vld [vmem:[%s1 + $0xa8] sm:$0xf]
      %v271 = vld [vmem:[%s1 + $0xac] sm:$0xf]
      %v272 = vld [vmem:[%s1 + $0xb0] sm:$0xf]
      %v273 = vld [vmem:[%s1 + $0xb4] sm:$0xf]
      %v274 = vld [vmem:[%s1 + $0xb8] sm:$0xf]
      %v275 = vld [vmem:[%s1 + $0xbc] sm:$0xf]
      %v276 = vld [vmem:[%s1 + $0xc0] sm:$0xf]
      %v277 = vld [vmem:[%s1 + $0xc4] sm:$0xf]
      %v278 = vld [vmem:[%s1 + $0xc8] sm:$0xf]
      %v279 = vld [vmem:[%s1 + $0xcc] sm:$0xf]
      %v280 = vld [vmem:[%s1 + $0xd0] sm:$0xf]
      %v281 = vld [vmem:[%s1 + $0xd4] sm:$0xf]
      %v282 = vld [vmem:[%s1 + $0xd8] sm:$0xf]
      %v283 = vld [vmem:[%s1 + $0xdc] sm:$0xf]
      %v284 = vld [vmem:[%s1 + $0xe0] sm:$0xf]
      %v285 = vld [vmem:[%s1 + $0xe4] sm:$0xf]
      %v286 = vld [vmem:[%s1 + $0xe8] sm:$0xf]
      %v287 = vld [vmem:[%s1 + $0xec] sm:$0xf]
      %v288 = vld [vmem:[%s1 + $0xf0] sm:$0xf]
      %v289 = vld [vmem:[%s1 + $0xf4] sm:$0xf]
      %v290 = vld [vmem:[%s1 + $0xf8] sm:$0xf]
      %v291 = vld [vmem:[%s1 + $0xfc] sm:$0xf]
      %v292 = vld [vmem:[%s1 + $0x100] sm:$0xf]
      %v293 = vld [vmem:[%s1 + $0x104] sm:$0xf]
      %v294 = vld [vmem:[%s1 + $0x108] sm:$0xf]
      %v295 = vld [vmem:[%s1 + $0x10c] sm:$0xf]
      %v296 = vld [vmem:[%s1 + $0x110] sm:$0xf]
      %v297 = vld [vmem:[%s1 + $0x114] sm:$0xf]
      %v298 = vld [vmem:[%s1 + $0x118] sm:$0xf]
      %v299 = vld [vmem:[%s1 + $0x11c] sm:$0xf]
      %v300 = vld [vmem:[%s1 + $0x120] sm:$0xf]
      %v301 = vld [vmem:[%s1 + $0x124] sm:$0xf]
      %v302 = vld [vmem:[%s1 + $0x128] sm:$0xf]
      %v303 = vld [vmem:[%s1 + $0x12c] sm:$0xf]
      %v304 = vld [vmem:[%s1 + $0x130] sm:$0xf]
      %v305 = vld [vmem:[%s1 + $0x134] sm:$0xf]
      %v306 = vld [vmem:[%s1 + $0x138] sm:$0xf]
      %v307 = vld [vmem:[%s1 + $0x13c] sm:$0xf]
      %v308 = vld [vmem:[%s1 + $0x140] sm:$0xf]
      %v309 = vld [vmem:[%s1 + $0x144] sm:$0xf]
      %v310 = vld [vmem:[%s1 + $0x148] sm:$0xf]
      %v311 = vld [vmem:[%s1 + $0x14c] sm:$0xf]
      %v312 = vld [vmem:[%s1 + $0x150] sm:$0xf]
      %v313 = vld [vmem:[%s1 + $0x154] sm:$0xf]
      %v314 = vld [vmem:[%s1 + $0x158] sm:$0xf]
      %v315 = vld [vmem:[%s1 + $0x15c] sm:$0xf]
      %v316 = vld [vmem:[%s1 + $0x160] sm:$0xf]
      %v317 = vld [vmem:[%s1 + $0x164] sm:$0xf]
      %v318 = vld [vmem:[%s1 + $0x168] sm:$0xf]
      %v319 = vld [vmem:[%s1 + $0x16c] sm:$0xf]
      %v320 = vld [vmem:[%s1 + $0x170] sm:$0xf]
      %v321 = vld [vmem:[%s1 + $0x174] sm:$0xf]
      %v322 = vld [vmem:[%s1 + $0x178] sm:$0xf]
      %v323 = vld [vmem:[%s1 + $0x17c] sm:$0xf]
      %v324 = vld [vmem:[%s1 + $0x180] sm:$0xf]
      %v325 = vld [vmem:[%s1 + $0x184] sm:$0xf]
      %v326 = vld [vmem:[%s1 + $0x188] sm:$0xf]
      %v327 = vld [vmem:[%s1 + $0x18c] sm:$0xf]
      %v328 = vld [vmem:[%s1 + $0x190] sm:$0xf]
      %v329 = vld [vmem:[%s1 + $0x194] sm:$0xf]
      %v330 = vld [vmem:[%s1 + $0x198] sm:$0xf]
      %v331 = vld [vmem:[%s1 + $0x19c] sm:$0xf]
      %v332 = vld [vmem:[%s1 + $0x1a0] sm:$0xf]
      %v333 = vld [vmem:[%s1 + $0x1a4] sm:$0xf]
      %v334 = vld [vmem:[%s1 + $0x1a8] sm:$0xf]
      %v335 = vld [vmem:[%s1 + $0x1ac] sm:$0xf]
      %v336 = vld [vmem:[%s1 + $0x1b0] sm:$0xf]
      %v337 = vld [vmem:[%s1 + $0x1b4] sm:$0xf]
      %v338 = vld [vmem:[%s1 + $0x1b8] sm:$0xf]
      %v339 = vld [vmem:[%s1 + $0x1bc] sm:$0xf]
      %v340 = vld [vmem:[%s1 + $0x1c0] sm:$0xf]
      %v341 = vld [vmem:[%s1 + $0x1c4] sm:$0xf]
      %v342 = vld [vmem:[%s1 + $0x1c8] sm:$0xf]
      %v343 = vld [vmem:[%s1 + $0x1cc] sm:$0xf]
      %v344 = vld [vmem:[%s1 + $0x1d0] sm:$0xf]
      %v345 = vld [vmem:[%s1 + $0x1d4] sm:$0xf]
      %v346 = vld [vmem:[%s1 + $0x1d8] sm:$0xf]
      %v347 = vld [vmem:[%s1 + $0x1dc] sm:$0xf]
      %v348 = vld [vmem:[%s1 + $0x1e0] sm:$0xf]
      %v349 = vld [vmem:[%s1 + $0x1e4] sm:$0xf]
      %v350 = vld [vmem:[%s1 + $0x1e8] sm:$0xf]
      %v351 = vld [vmem:[%s1 + $0x1ec] sm:$0xf]
      %v352 = vld [vmem:[%s1 + $0x1f0] sm:$0xf]
      %v353 = vld [vmem:[%s1 + $0x1f4] sm:$0xf]
      %v354 = vld [vmem:[%s1 + $0x1f8] sm:$0xf]
      %v355 = vld [vmem:[%s1 + $0x1fc] sm:$0xf]
      %v356 = vld [vmem:[%s1 + $0x200] sm:$0xf]
      %v357 = vld [vmem:[%s1 + $0x204] sm:$0xf]
      %v358 = vld [vmem:[%s1 + $0x208] sm:$0xf]
      %v359 = vld [vmem:[%s1 + $0x20c] sm:$0xf]
      %v360 = vld [vmem:[%s1 + $0x210] sm:$0xf]
      %v361 = vld [vmem:[%s1 + $0x214] sm:$0xf]
      %v362 = vld [vmem:[%s1 + $0x218] sm:$0xf]
      %v363 = vld [vmem:[%s1 + $0x21c] sm:$0xf]
      %v364 = vld [vmem:[%s1 + $0x220] sm:$0xf]
      %v365 = vld [vmem:[%s1 + $0x224] sm:$0xf]
      %v366 = vld [vmem:[%s1 + $0x228] sm:$0xf]
      %v367 = vld [vmem:[%s1 + $0x22c] sm:$0xf]
      %v368 = vld [vmem:[%s1 + $0x230] sm:$0xf]
      %v369 = vld [vmem:[%s1 + $0x234] sm:$0xf]
      %v370 = vld [vmem:[%s1 + $0x238] sm:$0xf]
      %v371 = vld [vmem:[%s1 + $0x23c] sm:$0xf]
      %v372 = vld [vmem:[%s1 + $0x240] sm:$0xf]
      %v373 = vld [vmem:[%s1 + $0x244] sm:$0xf]
      %v374 = vld [vmem:[%s1 + $0x248] sm:$0xf]
      %v375 = vld [vmem:[%s1 + $0x24c] sm:$0xf]
      %v376 = vld [vmem:[%s1 + $0x250] sm:$0xf]
      %v377 = vld [vmem:[%s1 + $0x254] sm:$0xf]
      %v378 = vld [vmem:[%s1 + $0x258] sm:$0xf]
      %v379 = vld [vmem:[%s1 + $0x25c] sm:$0xf]
      %v380 = vld [vmem:[%s1 + $0x260] sm:$0xf]
      %v381 = vld [vmem:[%s1 + $0x264] sm:$0xf]
      %v382 = vld [vmem:[%s1 + $0x268] sm:$0xf]
      %v383 = vld [vmem:[%s1 + $0x26c] sm:$0xf]
      %v384 = vld [vmem:[%s1 + $0x270] sm:$0xf]
      %v385 = vld [vmem:[%s1 + $0x274] sm:$0xf]
      %v386 = vld [vmem:[%s1 + $0x278] sm:$0xf]
      %v387 = vld [vmem:[%s1 + $0x27c] sm:$0xf]
      %v388 = vld [vmem:[%s1 + $0x280] sm:$0xf]
      %v389 = vld [vmem:[%s1 + $0x284] sm:$0xf]
      %v390 = vld [vmem:[%s1 + $0x288] sm:$0xf]
      %v391 = vld [vmem:[%s1 + $0x28c] sm:$0xf]
      %v392 = vld [vmem:[%s1 + $0x290] sm:$0xf]
      %v393 = vld [vmem:[%s1 + $0x294] sm:$0xf]
      %v394 = vld [vmem:[%s1 + $0x298] sm:$0xf]
      %v395 = vld [vmem:[%s1 + $0x29c] sm:$0xf]
      %v396 = vld [vmem:[%s1 + $0x2a0] sm:$0xf]
      %v397 = vld [vmem:[%s1 + $0x2a4] sm:$0xf]
      %v398 = vld [vmem:[%s1 + $0x2a8] sm:$0xf]
      %v399 = vld [vmem:[%s1 + $0x2ac] sm:$0xf]
      %v400 = vld [vmem:[%s1 + $0x2b0] sm:$0xf]
      %v401 = vld [vmem:[%s1 + $0x2b4] sm:$0xf]
      %v402 = vld [vmem:[%s1 + $0x2b8] sm:$0xf]
      %v403 = vld [vmem:[%s1 + $0x2bc] sm:$0xf]
      %v404 = vld [vmem:[%s1 + $0x2c0] sm:$0xf]
      %v405 = vld [vmem:[%s1 + $0x2c4] sm:$0xf]
      %v406 = vld [vmem:[%s1 + $0x2c8] sm:$0xf]
      %v407 = vld [vmem:[%s1 + $0x2cc] sm:$0xf]
      %v408 = vld [vmem:[%s1 + $0x2d0] sm:$0xf]
      %v409 = vld [vmem:[%s1 + $0x2d4] sm:$0xf]
      %v410 = vld [vmem:[%s1 + $0x2d8] sm:$0xf]
      %v411 = vld [vmem:[%s1 + $0x2dc] sm:$0xf]
      %v412 = vld [vmem:[%s1 + $0x2e0] sm:$0xf]
      %v413 = vld [vmem:[%s1 + $0x2e4] sm:$0xf]
      %v414 = vld [vmem:[%s1 + $0x2e8] sm:$0xf]
      %v415 = vld [vmem:[%s1 + $0x2ec] sm:$0xf]
      %v416 = vld [vmem:[%s1 + $0x2f0] sm:$0xf]
      %v417 = vld [vmem:[%s1 + $0x2f4] sm:$0xf]
      %v418 = vld [vmem:[%s1 + $0x2f8] sm:$0xf]
      %v419 = vld [vmem:[%s1 + $0x2fc] sm:$0xf]
      %v420 = vld [vmem:[%s1 + $0x300] sm:$0xf]
      %v421 = vld [vmem:[%s1 + $0x304] sm:$0xf]
      %v422 = vld [vmem:[%s1 + $0x308] sm:$0xf]
      %v423 = vld [vmem:[%s1 + $0x30c] sm:$0xf]
      %v424 = vld [vmem:[%s1 + $0x310] sm:$0xf]
      %v425 = vld [vmem:[%s1 + $0x314] sm:$0xf]
      %v426 = vld [vmem:[%s1 + $0x318] sm:$0xf]
      %v427 = vld [vmem:[%s1 + $0x31c] sm:$0xf]
      %v428 = vld [vmem:[%s1 + $0x320] sm:$0xf]
      %v429 = vld [vmem:[%s1 + $0x324] sm:$0xf]
      %v430 = vld [vmem:[%s1 + $0x328] sm:$0xf]
      %v431 = vld [vmem:[%s1 + $0x32c] sm:$0xf]
      %v432 = vld [vmem:[%s1 + $0x330] sm:$0xf]
      %v433 = vld [vmem:[%s1 + $0x334] sm:$0xf]
      %v434 = vld [vmem:[%s1 + $0x338] sm:$0xf]
      %v435 = vld [vmem:[%s1 + $0x33c] sm:$0xf]
      %v436 = vld [vmem:[%s1 + $0x340] sm:$0xf]
      %v437 = vld [vmem:[%s1 + $0x344] sm:$0xf]
      %v438 = vld [vmem:[%s1 + $0x348] sm:$0xf]
      %v439 = vld [vmem:[%s1 + $0x34c] sm:$0xf]
      %v440 = vld [vmem:[%s1 + $0x350] sm:$0xf]
      %v441 = vld [vmem:[%s1 + $0x354] sm:$0xf]
      %v442 = vld [vmem:[%s1 + $0x358] sm:$0xf]
      %v443 = vld [vmem:[%s1 + $0x35c] sm:$0xf]
      %v444 = vld [vmem:[%s212] sm:$0xff]
      %v445 = vld [vmem:[%s212 + $0x8] sm:$0xff]
      %v446 = vld [vmem:[%s212 + $0x10] sm:$0xff]
      %v447 = vld [vmem:[%s212 + $0x18] sm:$0xff]
      %v448 = vld [vmem:[%s212 + $0x20] sm:$0xff]
      %v449 = vld [vmem:[%s212 + $0x28] sm:$0xff]
      %v450 = vld [vmem:[%s212 + $0x30] sm:$0xff]
      %v451 = vld [vmem:[%s212 + $0x38] sm:$0xff]
      %v452 = vld [vmem:[%s212 + $0x40] sm:$0xff]
      %v453 = vld [vmem:[%s212 + $0x48] sm:$0xff]
      %v454 = vld [vmem:[%s212 + $0x50] sm:$0xff]
      %v455 = vld [vmem:[%s212 + $0x58] sm:$0xff]
      %v456 = vld [vmem:[%s212 + $0x60] sm:$0xff]
      %v457 = vld [vmem:[%s212 + $0x68] sm:$0xff]
      %v458 = vld [vmem:[%s212 + $0x70] sm:$0xff]
      %v459 = vld [vmem:[%s212 + $0x78] sm:$0xff]
      %v460 = vld [vmem:[%s212 + $0x80] sm:$0xff]
      %v461 = vld [vmem:[%s212 + $0x88] sm:$0xff]
      %v462 = vld [vmem:[%s212 + $0x90] sm:$0xff]
      %v463 = vld [vmem:[%s212 + $0x98] sm:$0xff]
      %v464 = vld [vmem:[%s212 + $0xa0] sm:$0xff]
      %v465 = vld [vmem:[%s212 + $0xa8] sm:$0xff]
      %v466 = vld [vmem:[%s212 + $0xb0] sm:$0xff]
      %v467 = vld [vmem:[%s212 + $0xb8] sm:$0xff]
      %v468 = vld [vmem:[%s212 + $0xc0] sm:$0xff]
      %v469 = vld [vmem:[%s212 + $0xc8] sm:$0xff]
      %v470 = vld [vmem:[%s212 + $0xd0] sm:$0xff]
      %v471 = vld [vmem:[%s212 + $0xd8] sm:$0xff]
      %v472 = vld [vmem:[%s216] sm:$0x1]
      %v474 = vlaneseq
      %v475 = vshrl.u32 %v474, 7
      %v476 = vsub.s32 0, %v475
      %v477 = vrot.slane %v472, %v476
      %v507 = vunpack.c.l.b16 %v444
      %v508 = vunpack.c.h.b16 %v444
      %v509 = vunpack.c.l.b16 %v445
      %v510 = vunpack.c.h.b16 %v445
      %v511 = vunpack.c.l.b16 %v446
      %v512 = vunpack.c.h.b16 %v446
      %v513 = vunpack.c.l.b16 %v447
      %v514 = vunpack.c.h.b16 %v447
      %v515 = vunpack.c.l.b16 %v448
      %v516 = vunpack.c.h.b16 %v448
      %v517 = vunpack.c.l.b16 %v449
      %v518 = vunpack.c.h.b16 %v449
      %v519 = vunpack.c.l.b16 %v450
      %v520 = vunpack.c.h.b16 %v450
      %v521 = vunpack.c.l.b16 %v451
      %v522 = vunpack.c.h.b16 %v451
      %v523 = vunpack.c.l.b16 %v452
      %v524 = vunpack.c.h.b16 %v452
      %v525 = vunpack.c.l.b16 %v453
      %v526 = vunpack.c.h.b16 %v453
      %v527 = vunpack.c.l.b16 %v454
      %v528 = vunpack.c.h.b16 %v454
      %v529 = vunpack.c.l.b16 %v455
      %v530 = vunpack.c.h.b16 %v455
      %v531 = vunpack.c.l.b16 %v456
      %v532 = vunpack.c.h.b16 %v456
      %v533 = vunpack.c.l.b16 %v457
      %v534 = vunpack.c.h.b16 %v457
      %v535 = vunpack.c.l.b16 %v458
      %v536 = vunpack.c.h.b16 %v458
      %v537 = vunpack.c.l.b16 %v459
      %v538 = vunpack.c.h.b16 %v459
      %v539 = vunpack.c.l.b16 %v460
      %v540 = vunpack.c.h.b16 %v460
      %v541 = vunpack.c.l.b16 %v461
      %v542 = vunpack.c.h.b16 %v461
      %v543 = vunpack.c.l.b16 %v462
      %v544 = vunpack.c.h.b16 %v462
      %v545 = vunpack.c.l.b16 %v463
      %v546 = vunpack.c.h.b16 %v463
      %v547 = vunpack.c.l.b16 %v464
      %v548 = vunpack.c.h.b16 %v464
      %v549 = vunpack.c.l.b16 %v465
      %v550 = vunpack.c.h.b16 %v465
      %v551 = vunpack.c.l.b16 %v466
      %v552 = vunpack.c.h.b16 %v466
      %v553 = vunpack.c.l.b16 %v467
      %v554 = vunpack.c.h.b16 %v467
      %v555 = vunpack.c.l.b16 %v468
      %v556 = vunpack.c.h.b16 %v468
      %v557 = vunpack.c.l.b16 %v469
      %v558 = vunpack.c.h.b16 %v469
      %v559 = vunpack.c.l.b16 %v470
      %v560 = vunpack.c.h.b16 %v470
      %v561 = vunpack.c.l.b16 %v471
      %v562 = vunpack.c.h.b16 %v471
      %v563 = vpack.c.b16 %v521, %v507
      %v564 = vpack.c.b16 %v522, %v508
      %v565 = vpack.c.b16 %v523, %v509
      %v566 = vpack.c.b16 %v524, %v510
      %v567 = vpack.c.b16 %v525, %v511
      %v568 = vpack.c.b16 %v526, %v512
      %v569 = vpack.c.b16 %v527, %v513
      %v570 = vpack.c.b16 %v528, %v514
      %v571 = vpack.c.b16 %v529, %v515
      %v572 = vpack.c.b16 %v530, %v516
      %v573 = vpack.c.b16 %v531, %v517
      %v574 = vpack.c.b16 %v532, %v518
      %v575 = vpack.c.b16 %v533, %v519
      %v576 = vpack.c.b16 %v534, %v520
      %v577 = vpack.c.b16 %v549, %v535
      %v578 = vpack.c.b16 %v550, %v536
      %v579 = vpack.c.b16 %v551, %v537
      %v580 = vpack.c.b16 %v552, %v538
      %v581 = vpack.c.b16 %v553, %v539
      %v582 = vpack.c.b16 %v554, %v540
      %v583 = vpack.c.b16 %v555, %v541
      %v584 = vpack.c.b16 %v556, %v542
      %v585 = vpack.c.b16 %v557, %v543
      %v586 = vpack.c.b16 %v558, %v544
      %v587 = vpack.c.b16 %v559, %v545
      %v588 = vpack.c.b16 %v560, %v546
      %v589 = vpack.c.b16 %v561, %v547
      %v590 = vpack.c.b16 %v562, %v548
      %v833 = vunpack.c.l.b16 %v228
      %v834 = vunpack.c.l.b16 %v229
      %v835 = vunpack.c.l.b16 %v230
      %v836 = vunpack.c.l.b16 %v231
      %v837 = vunpack.c.l.b16 %v232
      %v838 = vunpack.c.l.b16 %v233
      %v839 = vunpack.c.l.b16 %v234
      %v840 = vunpack.c.l.b16 %v235
      %v841 = vunpack.c.l.b16 %v236
      %v842 = vunpack.c.l.b16 %v237
      %v843 = vunpack.c.l.b16 %v238
      %v844 = vunpack.c.l.b16 %v239
      %v845 = vunpack.c.l.b16 %v240
      %v846 = vunpack.c.l.b16 %v241
      %v847 = vunpack.c.l.b16 %v242
      %v848 = vunpack.c.l.b16 %v243
      %v849 = vunpack.c.l.b16 %v244
      %v850 = vunpack.c.l.b16 %v245
      %v851 = vunpack.c.l.b16 %v246
      %v852 = vunpack.c.l.b16 %v247
      %v853 = vunpack.c.l.b16 %v248
      %v854 = vunpack.c.l.b16 %v249
      %v855 = vunpack.c.l.b16 %v250
      %v856 = vunpack.c.l.b16 %v251
      %v857 = vunpack.c.l.b16 %v252
      %v858 = vunpack.c.l.b16 %v253
      %v859 = vunpack.c.l.b16 %v254
      %v860 = vunpack.c.l.b16 %v255
      %v861 = vunpack.c.l.b16 %v256
      %v862 = vunpack.c.l.b16 %v257
      %v863 = vunpack.c.l.b16 %v258
      %v864 = vunpack.c.l.b16 %v259
      %v865 = vunpack.c.l.b16 %v260
      %v866 = vunpack.c.l.b16 %v261
      %v867 = vunpack.c.l.b16 %v262
      %v868 = vunpack.c.l.b16 %v263
      %v869 = vunpack.c.l.b16 %v264
      %v870 = vunpack.c.l.b16 %v265
      %v871 = vunpack.c.l.b16 %v266
      %v872 = vunpack.c.l.b16 %v267
      %v873 = vunpack.c.l.b16 %v268
      %v874 = vunpack.c.l.b16 %v269
      %v875 = vunpack.c.l.b16 %v270
      %v876 = vunpack.c.l.b16 %v271
      %v877 = vunpack.c.l.b16 %v272
      %v878 = vunpack.c.l.b16 %v273
      %v879 = vunpack.c.l.b16 %v274
      %v880 = vunpack.c.l.b16 %v275
      %v881 = vunpack.c.l.b16 %v276
      %v882 = vunpack.c.l.b16 %v277
      %v883 = vunpack.c.l.b16 %v278
      %v884 = vunpack.c.l.b16 %v279
      %v885 = vunpack.c.l.b16 %v280
      %v886 = vunpack.c.l.b16 %v281
      %v887 = vunpack.c.l.b16 %v282
      %v888 = vunpack.c.l.b16 %v283
      %v889 = vunpack.c.l.b16 %v284
      %v890 = vunpack.c.l.b16 %v285
      %v891 = vunpack.c.l.b16 %v286
      %v892 = vunpack.c.l.b16 %v287
      %v893 = vunpack.c.l.b16 %v288
      %v894 = vunpack.c.l.b16 %v289
      %v895 = vunpack.c.l.b16 %v290
      %v896 = vunpack.c.l.b16 %v291
      %v897 = vunpack.c.l.b16 %v292
      %v898 = vunpack.c.l.b16 %v293
      %v899 = vunpack.c.l.b16 %v294
      %v900 = vunpack.c.l.b16 %v295
      %v901 = vunpack.c.l.b16 %v296
      %v902 = vunpack.c.l.b16 %v297
      %v903 = vunpack.c.l.b16 %v298
      %v904 = vunpack.c.l.b16 %v299
      %v905 = vunpack.c.l.b16 %v300
      %v906 = vunpack.c.l.b16 %v301
      %v907 = vunpack.c.l.b16 %v302
      %v908 = vunpack.c.l.b16 %v303
      %v909 = vunpack.c.l.b16 %v304
      %v910 = vunpack.c.l.b16 %v305
      %v911 = vunpack.c.l.b16 %v306
      %v912 = vunpack.c.l.b16 %v307
      %v913 = vunpack.c.l.b16 %v308
      %v914 = vunpack.c.l.b16 %v309
      %v915 = vunpack.c.l.b16 %v310
      %v916 = vunpack.c.l.b16 %v311
      %v917 = vunpack.c.l.b16 %v312
      %v918 = vunpack.c.l.b16 %v313
      %v919 = vunpack.c.l.b16 %v314
      %v920 = vunpack.c.l.b16 %v315
      %v921 = vunpack.c.l.b16 %v316
      %v922 = vunpack.c.l.b16 %v317
      %v923 = vunpack.c.l.b16 %v318
      %v924 = vunpack.c.l.b16 %v319
      %v925 = vunpack.c.l.b16 %v320
      %v926 = vunpack.c.l.b16 %v321
      %v927 = vunpack.c.l.b16 %v322
      %v928 = vunpack.c.l.b16 %v323
      %v929 = vunpack.c.l.b16 %v324
      %v930 = vunpack.c.l.b16 %v325
      %v931 = vunpack.c.l.b16 %v326
      %v932 = vunpack.c.l.b16 %v327
      %v933 = vunpack.c.l.b16 %v328
      %v934 = vunpack.c.l.b16 %v329
      %v935 = vunpack.c.l.b16 %v330
      %v936 = vunpack.c.l.b16 %v331
      %v937 = vunpack.c.l.b16 %v332
      %v938 = vunpack.c.l.b16 %v333
      %v939 = vunpack.c.l.b16 %v334
      %v940 = vunpack.c.l.b16 %v335
      %v941 = vunpack.c.l.b16 %v336
      %v942 = vunpack.c.l.b16 %v337
      %v943 = vunpack.c.l.b16 %v338
      %v944 = vunpack.c.l.b16 %v339
      %v945 = vunpack.c.l.b16 %v340
      %v946 = vunpack.c.l.b16 %v341
      %v947 = vunpack.c.l.b16 %v342
      %v948 = vunpack.c.l.b16 %v343
      %v949 = vunpack.c.l.b16 %v344
      %v950 = vunpack.c.l.b16 %v345
      %v951 = vunpack.c.l.b16 %v346
      %v952 = vunpack.c.l.b16 %v347
      %v953 = vunpack.c.l.b16 %v348
      %v954 = vunpack.c.l.b16 %v349
      %v955 = vunpack.c.l.b16 %v350
      %v956 = vunpack.c.l.b16 %v351
      %v957 = vunpack.c.l.b16 %v352
      %v958 = vunpack.c.l.b16 %v353
      %v959 = vunpack.c.l.b16 %v354
      %v960 = vunpack.c.l.b16 %v355
      %v961 = vunpack.c.l.b16 %v356
      %v962 = vunpack.c.l.b16 %v357
      %v963 = vunpack.c.l.b16 %v358
      %v964 = vunpack.c.l.b16 %v359
      %v965 = vunpack.c.l.b16 %v360
      %v966 = vunpack.c.l.b16 %v361
      %v967 = vunpack.c.l.b16 %v362
      %v968 = vunpack.c.l.b16 %v363
      %v969 = vunpack.c.l.b16 %v364
      %v970 = vunpack.c.l.b16 %v365
      %v971 = vunpack.c.l.b16 %v366
      %v972 = vunpack.c.l.b16 %v367
      %v973 = vunpack.c.l.b16 %v368
      %v974 = vunpack.c.l.b16 %v369
      %v975 = vunpack.c.l.b16 %v370
      %v976 = vunpack.c.l.b16 %v371
      %v977 = vunpack.c.l.b16 %v372
      %v978 = vunpack.c.l.b16 %v373
      %v979 = vunpack.c.l.b16 %v374
      %v980 = vunpack.c.l.b16 %v375
      %v981 = vunpack.c.l.b16 %v376
      %v982 = vunpack.c.l.b16 %v377
      %v983 = vunpack.c.l.b16 %v378
      %v984 = vunpack.c.l.b16 %v379
      %v985 = vunpack.c.l.b16 %v380
      %v986 = vunpack.c.l.b16 %v381
      %v987 = vunpack.c.l.b16 %v382
      %v988 = vunpack.c.l.b16 %v383
      %v989 = vunpack.c.l.b16 %v384
      %v990 = vunpack.c.l.b16 %v385
      %v991 = vunpack.c.l.b16 %v386
      %v992 = vunpack.c.l.b16 %v387
      %v993 = vunpack.c.l.b16 %v388
      %v994 = vunpack.c.l.b16 %v389
      %v995 = vunpack.c.l.b16 %v390
      %v996 = vunpack.c.l.b16 %v391
      %v997 = vunpack.c.l.b16 %v392
      %v998 = vunpack.c.l.b16 %v393
      %v999 = vunpack.c.l.b16 %v394
      %v1000 = vunpack.c.l.b16 %v395
      %v1001 = vunpack.c.l.b16 %v396
      %v1002 = vunpack.c.l.b16 %v397
      %v1003 = vunpack.c.l.b16 %v398
      %v1004 = vunpack.c.l.b16 %v399
      %v1005 = vunpack.c.l.b16 %v400
      %v1006 = vunpack.c.l.b16 %v401
      %v1007 = vunpack.c.l.b16 %v402
      %v1008 = vunpack.c.l.b16 %v403
      %v1009 = vunpack.c.l.b16 %v404
      %v1010 = vunpack.c.l.b16 %v405
      %v1011 = vunpack.c.l.b16 %v406
      %v1012 = vunpack.c.l.b16 %v407
      %v1013 = vunpack.c.l.b16 %v408
      %v1014 = vunpack.c.l.b16 %v409
      %v1015 = vunpack.c.l.b16 %v410
      %v1016 = vunpack.c.l.b16 %v411
      %v1017 = vunpack.c.l.b16 %v412
      %v1018 = vunpack.c.l.b16 %v413
      %v1019 = vunpack.c.l.b16 %v414
      %v1020 = vunpack.c.l.b16 %v415
      %v1021 = vunpack.c.l.b16 %v416
      %v1022 = vunpack.c.l.b16 %v417
      %v1023 = vunpack.c.l.b16 %v418
      %v1024 = vunpack.c.l.b16 %v419
      %v1025 = vunpack.c.l.b16 %v420
      %v1026 = vunpack.c.l.b16 %v421
      %v1027 = vunpack.c.l.b16 %v422
      %v1028 = vunpack.c.l.b16 %v423
      %v1029 = vunpack.c.l.b16 %v424
      %v1030 = vunpack.c.l.b16 %v425
      %v1031 = vunpack.c.l.b16 %v426
      %v1032 = vunpack.c.l.b16 %v427
      %v1033 = vunpack.c.l.b16 %v428
      %v1034 = vunpack.c.l.b16 %v429
      %v1035 = vunpack.c.l.b16 %v430
      %v1036 = vunpack.c.l.b16 %v431
      %v1037 = vunpack.c.l.b16 %v432
      %v1038 = vunpack.c.l.b16 %v433
      %v1039 = vunpack.c.l.b16 %v434
      %v1040 = vunpack.c.l.b16 %v435
      %v1041 = vunpack.c.l.b16 %v436
      %v1042 = vunpack.c.l.b16 %v437
      %v1043 = vunpack.c.l.b16 %v438
      %v1044 = vunpack.c.l.b16 %v439
      %v1045 = vunpack.c.l.b16 %v440
      %v1046 = vunpack.c.l.b16 %v441
      %v1047 = vunpack.c.l.b16 %v442
      %v1048 = vunpack.c.l.b16 %v443
      %v1049 = vpack.c.b16 %v834, %v833
      %v1050 = vpack.c.b16 %v836, %v835
      %v1051 = vpack.c.b16 %v838, %v837
      %v1052 = vpack.c.b16 %v840, %v839
      %v1053 = vpack.c.b16 %v842, %v841
      %v1054 = vpack.c.b16 %v844, %v843
      %v1055 = vpack.c.b16 %v846, %v845
      %v1056 = vpack.c.b16 %v848, %v847
      %v1057 = vpack.c.b16 %v850, %v849
      %v1058 = vpack.c.b16 %v852, %v851
      %v1059 = vpack.c.b16 %v854, %v853
      %v1060 = vpack.c.b16 %v856, %v855
      %v1061 = vpack.c.b16 %v858, %v857
      %v1062 = vpack.c.b16 %v860, %v859
      %v1063 = vpack.c.b16 %v862, %v861
      %v1064 = vpack.c.b16 %v864, %v863
      %v1065 = vpack.c.b16 %v866, %v865
      %v1066 = vpack.c.b16 %v868, %v867
      %v1067 = vpack.c.b16 %v870, %v869
      %v1068 = vpack.c.b16 %v872, %v871
      %v1069 = vpack.c.b16 %v874, %v873
      %v1070 = vpack.c.b16 %v876, %v875
      %v1071 = vpack.c.b16 %v878, %v877
      %v1072 = vpack.c.b16 %v880, %v879
      %v1073 = vpack.c.b16 %v882, %v881
      %v1074 = vpack.c.b16 %v884, %v883
      %v1075 = vpack.c.b16 %v886, %v885
      %v1076 = vpack.c.b16 %v888, %v887
      %v1077 = vpack.c.b16 %v890, %v889
      %v1078 = vpack.c.b16 %v892, %v891
      %v1079 = vpack.c.b16 %v894, %v893
      %v1080 = vpack.c.b16 %v896, %v895
      %v1081 = vpack.c.b16 %v898, %v897
      %v1082 = vpack.c.b16 %v900, %v899
      %v1083 = vpack.c.b16 %v902, %v901
      %v1084 = vpack.c.b16 %v904, %v903
      %v1085 = vpack.c.b16 %v906, %v905
      %v1086 = vpack.c.b16 %v908, %v907
      %v1087 = vpack.c.b16 %v910, %v909
      %v1088 = vpack.c.b16 %v912, %v911
      %v1089 = vpack.c.b16 %v914, %v913
      %v1090 = vpack.c.b16 %v916, %v915
      %v1091 = vpack.c.b16 %v918, %v917
      %v1092 = vpack.c.b16 %v920, %v919
      %v1093 = vpack.c.b16 %v922, %v921
      %v1094 = vpack.c.b16 %v924, %v923
      %v1095 = vpack.c.b16 %v926, %v925
      %v1096 = vpack.c.b16 %v928, %v927
      %v1097 = vpack.c.b16 %v930, %v929
      %v1098 = vpack.c.b16 %v932, %v931
      %v1099 = vpack.c.b16 %v934, %v933
      %v1100 = vpack.c.b16 %v936, %v935
      %v1101 = vpack.c.b16 %v938, %v937
      %v1102 = vpack.c.b16 %v940, %v939
      %v1103 = vpack.c.b16 %v942, %v941
      %v1104 = vpack.c.b16 %v944, %v943
      %v1105 = vpack.c.b16 %v946, %v945
      %v1106 = vpack.c.b16 %v948, %v947
      %v1107 = vpack.c.b16 %v950, %v949
      %v1108 = vpack.c.b16 %v952, %v951
      %v1109 = vpack.c.b16 %v954, %v953
      %v1110 = vpack.c.b16 %v956, %v955
      %v1111 = vpack.c.b16 %v958, %v957
      %v1112 = vpack.c.b16 %v960, %v959
      %v1113 = vpack.c.b16 %v962, %v961
      %v1114 = vpack.c.b16 %v964, %v963
      %v1115 = vpack.c.b16 %v966, %v965
      %v1116 = vpack.c.b16 %v968, %v967
      %v1117 = vpack.c.b16 %v970, %v969
      %v1118 = vpack.c.b16 %v972, %v971
      %v1119 = vpack.c.b16 %v974, %v973
      %v1120 = vpack.c.b16 %v976, %v975
      %v1121 = vpack.c.b16 %v978, %v977
      %v1122 = vpack.c.b16 %v980, %v979
      %v1123 = vpack.c.b16 %v982, %v981
      %v1124 = vpack.c.b16 %v984, %v983
      %v1125 = vpack.c.b16 %v986, %v985
      %v1126 = vpack.c.b16 %v988, %v987
      %v1127 = vpack.c.b16 %v990, %v989
      %v1128 = vpack.c.b16 %v992, %v991
      %v1129 = vpack.c.b16 %v994, %v993
      %v1130 = vpack.c.b16 %v996, %v995
      %v1131 = vpack.c.b16 %v998, %v997
      %v1132 = vpack.c.b16 %v1000, %v999
      %v1133 = vpack.c.b16 %v1002, %v1001
      %v1134 = vpack.c.b16 %v1004, %v1003
      %v1135 = vpack.c.b16 %v1006, %v1005
      %v1136 = vpack.c.b16 %v1008, %v1007
      %v1137 = vpack.c.b16 %v1010, %v1009
      %v1138 = vpack.c.b16 %v1012, %v1011
      %v1139 = vpack.c.b16 %v1014, %v1013
      %v1140 = vpack.c.b16 %v1016, %v1015
      %v1141 = vpack.c.b16 %v1018, %v1017
      %v1142 = vpack.c.b16 %v1020, %v1019
      %v1143 = vpack.c.b16 %v1022, %v1021
      %v1144 = vpack.c.b16 %v1024, %v1023
      %v1145 = vpack.c.b16 %v1026, %v1025
      %v1146 = vpack.c.b16 %v1028, %v1027
      %v1147 = vpack.c.b16 %v1030, %v1029
      %v1148 = vpack.c.b16 %v1032, %v1031
      %v1149 = vpack.c.b16 %v1034, %v1033
      %v1150 = vpack.c.b16 %v1036, %v1035
      %v1151 = vpack.c.b16 %v1038, %v1037
      %v1152 = vpack.c.b16 %v1040, %v1039
      %v1153 = vpack.c.b16 %v1042, %v1041
      %v1154 = vpack.c.b16 %v1044, %v1043
      %v1155 = vpack.c.b16 %v1046, %v1045
      %v1156 = vpack.c.b16 %v1048, %v1047
      %vm1265 = vcmask 523264
      %v1267 = vsel %vm1265, %v576, 0
      %v1270 = vsel %vm1265, %v590, 0
      %1272 = vmatprep.subr.bf16.mxu0 0
      %1273 = vmatpush1.bf16.msra.mxu0 %v1049
      %1274 = vmatprep.subr.bf16.mxu0 0
      %1275 = vmatpush1.bf16.msra.mxu0 %v1050
      %1276 = vmatprep.subr.bf16.mxu0 0
      %1277 = vmatpush1.bf16.msra.mxu0 %v1051
      %1278 = vmatprep.subr.bf16.mxu0 0
      %1279 = vmatpush1.bf16.msra.mxu0 %v1052
      %1280 = vmatprep.subr.bf16.mxu0 0
      %1281 = vmatpush1.bf16.msra.mxu0 %v1053
      %1282 = vmatprep.subr.bf16.mxu0 0
      %1283 = vmatpush1.bf16.msra.mxu0 %v1054
      %1284 = vmatprep.subr.bf16.mxu0 0
      %1285 = vmatpush1.bf16.msra.mxu0 %v1055
      %1286 = vmatprep.subr.bf16.mxu0 0
      %1287 = vmatpush1.bf16.msra.mxu0 %v1056
      %1288 = vmatprep.subr.bf16.mxu0 0
      %1289 = vmatpush1.bf16.msra.mxu0 %v1057
      %1290 = vmatprep.subr.bf16.mxu0 0
      %1291 = vmatpush1.bf16.msra.mxu0 %v1058
      %1292 = vmatprep.subr.bf16.mxu0 0
      %1293 = vmatpush1.bf16.msra.mxu0 %v1059
      %1294 = vmatprep.subr.bf16.mxu0 0
      %1295 = vmatpush1.bf16.msra.mxu0 %v1060
      %1296 = vmatprep.subr.bf16.mxu0 0
      %1297 = vmatpush1.bf16.msra.mxu0 %v1061
      %1298 = vmatprep.subr.bf16.mxu0 0
      %1299 = vmatpush1.bf16.msra.mxu0 %v1062
      %1300 = vmatprep.subr.bf16.mxu0 0
      %1301 = vmatpush1.bf16.msra.mxu0 %v1063
      %1302 = vmatprep.subr.bf16.mxu0 0
      %1303 = vmatpush1.bf16.msra.mxu0 %v1064
      %1304 = vmatprep.mubr.bf16.mxu0 %v564
      %1305 = vmatmul.mubr.bf16.gmra.mrb[0].mxu0 %v563
      %v1306 = vpop.f32.mrb[0].mxu0
      %v1307 = vadd.f32 %v477, %v1306
      %v1308 = vpop.f32.mrb[0].mxu0
      %v1309 = vpop.f32.mrb[0].mxu0
      %v1310 = vadd.f32 %v477, %v1309
      %v1311 = vpop.f32.mrb[0].mxu0
      %1312 = vmatprep.mubr.bf16.mxu0 %v578
      %1313 = vmatmul.mubr.bf16.gmra.mrb[0].mxu0 %v577
      %v1314 = vpop.f32.mrb[0].mxu0
      %v1315 = vadd.f32 %v477, %v1314
      %v1316 = vpop.f32.mrb[0].mxu0
      %v1317 = vpop.f32.mrb[0].mxu0
      %v1318 = vadd.f32 %v477, %v1317
      %v1319 = vpop.f32.mrb[0].mxu0
      %1320 = vdwg.mxu0
      %1321 = vmatprep.subr.bf16.mxu0 0
      %1322 = vmatpush1.bf16.msra.mxu0 %v1065
      %1323 = vmatprep.subr.bf16.mxu0 0
      %1324 = vmatpush1.bf16.msra.mxu0 %v1066
      %1325 = vmatprep.subr.bf16.mxu0 0
      %1326 = vmatpush1.bf16.msra.mxu0 %v1067
      %1327 = vmatprep.subr.bf16.mxu0 0
      %1328 = vmatpush1.bf16.msra.mxu0 %v1068
      %1329 = vmatprep.subr.bf16.mxu0 0
      %1330 = vmatpush1.bf16.msra.mxu0 %v1069
      %1331 = vmatprep.subr.bf16.mxu0 0
      %1332 = vmatpush1.bf16.msra.mxu0 %v1070
      %1333 = vmatprep.subr.bf16.mxu0 0
      %1334 = vmatpush1.bf16.msra.mxu0 %v1071
      %1335 = vmatprep.subr.bf16.mxu0 0
      %1336 = vmatpush1.bf16.msra.mxu0 %v1072
      %1337 = vmatprep.subr.bf16.mxu0 0
      %1338 = vmatpush1.bf16.msra.mxu0 %v1073
      %1339 = vmatprep.subr.bf16.mxu0 0
      %1340 = vmatpush1.bf16.msra.mxu0 %v1074
      %1341 = vmatprep.subr.bf16.mxu0 0
      %1342 = vmatpush1.bf16.msra.mxu0 %v1075
      %1343 = vmatprep.subr.bf16.mxu0 0
      %1344 = vmatpush1.bf16.msra.mxu0 %v1076
      %1345 = vmatprep.subr.bf16.mxu0 0
      %1346 = vmatpush1.bf16.msra.mxu0 %v1077
      %1347 = vmatprep.subr.bf16.mxu0 0
      %1348 = vmatpush1.bf16.msra.mxu0 %v1078
      %1349 = vmatprep.subr.bf16.mxu0 0
      %1350 = vmatpush1.bf16.msra.mxu0 %v1079
      %1351 = vmatprep.subr.bf16.mxu0 0
      %1352 = vmatpush1.bf16.msra.mxu0 %v1080
      %1353 = vmatprep.mubr.bf16.mxu0 %v566
      %1354 = vmatmul.mubr.bf16.gmra.mrb[0].mxu0 %v565
      %v1355 = vpop.f32.mrb[0].mxu0
      %v1356 = vadd.f32 %v1307, %v1355
      %v1357 = vpop.f32.mrb[0].mxu0
      %v1358 = vpop.f32.mrb[0].mxu0
      %v1359 = vadd.f32 %v1310, %v1358
      %v1360 = vpop.f32.mrb[0].mxu0
      %1361 = vmatprep.mubr.bf16.mxu0 %v580
      %1362 = vmatmul.mubr.bf16.gmra.mrb[0].mxu0 %v579
      %v1363 = vpop.f32.mrb[0].mxu0
      %v1364 = vadd.f32 %v1315, %v1363
      %v1365 = vpop.f32.mrb[0].mxu0
      %v1366 = vpop.f32.mrb[0].mxu0
      %v1367 = vadd.f32 %v1318, %v1366
      %v1368 = vpop.f32.mrb[0].mxu0
      %1369 = vdwg.mxu0
      %1370 = vmatprep.subr.bf16.mxu0 0
      %1371 = vmatpush1.bf16.msra.mxu0 %v1081
      %1372 = vmatprep.subr.bf16.mxu0 0
      %1373 = vmatpush1.bf16.msra.mxu0 %v1082
      %1374 = vmatprep.subr.bf16.mxu0 0
      %1375 = vmatpush1.bf16.msra.mxu0 %v1083
      %1376 = vmatprep.subr.bf16.mxu0 0
      %1377 = vmatpush1.bf16.msra.mxu0 %v1084
      %1378 = vmatprep.subr.bf16.mxu0 0
      %1379 = vmatpush1.bf16.msra.mxu0 %v1085
      %1380 = vmatprep.subr.bf16.mxu0 0
      %1381 = vmatpush1.bf16.msra.mxu0 %v1086
      %1382 = vmatprep.subr.bf16.mxu0 0
      %1383 = vmatpush1.bf16.msra.mxu0 %v1087
      %1384 = vmatprep.subr.bf16.mxu0 0
      %1385 = vmatpush1.bf16.msra.mxu0 %v1088
      %1386 = vmatprep.subr.bf16.mxu0 0
      %1387 = vmatpush1.bf16.msra.mxu0 %v1089
      %1388 = vmatprep.subr.bf16.mxu0 0
      %1389 = vmatpush1.bf16.msra.mxu0 %v1090
      %1390 = vmatprep.subr.bf16.mxu0 0
      %1391 = vmatpush1.bf16.msra.mxu0 %v1091
      %1392 = vmatprep.subr.bf16.mxu0 0
      %1393 = vmatpush1.bf16.msra.mxu0 %v1092
      %1394 = vmatprep.subr.bf16.mxu0 0
      %1395 = vmatpush1.bf16.msra.mxu0 %v1093
      %1396 = vmatprep.subr.bf16.mxu0 0
      %1397 = vmatpush1.bf16.msra.mxu0 %v1094
      %1398 = vmatprep.subr.bf16.mxu0 0
      %1399 = vmatpush1.bf16.msra.mxu0 %v1095
      %1400 = vmatprep.subr.bf16.mxu0 0
      %1401 = vmatpush1.bf16.msra.mxu0 %v1096
      %1402 = vmatprep.mubr.bf16.mxu0 %v568
      %1403 = vmatmul.mubr.bf16.gmra.mrb[0].mxu0 %v567
      %v1404 = vpop.f32.mrb[0].mxu0
      %v1405 = vadd.f32 %v1356, %v1404
      %v1406 = vpop.f32.mrb[0].mxu0
      %v1407 = vpop.f32.mrb[0].mxu0
      %v1408 = vadd.f32 %v1359, %v1407
      %v1409 = vpop.f32.mrb[0].mxu0
      %1410 = vmatprep.mubr.bf16.mxu0 %v582
      %1411 = vmatmul.mubr.bf16.gmra.mrb[0].mxu0 %v581
      %v1412 = vpop.f32.mrb[0].mxu0
      %v1413 = vadd.f32 %v1364, %v1412
      %v1414 = vpop.f32.mrb[0].mxu0
      %v1415 = vpop.f32.mrb[0].mxu0
      %v1416 = vadd.f32 %v1367, %v1415
      %v1417 = vpop.f32.mrb[0].mxu0
      %1418 = vdwg.mxu0
      %1419 = vmatprep.subr.bf16.mxu0 0
      %1420 = vmatpush1.bf16.msra.mxu0 %v1097
      %1421 = vmatprep.subr.bf16.mxu0 0
      %1422 = vmatpush1.bf16.msra.mxu0 %v1098
      %1423 = vmatprep.subr.bf16.mxu0 0
      %1424 = vmatpush1.bf16.msra.mxu0 %v1099
      %1425 = vmatprep.subr.bf16.mxu0 0
      %1426 = vmatpush1.bf16.msra.mxu0 %v1100
      %1427 = vmatprep.subr.bf16.mxu0 0
      %1428 = vmatpush1.bf16.msra.mxu0 %v1101
      %1429 = vmatprep.subr.bf16.mxu0 0
      %1430 = vmatpush1.bf16.msra.mxu0 %v1102
      %1431 = vmatprep.subr.bf16.mxu0 0
      %1432 = vmatpush1.bf16.msra.mxu0 %v1103
      %1433 = vmatprep.subr.bf16.mxu0 0
      %1434 = vmatpush1.bf16.msra.mxu0 %v1104
      %1435 = vmatprep.subr.bf16.mxu0 0
      %1436 = vmatpush1.bf16.msra.mxu0 %v1105
      %1437 = vmatprep.subr.bf16.mxu0 0
      %1438 = vmatpush1.bf16.msra.mxu0 %v1106
      %1439 = vmatprep.subr.bf16.mxu0 0
      %1440 = vmatpush1.bf16.msra.mxu0 %v1107
      %1441 = vmatprep.subr.bf16.mxu0 0
      %1442 = vmatpush1.bf16.msra.mxu0 %v1108
      %1443 = vmatprep.subr.bf16.mxu0 0
      %1444 = vmatpush1.bf16.msra.mxu0 %v1109
      %1445 = vmatprep.subr.bf16.mxu0 0
      %1446 = vmatpush1.bf16.msra.mxu0 %v1110
      %1447 = vmatprep.subr.bf16.mxu0 0
      %1448 = vmatpush1.bf16.msra.mxu0 %v1111
      %1449 = vmatprep.subr.bf16.mxu0 0
      %1450 = vmatpush1.bf16.msra.mxu0 %v1112
      %1451 = vmatprep.mubr.bf16.mxu0 %v570
      %1452 = vmatmul.mubr.bf16.gmra.mrb[0].mxu0 %v569
      %v1453 = vpop.f32.mrb[0].mxu0
      %v1454 = vadd.f32 %v1405, %v1453
      %v1455 = vpop.f32.mrb[0].mxu0
      %v1456 = vpop.f32.mrb[0].mxu0
      %v1457 = vadd.f32 %v1408, %v1456
      %v1458 = vpop.f32.mrb[0].mxu0
      %1459 = vmatprep.mubr.bf16.mxu0 %v584
      %1460 = vmatmul.mubr.bf16.gmra.mrb[0].mxu0 %v583
      %v1461 = vpop.f32.mrb[0].mxu0
      %v1462 = vadd.f32 %v1413, %v1461
      %v1463 = vpop.f32.mrb[0].mxu0
      %v1464 = vpop.f32.mrb[0].mxu0
      %v1465 = vadd.f32 %v1416, %v1464
      %v1466 = vpop.f32.mrb[0].mxu0
      %1467 = vdwg.mxu0
      %1468 = vmatprep.subr.bf16.mxu0 0
      %1469 = vmatpush1.bf16.msra.mxu0 %v1113
      %1470 = vmatprep.subr.bf16.mxu0 0
      %1471 = vmatpush1.bf16.msra.mxu0 %v1114
      %1472 = vmatprep.subr.bf16.mxu0 0
      %1473 = vmatpush1.bf16.msra.mxu0 %v1115
      %1474 = vmatprep.subr.bf16.mxu0 0
      %1475 = vmatpush1.bf16.msra.mxu0 %v1116
      %1476 = vmatprep.subr.bf16.mxu0 0
      %1477 = vmatpush1.bf16.msra.mxu0 %v1117
      %1478 = vmatprep.subr.bf16.mxu0 0
      %1479 = vmatpush1.bf16.msra.mxu0 %v1118
      %1480 = vmatprep.subr.bf16.mxu0 0
      %1481 = vmatpush1.bf16.msra.mxu0 %v1119
      %1482 = vmatprep.subr.bf16.mxu0 0
      %1483 = vmatpush1.bf16.msra.mxu0 %v1120
      %1484 = vmatprep.subr.bf16.mxu0 0
      %1485 = vmatpush1.bf16.msra.mxu0 %v1121
      %1486 = vmatprep.subr.bf16.mxu0 0
      %1487 = vmatpush1.bf16.msra.mxu0 %v1122
      %1488 = vmatprep.subr.bf16.mxu0 0
      %1489 = vmatpush1.bf16.msra.mxu0 %v1123
      %1490 = vmatprep.subr.bf16.mxu0 0
      %1491 = vmatpush1.bf16.msra.mxu0 %v1124
      %1492 = vmatprep.subr.bf16.mxu0 0
      %1493 = vmatpush1.bf16.msra.mxu0 %v1125
      %1494 = vmatprep.subr.bf16.mxu0 0
      %1495 = vmatpush1.bf16.msra.mxu0 %v1126
      %1496 = vmatprep.subr.bf16.mxu0 0
      %1497 = vmatpush1.bf16.msra.mxu0 %v1127
      %1498 = vmatprep.subr.bf16.mxu0 0
      %1499 = vmatpush1.bf16.msra.mxu0 %v1128
      %1500 = vmatprep.mubr.bf16.mxu0 %v572
      %1501 = vmatmul.mubr.bf16.gmra.mrb[0].mxu0 %v571
      %v1502 = vpop.f32.mrb[0].mxu0
      %v1503 = vadd.f32 %v1454, %v1502
      %v1504 = vpop.f32.mrb[0].mxu0
      %v1505 = vpop.f32.mrb[0].mxu0
      %v1506 = vadd.f32 %v1457, %v1505
      %v1507 = vpop.f32.mrb[0].mxu0
      %1508 = vmatprep.mubr.bf16.mxu0 %v586
      %1509 = vmatmul.mubr.bf16.gmra.mrb[0].mxu0 %v585
      %v1510 = vpop.f32.mrb[0].mxu0
      %v1511 = vadd.f32 %v1462, %v1510
      %v1512 = vpop.f32.mrb[0].mxu0
      %v1513 = vpop.f32.mrb[0].mxu0
      %v1514 = vadd.f32 %v1465, %v1513
      %v1515 = vpop.f32.mrb[0].mxu0
      %1516 = vdwg.mxu0
      %1517 = vmatprep.subr.bf16.mxu0 0
      %1518 = vmatpush1.bf16.msra.mxu0 %v1129
      %1519 = vmatprep.subr.bf16.mxu0 0
      %1520 = vmatpush1.bf16.msra.mxu0 %v1130
      %1521 = vmatprep.subr.bf16.mxu0 0
      %1522 = vmatpush1.bf16.msra.mxu0 %v1131
      %1523 = vmatprep.subr.bf16.mxu0 0
      %1524 = vmatpush1.bf16.msra.mxu0 %v1132
      %1525 = vmatprep.subr.bf16.mxu0 0
      %1526 = vmatpush1.bf16.msra.mxu0 %v1133
      %1527 = vmatprep.subr.bf16.mxu0 0
      %1528 = vmatpush1.bf16.msra.mxu0 %v1134
      %1529 = vmatprep.subr.bf16.mxu0 0
      %1530 = vmatpush1.bf16.msra.mxu0 %v1135
      %1531 = vmatprep.subr.bf16.mxu0 0
      %1532 = vmatpush1.bf16.msra.mxu0 %v1136
      %1533 = vmatprep.subr.bf16.mxu0 0
      %1534 = vmatpush1.bf16.msra.mxu0 %v1137
      %1535 = vmatprep.subr.bf16.mxu0 0
      %1536 = vmatpush1.bf16.msra.mxu0 %v1138
      %1537 = vmatprep.subr.bf16.mxu0 0
      %1538 = vmatpush1.bf16.msra.mxu0 %v1139
      %1539 = vmatprep.subr.bf16.mxu0 0
      %1540 = vmatpush1.bf16.msra.mxu0 %v1140
      %1541 = vmatprep.subr.bf16.mxu0 0
      %1542 = vmatpush1.bf16.msra.mxu0 %v1141
      %1543 = vmatprep.subr.bf16.mxu0 0
      %1544 = vmatpush1.bf16.msra.mxu0 %v1142
      %1545 = vmatprep.subr.bf16.mxu0 0
      %1546 = vmatpush1.bf16.msra.mxu0 %v1143
      %1547 = vmatprep.subr.bf16.mxu0 0
      %1548 = vmatpush1.bf16.msra.mxu0 %v1144
      %1549 = vmatprep.mubr.bf16.mxu0 %v574
      %1550 = vmatmul.mubr.bf16.gmra.mrb[0].mxu0 %v573
      %v1551 = vpop.f32.mrb[0].mxu0
      %v1552 = vadd.f32 %v1503, %v1551
      %v1553 = vpop.f32.mrb[0].mxu0
      %v1554 = vpop.f32.mrb[0].mxu0
      %v1555 = vadd.f32 %v1506, %v1554
      %v1556 = vpop.f32.mrb[0].mxu0
      %1557 = vmatprep.mubr.bf16.mxu0 %v588
      %1558 = vmatmul.mubr.bf16.gmra.mrb[0].mxu0 %v587
      %v1559 = vpop.f32.mrb[0].mxu0
      %v1560 = vadd.f32 %v1511, %v1559
      %v1561 = vpop.f32.mrb[0].mxu0
      %v1562 = vpop.f32.mrb[0].mxu0
      %v1563 = vadd.f32 %v1514, %v1562
      %v1564 = vpop.f32.mrb[0].mxu0
      %1565 = vdwg.mxu0
      %1566 = vmatprep.subr.bf16.mxu0 0
      %1567 = vmatpush1.bf16.msra.mxu0 %v1145
      %1568 = vmatprep.subr.bf16.mxu0 0
      %1569 = vmatpush1.bf16.msra.mxu0 %v1146
      %1570 = vmatprep.subr.bf16.mxu0 0
      %1571 = vmatpush1.bf16.msra.mxu0 %v1147
      %1572 = vmatprep.subr.bf16.mxu0 0
      %1573 = vmatpush1.bf16.msra.mxu0 %v1148
      %1574 = vmatprep.subr.bf16.mxu0 0
      %1575 = vmatpush1.bf16.msra.mxu0 %v1149
      %1576 = vmatprep.subr.bf16.mxu0 0
      %1577 = vmatpush1.bf16.msra.mxu0 %v1150
      %1578 = vmatprep.subr.bf16.mxu0 0
      %1579 = vmatpush1.bf16.msra.mxu0 %v1151
      %1580 = vmatprep.subr.bf16.mxu0 0
      %1581 = vmatpush1.bf16.msra.mxu0 %v1152
      %1582 = vmatprep.subr.bf16.mxu0 0
      %1583 = vmatpush1.bf16.msra.mxu0 %v1153
      %1584 = vmatprep.subr.bf16.mxu0 0
      %1585 = vmatpush1.bf16.msra.mxu0 %v1154
      %1586 = vmatprep.subr.bf16.mxu0 0
      %1587 = vmatpush1.bf16.msra.mxu0 %v1155
      %1588 = vmatprep.subr.bf16.mxu0 0
      %1589 = vmatpush1.bf16.msra.mxu0 %v1156
      %1590 = vmatprep.subr.bf16.mxu0 0
      %1591 = vmatpush1.bf16.msra.mxu0 0
      %1592 = vmatprep.subr.bf16.mxu0 0
      %1593 = vmatpush1.bf16.msra.mxu0 0
      %1594 = vmatprep.subr.bf16.mxu0 0
      %1595 = vmatpush1.bf16.msra.mxu0 0
      %1596 = vmatprep.subr.bf16.mxu0 0
      %1597 = vmatpush1.bf16.msra.mxu0 0
      %1598 = vmatprep.mubr.bf16.mxu0 %v1267
      %1599 = vmatmul.mubr.bf16.gmra.mrb[0].mxu0 %v575
      %v1600 = vpop.f32.mrb[0].mxu0
      %v1601 = vadd.f32 %v1552, %v1600
      %v1602 = vpop.f32.mrb[0].mxu0
      %v1603 = vpop.f32.mrb[0].mxu0
      %v1604 = vadd.f32 %v1555, %v1603
      %v1605 = vpop.f32.mrb[0].mxu0
      %1606 = vmatprep.mubr.bf16.mxu0 %v1270
      %1607 = vmatmul.mubr.bf16.gmra.mrb[0].mxu0 %v589
      %v1608 = vpop.f32.mrb[0].mxu0
      %v1609 = vadd.f32 %v1560, %v1608
      %v1610 = vpop.f32.mrb[0].mxu0
      %v1611 = vpop.f32.mrb[0].mxu0
      %v1612 = vadd.f32 %v1563, %v1611
      %v1613 = vpop.f32.mrb[0].mxu0
      %1614 = vdwg.mxu0
      %v1615 = vxor.u32 %v1601, 2147483648
      %v1616 = vxor.u32 %v1604, 2147483648
      %v1617 = vxor.u32 %v1609, 2147483648
      %v1618 = vxor.u32 %v1612, 2147483648
      %v1619 = vmul.f32 %v1615, 1.442695
      %v1620 = vpow.pop %v1619
      %v1621 = vmul.f32 %v1616, 1.442695
      %v1622 = vpow.pop %v1621
      %v1623 = vmul.f32 %v1617, 1.442695
      %v1624 = vpow.pop %v1623
      %v1625 = vmul.f32 %v1618, 1.442695
      %v1626 = vpow.pop %v1625
      %v1627 = vadd.f32 %v1620, 1.0
      %v1628 = vadd.f32 %v1622, 1.0
      %v1629 = vadd.f32 %v1624, 1.0
      %v1630 = vadd.f32 %v1626, 1.0
      %v1631 = vrcp.pop %v1627
      %v1632 = vmul.f32 1.0, %v1631
      %v1633 = vrcp.pop %v1628
      %v1634 = vmul.f32 1.0, %v1633
      %v1635 = vrcp.pop %v1629
      %v1636 = vmul.f32 1.0, %v1635
      %v1637 = vrcp.pop %v1630
      %v1638 = vmul.f32 1.0, %v1637
      %v1639 = vmul.f32 %v1601, %v1632
      %v1640 = vmul.f32 %v1604, %v1634
      %v1641 = vmul.f32 %v1609, %v1636
      %v1642 = vmul.f32 %v1612, %v1638
      %v1643 = vpack.c.bf16 %v1640, %v1639
      %v1644 = vpack.c.bf16 %v1642, %v1641
      %v1647 = vunpack.c.l.b16 %v1643
      %v1648 = vunpack.c.h.b16 %v1643
      %v1649 = vunpack.c.l.b16 %v1644
      %v1650 = vunpack.c.h.b16 %v1644
      %v1651 = vpack.c.b16 %v1647, %v1647
      %v1652 = vpack.c.b16 %v1648, %v1648
      %v1653 = vpack.c.b16 %v1649, %v1649
      %v1654 = vpack.c.b16 %v1650, %v1650
      %1659 = vst [vmem:[%s225] sm:$0xf] %v1651
      %1660 = vst [vmem:[%s225 + $0x4] sm:$0xf] %v1652
      %1661 = vst [vmem:[%s225 + $0x8] sm:$0xf] %v1653
      %1662 = vst [vmem:[%s225 + $0xc] sm:$0xf] %v1654
      %s1663 = smul.u32 4, %s19
      %p1664 = scmp.lt.s32.totalorder %s18, 0
      %s1665 = scalar_select %p1664, %s18, 0
      %p1666 = scmp.lt.s32.totalorder %s1663, 7
      %s1667 = scalar_select %p1666, %s1663, 7
      %s1668 = smul.addr %s1665, 8
      %s1669 = sadd.s32 %s1667, %s1668
      %s1670 = smul.addr %s1669, 4
      %s1671 = scalar_lea.vmem %s3, %s1670
      // Predicated region
      $region33: #{simple_video_unet_forward.10} parent=31 // pred_check
        %p1672 = pneg %p121
      $region34: #{simple_video_unet_forward.10} parent=31 // pred_check_branch
        %1674 = sbr.rel (%p1672) target = $region36
      $region35: #{simple_video_unet_forward.10} parent=31 // pred_region
        %s1675 = smul.u32 4, %s19
      $region36: #{simple_video_unet_forward.10} parent=31 // pred_fallthru
        _
    $region32: #{simple_video_unet_forward.10} parent=5 // pred_fallthru
      _
    %p1676 = scmp.le.s32.totalorder 2, %s9
    // Predicated region
    $region37: #{simple_video_unet_forward.10} parent=5 // pred_check
      %p1677 = pneg %p1676
    $region38: #{simple_video_unet_forward.10} parent=5 // pred_check_branch
      %1679 = sbr.rel (%p1677) target = $region40
    $region39: #{simple_video_unet_forward.10} parent=5 // pred_region
      %s1680 = ssub.s32 %s9, 2
      // Predicated region
      $region41: #{simple_video_unet_forward.10} parent=39 // pred_check
        %p1681 = pneg %p127
      $region42: #{simple_video_unet_forward.10} parent=39 // pred_check_branch
        %1683 = sbr.rel (%p1681) target = $region44
      $region43: #{simple_video_unet_forward.10} parent=39 // pred_region
        %s1684 = smul.u32 4, %s21
        %p1685 = scmp.lt.s32.totalorder %s20, 0
        %s1686 = scalar_select %p1685, %s20, 0
        %p1687 = scmp.lt.s32.totalorder %s1684, 7
        %s1688 = scalar_select %p1687, %s1684, 7
        %s1689 = smul.addr %s1686, 8
        %s1690 = sadd.s32 %s1688, %s1689
        %s1691 = smul.addr %s1690, 4
        %s1692 = scalar_lea.vmem %s3, %s1691
      $region44: #{simple_video_unet_forward.10} parent=39 // pred_fallthru
        _
    $region40: #{simple_video_unet_forward.10} parent=5 // pred_fallthru
      _
  $region6: #{simple_video_unet_forward.10} parent=0 // loop_footer
    %s13 = sadd.s32 1, %s9
  $region7: #{simple_video_unet_forward.10} parent=0 // loop_footer_branch
    %8 = sbr.rel target = $region3
  $region8: #{simple_video_unet_forward.10} parent=0 // loop_exit
    _

// kernel: simple_video_unet_forward.11
$region0: #{simple_video_unet_forward.11}
  #allocation0 [shape = 'u32[]', space=smem, size = 0x4, offset = 0x4, fixed_abs, tag = 'smem constant byte address 0x4 - core index']
  #allocation1 [shape = 'u32[144,128]{1,0:T(1,128)}', space=vmem, size = 0x12000, scoped, tag = 'internal scratch']
  %s0 = inlined_call_operand.vmem [shape: bf16[8,64,512], index: 0, kind: input, shape index: {}]
  %s1 = inlined_call_operand.vmem [shape: bf16[8,512,128], index: 1, kind: input, shape index: {}]
  %s2 = inlined_call_operand.vmem [shape: f32[8,1,128], index: 2, kind: input, shape index: {}]
  %s3 = inlined_call_operand.vmem [shape: bf16[8,64,128], index: 3, kind: output, shape index: {}]
  %s4 = sld [smem:[#allocation0]]
  $region45: #{simple_video_unet_forward.11} parent=0
    _
  %s6 = ssub.s32 1, %s4
  %s7 = scalar_select 0, %s6, %s4
  loop: start=0, step=1, limit=10
  $region2: #{simple_video_unet_forward.11} parent=0 // loop_pre_header
    _
  $region3: #{simple_video_unet_forward.11} parent=0 // loop_header
    %s9 = sphi 0, %s13
    %p10 = scmp.ge.s32.totalorder %s9, 10
    %s16 = sphi 0, %s28
    %s17 = sphi 0, %s24
    %s18 = sphi 0, %s16
    %s19 = sphi 0, %s17
    %s20 = sphi 0, %s18
    %s21 = sphi 0, %s19
    %s33 = sphi 0, %s35
    %s36 = sphi 0, %s33
    %s37 = sphi 0, %s36
    %s53 = sphi 0, %s37
    %s59 = sphi 0, %s61
    %s62 = sphi 0, %s59
    %s63 = sphi 0, %s62
    %s79 = sphi 0, %s63
    %s85 = sphi 0, %s87
    %s88 = sphi 0, %s85
    %s89 = sphi 0, %s88
    %s105 = sphi 0, %s89
    %s113 = sphi 0, %s115
    %s116 = sphi 0, %s113
    %s117 = sphi 0, %s116
    %s133 = sphi 0, %s117
  $region4: #{simple_video_unet_forward.11} parent=0 // loop_header_branch
    %12 = sbr.rel (%p10) target = $region8
  $region5: #{simple_video_unet_forward.11} parent=0 // loop_body
    %s14 = ssub.s32 %s9, 1
    %s15 = ssub.s32 %s9, 2
    %s22 = sadd.s32 1, %s17
    %p23 = scmp.ge.s32.totalorder %s22, 1
    %s24 = scalar_select %p23, 0, %s22
    %s25 = sadd.s32 1, %s16
    %s26 = scalar_select %p23, %s25, %s16
    %p27 = scmp.ge.s32.totalorder %s26, 8
    %s28 = scalar_select %p27, 0, %s26
    %s29 = ssub.s32 %s16, %s28
    %s30 = ssub.s32 %s17, %s24
    %s31 = sor.u32 %s29, %s30
    %p32 = scmp.eq.s32.totalorder %s31, 0
    %s34 = sadd.s32 %s33, 1
    %s35 = scalar_select %p32, %s33, %s34
    %p38 = pneg %p32
    %p39 = scmp.eq.s32.totalorder %s9, 7
    %p40 = por %p38, %p39
    %p41 = scmp.ne.s32.totalorder %s33, %s36
    %p42 = scmp.eq.s32.totalorder %s9, 0
    %p43 = por %p41, %p42
    %p44 = scmp.ne.s32.totalorder %s33, %s36
    %p45 = scmp.eq.s32.totalorder %s14, 7
    %p46 = por %p44, %p45
    %p47 = scmp.ne.s32.totalorder %s36, %s37
    %p48 = scmp.eq.s32.totalorder %s14, 0
    %p49 = por %p47, %p48
    %p50 = scmp.ne.s32.totalorder %s36, %s37
    %p51 = scmp.eq.s32.totalorder %s15, 7
    %p52 = por %p50, %p51
    %p54 = scmp.ne.s32.totalorder %s37, %s53
    %p55 = scmp.eq.s32.totalorder %s15, 0
    %p56 = por %p54, %p55
    %s57 = ssub.s32 %s16, %s28
    %p58 = scmp.eq.s32.totalorder %s57, 0
    %s60 = sadd.s32 %s59, 1
    %s61 = scalar_select %p58, %s59, %s60
    %p64 = pneg %p58
    %p65 = scmp.eq.s32.totalorder %s9, 7
    %p66 = por %p64, %p65
    %p67 = scmp.ne.s32.totalorder %s59, %s62
    %p68 = scmp.eq.s32.totalorder %s9, 0
    %p69 = por %p67, %p68
    %p70 = scmp.ne.s32.totalorder %s59, %s62
    %p71 = scmp.eq.s32.totalorder %s14, 7
    %p72 = por %p70, %p71
    %p73 = scmp.ne.s32.totalorder %s62, %s63
    %p74 = scmp.eq.s32.totalorder %s14, 0
    %p75 = por %p73, %p74
    %p76 = scmp.ne.s32.totalorder %s62, %s63
    %p77 = scmp.eq.s32.totalorder %s15, 7
    %p78 = por %p76, %p77
    %p80 = scmp.ne.s32.totalorder %s63, %s79
    %p81 = scmp.eq.s32.totalorder %s15, 0
    %p82 = por %p80, %p81
    %s83 = ssub.s32 %s16, %s28
    %p84 = scmp.eq.s32.totalorder %s83, 0
    %s86 = sadd.s32 %s85, 1
    %s87 = scalar_select %p84, %s85, %s86
    %p90 = pneg %p84
    %p91 = scmp.eq.s32.totalorder %s9, 7
    %p92 = por %p90, %p91
    %p93 = scmp.ne.s32.totalorder %s85, %s88
    %p94 = scmp.eq.s32.totalorder %s9, 0
    %p95 = por %p93, %p94
    %p96 = scmp.ne.s32.totalorder %s85, %s88
    %p97 = scmp.eq.s32.totalorder %s14, 7
    %p98 = por %p96, %p97
    %p99 = scmp.ne.s32.totalorder %s88, %s89
    %p100 = scmp.eq.s32.totalorder %s14, 0
    %p101 = por %p99, %p100
    %p102 = scmp.ne.s32.totalorder %s88, %s89
    %p103 = scmp.eq.s32.totalorder %s15, 7
    %p104 = por %p102, %p103
    %p106 = scmp.ne.s32.totalorder %s89, %s105
    %p107 = scmp.eq.s32.totalorder %s15, 0
    %p108 = por %p106, %p107
    %s109 = ssub.s32 %s16, %s28
    %s110 = ssub.s32 %s17, %s24
    %s111 = sor.u32 %s109, %s110
    %p112 = scmp.eq.s32.totalorder %s111, 0
    %s114 = sadd.s32 %s113, 1
    %s115 = scalar_select %p112, %s113, %s114
    %p118 = pneg %p112
    %p119 = scmp.eq.s32.totalorder %s9, 7
    %p120 = por %p118, %p119
    %p121 = scmp.ne.s32.totalorder %s113, %s116
    %p122 = scmp.eq.s32.totalorder %s9, 0
    %p123 = por %p121, %p122
    %p124 = scmp.ne.s32.totalorder %s113, %s116
    %p125 = scmp.eq.s32.totalorder %s14, 7
    %p126 = por %p124, %p125
    %p127 = scmp.ne.s32.totalorder %s116, %s117
    %p128 = scmp.eq.s32.totalorder %s14, 0
    %p129 = por %p127, %p128
    %p130 = scmp.ne.s32.totalorder %s116, %s117
    %p131 = scmp.eq.s32.totalorder %s15, 7
    %p132 = por %p130, %p131
    %p134 = scmp.ne.s32.totalorder %s117, %s133
    %p135 = scmp.eq.s32.totalorder %s15, 0
    %p136 = por %p134, %p135
    %p137 = scmp.le.s32.totalorder 1, %s9
    %p138 = scmp.lt.s32.totalorder %s9, 9
    %p139 = pnand %p137, %p138
    %p140 = pneg %p139
    // Predicated region
    $region9: #{simple_video_unet_forward.11} parent=5 // pred_check
      _
    $region10: #{simple_video_unet_forward.11} parent=5 // pred_check_branch
      %142 = sbr.rel (%p139) target = $region12
    $region11: #{simple_video_unet_forward.11} parent=5 // pred_region
      %s143 = ssub.s32 %s9, 1
    $region12: #{simple_video_unet_forward.11} parent=5 // pred_fallthru
      _
    %p144 = scmp.lt.s32.totalorder %s9, 8
    // Predicated region
    $region13: #{simple_video_unet_forward.11} parent=5 // pred_check
      %p145 = pneg %p144
    $region14: #{simple_video_unet_forward.11} parent=5 // pred_check_branch
      %147 = sbr.rel (%p145) target = $region16
    $region15: #{simple_video_unet_forward.11} parent=5 // pred_region
      // Predicated region
      $region17: #{simple_video_unet_forward.11} parent=15 // pred_check
        %p148 = pneg %p43
      $region18: #{simple_video_unet_forward.11} parent=15 // pred_check_branch
        %150 = sbr.rel (%p148) target = $region20
      $region19: #{simple_video_unet_forward.11} parent=15 // pred_region
        %s151 = smul.u32 8, %s17
        %p152 = scmp.lt.s32.totalorder %s16, 7
        %s153 = scalar_select %p152, %s16, 7
        %p154 = scmp.lt.s32.totalorder %s151, 7
        %s155 = scalar_select %p154, %s151, 7
        %s156 = smul.addr %s155, 4
        %s157 = smul.addr %s153, 32
        %s158 = sadd.s32 %s156, %s157
        %s159 = smul.addr %s158, 4
        %s160 = scalar_lea.vmem %s0, %s159
        %s161 = smul.u32 8, %s17
      $region20: #{simple_video_unet_forward.11} parent=15 // pred_fallthru
        _
      // Predicated region
      $region21: #{simple_video_unet_forward.11} parent=15 // pred_check
        %p162 = pneg %p69
      $region22: #{simple_video_unet_forward.11} parent=15 // pred_check_branch
        %164 = sbr.rel (%p162) target = $region24
      $region23: #{simple_video_unet_forward.11} parent=15 // pred_region
        %p165 = scmp.lt.s32.totalorder %s16, 7
        %s166 = scalar_select %p165, %s16, 7
        %s167 = smul.addr %s166, 64
        %s168 = smul.addr %s167, 4
        %s169 = scalar_lea.vmem %s1, %s168
      $region24: #{simple_video_unet_forward.11} parent=15 // pred_fallthru
        _
      // Predicated region
      $region25: #{simple_video_unet_forward.11} parent=15 // pred_check
        %p170 = pneg %p95
      $region26: #{simple_video_unet_forward.11} parent=15 // pred_check_branch
        %172 = sbr.rel (%p170) target = $region28
      $region27: #{simple_video_unet_forward.11} parent=15 // pred_region
        %p173 = scmp.lt.s32.totalorder %s16, 7
        %s174 = scalar_select %p173, %s16, 7
        %s175 = scalar_lea.vmem %s2, %s174
      $region28: #{simple_video_unet_forward.11} parent=15 // pred_fallthru
        _
    $region16: #{simple_video_unet_forward.11} parent=5 // pred_fallthru
      _
    %p176 = scmp.le.s32.totalorder 1, %s9
    %p177 = scmp.lt.s32.totalorder %s9, 9
    %p178 = pnand %p176, %p177
    %p179 = pneg %p178
    // Predicated region
    $region29: #{simple_video_unet_forward.11} parent=5 // pred_check
      _
    $region30: #{simple_video_unet_forward.11} parent=5 // pred_check_branch
      %181 = sbr.rel (%p178) target = $region32
    $region31: #{simple_video_unet_forward.11} parent=5 // pred_region
      %s182 = ssub.s32 %s9, 1
      %s183 = smul.u32 8, %s19
      %p184 = scmp.lt.s32.totalorder %s18, 7
      %s185 = scalar_select %p184, %s18, 7
      %p186 = scmp.lt.s32.totalorder %s183, 7
      %s187 = scalar_select %p186, %s183, 7
      %s188 = smul.addr %s187, 4
      %s189 = smul.addr %s185, 32
      %s190 = sadd.s32 %s188, %s189
      %s191 = smul.addr %s190, 4
      %s192 = scalar_lea.vmem %s0, %s191
      %p193 = pneg %p49
      %p194 = pneg %p46
      %p195 = scmp.lt.s32.totalorder %s18, 7
      %s196 = scalar_select %p195, %s18, 7
      %s197 = smul.addr %s196, 64
      %s198 = smul.addr %s197, 4
      %s199 = scalar_lea.vmem %s1, %s198
      %p200 = pneg %p75
      %p201 = pneg %p72
      %p202 = scmp.lt.s32.totalorder %s18, 7
      %s203 = scalar_select %p202, %s18, 7
      %s204 = scalar_lea.vmem %s2, %s203
      %p205 = pneg %p101
      %p206 = pneg %p98
      %p207 = pneg %p129
      %p208 = pneg %p126
      %s209 = smul.u32 8, %s19
      %p210 = scmp.lt.s32.totalorder %s18, 7
      %s211 = scalar_select %p210, %s18, 7
      %p212 = scmp.lt.s32.totalorder %s209, 7
      %s213 = scalar_select %p212, %s209, 7
      %s214 = smul.addr %s211, 8
      %s215 = sadd.s32 %s213, %s214
      %s216 = smul.addr %s215, 4
      %s217 = scalar_lea.vmem %s3, %s216
      %s218 = smul.u32 8, %s19
      %p219 = scmp.lt.s32.totalorder %s18, 7
      %s220 = scalar_select %p219, %s18, 7
      %p221 = scmp.lt.s32.totalorder %s218, 7
      %s222 = scalar_select %p221, %s218, 7
      %s223 = smul.addr %s222, 4
      %s224 = smul.addr %s220, 32
      %s225 = sadd.s32 %s223, %s224
      %s226 = smul.addr %s225, 4
      %s227 = scalar_lea.vmem %s0, %s226
      %s228 = smul.u32 8, %s19
      %p229 = scmp.lt.s32.totalorder %s18, 7
      %s230 = scalar_select %p229, %s18, 7
      %s231 = smul.addr %s230, 64
      %s232 = smul.addr %s231, 4
      %s233 = scalar_lea.vmem %s1, %s232
      %p234 = scmp.lt.s32.totalorder %s18, 7
      %s235 = scalar_select %p234, %s18, 7
      %s236 = scalar_lea.vmem %s2, %s235
      %s237 = smul.u32 8, %s19
      %p238 = scmp.lt.s32.totalorder %s18, 7
      %s239 = scalar_select %p238, %s18, 7
      %p240 = scmp.lt.s32.totalorder %s237, 7
      %s241 = scalar_select %p240, %s237, 7
      %s242 = smul.addr %s239, 8
      %s243 = sadd.s32 %s241, %s242
      %s244 = smul.addr %s243, 4
      %s245 = scalar_lea.vmem %s3, %s244
      %s246 = smul.u32 8, %s19
      %v248 = vld [vmem:[%s233] sm:$0xf]
      %v249 = vld [vmem:[%s233 + $0x4] sm:$0xf]
      %v250 = vld [vmem:[%s233 + $0x8] sm:$0xf]
      %v251 = vld [vmem:[%s233 + $0xc] sm:$0xf]
      %v252 = vld [vmem:[%s233 + $0x10] sm:$0xf]
      %v253 = vld [vmem:[%s233 + $0x14] sm:$0xf]
      %v254 = vld [vmem:[%s233 + $0x18] sm:$0xf]
      %v255 = vld [vmem:[%s233 + $0x1c] sm:$0xf]
      %v256 = vld [vmem:[%s233 + $0x20] sm:$0xf]
      %v257 = vld [vmem:[%s233 + $0x24] sm:$0xf]
      %v258 = vld [vmem:[%s233 + $0x28] sm:$0xf]
      %v259 = vld [vmem:[%s233 + $0x2c] sm:$0xf]
      %v260 = vld [vmem:[%s233 + $0x30] sm:$0xf]
      %v261 = vld [vmem:[%s233 + $0x34] sm:$0xf]
      %v262 = vld [vmem:[%s233 + $0x38] sm:$0xf]
      %v263 = vld [vmem:[%s233 + $0x3c] sm:$0xf]
      %v264 = vld [vmem:[%s233 + $0x40] sm:$0xf]
      %v265 = vld [vmem:[%s233 + $0x44] sm:$0xf]
      %v266 = vld [vmem:[%s233 + $0x48] sm:$0xf]
      %v267 = vld [vmem:[%s233 + $0x4c] sm:$0xf]
      %v268 = vld [vmem:[%s233 + $0x50] sm:$0xf]
      %v269 = vld [vmem:[%s233 + $0x54] sm:$0xf]
      %v270 = vld [vmem:[%s233 + $0x58] sm:$0xf]
      %v271 = vld [vmem:[%s233 + $0x5c] sm:$0xf]
      %v272 = vld [vmem:[%s233 + $0x60] sm:$0xf]
      %v273 = vld [vmem:[%s233 + $0x64] sm:$0xf]
      %v274 = vld [vmem:[%s233 + $0x68] sm:$0xf]
      %v275 = vld [vmem:[%s233 + $0x6c] sm:$0xf]
      %v276 = vld [vmem:[%s233 + $0x70] sm:$0xf]
      %v277 = vld [vmem:[%s233 + $0x74] sm:$0xf]
      %v278 = vld [vmem:[%s233 + $0x78] sm:$0xf]
      %v279 = vld [vmem:[%s233 + $0x7c] sm:$0xf]
      %v280 = vld [vmem:[%s233 + $0x80] sm:$0xf]
      %v281 = vld [vmem:[%s233 + $0x84] sm:$0xf]
      %v282 = vld [vmem:[%s233 + $0x88] sm:$0xf]
      %v283 = vld [vmem:[%s233 + $0x8c] sm:$0xf]
      %v284 = vld [vmem:[%s233 + $0x90] sm:$0xf]
      %v285 = vld [vmem:[%s233 + $0x94] sm:$0xf]
      %v286 = vld [vmem:[%s233 + $0x98] sm:$0xf]
      %v287 = vld [vmem:[%s233 + $0x9c] sm:$0xf]
      %v288 = vld [vmem:[%s233 + $0xa0] sm:$0xf]
      %v289 = vld [vmem:[%s233 + $0xa4] sm:$0xf]
      %v290 = vld [vmem:[%s233 + $0xa8] sm:$0xf]
      %v291 = vld [vmem:[%s233 + $0xac] sm:$0xf]
      %v292 = vld [vmem:[%s233 + $0xb0] sm:$0xf]
      %v293 = vld [vmem:[%s233 + $0xb4] sm:$0xf]
      %v294 = vld [vmem:[%s233 + $0xb8] sm:$0xf]
      %v295 = vld [vmem:[%s233 + $0xbc] sm:$0xf]
      %v296 = vld [vmem:[%s233 + $0xc0] sm:$0xf]
      %v297 = vld [vmem:[%s233 + $0xc4] sm:$0xf]
      %v298 = vld [vmem:[%s233 + $0xc8] sm:$0xf]
      %v299 = vld [vmem:[%s233 + $0xcc] sm:$0xf]
      %v300 = vld [vmem:[%s233 + $0xd0] sm:$0xf]
      %v301 = vld [vmem:[%s233 + $0xd4] sm:$0xf]
      %v302 = vld [vmem:[%s233 + $0xd8] sm:$0xf]
      %v303 = vld [vmem:[%s233 + $0xdc] sm:$0xf]
      %v304 = vld [vmem:[%s233 + $0xe0] sm:$0xf]
      %v305 = vld [vmem:[%s233 + $0xe4] sm:$0xf]
      %v306 = vld [vmem:[%s233 + $0xe8] sm:$0xf]
      %v307 = vld [vmem:[%s233 + $0xec] sm:$0xf]
      %v308 = vld [vmem:[%s233 + $0xf0] sm:$0xf]
      %v309 = vld [vmem:[%s233 + $0xf4] sm:$0xf]
      %v310 = vld [vmem:[%s233 + $0xf8] sm:$0xf]
      %v311 = vld [vmem:[%s233 + $0xfc] sm:$0xf]
      %v312 = vld [vmem:[%s227] sm:$0xff]
      %v313 = vld [vmem:[%s227 + $0x8] sm:$0xff]
      %v314 = vld [vmem:[%s227 + $0x10] sm:$0xff]
      %v315 = vld [vmem:[%s227 + $0x18] sm:$0xff]
      %v316 = vld [vmem:[%s227 + $0x20] sm:$0xff]
      %v317 = vld [vmem:[%s227 + $0x28] sm:$0xff]
      %v318 = vld [vmem:[%s227 + $0x30] sm:$0xff]
      %v319 = vld [vmem:[%s227 + $0x38] sm:$0xff]
      %v320 = vld [vmem:[%s227 + $0x40] sm:$0xff]
      %v321 = vld [vmem:[%s227 + $0x48] sm:$0xff]
      %v322 = vld [vmem:[%s227 + $0x50] sm:$0xff]
      %v323 = vld [vmem:[%s227 + $0x58] sm:$0xff]
      %v324 = vld [vmem:[%s227 + $0x60] sm:$0xff]
      %v325 = vld [vmem:[%s227 + $0x68] sm:$0xff]
      %v326 = vld [vmem:[%s227 + $0x70] sm:$0xff]
      %v327 = vld [vmem:[%s227 + $0x78] sm:$0xff]
      %v328 = vld [vmem:[%s236] sm:$0x1]
      %v330 = vlaneseq
      %v331 = vshrl.u32 %v330, 7
      %v332 = vsub.s32 0, %v331
      %v333 = vrot.slane %v328, %v332
      %v351 = vunpack.c.l.b16 %v312
      %v352 = vunpack.c.h.b16 %v312
      %v353 = vunpack.c.l.b16 %v313
      %v354 = vunpack.c.h.b16 %v313
      %v355 = vunpack.c.l.b16 %v314
      %v356 = vunpack.c.h.b16 %v314
      %v357 = vunpack.c.l.b16 %v315
      %v358 = vunpack.c.h.b16 %v315
      %v359 = vunpack.c.l.b16 %v316
      %v360 = vunpack.c.h.b16 %v316
      %v361 = vunpack.c.l.b16 %v317
      %v362 = vunpack.c.h.b16 %v317
      %v363 = vunpack.c.l.b16 %v318
      %v364 = vunpack.c.h.b16 %v318
      %v365 = vunpack.c.l.b16 %v319
      %v366 = vunpack.c.h.b16 %v319
      %v367 = vunpack.c.l.b16 %v320
      %v368 = vunpack.c.h.b16 %v320
      %v369 = vunpack.c.l.b16 %v321
      %v370 = vunpack.c.h.b16 %v321
      %v371 = vunpack.c.l.b16 %v322
      %v372 = vunpack.c.h.b16 %v322
      %v373 = vunpack.c.l.b16 %v323
      %v374 = vunpack.c.h.b16 %v323
      %v375 = vunpack.c.l.b16 %v324
      %v376 = vunpack.c.h.b16 %v324
      %v377 = vunpack.c.l.b16 %v325
      %v378 = vunpack.c.h.b16 %v325
      %v379 = vunpack.c.l.b16 %v326
      %v380 = vunpack.c.h.b16 %v326
      %v381 = vunpack.c.l.b16 %v327
      %v382 = vunpack.c.h.b16 %v327
      %v383 = vpack.c.b16 %v355, %v351
      %v384 = vpack.c.b16 %v356, %v352
      %v385 = vpack.c.b16 %v357, %v353
      %v386 = vpack.c.b16 %v358, %v354
      %v387 = vpack.c.b16 %v363, %v359
      %v388 = vpack.c.b16 %v364, %v360
      %v389 = vpack.c.b16 %v365, %v361
      %v390 = vpack.c.b16 %v366, %v362
      %v391 = vpack.c.b16 %v371, %v367
      %v392 = vpack.c.b16 %v372, %v368
      %v393 = vpack.c.b16 %v373, %v369
      %v394 = vpack.c.b16 %v374, %v370
      %v395 = vpack.c.b16 %v379, %v375
      %v396 = vpack.c.b16 %v380, %v376
      %v397 = vpack.c.b16 %v381, %v377
      %v398 = vpack.c.b16 %v382, %v378
      %v479 = vunpack.c.l.b16 %v248
      %v480 = vunpack.c.l.b16 %v249
      %v481 = vunpack.c.l.b16 %v250
      %v482 = vunpack.c.l.b16 %v251
      %v483 = vunpack.c.l.b16 %v252
      %v484 = vunpack.c.l.b16 %v253
      %v485 = vunpack.c.l.b16 %v254
      %v486 = vunpack.c.l.b16 %v255
      %v487 = vunpack.c.l.b16 %v256
      %v488 = vunpack.c.l.b16 %v257
      %v489 = vunpack.c.l.b16 %v258
      %v490 = vunpack.c.l.b16 %v259
      %v491 = vunpack.c.l.b16 %v260
      %v492 = vunpack.c.l.b16 %v261
      %v493 = vunpack.c.l.b16 %v262
      %v494 = vunpack.c.l.b16 %v263
      %v495 = vunpack.c.l.b16 %v264
      %v496 = vunpack.c.l.b16 %v265
      %v497 = vunpack.c.l.b16 %v266
      %v498 = vunpack.c.l.b16 %v267
      %v499 = vunpack.c.l.b16 %v268
      %v500 = vunpack.c.l.b16 %v269
      %v501 = vunpack.c.l.b16 %v270
      %v502 = vunpack.c.l.b16 %v271
      %v503 = vunpack.c.l.b16 %v272
      %v504 = vunpack.c.l.b16 %v273
      %v505 = vunpack.c.l.b16 %v274
      %v506 = vunpack.c.l.b16 %v275
      %v507 = vunpack.c.l.b16 %v276
      %v508 = vunpack.c.l.b16 %v277
      %v509 = vunpack.c.l.b16 %v278
      %v510 = vunpack.c.l.b16 %v279
      %v511 = vunpack.c.l.b16 %v280
      %v512 = vunpack.c.l.b16 %v281
      %v513 = vunpack.c.l.b16 %v282
      %v514 = vunpack.c.l.b16 %v283
      %v515 = vunpack.c.l.b16 %v284
      %v516 = vunpack.c.l.b16 %v285
      %v517 = vunpack.c.l.b16 %v286
      %v518 = vunpack.c.l.b16 %v287
      %v519 = vunpack.c.l.b16 %v288
      %v520 = vunpack.c.l.b16 %v289
      %v521 = vunpack.c.l.b16 %v290
      %v522 = vunpack.c.l.b16 %v291
      %v523 = vunpack.c.l.b16 %v292
      %v524 = vunpack.c.l.b16 %v293
      %v525 = vunpack.c.l.b16 %v294
      %v526 = vunpack.c.l.b16 %v295
      %v527 = vunpack.c.l.b16 %v296
      %v528 = vunpack.c.l.b16 %v297
      %v529 = vunpack.c.l.b16 %v298
      %v530 = vunpack.c.l.b16 %v299
      %v531 = vunpack.c.l.b16 %v300
      %v532 = vunpack.c.l.b16 %v301
      %v533 = vunpack.c.l.b16 %v302
      %v534 = vunpack.c.l.b16 %v303
      %v535 = vunpack.c.l.b16 %v304
      %v536 = vunpack.c.l.b16 %v305
      %v537 = vunpack.c.l.b16 %v306
      %v538 = vunpack.c.l.b16 %v307
      %v539 = vunpack.c.l.b16 %v308
      %v540 = vunpack.c.l.b16 %v309
      %v541 = vunpack.c.l.b16 %v310
      %v542 = vunpack.c.l.b16 %v311
      %v543 = vpack.c.b16 %v480, %v479
      %v544 = vpack.c.b16 %v482, %v481
      %v545 = vpack.c.b16 %v484, %v483
      %v546 = vpack.c.b16 %v486, %v485
      %v547 = vpack.c.b16 %v488, %v487
      %v548 = vpack.c.b16 %v490, %v489
      %v549 = vpack.c.b16 %v492, %v491
      %v550 = vpack.c.b16 %v494, %v493
      %v551 = vpack.c.b16 %v496, %v495
      %v552 = vpack.c.b16 %v498, %v497
      %v553 = vpack.c.b16 %v500, %v499
      %v554 = vpack.c.b16 %v502, %v501
      %v555 = vpack.c.b16 %v504, %v503
      %v556 = vpack.c.b16 %v506, %v505
      %v557 = vpack.c.b16 %v508, %v507
      %v558 = vpack.c.b16 %v510, %v509
      %v559 = vpack.c.b16 %v512, %v511
      %v560 = vpack.c.b16 %v514, %v513
      %v561 = vpack.c.b16 %v516, %v515
      %v562 = vpack.c.b16 %v518, %v517
      %v563 = vpack.c.b16 %v520, %v519
      %v564 = vpack.c.b16 %v522, %v521
      %v565 = vpack.c.b16 %v524, %v523
      %v566 = vpack.c.b16 %v526, %v525
      %v567 = vpack.c.b16 %v528, %v527
      %v568 = vpack.c.b16 %v530, %v529
      %v569 = vpack.c.b16 %v532, %v531
      %v570 = vpack.c.b16 %v534, %v533
      %v571 = vpack.c.b16 %v536, %v535
      %v572 = vpack.c.b16 %v538, %v537
      %v573 = vpack.c.b16 %v540, %v539
      %v574 = vpack.c.b16 %v542, %v541
      %607 = vmatprep.subr.bf16.mxu0 0
      %608 = vmatpush1.bf16.msra.mxu0 %v543
      %609 = vmatprep.subr.bf16.mxu0 0
      %610 = vmatpush1.bf16.msra.mxu0 %v544
      %611 = vmatprep.subr.bf16.mxu0 0
      %612 = vmatpush1.bf16.msra.mxu0 %v545
      %613 = vmatprep.subr.bf16.mxu0 0
      %614 = vmatpush1.bf16.msra.mxu0 %v546
      %615 = vmatprep.subr.bf16.mxu0 0
      %616 = vmatpush1.bf16.msra.mxu0 %v547
      %617 = vmatprep.subr.bf16.mxu0 0
      %618 = vmatpush1.bf16.msra.mxu0 %v548
      %619 = vmatprep.subr.bf16.mxu0 0
      %620 = vmatpush1.bf16.msra.mxu0 %v549
      %621 = vmatprep.subr.bf16.mxu0 0
      %622 = vmatpush1.bf16.msra.mxu0 %v550
      %623 = vmatprep.subr.bf16.mxu0 0
      %624 = vmatpush1.bf16.msra.mxu0 %v551
      %625 = vmatprep.subr.bf16.mxu0 0
      %626 = vmatpush1.bf16.msra.mxu0 %v552
      %627 = vmatprep.subr.bf16.mxu0 0
      %628 = vmatpush1.bf16.msra.mxu0 %v553
      %629 = vmatprep.subr.bf16.mxu0 0
      %630 = vmatpush1.bf16.msra.mxu0 %v554
      %631 = vmatprep.subr.bf16.mxu0 0
      %632 = vmatpush1.bf16.msra.mxu0 %v555
      %633 = vmatprep.subr.bf16.mxu0 0
      %634 = vmatpush1.bf16.msra.mxu0 %v556
      %635 = vmatprep.subr.bf16.mxu0 0
      %636 = vmatpush1.bf16.msra.mxu0 %v557
      %637 = vmatprep.subr.bf16.mxu0 0
      %638 = vmatpush1.bf16.msra.mxu0 %v558
      %639 = vmatprep.mubr.bf16.mxu0 %v384
      %640 = vmatmul.mubr.bf16.gmra.mrb[0].mxu0 %v383
      %v641 = vpop.f32.mrb[0].mxu0
      %v642 = vadd.f32 %v333, %v641
      %v643 = vpop.f32.mrb[0].mxu0
      %v644 = vpop.f32.mrb[0].mxu0
      %v645 = vadd.f32 %v333, %v644
      %v646 = vpop.f32.mrb[0].mxu0
      %647 = vmatprep.mubr.bf16.mxu0 %v388
      %648 = vmatmul.mubr.bf16.gmra.mrb[0].mxu0 %v387
      %v649 = vpop.f32.mrb[0].mxu0
      %v650 = vadd.f32 %v333, %v649
      %v651 = vpop.f32.mrb[0].mxu0
      %v652 = vpop.f32.mrb[0].mxu0
      %v653 = vadd.f32 %v333, %v652
      %v654 = vpop.f32.mrb[0].mxu0
      %655 = vmatprep.mubr.bf16.mxu0 %v392
      %656 = vmatmul.mubr.bf16.gmra.mrb[0].mxu0 %v391
      %v657 = vpop.f32.mrb[0].mxu0
      %v658 = vadd.f32 %v333, %v657
      %v659 = vpop.f32.mrb[0].mxu0
      %v660 = vpop.f32.mrb[0].mxu0
      %v661 = vadd.f32 %v333, %v660
      %v662 = vpop.f32.mrb[0].mxu0
      %663 = vmatprep.mubr.bf16.mxu0 %v396
      %664 = vmatmul.mubr.bf16.gmra.mrb[0].mxu0 %v395
      %v665 = vpop.f32.mrb[0].mxu0
      %v666 = vadd.f32 %v333, %v665
      %v667 = vpop.f32.mrb[0].mxu0
      %v668 = vpop.f32.mrb[0].mxu0
      %v669 = vadd.f32 %v333, %v668
      %v670 = vpop.f32.mrb[0].mxu0
      %671 = vdwg.mxu0
      %672 = vmatprep.subr.bf16.mxu0 0
      %673 = vmatpush1.bf16.msra.mxu0 %v559
      %674 = vmatprep.subr.bf16.mxu0 0
      %675 = vmatpush1.bf16.msra.mxu0 %v560
      %676 = vmatprep.subr.bf16.mxu0 0
      %677 = vmatpush1.bf16.msra.mxu0 %v561
      %678 = vmatprep.subr.bf16.mxu0 0
      %679 = vmatpush1.bf16.msra.mxu0 %v562
      %680 = vmatprep.subr.bf16.mxu0 0
      %681 = vmatpush1.bf16.msra.mxu0 %v563
      %682 = vmatprep.subr.bf16.mxu0 0
      %683 = vmatpush1.bf16.msra.mxu0 %v564
      %684 = vmatprep.subr.bf16.mxu0 0
      %685 = vmatpush1.bf16.msra.mxu0 %v565
      %686 = vmatprep.subr.bf16.mxu0 0
      %687 = vmatpush1.bf16.msra.mxu0 %v566
      %688 = vmatprep.subr.bf16.mxu0 0
      %689 = vmatpush1.bf16.msra.mxu0 %v567
      %690 = vmatprep.subr.bf16.mxu0 0
      %691 = vmatpush1.bf16.msra.mxu0 %v568
      %692 = vmatprep.subr.bf16.mxu0 0
      %693 = vmatpush1.bf16.msra.mxu0 %v569
      %694 = vmatprep.subr.bf16.mxu0 0
      %695 = vmatpush1.bf16.msra.mxu0 %v570
      %696 = vmatprep.subr.bf16.mxu0 0
      %697 = vmatpush1.bf16.msra.mxu0 %v571
      %698 = vmatprep.subr.bf16.mxu0 0
      %699 = vmatpush1.bf16.msra.mxu0 %v572
      %700 = vmatprep.subr.bf16.mxu0 0
      %701 = vmatpush1.bf16.msra.mxu0 %v573
      %702 = vmatprep.subr.bf16.mxu0 0
      %703 = vmatpush1.bf16.msra.mxu0 %v574
      %704 = vmatprep.mubr.bf16.mxu0 %v386
      %705 = vmatmul.mubr.bf16.gmra.mrb[0].mxu0 %v385
      %v706 = vpop.f32.mrb[0].mxu0
      %v707 = vadd.f32 %v642, %v706
      %v708 = vpop.f32.mrb[0].mxu0
      %v709 = vpop.f32.mrb[0].mxu0
      %v710 = vadd.f32 %v645, %v709
      %v711 = vpop.f32.mrb[0].mxu0
      %712 = vmatprep.mubr.bf16.mxu0 %v390
      %713 = vmatmul.mubr.bf16.gmra.mrb[0].mxu0 %v389
      %v714 = vpop.f32.mrb[0].mxu0
      %v715 = vadd.f32 %v650, %v714
      %v716 = vpop.f32.mrb[0].mxu0
      %v717 = vpop.f32.mrb[0].mxu0
      %v718 = vadd.f32 %v653, %v717
      %v719 = vpop.f32.mrb[0].mxu0
      %720 = vmatprep.mubr.bf16.mxu0 %v394
      %721 = vmatmul.mubr.bf16.gmra.mrb[0].mxu0 %v393
      %v722 = vpop.f32.mrb[0].mxu0
      %v723 = vadd.f32 %v658, %v722
      %v724 = vpop.f32.mrb[0].mxu0
      %v725 = vpop.f32.mrb[0].mxu0
      %v726 = vadd.f32 %v661, %v725
      %v727 = vpop.f32.mrb[0].mxu0
      %728 = vmatprep.mubr.bf16.mxu0 %v398
      %729 = vmatmul.mubr.bf16.gmra.mrb[0].mxu0 %v397
      %v730 = vpop.f32.mrb[0].mxu0
      %v731 = vadd.f32 %v666, %v730
      %v732 = vpop.f32.mrb[0].mxu0
      %v733 = vpop.f32.mrb[0].mxu0
      %v734 = vadd.f32 %v669, %v733
      %v735 = vpop.f32.mrb[0].mxu0
      %736 = vdwg.mxu0
      %v737 = vxor.u32 %v707, 2147483648
      %v738 = vxor.u32 %v710, 2147483648
      %v739 = vxor.u32 %v715, 2147483648
      %v740 = vxor.u32 %v718, 2147483648
      %v741 = vxor.u32 %v723, 2147483648
      %v742 = vxor.u32 %v726, 2147483648
      %v743 = vxor.u32 %v731, 2147483648
      %v744 = vxor.u32 %v734, 2147483648
      %v745 = vmul.f32 %v737, 1.442695
      %v746 = vpow.pop %v745
      %v747 = vmul.f32 %v738, 1.442695
      %v748 = vpow.pop %v747
      %v749 = vmul.f32 %v739, 1.442695
      %v750 = vpow.pop %v749
      %v751 = vmul.f32 %v740, 1.442695
      %v752 = vpow.pop %v751
      %v753 = vmul.f32 %v741, 1.442695
      %v754 = vpow.pop %v753
      %v755 = vmul.f32 %v742, 1.442695
      %v756 = vpow.pop %v755
      %v757 = vmul.f32 %v743, 1.442695
      %v758 = vpow.pop %v757
      %v759 = vmul.f32 %v744, 1.442695
      %v760 = vpow.pop %v759
      %v761 = vadd.f32 %v746, 1.0
      %v762 = vadd.f32 %v748, 1.0
      %v763 = vadd.f32 %v750, 1.0
      %v764 = vadd.f32 %v752, 1.0
      %v765 = vadd.f32 %v754, 1.0
      %v766 = vadd.f32 %v756, 1.0
      %v767 = vadd.f32 %v758, 1.0
      %v768 = vadd.f32 %v760, 1.0
      %v769 = vrcp.pop %v761
      %v770 = vmul.f32 1.0, %v769
      %v771 = vrcp.pop %v762
      %v772 = vmul.f32 1.0, %v771
      %v773 = vrcp.pop %v763
      %v774 = vmul.f32 1.0, %v773
      %v775 = vrcp.pop %v764
      %v776 = vmul.f32 1.0, %v775
      %v777 = vrcp.pop %v765
      %v778 = vmul.f32 1.0, %v777
      %v779 = vrcp.pop %v766
      %v780 = vmul.f32 1.0, %v779
      %v781 = vrcp.pop %v767
      %v782 = vmul.f32 1.0, %v781
      %v783 = vrcp.pop %v768
      %v784 = vmul.f32 1.0, %v783
      %v785 = vmul.f32 %v707, %v770
      %v786 = vmul.f32 %v710, %v772
      %v787 = vmul.f32 %v715, %v774
      %v788 = vmul.f32 %v718, %v776
      %v789 = vmul.f32 %v723, %v778
      %v790 = vmul.f32 %v726, %v780
      %v791 = vmul.f32 %v731, %v782
      %v792 = vmul.f32 %v734, %v784
      %v793 = vpack.c.bf16 %v786, %v785
      %v794 = vpack.c.bf16 %v788, %v787
      %v795 = vpack.c.bf16 %v790, %v789
      %v796 = vpack.c.bf16 %v792, %v791
      %v801 = vunpack.c.l.b16 %v793
      %v802 = vunpack.c.h.b16 %v793
      %v803 = vunpack.c.l.b16 %v794
      %v804 = vunpack.c.h.b16 %v794
      %v805 = vunpack.c.l.b16 %v795
      %v806 = vunpack.c.h.b16 %v795
      %v807 = vunpack.c.l.b16 %v796
      %v808 = vunpack.c.h.b16 %v796
      %v809 = vpack.c.b16 %v801, %v801
      %v810 = vpack.c.b16 %v802, %v802
      %v811 = vpack.c.b16 %v803, %v803
      %v812 = vpack.c.b16 %v804, %v804
      %v813 = vpack.c.b16 %v805, %v805
      %v814 = vpack.c.b16 %v806, %v806
      %v815 = vpack.c.b16 %v807, %v807
      %v816 = vpack.c.b16 %v808, %v808
      %825 = vst [vmem:[%s245] sm:$0xf] %v809
      %826 = vst [vmem:[%s245 + $0x4] sm:$0xf] %v810
      %827 = vst [vmem:[%s245 + $0x8] sm:$0xf] %v811
      %828 = vst [vmem:[%s245 + $0xc] sm:$0xf] %v812
      %829 = vst [vmem:[%s245 + $0x10] sm:$0xf] %v813
      %830 = vst [vmem:[%s245 + $0x14] sm:$0xf] %v814
      %831 = vst [vmem:[%s245 + $0x18] sm:$0xf] %v815
      %832 = vst [vmem:[%s245 + $0x1c] sm:$0xf] %v816
      %s833 = smul.u32 8, %s19
      %p834 = scmp.lt.s32.totalorder %s18, 7
      %s835 = scalar_select %p834, %s18, 7
      %p836 = scmp.lt.s32.totalorder %s833, 7
      %s837 = scalar_select %p836, %s833, 7
      %s838 = smul.addr %s835, 8
      %s839 = sadd.s32 %s837, %s838
      %s840 = smul.addr %s839, 4
      %s841 = scalar_lea.vmem %s3, %s840
      // Predicated region
      $region33: #{simple_video_unet_forward.11} parent=31 // pred_check
        %p842 = pneg %p126
      $region34: #{simple_video_unet_forward.11} parent=31 // pred_check_branch
        %844 = sbr.rel (%p842) target = $region36
      $region35: #{simple_video_unet_forward.11} parent=31 // pred_region
        %s845 = smul.u32 8, %s19
      $region36: #{simple_video_unet_forward.11} parent=31 // pred_fallthru
        _
    $region32: #{simple_video_unet_forward.11} parent=5 // pred_fallthru
      _
    %p846 = scmp.le.s32.totalorder 2, %s9
    // Predicated region
    $region37: #{simple_video_unet_forward.11} parent=5 // pred_check
      %p847 = pneg %p846
    $region38: #{simple_video_unet_forward.11} parent=5 // pred_check_branch
      %849 = sbr.rel (%p847) target = $region40
    $region39: #{simple_video_unet_forward.11} parent=5 // pred_region
      %s850 = ssub.s32 %s9, 2
      // Predicated region
      $region41: #{simple_video_unet_forward.11} parent=39 // pred_check
        %p851 = pneg %p132
      $region42: #{simple_video_unet_forward.11} parent=39 // pred_check_branch
        %853 = sbr.rel (%p851) target = $region44
      $region43: #{simple_video_unet_forward.11} parent=39 // pred_region
        %s854 = smul.u32 8, %s21
        %p855 = scmp.lt.s32.totalorder %s20, 7
        %s856 = scalar_select %p855, %s20, 7
        %p857 = scmp.lt.s32.totalorder %s854, 7
        %s858 = scalar_select %p857, %s854, 7
        %s859 = smul.addr %s856, 8
        %s860 = sadd.s32 %s858, %s859
        %s861 = smul.addr %s860, 4
        %s862 = scalar_lea.vmem %s3, %s861
      $region44: #{simple_video_unet_forward.11} parent=39 // pred_fallthru
        _
    $region40: #{simple_video_unet_forward.11} parent=5 // pred_fallthru
      _
  $region6: #{simple_video_unet_forward.11} parent=0 // loop_footer
    %s13 = sadd.s32 1, %s9
  $region7: #{simple_video_unet_forward.11} parent=0 // loop_footer_branch
    %8 = sbr.rel target = $region3
  $region8: #{simple_video_unet_forward.11} parent=0 // loop_exit
    _

// kernel: simple_video_unet_forward.12
$region0: #{simple_video_unet_forward.12}
  #allocation0 [shape = 'u32[]', space=smem, size = 0x4, offset = 0x4, fixed_abs, tag = 'smem constant byte address 0x4 - core index']
  #allocation1 [shape = 'u32[144,128]{1,0:T(1,128)}', space=vmem, size = 0x12000, scoped, tag = 'internal scratch']
  %s0 = inlined_call_operand.vmem [shape: bf16[1,512,1728], index: 0, kind: input, shape index: {}]
  %s1 = inlined_call_operand.vmem [shape: bf16[1728,128], index: 1, kind: input, shape index: {}]
  %s2 = inlined_call_operand.vmem [shape: f32[1,1,128], index: 2, kind: input, shape index: {}]
  %s3 = inlined_call_operand.vmem [shape: bf16[1,512,128], index: 3, kind: output, shape index: {}]
  %s4 = sld [smem:[#allocation0]]
  $region45: #{simple_video_unet_forward.12} parent=0
    _
  %s6 = ssub.s32 1, %s4
  %s7 = scalar_select 0, %s6, %s4
  loop: start=0, step=1, limit=4
  $region2: #{simple_video_unet_forward.12} parent=0 // loop_pre_header
    _
  $region3: #{simple_video_unet_forward.12} parent=0 // loop_header
    %s9 = sphi 0, %s13
    %p10 = scmp.ge.s32.totalorder %s9, 4
    %s16 = sphi 0, %s28
    %s17 = sphi 0, %s24
    %s18 = sphi 0, %s16
    %s19 = sphi 0, %s17
    %s20 = sphi 0, %s18
    %s21 = sphi 0, %s19
    %s33 = sphi 0, %s35
    %s36 = sphi 0, %s33
    %s37 = sphi 0, %s36
    %s53 = sphi 0, %s37
    %s57 = sphi 0, %s57
    %s59 = sphi 0, %s57
    %s60 = sphi 0, %s59
    %s74 = sphi 0, %s60
    %s80 = sphi 0, %s82
    %s83 = sphi 0, %s80
    %s84 = sphi 0, %s83
    %s100 = sphi 0, %s84
    %s108 = sphi 0, %s110
    %s111 = sphi 0, %s108
    %s112 = sphi 0, %s111
    %s128 = sphi 0, %s112
  $region4: #{simple_video_unet_forward.12} parent=0 // loop_header_branch
    %12 = sbr.rel (%p10) target = $region8
  $region5: #{simple_video_unet_forward.12} parent=0 // loop_body
    %s14 = ssub.s32 %s9, 1
    %s15 = ssub.s32 %s9, 2
    %s22 = sadd.s32 1, %s17
    %p23 = scmp.ge.s32.totalorder %s22, 2
    %s24 = scalar_select %p23, 0, %s22
    %s25 = sadd.s32 1, %s16
    %s26 = scalar_select %p23, %s25, %s16
    %p27 = scmp.ge.s32.totalorder %s26, 1
    %s28 = scalar_select %p27, 0, %s26
    %s29 = ssub.s32 %s16, %s28
    %s30 = ssub.s32 %s17, %s24
    %s31 = sor.u32 %s29, %s30
    %p32 = scmp.eq.s32.totalorder %s31, 0
    %s34 = sadd.s32 %s33, 1
    %s35 = scalar_select %p32, %s33, %s34
    %p38 = pneg %p32
    %p39 = scmp.eq.s32.totalorder %s9, 1
    %p40 = por %p38, %p39
    %p41 = scmp.ne.s32.totalorder %s33, %s36
    %p42 = scmp.eq.s32.totalorder %s9, 0
    %p43 = por %p41, %p42
    %p44 = scmp.ne.s32.totalorder %s33, %s36
    %p45 = scmp.eq.s32.totalorder %s14, 1
    %p46 = por %p44, %p45
    %p47 = scmp.ne.s32.totalorder %s36, %s37
    %p48 = scmp.eq.s32.totalorder %s14, 0
    %p49 = por %p47, %p48
    %p50 = scmp.ne.s32.totalorder %s36, %s37
    %p51 = scmp.eq.s32.totalorder %s15, 1
    %p52 = por %p50, %p51
    %p54 = scmp.ne.s32.totalorder %s37, %s53
    %p55 = scmp.eq.s32.totalorder %s15, 0
    %p56 = por %p54, %p55
    %s58 = sadd.s32 %s57, 1
    %p61 = scmp.eq.s32.totalorder %s9, 1
    %p62 = scmp.ne.s32.totalorder %s57, %s59
    %p63 = scmp.eq.s32.totalorder %s9, 0
    %p64 = por %p62, %p63
    %p65 = scmp.ne.s32.totalorder %s57, %s59
    %p66 = scmp.eq.s32.totalorder %s14, 1
    %p67 = por %p65, %p66
    %p68 = scmp.ne.s32.totalorder %s59, %s60
    %p69 = scmp.eq.s32.totalorder %s14, 0
    %p70 = por %p68, %p69
    %p71 = scmp.ne.s32.totalorder %s59, %s60
    %p72 = scmp.eq.s32.totalorder %s15, 1
    %p73 = por %p71, %p72
    %p75 = scmp.ne.s32.totalorder %s60, %s74
    %p76 = scmp.eq.s32.totalorder %s15, 0
    %p77 = por %p75, %p76
    %s78 = ssub.s32 %s16, %s28
    %p79 = scmp.eq.s32.totalorder %s78, 0
    %s81 = sadd.s32 %s80, 1
    %s82 = scalar_select %p79, %s80, %s81
    %p85 = pneg %p79
    %p86 = scmp.eq.s32.totalorder %s9, 1
    %p87 = por %p85, %p86
    %p88 = scmp.ne.s32.totalorder %s80, %s83
    %p89 = scmp.eq.s32.totalorder %s9, 0
    %p90 = por %p88, %p89
    %p91 = scmp.ne.s32.totalorder %s80, %s83
    %p92 = scmp.eq.s32.totalorder %s14, 1
    %p93 = por %p91, %p92
    %p94 = scmp.ne.s32.totalorder %s83, %s84
    %p95 = scmp.eq.s32.totalorder %s14, 0
    %p96 = por %p94, %p95
    %p97 = scmp.ne.s32.totalorder %s83, %s84
    %p98 = scmp.eq.s32.totalorder %s15, 1
    %p99 = por %p97, %p98
    %p101 = scmp.ne.s32.totalorder %s84, %s100
    %p102 = scmp.eq.s32.totalorder %s15, 0
    %p103 = por %p101, %p102
    %s104 = ssub.s32 %s16, %s28
    %s105 = ssub.s32 %s17, %s24
    %s106 = sor.u32 %s104, %s105
    %p107 = scmp.eq.s32.totalorder %s106, 0
    %s109 = sadd.s32 %s108, 1
    %s110 = scalar_select %p107, %s108, %s109
    %p113 = pneg %p107
    %p114 = scmp.eq.s32.totalorder %s9, 1
    %p115 = por %p113, %p114
    %p116 = scmp.ne.s32.totalorder %s108, %s111
    %p117 = scmp.eq.s32.totalorder %s9, 0
    %p118 = por %p116, %p117
    %p119 = scmp.ne.s32.totalorder %s108, %s111
    %p120 = scmp.eq.s32.totalorder %s14, 1
    %p121 = por %p119, %p120
    %p122 = scmp.ne.s32.totalorder %s111, %s112
    %p123 = scmp.eq.s32.totalorder %s14, 0
    %p124 = por %p122, %p123
    %p125 = scmp.ne.s32.totalorder %s111, %s112
    %p126 = scmp.eq.s32.totalorder %s15, 1
    %p127 = por %p125, %p126
    %p129 = scmp.ne.s32.totalorder %s112, %s128
    %p130 = scmp.eq.s32.totalorder %s15, 0
    %p131 = por %p129, %p130
    %p132 = scmp.le.s32.totalorder 1, %s9
    %p133 = scmp.lt.s32.totalorder %s9, 3
    %p134 = pnand %p132, %p133
    %p135 = pneg %p134
    // Predicated region
    $region9: #{simple_video_unet_forward.12} parent=5 // pred_check
      _
    $region10: #{simple_video_unet_forward.12} parent=5 // pred_check_branch
      %137 = sbr.rel (%p134) target = $region12
    $region11: #{simple_video_unet_forward.12} parent=5 // pred_region
      %s138 = ssub.s32 %s9, 1
      // Predicated region
      $region13: #{simple_video_unet_forward.12} parent=11 // pred_check
        %p139 = pneg %p70
      $region14: #{simple_video_unet_forward.12} parent=11 // pred_check_branch
        %141 = sbr.rel (%p139) target = $region16
      $region15: #{simple_video_unet_forward.12} parent=11 // pred_region
        _
      $region16: #{simple_video_unet_forward.12} parent=11 // pred_fallthru
        _
      // Predicated region
      $region17: #{simple_video_unet_forward.12} parent=11 // pred_check
        %p142 = pneg %p96
      $region18: #{simple_video_unet_forward.12} parent=11 // pred_check_branch
        %144 = sbr.rel (%p142) target = $region20
      $region19: #{simple_video_unet_forward.12} parent=11 // pred_region
        %p145 = scmp.lt.s32.totalorder %s18, 0
        %s146 = scalar_select %p145, %s18, 0
        %s147 = scalar_lea.vmem %s2, %s146
      $region20: #{simple_video_unet_forward.12} parent=11 // pred_fallthru
        _
    $region12: #{simple_video_unet_forward.12} parent=5 // pred_fallthru
      _
    %p148 = scmp.lt.s32.totalorder %s9, 2
    // Predicated region
    $region21: #{simple_video_unet_forward.12} parent=5 // pred_check
      %p149 = pneg %p148
    $region22: #{simple_video_unet_forward.12} parent=5 // pred_check_branch
      %151 = sbr.rel (%p149) target = $region24
    $region23: #{simple_video_unet_forward.12} parent=5 // pred_region
      // Predicated region
      $region25: #{simple_video_unet_forward.12} parent=23 // pred_check
        %p152 = pneg %p43
      $region26: #{simple_video_unet_forward.12} parent=23 // pred_check_branch
        %154 = sbr.rel (%p152) target = $region28
      $region27: #{simple_video_unet_forward.12} parent=23 // pred_region
        %s155 = smul.u32 32, %s17
        %p156 = scmp.lt.s32.totalorder %s16, 0
        %s157 = scalar_select %p156, %s16, 0
        %p158 = scmp.lt.s32.totalorder %s155, 63
        %s159 = scalar_select %p158, %s155, 63
        %s160 = smul.addr %s159, 14
        %s161 = smul.addr %s157, 896
        %s162 = sadd.s32 %s160, %s161
        %s163 = smul.addr %s162, 4
        %s164 = scalar_lea.vmem %s0, %s163
        %s165 = smul.u32 32, %s17
      $region28: #{simple_video_unet_forward.12} parent=23 // pred_fallthru
        _
    $region24: #{simple_video_unet_forward.12} parent=5 // pred_fallthru
      _
    %p166 = scmp.le.s32.totalorder 1, %s9
    %p167 = scmp.lt.s32.totalorder %s9, 3
    %p168 = pnand %p166, %p167
    %p169 = pneg %p168
    // Predicated region
    $region29: #{simple_video_unet_forward.12} parent=5 // pred_check
      _
    $region30: #{simple_video_unet_forward.12} parent=5 // pred_check_branch
      %171 = sbr.rel (%p168) target = $region32
    $region31: #{simple_video_unet_forward.12} parent=5 // pred_region
      %s172 = ssub.s32 %s9, 1
      %s173 = smul.u32 32, %s19
      %p174 = scmp.lt.s32.totalorder %s18, 0
      %s175 = scalar_select %p174, %s18, 0
      %p176 = scmp.lt.s32.totalorder %s173, 63
      %s177 = scalar_select %p176, %s173, 63
      %s178 = smul.addr %s177, 14
      %s179 = smul.addr %s175, 896
      %s180 = sadd.s32 %s178, %s179
      %s181 = smul.addr %s180, 4
      %s182 = scalar_lea.vmem %s0, %s181
      %p183 = pneg %p49
      %p184 = pneg %p46
      %p185 = pneg %p70
      %p186 = pneg %p67
      %p187 = scmp.lt.s32.totalorder %s18, 0
      %s188 = scalar_select %p187, %s18, 0
      %s189 = scalar_lea.vmem %s2, %s188
      %p190 = pneg %p96
      %p191 = pneg %p93
      %p192 = pneg %p124
      %p193 = pneg %p121
      %s194 = smul.u32 32, %s19
      %p195 = scmp.lt.s32.totalorder %s18, 0
      %s196 = scalar_select %p195, %s18, 0
      %p197 = scmp.lt.s32.totalorder %s194, 63
      %s198 = scalar_select %p197, %s194, 63
      %s199 = smul.addr %s196, 64
      %s200 = sadd.s32 %s198, %s199
      %s201 = smul.addr %s200, 4
      %s202 = scalar_lea.vmem %s3, %s201
      %s203 = smul.u32 32, %s19
      %p204 = scmp.lt.s32.totalorder %s18, 0
      %s205 = scalar_select %p204, %s18, 0
      %p206 = scmp.lt.s32.totalorder %s203, 63
      %s207 = scalar_select %p206, %s203, 63
      %s208 = smul.addr %s207, 14
      %s209 = smul.addr %s205, 896
      %s210 = sadd.s32 %s208, %s209
      %s211 = smul.addr %s210, 4
      %s212 = scalar_lea.vmem %s0, %s211
      %s213 = smul.u32 32, %s19
      %p214 = scmp.lt.s32.totalorder %s18, 0
      %s215 = scalar_select %p214, %s18, 0
      %s216 = scalar_lea.vmem %s2, %s215
      %s217 = smul.u32 32, %s19
      %p218 = scmp.lt.s32.totalorder %s18, 0
      %s219 = scalar_select %p218, %s18, 0
      %p220 = scmp.lt.s32.totalorder %s217, 63
      %s221 = scalar_select %p220, %s217, 63
      %s222 = smul.addr %s219, 64
      %s223 = sadd.s32 %s221, %s222
      %s224 = smul.addr %s223, 4
      %s225 = scalar_lea.vmem %s3, %s224
      %s226 = smul.u32 32, %s19
      %v228 = vld [vmem:[%s1] sm:$0xf]
      %v229 = vld [vmem:[%s1 + $0x4] sm:$0xf]
      %v230 = vld [vmem:[%s1 + $0x8] sm:$0xf]
      %v231 = vld [vmem:[%s1 + $0xc] sm:$0xf]
      %v232 = vld [vmem:[%s1 + $0x10] sm:$0xf]
      %v233 = vld [vmem:[%s1 + $0x14] sm:$0xf]
      %v234 = vld [vmem:[%s1 + $0x18] sm:$0xf]
      %v235 = vld [vmem:[%s1 + $0x1c] sm:$0xf]
      %v236 = vld [vmem:[%s1 + $0x20] sm:$0xf]
      %v237 = vld [vmem:[%s1 + $0x24] sm:$0xf]
      %v238 = vld [vmem:[%s1 + $0x28] sm:$0xf]
      %v239 = vld [vmem:[%s1 + $0x2c] sm:$0xf]
      %v240 = vld [vmem:[%s1 + $0x30] sm:$0xf]
      %v241 = vld [vmem:[%s1 + $0x34] sm:$0xf]
      %v242 = vld [vmem:[%s1 + $0x38] sm:$0xf]
      %v243 = vld [vmem:[%s1 + $0x3c] sm:$0xf]
      %v244 = vld [vmem:[%s1 + $0x40] sm:$0xf]
      %v245 = vld [vmem:[%s1 + $0x44] sm:$0xf]
      %v246 = vld [vmem:[%s1 + $0x48] sm:$0xf]
      %v247 = vld [vmem:[%s1 + $0x4c] sm:$0xf]
      %v248 = vld [vmem:[%s1 + $0x50] sm:$0xf]
      %v249 = vld [vmem:[%s1 + $0x54] sm:$0xf]
      %v250 = vld [vmem:[%s1 + $0x58] sm:$0xf]
      %v251 = vld [vmem:[%s1 + $0x5c] sm:$0xf]
      %v252 = vld [vmem:[%s1 + $0x60] sm:$0xf]
      %v253 = vld [vmem:[%s1 + $0x64] sm:$0xf]
      %v254 = vld [vmem:[%s1 + $0x68] sm:$0xf]
      %v255 = vld [vmem:[%s1 + $0x6c] sm:$0xf]
      %v256 = vld [vmem:[%s1 + $0x70] sm:$0xf]
      %v257 = vld [vmem:[%s1 + $0x74] sm:$0xf]
      %v258 = vld [vmem:[%s1 + $0x78] sm:$0xf]
      %v259 = vld [vmem:[%s1 + $0x7c] sm:$0xf]
      %v260 = vld [vmem:[%s1 + $0x80] sm:$0xf]
      %v261 = vld [vmem:[%s1 + $0x84] sm:$0xf]
      %v262 = vld [vmem:[%s1 + $0x88] sm:$0xf]
      %v263 = vld [vmem:[%s1 + $0x8c] sm:$0xf]
      %v264 = vld [vmem:[%s1 + $0x90] sm:$0xf]
      %v265 = vld [vmem:[%s1 + $0x94] sm:$0xf]
      %v266 = vld [vmem:[%s1 + $0x98] sm:$0xf]
      %v267 = vld [vmem:[%s1 + $0x9c] sm:$0xf]
      %v268 = vld [vmem:[%s1 + $0xa0] sm:$0xf]
      %v269 = vld [vmem:[%s1 + $0xa4] sm:$0xf]
      %v270 = vld [vmem:[%s1 + $0xa8] sm:$0xf]
      %v271 = vld [vmem:[%s1 + $0xac] sm:$0xf]
      %v272 = vld [vmem:[%s1 + $0xb0] sm:$0xf]
      %v273 = vld [vmem:[%s1 + $0xb4] sm:$0xf]
      %v274 = vld [vmem:[%s1 + $0xb8] sm:$0xf]
      %v275 = vld [vmem:[%s1 + $0xbc] sm:$0xf]
      %v276 = vld [vmem:[%s1 + $0xc0] sm:$0xf]
      %v277 = vld [vmem:[%s1 + $0xc4] sm:$0xf]
      %v278 = vld [vmem:[%s1 + $0xc8] sm:$0xf]
      %v279 = vld [vmem:[%s1 + $0xcc] sm:$0xf]
      %v280 = vld [vmem:[%s1 + $0xd0] sm:$0xf]
      %v281 = vld [vmem:[%s1 + $0xd4] sm:$0xf]
      %v282 = vld [vmem:[%s1 + $0xd8] sm:$0xf]
      %v283 = vld [vmem:[%s1 + $0xdc] sm:$0xf]
      %v284 = vld [vmem:[%s1 + $0xe0] sm:$0xf]
      %v285 = vld [vmem:[%s1 + $0xe4] sm:$0xf]
      %v286 = vld [vmem:[%s1 + $0xe8] sm:$0xf]
      %v287 = vld [vmem:[%s1 + $0xec] sm:$0xf]
      %v288 = vld [vmem:[%s1 + $0xf0] sm:$0xf]
      %v289 = vld [vmem:[%s1 + $0xf4] sm:$0xf]
      %v290 = vld [vmem:[%s1 + $0xf8] sm:$0xf]
      %v291 = vld [vmem:[%s1 + $0xfc] sm:$0xf]
      %v292 = vld [vmem:[%s1 + $0x100] sm:$0xf]
      %v293 = vld [vmem:[%s1 + $0x104] sm:$0xf]
      %v294 = vld [vmem:[%s1 + $0x108] sm:$0xf]
      %v295 = vld [vmem:[%s1 + $0x10c] sm:$0xf]
      %v296 = vld [vmem:[%s1 + $0x110] sm:$0xf]
      %v297 = vld [vmem:[%s1 + $0x114] sm:$0xf]
      %v298 = vld [vmem:[%s1 + $0x118] sm:$0xf]
      %v299 = vld [vmem:[%s1 + $0x11c] sm:$0xf]
      %v300 = vld [vmem:[%s1 + $0x120] sm:$0xf]
      %v301 = vld [vmem:[%s1 + $0x124] sm:$0xf]
      %v302 = vld [vmem:[%s1 + $0x128] sm:$0xf]
      %v303 = vld [vmem:[%s1 + $0x12c] sm:$0xf]
      %v304 = vld [vmem:[%s1 + $0x130] sm:$0xf]
      %v305 = vld [vmem:[%s1 + $0x134] sm:$0xf]
      %v306 = vld [vmem:[%s1 + $0x138] sm:$0xf]
      %v307 = vld [vmem:[%s1 + $0x13c] sm:$0xf]
      %v308 = vld [vmem:[%s1 + $0x140] sm:$0xf]
      %v309 = vld [vmem:[%s1 + $0x144] sm:$0xf]
      %v310 = vld [vmem:[%s1 + $0x148] sm:$0xf]
      %v311 = vld [vmem:[%s1 + $0x14c] sm:$0xf]
      %v312 = vld [vmem:[%s1 + $0x150] sm:$0xf]
      %v313 = vld [vmem:[%s1 + $0x154] sm:$0xf]
      %v314 = vld [vmem:[%s1 + $0x158] sm:$0xf]
      %v315 = vld [vmem:[%s1 + $0x15c] sm:$0xf]
      %v316 = vld [vmem:[%s1 + $0x160] sm:$0xf]
      %v317 = vld [vmem:[%s1 + $0x164] sm:$0xf]
      %v318 = vld [vmem:[%s1 + $0x168] sm:$0xf]
      %v319 = vld [vmem:[%s1 + $0x16c] sm:$0xf]
      %v320 = vld [vmem:[%s1 + $0x170] sm:$0xf]
      %v321 = vld [vmem:[%s1 + $0x174] sm:$0xf]
      %v322 = vld [vmem:[%s1 + $0x178] sm:$0xf]
      %v323 = vld [vmem:[%s1 + $0x17c] sm:$0xf]
      %v324 = vld [vmem:[%s1 + $0x180] sm:$0xf]
      %v325 = vld [vmem:[%s1 + $0x184] sm:$0xf]
      %v326 = vld [vmem:[%s1 + $0x188] sm:$0xf]
      %v327 = vld [vmem:[%s1 + $0x18c] sm:$0xf]
      %v328 = vld [vmem:[%s1 + $0x190] sm:$0xf]
      %v329 = vld [vmem:[%s1 + $0x194] sm:$0xf]
      %v330 = vld [vmem:[%s1 + $0x198] sm:$0xf]
      %v331 = vld [vmem:[%s1 + $0x19c] sm:$0xf]
      %v332 = vld [vmem:[%s1 + $0x1a0] sm:$0xf]
      %v333 = vld [vmem:[%s1 + $0x1a4] sm:$0xf]
      %v334 = vld [vmem:[%s1 + $0x1a8] sm:$0xf]
      %v335 = vld [vmem:[%s1 + $0x1ac] sm:$0xf]
      %v336 = vld [vmem:[%s1 + $0x1b0] sm:$0xf]
      %v337 = vld [vmem:[%s1 + $0x1b4] sm:$0xf]
      %v338 = vld [vmem:[%s1 + $0x1b8] sm:$0xf]
      %v339 = vld [vmem:[%s1 + $0x1bc] sm:$0xf]
      %v340 = vld [vmem:[%s1 + $0x1c0] sm:$0xf]
      %v341 = vld [vmem:[%s1 + $0x1c4] sm:$0xf]
      %v342 = vld [vmem:[%s1 + $0x1c8] sm:$0xf]
      %v343 = vld [vmem:[%s1 + $0x1cc] sm:$0xf]
      %v344 = vld [vmem:[%s1 + $0x1d0] sm:$0xf]
      %v345 = vld [vmem:[%s1 + $0x1d4] sm:$0xf]
      %v346 = vld [vmem:[%s1 + $0x1d8] sm:$0xf]
      %v347 = vld [vmem:[%s1 + $0x1dc] sm:$0xf]
      %v348 = vld [vmem:[%s1 + $0x1e0] sm:$0xf]
      %v349 = vld [vmem:[%s1 + $0x1e4] sm:$0xf]
      %v350 = vld [vmem:[%s1 + $0x1e8] sm:$0xf]
      %v351 = vld [vmem:[%s1 + $0x1ec] sm:$0xf]
      %v352 = vld [vmem:[%s1 + $0x1f0] sm:$0xf]
      %v353 = vld [vmem:[%s1 + $0x1f4] sm:$0xf]
      %v354 = vld [vmem:[%s1 + $0x1f8] sm:$0xf]
      %v355 = vld [vmem:[%s1 + $0x1fc] sm:$0xf]
      %v356 = vld [vmem:[%s1 + $0x200] sm:$0xf]
      %v357 = vld [vmem:[%s1 + $0x204] sm:$0xf]
      %v358 = vld [vmem:[%s1 + $0x208] sm:$0xf]
      %v359 = vld [vmem:[%s1 + $0x20c] sm:$0xf]
      %v360 = vld [vmem:[%s1 + $0x210] sm:$0xf]
      %v361 = vld [vmem:[%s1 + $0x214] sm:$0xf]
      %v362 = vld [vmem:[%s1 + $0x218] sm:$0xf]
      %v363 = vld [vmem:[%s1 + $0x21c] sm:$0xf]
      %v364 = vld [vmem:[%s1 + $0x220] sm:$0xf]
      %v365 = vld [vmem:[%s1 + $0x224] sm:$0xf]
      %v366 = vld [vmem:[%s1 + $0x228] sm:$0xf]
      %v367 = vld [vmem:[%s1 + $0x22c] sm:$0xf]
      %v368 = vld [vmem:[%s1 + $0x230] sm:$0xf]
      %v369 = vld [vmem:[%s1 + $0x234] sm:$0xf]
      %v370 = vld [vmem:[%s1 + $0x238] sm:$0xf]
      %v371 = vld [vmem:[%s1 + $0x23c] sm:$0xf]
      %v372 = vld [vmem:[%s1 + $0x240] sm:$0xf]
      %v373 = vld [vmem:[%s1 + $0x244] sm:$0xf]
      %v374 = vld [vmem:[%s1 + $0x248] sm:$0xf]
      %v375 = vld [vmem:[%s1 + $0x24c] sm:$0xf]
      %v376 = vld [vmem:[%s1 + $0x250] sm:$0xf]
      %v377 = vld [vmem:[%s1 + $0x254] sm:$0xf]
      %v378 = vld [vmem:[%s1 + $0x258] sm:$0xf]
      %v379 = vld [vmem:[%s1 + $0x25c] sm:$0xf]
      %v380 = vld [vmem:[%s1 + $0x260] sm:$0xf]
      %v381 = vld [vmem:[%s1 + $0x264] sm:$0xf]
      %v382 = vld [vmem:[%s1 + $0x268] sm:$0xf]
      %v383 = vld [vmem:[%s1 + $0x26c] sm:$0xf]
      %v384 = vld [vmem:[%s1 + $0x270] sm:$0xf]
      %v385 = vld [vmem:[%s1 + $0x274] sm:$0xf]
      %v386 = vld [vmem:[%s1 + $0x278] sm:$0xf]
      %v387 = vld [vmem:[%s1 + $0x27c] sm:$0xf]
      %v388 = vld [vmem:[%s1 + $0x280] sm:$0xf]
      %v389 = vld [vmem:[%s1 + $0x284] sm:$0xf]
      %v390 = vld [vmem:[%s1 + $0x288] sm:$0xf]
      %v391 = vld [vmem:[%s1 + $0x28c] sm:$0xf]
      %v392 = vld [vmem:[%s1 + $0x290] sm:$0xf]
      %v393 = vld [vmem:[%s1 + $0x294] sm:$0xf]
      %v394 = vld [vmem:[%s1 + $0x298] sm:$0xf]
      %v395 = vld [vmem:[%s1 + $0x29c] sm:$0xf]
      %v396 = vld [vmem:[%s1 + $0x2a0] sm:$0xf]
      %v397 = vld [vmem:[%s1 + $0x2a4] sm:$0xf]
      %v398 = vld [vmem:[%s1 + $0x2a8] sm:$0xf]
      %v399 = vld [vmem:[%s1 + $0x2ac] sm:$0xf]
      %v400 = vld [vmem:[%s1 + $0x2b0] sm:$0xf]
      %v401 = vld [vmem:[%s1 + $0x2b4] sm:$0xf]
      %v402 = vld [vmem:[%s1 + $0x2b8] sm:$0xf]
      %v403 = vld [vmem:[%s1 + $0x2bc] sm:$0xf]
      %v404 = vld [vmem:[%s1 + $0x2c0] sm:$0xf]
      %v405 = vld [vmem:[%s1 + $0x2c4] sm:$0xf]
      %v406 = vld [vmem:[%s1 + $0x2c8] sm:$0xf]
      %v407 = vld [vmem:[%s1 + $0x2cc] sm:$0xf]
      %v408 = vld [vmem:[%s1 + $0x2d0] sm:$0xf]
      %v409 = vld [vmem:[%s1 + $0x2d4] sm:$0xf]
      %v410 = vld [vmem:[%s1 + $0x2d8] sm:$0xf]
      %v411 = vld [vmem:[%s1 + $0x2dc] sm:$0xf]
      %v412 = vld [vmem:[%s1 + $0x2e0] sm:$0xf]
      %v413 = vld [vmem:[%s1 + $0x2e4] sm:$0xf]
      %v414 = vld [vmem:[%s1 + $0x2e8] sm:$0xf]
      %v415 = vld [vmem:[%s1 + $0x2ec] sm:$0xf]
      %v416 = vld [vmem:[%s1 + $0x2f0] sm:$0xf]
      %v417 = vld [vmem:[%s1 + $0x2f4] sm:$0xf]
      %v418 = vld [vmem:[%s1 + $0x2f8] sm:$0xf]
      %v419 = vld [vmem:[%s1 + $0x2fc] sm:$0xf]
      %v420 = vld [vmem:[%s1 + $0x300] sm:$0xf]
      %v421 = vld [vmem:[%s1 + $0x304] sm:$0xf]
      %v422 = vld [vmem:[%s1 + $0x308] sm:$0xf]
      %v423 = vld [vmem:[%s1 + $0x30c] sm:$0xf]
      %v424 = vld [vmem:[%s1 + $0x310] sm:$0xf]
      %v425 = vld [vmem:[%s1 + $0x314] sm:$0xf]
      %v426 = vld [vmem:[%s1 + $0x318] sm:$0xf]
      %v427 = vld [vmem:[%s1 + $0x31c] sm:$0xf]
      %v428 = vld [vmem:[%s1 + $0x320] sm:$0xf]
      %v429 = vld [vmem:[%s1 + $0x324] sm:$0xf]
      %v430 = vld [vmem:[%s1 + $0x328] sm:$0xf]
      %v431 = vld [vmem:[%s1 + $0x32c] sm:$0xf]
      %v432 = vld [vmem:[%s1 + $0x330] sm:$0xf]
      %v433 = vld [vmem:[%s1 + $0x334] sm:$0xf]
      %v434 = vld [vmem:[%s1 + $0x338] sm:$0xf]
      %v435 = vld [vmem:[%s1 + $0x33c] sm:$0xf]
      %v436 = vld [vmem:[%s1 + $0x340] sm:$0xf]
      %v437 = vld [vmem:[%s1 + $0x344] sm:$0xf]
      %v438 = vld [vmem:[%s1 + $0x348] sm:$0xf]
      %v439 = vld [vmem:[%s1 + $0x34c] sm:$0xf]
      %v440 = vld [vmem:[%s1 + $0x350] sm:$0xf]
      %v441 = vld [vmem:[%s1 + $0x354] sm:$0xf]
      %v442 = vld [vmem:[%s1 + $0x358] sm:$0xf]
      %v443 = vld [vmem:[%s1 + $0x35c] sm:$0xf]
      %v444 = vld [vmem:[%s212] sm:$0xff]
      %v445 = vld [vmem:[%s212 + $0x8] sm:$0xff]
      %v446 = vld [vmem:[%s212 + $0x10] sm:$0xff]
      %v447 = vld [vmem:[%s212 + $0x18] sm:$0xff]
      %v448 = vld [vmem:[%s212 + $0x20] sm:$0xff]
      %v449 = vld [vmem:[%s212 + $0x28] sm:$0xff]
      %v450 = vld [vmem:[%s212 + $0x30] sm:$0xff]
      %v451 = vld [vmem:[%s212 + $0x38] sm:$0xff]
      %v452 = vld [vmem:[%s212 + $0x40] sm:$0xff]
      %v453 = vld [vmem:[%s212 + $0x48] sm:$0xff]
      %v454 = vld [vmem:[%s212 + $0x50] sm:$0xff]
      %v455 = vld [vmem:[%s212 + $0x58] sm:$0xff]
      %v456 = vld [vmem:[%s212 + $0x60] sm:$0xff]
      %v457 = vld [vmem:[%s212 + $0x68] sm:$0xff]
      %v458 = vld [vmem:[%s212 + $0x70] sm:$0xff]
      %v459 = vld [vmem:[%s212 + $0x78] sm:$0xff]
      %v460 = vld [vmem:[%s212 + $0x80] sm:$0xff]
      %v461 = vld [vmem:[%s212 + $0x88] sm:$0xff]
      %v462 = vld [vmem:[%s212 + $0x90] sm:$0xff]
      %v463 = vld [vmem:[%s212 + $0x98] sm:$0xff]
      %v464 = vld [vmem:[%s212 + $0xa0] sm:$0xff]
      %v465 = vld [vmem:[%s212 + $0xa8] sm:$0xff]
      %v466 = vld [vmem:[%s212 + $0xb0] sm:$0xff]
      %v467 = vld [vmem:[%s212 + $0xb8] sm:$0xff]
      %v468 = vld [vmem:[%s212 + $0xc0] sm:$0xff]
      %v469 = vld [vmem:[%s212 + $0xc8] sm:$0xff]
      %v470 = vld [vmem:[%s212 + $0xd0] sm:$0xff]
      %v471 = vld [vmem:[%s212 + $0xd8] sm:$0xff]
      %v472 = vld [vmem:[%s212 + $0xe0] sm:$0xff]
      %v473 = vld [vmem:[%s212 + $0xe8] sm:$0xff]
      %v474 = vld [vmem:[%s212 + $0xf0] sm:$0xff]
      %v475 = vld [vmem:[%s212 + $0xf8] sm:$0xff]
      %v476 = vld [vmem:[%s212 + $0x100] sm:$0xff]
      %v477 = vld [vmem:[%s212 + $0x108] sm:$0xff]
      %v478 = vld [vmem:[%s212 + $0x110] sm:$0xff]
      %v479 = vld [vmem:[%s212 + $0x118] sm:$0xff]
      %v480 = vld [vmem:[%s212 + $0x120] sm:$0xff]
      %v481 = vld [vmem:[%s212 + $0x128] sm:$0xff]
      %v482 = vld [vmem:[%s212 + $0x130] sm:$0xff]
      %v483 = vld [vmem:[%s212 + $0x138] sm:$0xff]
      %v484 = vld [vmem:[%s212 + $0x140] sm:$0xff]
      %v485 = vld [vmem:[%s212 + $0x148] sm:$0xff]
      %v486 = vld [vmem:[%s212 + $0x150] sm:$0xff]
      %v487 = vld [vmem:[%s212 + $0x158] sm:$0xff]
      %v488 = vld [vmem:[%s212 + $0x160] sm:$0xff]
      %v489 = vld [vmem:[%s212 + $0x168] sm:$0xff]
      %v490 = vld [vmem:[%s212 + $0x170] sm:$0xff]
      %v491 = vld [vmem:[%s212 + $0x178] sm:$0xff]
      %v492 = vld [vmem:[%s212 + $0x180] sm:$0xff]
      %v493 = vld [vmem:[%s212 + $0x188] sm:$0xff]
      %v494 = vld [vmem:[%s212 + $0x190] sm:$0xff]
      %v495 = vld [vmem:[%s212 + $0x198] sm:$0xff]
      %v496 = vld [vmem:[%s212 + $0x1a0] sm:$0xff]
      %v497 = vld [vmem:[%s212 + $0x1a8] sm:$0xff]
      %v498 = vld [vmem:[%s212 + $0x1b0] sm:$0xff]
      %v499 = vld [vmem:[%s212 + $0x1b8] sm:$0xff]
      %v500 = vld [vmem:[%s212 + $0x1c0] sm:$0xff]
      %v501 = vld [vmem:[%s212 + $0x1c8] sm:$0xff]
      %v502 = vld [vmem:[%s212 + $0x1d0] sm:$0xff]
      %v503 = vld [vmem:[%s212 + $0x1d8] sm:$0xff]
      %v504 = vld [vmem:[%s212 + $0x1e0] sm:$0xff]
      %v505 = vld [vmem:[%s212 + $0x1e8] sm:$0xff]
      %v506 = vld [vmem:[%s212 + $0x1f0] sm:$0xff]
      %v507 = vld [vmem:[%s212 + $0x1f8] sm:$0xff]
      %v508 = vld [vmem:[%s212 + $0x200] sm:$0xff]
      %v509 = vld [vmem:[%s212 + $0x208] sm:$0xff]
      %v510 = vld [vmem:[%s212 + $0x210] sm:$0xff]
      %v511 = vld [vmem:[%s212 + $0x218] sm:$0xff]
      %v512 = vld [vmem:[%s212 + $0x220] sm:$0xff]
      %v513 = vld [vmem:[%s212 + $0x228] sm:$0xff]
      %v514 = vld [vmem:[%s212 + $0x230] sm:$0xff]
      %v515 = vld [vmem:[%s212 + $0x238] sm:$0xff]
      %v516 = vld [vmem:[%s212 + $0x240] sm:$0xff]
      %v517 = vld [vmem:[%s212 + $0x248] sm:$0xff]
      %v518 = vld [vmem:[%s212 + $0x250] sm:$0xff]
      %v519 = vld [vmem:[%s212 + $0x258] sm:$0xff]
      %v520 = vld [vmem:[%s212 + $0x260] sm:$0xff]
      %v521 = vld [vmem:[%s212 + $0x268] sm:$0xff]
      %v522 = vld [vmem:[%s212 + $0x270] sm:$0xff]
      %v523 = vld [vmem:[%s212 + $0x278] sm:$0xff]
      %v524 = vld [vmem:[%s212 + $0x280] sm:$0xff]
      %v525 = vld [vmem:[%s212 + $0x288] sm:$0xff]
      %v526 = vld [vmem:[%s212 + $0x290] sm:$0xff]
      %v527 = vld [vmem:[%s212 + $0x298] sm:$0xff]
      %v528 = vld [vmem:[%s212 + $0x2a0] sm:$0xff]
      %v529 = vld [vmem:[%s212 + $0x2a8] sm:$0xff]
      %v530 = vld [vmem:[%s212 + $0x2b0] sm:$0xff]
      %v531 = vld [vmem:[%s212 + $0x2b8] sm:$0xff]
      %v532 = vld [vmem:[%s212 + $0x2c0] sm:$0xff]
      %v533 = vld [vmem:[%s212 + $0x2c8] sm:$0xff]
      %v534 = vld [vmem:[%s212 + $0x2d0] sm:$0xff]
      %v535 = vld [vmem:[%s212 + $0x2d8] sm:$0xff]
      %v536 = vld [vmem:[%s212 + $0x2e0] sm:$0xff]
      %v537 = vld [vmem:[%s212 + $0x2e8] sm:$0xff]
      %v538 = vld [vmem:[%s212 + $0x2f0] sm:$0xff]
      %v539 = vld [vmem:[%s212 + $0x2f8] sm:$0xff]
      %v540 = vld [vmem:[%s212 + $0x300] sm:$0xff]
      %v541 = vld [vmem:[%s212 + $0x308] sm:$0xff]
      %v542 = vld [vmem:[%s212 + $0x310] sm:$0xff]
      %v543 = vld [vmem:[%s212 + $0x318] sm:$0xff]
      %v544 = vld [vmem:[%s212 + $0x320] sm:$0xff]
      %v545 = vld [vmem:[%s212 + $0x328] sm:$0xff]
      %v546 = vld [vmem:[%s212 + $0x330] sm:$0xff]
      %v547 = vld [vmem:[%s212 + $0x338] sm:$0xff]
      %v548 = vld [vmem:[%s212 + $0x340] sm:$0xff]
      %v549 = vld [vmem:[%s212 + $0x348] sm:$0xff]
      %v550 = vld [vmem:[%s212 + $0x350] sm:$0xff]
      %v551 = vld [vmem:[%s212 + $0x358] sm:$0xff]
      %v552 = vld [vmem:[%s212 + $0x360] sm:$0xff]
      %v553 = vld [vmem:[%s212 + $0x368] sm:$0xff]
      %v554 = vld [vmem:[%s212 + $0x370] sm:$0xff]
      %v555 = vld [vmem:[%s212 + $0x378] sm:$0xff]
      %v556 = vld [vmem:[%s212 + $0x380] sm:$0xff]
      %v557 = vld [vmem:[%s212 + $0x388] sm:$0xff]
      %v558 = vld [vmem:[%s212 + $0x390] sm:$0xff]
      %v559 = vld [vmem:[%s212 + $0x398] sm:$0xff]
      %v560 = vld [vmem:[%s212 + $0x3a0] sm:$0xff]
      %v561 = vld [vmem:[%s212 + $0x3a8] sm:$0xff]
      %v562 = vld [vmem:[%s212 + $0x3b0] sm:$0xff]
      %v563 = vld [vmem:[%s212 + $0x3b8] sm:$0xff]
      %v564 = vld [vmem:[%s212 + $0x3c0] sm:$0xff]
      %v565 = vld [vmem:[%s212 + $0x3c8] sm:$0xff]
      %v566 = vld [vmem:[%s212 + $0x3d0] sm:$0xff]
      %v567 = vld [vmem:[%s212 + $0x3d8] sm:$0xff]
      %v568 = vld [vmem:[%s212 + $0x3e0] sm:$0xff]
      %v569 = vld [vmem:[%s212 + $0x3e8] sm:$0xff]
      %v570 = vld [vmem:[%s212 + $0x3f0] sm:$0xff]
      %v571 = vld [vmem:[%s212 + $0x3f8] sm:$0xff]
      %v572 = vld [vmem:[%s212 + $0x400] sm:$0xff]
      %v573 = vld [vmem:[%s212 + $0x408] sm:$0xff]
      %v574 = vld [vmem:[%s212 + $0x410] sm:$0xff]
      %v575 = vld [vmem:[%s212 + $0x418] sm:$0xff]
      %v576 = vld [vmem:[%s212 + $0x420] sm:$0xff]
      %v577 = vld [vmem:[%s212 + $0x428] sm:$0xff]
      %v578 = vld [vmem:[%s212 + $0x430] sm:$0xff]
      %v579 = vld [vmem:[%s212 + $0x438] sm:$0xff]
      %v580 = vld [vmem:[%s212 + $0x440] sm:$0xff]
      %v581 = vld [vmem:[%s212 + $0x448] sm:$0xff]
      %v582 = vld [vmem:[%s212 + $0x450] sm:$0xff]
      %v583 = vld [vmem:[%s212 + $0x458] sm:$0xff]
      %v584 = vld [vmem:[%s212 + $0x460] sm:$0xff]
      %v585 = vld [vmem:[%s212 + $0x468] sm:$0xff]
      %v586 = vld [vmem:[%s212 + $0x470] sm:$0xff]
      %v587 = vld [vmem:[%s212 + $0x478] sm:$0xff]
      %v588 = vld [vmem:[%s212 + $0x480] sm:$0xff]
      %v589 = vld [vmem:[%s212 + $0x488] sm:$0xff]
      %v590 = vld [vmem:[%s212 + $0x490] sm:$0xff]
      %v591 = vld [vmem:[%s212 + $0x498] sm:$0xff]
      %v592 = vld [vmem:[%s212 + $0x4a0] sm:$0xff]
      %v593 = vld [vmem:[%s212 + $0x4a8] sm:$0xff]
      %v594 = vld [vmem:[%s212 + $0x4b0] sm:$0xff]
      %v595 = vld [vmem:[%s212 + $0x4b8] sm:$0xff]
      %v596 = vld [vmem:[%s212 + $0x4c0] sm:$0xff]
      %v597 = vld [vmem:[%s212 + $0x4c8] sm:$0xff]
      %v598 = vld [vmem:[%s212 + $0x4d0] sm:$0xff]
      %v599 = vld [vmem:[%s212 + $0x4d8] sm:$0xff]
      %v600 = vld [vmem:[%s212 + $0x4e0] sm:$0xff]
      %v601 = vld [vmem:[%s212 + $0x4e8] sm:$0xff]
      %v602 = vld [vmem:[%s212 + $0x4f0] sm:$0xff]
      %v603 = vld [vmem:[%s212 + $0x4f8] sm:$0xff]
      %v604 = vld [vmem:[%s212 + $0x500] sm:$0xff]
      %v605 = vld [vmem:[%s212 + $0x508] sm:$0xff]
      %v606 = vld [vmem:[%s212 + $0x510] sm:$0xff]
      %v607 = vld [vmem:[%s212 + $0x518] sm:$0xff]
      %v608 = vld [vmem:[%s212 + $0x520] sm:$0xff]
      %v609 = vld [vmem:[%s212 + $0x528] sm:$0xff]
      %v610 = vld [vmem:[%s212 + $0x530] sm:$0xff]
      %v611 = vld [vmem:[%s212 + $0x538] sm:$0xff]
      %v612 = vld [vmem:[%s212 + $0x540] sm:$0xff]
      %v613 = vld [vmem:[%s212 + $0x548] sm:$0xff]
      %v614 = vld [vmem:[%s212 + $0x550] sm:$0xff]
      %v615 = vld [vmem:[%s212 + $0x558] sm:$0xff]
      %v616 = vld [vmem:[%s212 + $0x560] sm:$0xff]
      %v617 = vld [vmem:[%s212 + $0x568] sm:$0xff]
      %v618 = vld [vmem:[%s212 + $0x570] sm:$0xff]
      %v619 = vld [vmem:[%s212 + $0x578] sm:$0xff]
      %v620 = vld [vmem:[%s212 + $0x580] sm:$0xff]
      %v621 = vld [vmem:[%s212 + $0x588] sm:$0xff]
      %v622 = vld [vmem:[%s212 + $0x590] sm:$0xff]
      %v623 = vld [vmem:[%s212 + $0x598] sm:$0xff]
      %v624 = vld [vmem:[%s212 + $0x5a0] sm:$0xff]
      %v625 = vld [vmem:[%s212 + $0x5a8] sm:$0xff]
      %v626 = vld [vmem:[%s212 + $0x5b0] sm:$0xff]
      %v627 = vld [vmem:[%s212 + $0x5b8] sm:$0xff]
      %v628 = vld [vmem:[%s212 + $0x5c0] sm:$0xff]
      %v629 = vld [vmem:[%s212 + $0x5c8] sm:$0xff]
      %v630 = vld [vmem:[%s212 + $0x5d0] sm:$0xff]
      %v631 = vld [vmem:[%s212 + $0x5d8] sm:$0xff]
      %v632 = vld [vmem:[%s212 + $0x5e0] sm:$0xff]
      %v633 = vld [vmem:[%s212 + $0x5e8] sm:$0xff]
      %v634 = vld [vmem:[%s212 + $0x5f0] sm:$0xff]
      %v635 = vld [vmem:[%s212 + $0x5f8] sm:$0xff]
      %v636 = vld [vmem:[%s212 + $0x600] sm:$0xff]
      %v637 = vld [vmem:[%s212 + $0x608] sm:$0xff]
      %v638 = vld [vmem:[%s212 + $0x610] sm:$0xff]
      %v639 = vld [vmem:[%s212 + $0x618] sm:$0xff]
      %v640 = vld [vmem:[%s212 + $0x620] sm:$0xff]
      %v641 = vld [vmem:[%s212 + $0x628] sm:$0xff]
      %v642 = vld [vmem:[%s212 + $0x630] sm:$0xff]
      %v643 = vld [vmem:[%s212 + $0x638] sm:$0xff]
      %v644 = vld [vmem:[%s212 + $0x640] sm:$0xff]
      %v645 = vld [vmem:[%s212 + $0x648] sm:$0xff]
      %v646 = vld [vmem:[%s212 + $0x650] sm:$0xff]
      %v647 = vld [vmem:[%s212 + $0x658] sm:$0xff]
      %v648 = vld [vmem:[%s212 + $0x660] sm:$0xff]
      %v649 = vld [vmem:[%s212 + $0x668] sm:$0xff]
      %v650 = vld [vmem:[%s212 + $0x670] sm:$0xff]
      %v651 = vld [vmem:[%s212 + $0x678] sm:$0xff]
      %v652 = vld [vmem:[%s212 + $0x680] sm:$0xff]
      %v653 = vld [vmem:[%s212 + $0x688] sm:$0xff]
      %v654 = vld [vmem:[%s212 + $0x690] sm:$0xff]
      %v655 = vld [vmem:[%s212 + $0x698] sm:$0xff]
      %v656 = vld [vmem:[%s212 + $0x6a0] sm:$0xff]
      %v657 = vld [vmem:[%s212 + $0x6a8] sm:$0xff]
      %v658 = vld [vmem:[%s212 + $0x6b0] sm:$0xff]
      %v659 = vld [vmem:[%s212 + $0x6b8] sm:$0xff]
      %v660 = vld [vmem:[%s212 + $0x6c0] sm:$0xff]
      %v661 = vld [vmem:[%s212 + $0x6c8] sm:$0xff]
      %v662 = vld [vmem:[%s212 + $0x6d0] sm:$0xff]
      %v663 = vld [vmem:[%s212 + $0x6d8] sm:$0xff]
      %v664 = vld [vmem:[%s212 + $0x6e0] sm:$0xff]
      %v665 = vld [vmem:[%s212 + $0x6e8] sm:$0xff]
      %v666 = vld [vmem:[%s212 + $0x6f0] sm:$0xff]
      %v667 = vld [vmem:[%s212 + $0x6f8] sm:$0xff]
      %v668 = vld [vmem:[%s216] sm:$0x1]
      %v670 = vlaneseq
      %v671 = vshrl.u32 %v670, 7
      %v672 = vsub.s32 0, %v671
      %v673 = vrot.slane %v668, %v672
      %v899 = vunpack.c.l.b16 %v444
      %v900 = vunpack.c.h.b16 %v444
      %v901 = vunpack.c.l.b16 %v445
      %v902 = vunpack.c.h.b16 %v445
      %v903 = vunpack.c.l.b16 %v446
      %v904 = vunpack.c.h.b16 %v446
      %v905 = vunpack.c.l.b16 %v447
      %v906 = vunpack.c.h.b16 %v447
      %v907 = vunpack.c.l.b16 %v448
      %v908 = vunpack.c.h.b16 %v448
      %v909 = vunpack.c.l.b16 %v449
      %v910 = vunpack.c.h.b16 %v449
      %v911 = vunpack.c.l.b16 %v450
      %v912 = vunpack.c.h.b16 %v450
      %v913 = vunpack.c.l.b16 %v451
      %v914 = vunpack.c.h.b16 %v451
      %v915 = vunpack.c.l.b16 %v452
      %v916 = vunpack.c.h.b16 %v452
      %v917 = vunpack.c.l.b16 %v453
      %v918 = vunpack.c.h.b16 %v453
      %v919 = vunpack.c.l.b16 %v454
      %v920 = vunpack.c.h.b16 %v454
      %v921 = vunpack.c.l.b16 %v455
      %v922 = vunpack.c.h.b16 %v455
      %v923 = vunpack.c.l.b16 %v456
      %v924 = vunpack.c.h.b16 %v456
      %v925 = vunpack.c.l.b16 %v457
      %v926 = vunpack.c.h.b16 %v457
      %v927 = vunpack.c.l.b16 %v458
      %v928 = vunpack.c.h.b16 %v458
      %v929 = vunpack.c.l.b16 %v459
      %v930 = vunpack.c.h.b16 %v459
      %v931 = vunpack.c.l.b16 %v460
      %v932 = vunpack.c.h.b16 %v460
      %v933 = vunpack.c.l.b16 %v461
      %v934 = vunpack.c.h.b16 %v461
      %v935 = vunpack.c.l.b16 %v462
      %v936 = vunpack.c.h.b16 %v462
      %v937 = vunpack.c.l.b16 %v463
      %v938 = vunpack.c.h.b16 %v463
      %v939 = vunpack.c.l.b16 %v464
      %v940 = vunpack.c.h.b16 %v464
      %v941 = vunpack.c.l.b16 %v465
      %v942 = vunpack.c.h.b16 %v465
      %v943 = vunpack.c.l.b16 %v466
      %v944 = vunpack.c.h.b16 %v466
      %v945 = vunpack.c.l.b16 %v467
      %v946 = vunpack.c.h.b16 %v467
      %v947 = vunpack.c.l.b16 %v468
      %v948 = vunpack.c.h.b16 %v468
      %v949 = vunpack.c.l.b16 %v469
      %v950 = vunpack.c.h.b16 %v469
      %v951 = vunpack.c.l.b16 %v470
      %v952 = vunpack.c.h.b16 %v470
      %v953 = vunpack.c.l.b16 %v471
      %v954 = vunpack.c.h.b16 %v471
      %v955 = vunpack.c.l.b16 %v472
      %v956 = vunpack.c.h.b16 %v472
      %v957 = vunpack.c.l.b16 %v473
      %v958 = vunpack.c.h.b16 %v473
      %v959 = vunpack.c.l.b16 %v474
      %v960 = vunpack.c.h.b16 %v474
      %v961 = vunpack.c.l.b16 %v475
      %v962 = vunpack.c.h.b16 %v475
      %v963 = vunpack.c.l.b16 %v476
      %v964 = vunpack.c.h.b16 %v476
      %v965 = vunpack.c.l.b16 %v477
      %v966 = vunpack.c.h.b16 %v477
      %v967 = vunpack.c.l.b16 %v478
      %v968 = vunpack.c.h.b16 %v478
      %v969 = vunpack.c.l.b16 %v479
      %v970 = vunpack.c.h.b16 %v479
      %v971 = vunpack.c.l.b16 %v480
      %v972 = vunpack.c.h.b16 %v480
      %v973 = vunpack.c.l.b16 %v481
      %v974 = vunpack.c.h.b16 %v481
      %v975 = vunpack.c.l.b16 %v482
      %v976 = vunpack.c.h.b16 %v482
      %v977 = vunpack.c.l.b16 %v483
      %v978 = vunpack.c.h.b16 %v483
      %v979 = vunpack.c.l.b16 %v484
      %v980 = vunpack.c.h.b16 %v484
      %v981 = vunpack.c.l.b16 %v485
      %v982 = vunpack.c.h.b16 %v485
      %v983 = vunpack.c.l.b16 %v486
      %v984 = vunpack.c.h.b16 %v486
      %v985 = vunpack.c.l.b16 %v487
      %v986 = vunpack.c.h.b16 %v487
      %v987 = vunpack.c.l.b16 %v488
      %v988 = vunpack.c.h.b16 %v488
      %v989 = vunpack.c.l.b16 %v489
      %v990 = vunpack.c.h.b16 %v489
      %v991 = vunpack.c.l.b16 %v490
      %v992 = vunpack.c.h.b16 %v490
      %v993 = vunpack.c.l.b16 %v491
      %v994 = vunpack.c.h.b16 %v491
      %v995 = vunpack.c.l.b16 %v492
      %v996 = vunpack.c.h.b16 %v492
      %v997 = vunpack.c.l.b16 %v493
      %v998 = vunpack.c.h.b16 %v493
      %v999 = vunpack.c.l.b16 %v494
      %v1000 = vunpack.c.h.b16 %v494
      %v1001 = vunpack.c.l.b16 %v495
      %v1002 = vunpack.c.h.b16 %v495
      %v1003 = vunpack.c.l.b16 %v496
      %v1004 = vunpack.c.h.b16 %v496
      %v1005 = vunpack.c.l.b16 %v497
      %v1006 = vunpack.c.h.b16 %v497
      %v1007 = vunpack.c.l.b16 %v498
      %v1008 = vunpack.c.h.b16 %v498
      %v1009 = vunpack.c.l.b16 %v499
      %v1010 = vunpack.c.h.b16 %v499
      %v1011 = vunpack.c.l.b16 %v500
      %v1012 = vunpack.c.h.b16 %v500
      %v1013 = vunpack.c.l.b16 %v501
      %v1014 = vunpack.c.h.b16 %v501
      %v1015 = vunpack.c.l.b16 %v502
      %v1016 = vunpack.c.h.b16 %v502
      %v1017 = vunpack.c.l.b16 %v503
      %v1018 = vunpack.c.h.b16 %v503
      %v1019 = vunpack.c.l.b16 %v504
      %v1020 = vunpack.c.h.b16 %v504
      %v1021 = vunpack.c.l.b16 %v505
      %v1022 = vunpack.c.h.b16 %v505
      %v1023 = vunpack.c.l.b16 %v506
      %v1024 = vunpack.c.h.b16 %v506
      %v1025 = vunpack.c.l.b16 %v507
      %v1026 = vunpack.c.h.b16 %v507
      %v1027 = vunpack.c.l.b16 %v508
      %v1028 = vunpack.c.h.b16 %v508
      %v1029 = vunpack.c.l.b16 %v509
      %v1030 = vunpack.c.h.b16 %v509
      %v1031 = vunpack.c.l.b16 %v510
      %v1032 = vunpack.c.h.b16 %v510
      %v1033 = vunpack.c.l.b16 %v511
      %v1034 = vunpack.c.h.b16 %v511
      %v1035 = vunpack.c.l.b16 %v512
      %v1036 = vunpack.c.h.b16 %v512
      %v1037 = vunpack.c.l.b16 %v513
      %v1038 = vunpack.c.h.b16 %v513
      %v1039 = vunpack.c.l.b16 %v514
      %v1040 = vunpack.c.h.b16 %v514
      %v1041 = vunpack.c.l.b16 %v515
      %v1042 = vunpack.c.h.b16 %v515
      %v1043 = vunpack.c.l.b16 %v516
      %v1044 = vunpack.c.h.b16 %v516
      %v1045 = vunpack.c.l.b16 %v517
      %v1046 = vunpack.c.h.b16 %v517
      %v1047 = vunpack.c.l.b16 %v518
      %v1048 = vunpack.c.h.b16 %v518
      %v1049 = vunpack.c.l.b16 %v519
      %v1050 = vunpack.c.h.b16 %v519
      %v1051 = vunpack.c.l.b16 %v520
      %v1052 = vunpack.c.h.b16 %v520
      %v1053 = vunpack.c.l.b16 %v521
      %v1054 = vunpack.c.h.b16 %v521
      %v1055 = vunpack.c.l.b16 %v522
      %v1056 = vunpack.c.h.b16 %v522
      %v1057 = vunpack.c.l.b16 %v523
      %v1058 = vunpack.c.h.b16 %v523
      %v1059 = vunpack.c.l.b16 %v524
      %v1060 = vunpack.c.h.b16 %v524
      %v1061 = vunpack.c.l.b16 %v525
      %v1062 = vunpack.c.h.b16 %v525
      %v1063 = vunpack.c.l.b16 %v526
      %v1064 = vunpack.c.h.b16 %v526
      %v1065 = vunpack.c.l.b16 %v527
      %v1066 = vunpack.c.h.b16 %v527
      %v1067 = vunpack.c.l.b16 %v528
      %v1068 = vunpack.c.h.b16 %v528
      %v1069 = vunpack.c.l.b16 %v529
      %v1070 = vunpack.c.h.b16 %v529
      %v1071 = vunpack.c.l.b16 %v530
      %v1072 = vunpack.c.h.b16 %v530
      %v1073 = vunpack.c.l.b16 %v531
      %v1074 = vunpack.c.h.b16 %v531
      %v1075 = vunpack.c.l.b16 %v532
      %v1076 = vunpack.c.h.b16 %v532
      %v1077 = vunpack.c.l.b16 %v533
      %v1078 = vunpack.c.h.b16 %v533
      %v1079 = vunpack.c.l.b16 %v534
      %v1080 = vunpack.c.h.b16 %v534
      %v1081 = vunpack.c.l.b16 %v535
      %v1082 = vunpack.c.h.b16 %v535
      %v1083 = vunpack.c.l.b16 %v536
      %v1084 = vunpack.c.h.b16 %v536
      %v1085 = vunpack.c.l.b16 %v537
      %v1086 = vunpack.c.h.b16 %v537
      %v1087 = vunpack.c.l.b16 %v538
      %v1088 = vunpack.c.h.b16 %v538
      %v1089 = vunpack.c.l.b16 %v539
      %v1090 = vunpack.c.h.b16 %v539
      %v1091 = vunpack.c.l.b16 %v540
      %v1092 = vunpack.c.h.b16 %v540
      %v1093 = vunpack.c.l.b16 %v541
      %v1094 = vunpack.c.h.b16 %v541
      %v1095 = vunpack.c.l.b16 %v542
      %v1096 = vunpack.c.h.b16 %v542
      %v1097 = vunpack.c.l.b16 %v543
      %v1098 = vunpack.c.h.b16 %v543
      %v1099 = vunpack.c.l.b16 %v544
      %v1100 = vunpack.c.h.b16 %v544
      %v1101 = vunpack.c.l.b16 %v545
      %v1102 = vunpack.c.h.b16 %v545
      %v1103 = vunpack.c.l.b16 %v546
      %v1104 = vunpack.c.h.b16 %v546
      %v1105 = vunpack.c.l.b16 %v547
      %v1106 = vunpack.c.h.b16 %v547
      %v1107 = vunpack.c.l.b16 %v548
      %v1108 = vunpack.c.h.b16 %v548
      %v1109 = vunpack.c.l.b16 %v549
      %v1110 = vunpack.c.h.b16 %v549
      %v1111 = vunpack.c.l.b16 %v550
      %v1112 = vunpack.c.h.b16 %v550
      %v1113 = vunpack.c.l.b16 %v551
      %v1114 = vunpack.c.h.b16 %v551
      %v1115 = vunpack.c.l.b16 %v552
      %v1116 = vunpack.c.h.b16 %v552
      %v1117 = vunpack.c.l.b16 %v553
      %v1118 = vunpack.c.h.b16 %v553
      %v1119 = vunpack.c.l.b16 %v554
      %v1120 = vunpack.c.h.b16 %v554
      %v1121 = vunpack.c.l.b16 %v555
      %v1122 = vunpack.c.h.b16 %v555
      %v1123 = vunpack.c.l.b16 %v556
      %v1124 = vunpack.c.h.b16 %v556
      %v1125 = vunpack.c.l.b16 %v557
      %v1126 = vunpack.c.h.b16 %v557
      %v1127 = vunpack.c.l.b16 %v558
      %v1128 = vunpack.c.h.b16 %v558
      %v1129 = vunpack.c.l.b16 %v559
      %v1130 = vunpack.c.h.b16 %v559
      %v1131 = vunpack.c.l.b16 %v560
      %v1132 = vunpack.c.h.b16 %v560
      %v1133 = vunpack.c.l.b16 %v561
      %v1134 = vunpack.c.h.b16 %v561
      %v1135 = vunpack.c.l.b16 %v562
      %v1136 = vunpack.c.h.b16 %v562
      %v1137 = vunpack.c.l.b16 %v563
      %v1138 = vunpack.c.h.b16 %v563
      %v1139 = vunpack.c.l.b16 %v564
      %v1140 = vunpack.c.h.b16 %v564
      %v1141 = vunpack.c.l.b16 %v565
      %v1142 = vunpack.c.h.b16 %v565
      %v1143 = vunpack.c.l.b16 %v566
      %v1144 = vunpack.c.h.b16 %v566
      %v1145 = vunpack.c.l.b16 %v567
      %v1146 = vunpack.c.h.b16 %v567
      %v1147 = vunpack.c.l.b16 %v568
      %v1148 = vunpack.c.h.b16 %v568
      %v1149 = vunpack.c.l.b16 %v569
      %v1150 = vunpack.c.h.b16 %v569
      %v1151 = vunpack.c.l.b16 %v570
      %v1152 = vunpack.c.h.b16 %v570
      %v1153 = vunpack.c.l.b16 %v571
      %v1154 = vunpack.c.h.b16 %v571
      %v1155 = vunpack.c.l.b16 %v572
      %v1156 = vunpack.c.h.b16 %v572
      %v1157 = vunpack.c.l.b16 %v573
      %v1158 = vunpack.c.h.b16 %v573
      %v1159 = vunpack.c.l.b16 %v574
      %v1160 = vunpack.c.h.b16 %v574
      %v1161 = vunpack.c.l.b16 %v575
      %v1162 = vunpack.c.h.b16 %v575
      %v1163 = vunpack.c.l.b16 %v576
      %v1164 = vunpack.c.h.b16 %v576
      %v1165 = vunpack.c.l.b16 %v577
      %v1166 = vunpack.c.h.b16 %v577
      %v1167 = vunpack.c.l.b16 %v578
      %v1168 = vunpack.c.h.b16 %v578
      %v1169 = vunpack.c.l.b16 %v579
      %v1170 = vunpack.c.h.b16 %v579
      %v1171 = vunpack.c.l.b16 %v580
      %v1172 = vunpack.c.h.b16 %v580
      %v1173 = vunpack.c.l.b16 %v581
      %v1174 = vunpack.c.h.b16 %v581
      %v1175 = vunpack.c.l.b16 %v582
      %v1176 = vunpack.c.h.b16 %v582
      %v1177 = vunpack.c.l.b16 %v583
      %v1178 = vunpack.c.h.b16 %v583
      %v1179 = vunpack.c.l.b16 %v584
      %v1180 = vunpack.c.h.b16 %v584
      %v1181 = vunpack.c.l.b16 %v585
      %v1182 = vunpack.c.h.b16 %v585
      %v1183 = vunpack.c.l.b16 %v586
      %v1184 = vunpack.c.h.b16 %v586
      %v1185 = vunpack.c.l.b16 %v587
      %v1186 = vunpack.c.h.b16 %v587
      %v1187 = vunpack.c.l.b16 %v588
      %v1188 = vunpack.c.h.b16 %v588
      %v1189 = vunpack.c.l.b16 %v589
      %v1190 = vunpack.c.h.b16 %v589
      %v1191 = vunpack.c.l.b16 %v590
      %v1192 = vunpack.c.h.b16 %v590
      %v1193 = vunpack.c.l.b16 %v591
      %v1194 = vunpack.c.h.b16 %v591
      %v1195 = vunpack.c.l.b16 %v592
      %v1196 = vunpack.c.h.b16 %v592
      %v1197 = vunpack.c.l.b16 %v593
      %v1198 = vunpack.c.h.b16 %v593
      %v1199 = vunpack.c.l.b16 %v594
      %v1200 = vunpack.c.h.b16 %v594
      %v1201 = vunpack.c.l.b16 %v595
      %v1202 = vunpack.c.h.b16 %v595
      %v1203 = vunpack.c.l.b16 %v596
      %v1204 = vunpack.c.h.b16 %v596
      %v1205 = vunpack.c.l.b16 %v597
      %v1206 = vunpack.c.h.b16 %v597
      %v1207 = vunpack.c.l.b16 %v598
      %v1208 = vunpack.c.h.b16 %v598
      %v1209 = vunpack.c.l.b16 %v599
      %v1210 = vunpack.c.h.b16 %v599
      %v1211 = vunpack.c.l.b16 %v600
      %v1212 = vunpack.c.h.b16 %v600
      %v1213 = vunpack.c.l.b16 %v601
      %v1214 = vunpack.c.h.b16 %v601
      %v1215 = vunpack.c.l.b16 %v602
      %v1216 = vunpack.c.h.b16 %v602
      %v1217 = vunpack.c.l.b16 %v603
      %v1218 = vunpack.c.h.b16 %v603
      %v1219 = vunpack.c.l.b16 %v604
      %v1220 = vunpack.c.h.b16 %v604
      %v1221 = vunpack.c.l.b16 %v605
      %v1222 = vunpack.c.h.b16 %v605
      %v1223 = vunpack.c.l.b16 %v606
      %v1224 = vunpack.c.h.b16 %v606
      %v1225 = vunpack.c.l.b16 %v607
      %v1226 = vunpack.c.h.b16 %v607
      %v1227 = vunpack.c.l.b16 %v608
      %v1228 = vunpack.c.h.b16 %v608
      %v1229 = vunpack.c.l.b16 %v609
      %v1230 = vunpack.c.h.b16 %v609
      %v1231 = vunpack.c.l.b16 %v610
      %v1232 = vunpack.c.h.b16 %v610
      %v1233 = vunpack.c.l.b16 %v611
      %v1234 = vunpack.c.h.b16 %v611
      %v1235 = vunpack.c.l.b16 %v612
      %v1236 = vunpack.c.h.b16 %v612
      %v1237 = vunpack.c.l.b16 %v613
      %v1238 = vunpack.c.h.b16 %v613
      %v1239 = vunpack.c.l.b16 %v614
      %v1240 = vunpack.c.h.b16 %v614
      %v1241 = vunpack.c.l.b16 %v615
      %v1242 = vunpack.c.h.b16 %v615
      %v1243 = vunpack.c.l.b16 %v616
      %v1244 = vunpack.c.h.b16 %v616
      %v1245 = vunpack.c.l.b16 %v617
      %v1246 = vunpack.c.h.b16 %v617
      %v1247 = vunpack.c.l.b16 %v618
      %v1248 = vunpack.c.h.b16 %v618
      %v1249 = vunpack.c.l.b16 %v619
      %v1250 = vunpack.c.h.b16 %v619
      %v1251 = vunpack.c.l.b16 %v620
      %v1252 = vunpack.c.h.b16 %v620
      %v1253 = vunpack.c.l.b16 %v621
      %v1254 = vunpack.c.h.b16 %v621
      %v1255 = vunpack.c.l.b16 %v622
      %v1256 = vunpack.c.h.b16 %v622
      %v1257 = vunpack.c.l.b16 %v623
      %v1258 = vunpack.c.h.b16 %v623
      %v1259 = vunpack.c.l.b16 %v624
      %v1260 = vunpack.c.h.b16 %v624
      %v1261 = vunpack.c.l.b16 %v625
      %v1262 = vunpack.c.h.b16 %v625
      %v1263 = vunpack.c.l.b16 %v626
      %v1264 = vunpack.c.h.b16 %v626
      %v1265 = vunpack.c.l.b16 %v627
      %v1266 = vunpack.c.h.b16 %v627
      %v1267 = vunpack.c.l.b16 %v628
      %v1268 = vunpack.c.h.b16 %v628
      %v1269 = vunpack.c.l.b16 %v629
      %v1270 = vunpack.c.h.b16 %v629
      %v1271 = vunpack.c.l.b16 %v630
      %v1272 = vunpack.c.h.b16 %v630
      %v1273 = vunpack.c.l.b16 %v631
      %v1274 = vunpack.c.h.b16 %v631
      %v1275 = vunpack.c.l.b16 %v632
      %v1276 = vunpack.c.h.b16 %v632
      %v1277 = vunpack.c.l.b16 %v633
      %v1278 = vunpack.c.h.b16 %v633
      %v1279 = vunpack.c.l.b16 %v634
      %v1280 = vunpack.c.h.b16 %v634
      %v1281 = vunpack.c.l.b16 %v635
      %v1282 = vunpack.c.h.b16 %v635
      %v1283 = vunpack.c.l.b16 %v636
      %v1284 = vunpack.c.h.b16 %v636
      %v1285 = vunpack.c.l.b16 %v637
      %v1286 = vunpack.c.h.b16 %v637
      %v1287 = vunpack.c.l.b16 %v638
      %v1288 = vunpack.c.h.b16 %v638
      %v1289 = vunpack.c.l.b16 %v639
      %v1290 = vunpack.c.h.b16 %v639
      %v1291 = vunpack.c.l.b16 %v640
      %v1292 = vunpack.c.h.b16 %v640
      %v1293 = vunpack.c.l.b16 %v641
      %v1294 = vunpack.c.h.b16 %v641
      %v1295 = vunpack.c.l.b16 %v642
      %v1296 = vunpack.c.h.b16 %v642
      %v1297 = vunpack.c.l.b16 %v643
      %v1298 = vunpack.c.h.b16 %v643
      %v1299 = vunpack.c.l.b16 %v644
      %v1300 = vunpack.c.h.b16 %v644
      %v1301 = vunpack.c.l.b16 %v645
      %v1302 = vunpack.c.h.b16 %v645
      %v1303 = vunpack.c.l.b16 %v646
      %v1304 = vunpack.c.h.b16 %v646
      %v1305 = vunpack.c.l.b16 %v647
      %v1306 = vunpack.c.h.b16 %v647
      %v1307 = vunpack.c.l.b16 %v648
      %v1308 = vunpack.c.h.b16 %v648
      %v1309 = vunpack.c.l.b16 %v649
      %v1310 = vunpack.c.h.b16 %v649
      %v1311 = vunpack.c.l.b16 %v650
      %v1312 = vunpack.c.h.b16 %v650
      %v1313 = vunpack.c.l.b16 %v651
      %v1314 = vunpack.c.h.b16 %v651
      %v1315 = vunpack.c.l.b16 %v652
      %v1316 = vunpack.c.h.b16 %v652
      %v1317 = vunpack.c.l.b16 %v653
      %v1318 = vunpack.c.h.b16 %v653
      %v1319 = vunpack.c.l.b16 %v654
      %v1320 = vunpack.c.h.b16 %v654
      %v1321 = vunpack.c.l.b16 %v655
      %v1322 = vunpack.c.h.b16 %v655
      %v1323 = vunpack.c.l.b16 %v656
      %v1324 = vunpack.c.h.b16 %v656
      %v1325 = vunpack.c.l.b16 %v657
      %v1326 = vunpack.c.h.b16 %v657
      %v1327 = vunpack.c.l.b16 %v658
      %v1328 = vunpack.c.h.b16 %v658
      %v1329 = vunpack.c.l.b16 %v659
      %v1330 = vunpack.c.h.b16 %v659
      %v1331 = vunpack.c.l.b16 %v660
      %v1332 = vunpack.c.h.b16 %v660
      %v1333 = vunpack.c.l.b16 %v661
      %v1334 = vunpack.c.h.b16 %v661
      %v1335 = vunpack.c.l.b16 %v662
      %v1336 = vunpack.c.h.b16 %v662
      %v1337 = vunpack.c.l.b16 %v663
      %v1338 = vunpack.c.h.b16 %v663
      %v1339 = vunpack.c.l.b16 %v664
      %v1340 = vunpack.c.h.b16 %v664
      %v1341 = vunpack.c.l.b16 %v665
      %v1342 = vunpack.c.h.b16 %v665
      %v1343 = vunpack.c.l.b16 %v666
      %v1344 = vunpack.c.h.b16 %v666
      %v1345 = vunpack.c.l.b16 %v667
      %v1346 = vunpack.c.h.b16 %v667
      %v1347 = vpack.c.b16 %v913, %v899
      %v1348 = vpack.c.b16 %v914, %v900
      %v1349 = vpack.c.b16 %v915, %v901
      %v1350 = vpack.c.b16 %v916, %v902
      %v1351 = vpack.c.b16 %v917, %v903
      %v1352 = vpack.c.b16 %v918, %v904
      %v1353 = vpack.c.b16 %v919, %v905
      %v1354 = vpack.c.b16 %v920, %v906
      %v1355 = vpack.c.b16 %v921, %v907
      %v1356 = vpack.c.b16 %v922, %v908
      %v1357 = vpack.c.b16 %v923, %v909
      %v1358 = vpack.c.b16 %v924, %v910
      %v1359 = vpack.c.b16 %v925, %v911
      %v1360 = vpack.c.b16 %v926, %v912
      %v1361 = vpack.c.b16 %v941, %v927
      %v1362 = vpack.c.b16 %v942, %v928
      %v1363 = vpack.c.b16 %v943, %v929
      %v1364 = vpack.c.b16 %v944, %v930
      %v1365 = vpack.c.b16 %v945, %v931
      %v1366 = vpack.c.b16 %v946, %v932
      %v1367 = vpack.c.b16 %v947, %v933
      %v1368 = vpack.c.b16 %v948, %v934
      %v1369 = vpack.c.b16 %v949, %v935
      %v1370 = vpack.c.b16 %v950, %v936
      %v1371 = vpack.c.b16 %v951, %v937
      %v1372 = vpack.c.b16 %v952, %v938
      %v1373 = vpack.c.b16 %v953, %v939
      %v1374 = vpack.c.b16 %v954, %v940
      %v1375 = vpack.c.b16 %v969, %v955
      %v1376 = vpack.c.b16 %v970, %v956
      %v1377 = vpack.c.b16 %v971, %v957
      %v1378 = vpack.c.b16 %v972, %v958
      %v1379 = vpack.c.b16 %v973, %v959
      %v1380 = vpack.c.b16 %v974, %v960
      %v1381 = vpack.c.b16 %v975, %v961
      %v1382 = vpack.c.b16 %v976, %v962
      %v1383 = vpack.c.b16 %v977, %v963
      %v1384 = vpack.c.b16 %v978, %v964
      %v1385 = vpack.c.b16 %v979, %v965
      %v1386 = vpack.c.b16 %v980, %v966
      %v1387 = vpack.c.b16 %v981, %v967
      %v1388 = vpack.c.b16 %v982, %v968
      %v1389 = vpack.c.b16 %v997, %v983
      %v1390 = vpack.c.b16 %v998, %v984
      %v1391 = vpack.c.b16 %v999, %v985
      %v1392 = vpack.c.b16 %v1000, %v986
      %v1393 = vpack.c.b16 %v1001, %v987
      %v1394 = vpack.c.b16 %v1002, %v988
      %v1395 = vpack.c.b16 %v1003, %v989
      %v1396 = vpack.c.b16 %v1004, %v990
      %v1397 = vpack.c.b16 %v1005, %v991
      %v1398 = vpack.c.b16 %v1006, %v992
      %v1399 = vpack.c.b16 %v1007, %v993
      %v1400 = vpack.c.b16 %v1008, %v994
      %v1401 = vpack.c.b16 %v1009, %v995
      %v1402 = vpack.c.b16 %v1010, %v996
      %v1403 = vpack.c.b16 %v1025, %v1011
      %v1404 = vpack.c.b16 %v1026, %v1012
      %v1405 = vpack.c.b16 %v1027, %v1013
      %v1406 = vpack.c.b16 %v1028, %v1014
      %v1407 = vpack.c.b16 %v1029, %v1015
      %v1408 = vpack.c.b16 %v1030, %v1016
      %v1409 = vpack.c.b16 %v1031, %v1017
      %v1410 = vpack.c.b16 %v1032, %v1018
      %v1411 = vpack.c.b16 %v1033, %v1019
      %v1412 = vpack.c.b16 %v1034, %v1020
      %v1413 = vpack.c.b16 %v1035, %v1021
      %v1414 = vpack.c.b16 %v1036, %v1022
      %v1415 = vpack.c.b16 %v1037, %v1023
      %v1416 = vpack.c.b16 %v1038, %v1024
      %v1417 = vpack.c.b16 %v1053, %v1039
      %v1418 = vpack.c.b16 %v1054, %v1040
      %v1419 = vpack.c.b16 %v1055, %v1041
      %v1420 = vpack.c.b16 %v1056, %v1042
      %v1421 = vpack.c.b16 %v1057, %v1043
      %v1422 = vpack.c.b16 %v1058, %v1044
      %v1423 = vpack.c.b16 %v1059, %v1045
      %v1424 = vpack.c.b16 %v1060, %v1046
      %v1425 = vpack.c.b16 %v1061, %v1047
      %v1426 = vpack.c.b16 %v1062, %v1048
      %v1427 = vpack.c.b16 %v1063, %v1049
      %v1428 = vpack.c.b16 %v1064, %v1050
      %v1429 = vpack.c.b16 %v1065, %v1051
      %v1430 = vpack.c.b16 %v1066, %v1052
      %v1431 = vpack.c.b16 %v1081, %v1067
      %v1432 = vpack.c.b16 %v1082, %v1068
      %v1433 = vpack.c.b16 %v1083, %v1069
      %v1434 = vpack.c.b16 %v1084, %v1070
      %v1435 = vpack.c.b16 %v1085, %v1071
      %v1436 = vpack.c.b16 %v1086, %v1072
      %v1437 = vpack.c.b16 %v1087, %v1073
      %v1438 = vpack.c.b16 %v1088, %v1074
      %v1439 = vpack.c.b16 %v1089, %v1075
      %v1440 = vpack.c.b16 %v1090, %v1076
      %v1441 = vpack.c.b16 %v1091, %v1077
      %v1442 = vpack.c.b16 %v1092, %v1078
      %v1443 = vpack.c.b16 %v1093, %v1079
      %v1444 = vpack.c.b16 %v1094, %v1080
      %v1445 = vpack.c.b16 %v1109, %v1095
      %v1446 = vpack.c.b16 %v1110, %v1096
      %v1447 = vpack.c.b16 %v1111, %v1097
      %v1448 = vpack.c.b16 %v1112, %v1098
      %v1449 = vpack.c.b16 %v1113, %v1099
      %v1450 = vpack.c.b16 %v1114, %v1100
      %v1451 = vpack.c.b16 %v1115, %v1101
      %v1452 = vpack.c.b16 %v1116, %v1102
      %v1453 = vpack.c.b16 %v1117, %v1103
      %v1454 = vpack.c.b16 %v1118, %v1104
      %v1455 = vpack.c.b16 %v1119, %v1105
      %v1456 = vpack.c.b16 %v1120, %v1106
      %v1457 = vpack.c.b16 %v1121, %v1107
      %v1458 = vpack.c.b16 %v1122, %v1108
      %v1459 = vpack.c.b16 %v1137, %v1123
      %v1460 = vpack.c.b16 %v1138, %v1124
      %v1461 = vpack.c.b16 %v1139, %v1125
      %v1462 = vpack.c.b16 %v1140, %v1126
      %v1463 = vpack.c.b16 %v1141, %v1127
      %v1464 = vpack.c.b16 %v1142, %v1128
      %v1465 = vpack.c.b16 %v1143, %v1129
      %v1466 = vpack.c.b16 %v1144, %v1130
      %v1467 = vpack.c.b16 %v1145, %v1131
      %v1468 = vpack.c.b16 %v1146, %v1132
      %v1469 = vpack.c.b16 %v1147, %v1133
      %v1470 = vpack.c.b16 %v1148, %v1134
      %v1471 = vpack.c.b16 %v1149, %v1135
      %v1472 = vpack.c.b16 %v1150, %v1136
      %v1473 = vpack.c.b16 %v1165, %v1151
      %v1474 = vpack.c.b16 %v1166, %v1152
      %v1475 = vpack.c.b16 %v1167, %v1153
      %v1476 = vpack.c.b16 %v1168, %v1154
      %v1477 = vpack.c.b16 %v1169, %v1155
      %v1478 = vpack.c.b16 %v1170, %v1156
      %v1479 = vpack.c.b16 %v1171, %v1157
      %v1480 = vpack.c.b16 %v1172, %v1158
      %v1481 = vpack.c.b16 %v1173, %v1159
      %v1482 = vpack.c.b16 %v1174, %v1160
      %v1483 = vpack.c.b16 %v1175, %v1161
      %v1484 = vpack.c.b16 %v1176, %v1162
      %v1485 = vpack.c.b16 %v1177, %v1163
      %v1486 = vpack.c.b16 %v1178, %v1164
      %v1487 = vpack.c.b16 %v1193, %v1179
      %v1488 = vpack.c.b16 %v1194, %v1180
      %v1489 = vpack.c.b16 %v1195, %v1181
      %v1490 = vpack.c.b16 %v1196, %v1182
      %v1491 = vpack.c.b16 %v1197, %v1183
      %v1492 = vpack.c.b16 %v1198, %v1184
      %v1493 = vpack.c.b16 %v1199, %v1185
      %v1494 = vpack.c.b16 %v1200, %v1186
      %v1495 = vpack.c.b16 %v1201, %v1187
      %v1496 = vpack.c.b16 %v1202, %v1188
      %v1497 = vpack.c.b16 %v1203, %v1189
      %v1498 = vpack.c.b16 %v1204, %v1190
      %v1499 = vpack.c.b16 %v1205, %v1191
      %v1500 = vpack.c.b16 %v1206, %v1192
      %v1501 = vpack.c.b16 %v1221, %v1207
      %v1502 = vpack.c.b16 %v1222, %v1208
      %v1503 = vpack.c.b16 %v1223, %v1209
      %v1504 = vpack.c.b16 %v1224, %v1210
      %v1505 = vpack.c.b16 %v1225, %v1211
      %v1506 = vpack.c.b16 %v1226, %v1212
      %v1507 = vpack.c.b16 %v1227, %v1213
      %v1508 = vpack.c.b16 %v1228, %v1214
      %v1509 = vpack.c.b16 %v1229, %v1215
      %v1510 = vpack.c.b16 %v1230, %v1216
      %v1511 = vpack.c.b16 %v1231, %v1217
      %v1512 = vpack.c.b16 %v1232, %v1218
      %v1513 = vpack.c.b16 %v1233, %v1219
      %v1514 = vpack.c.b16 %v1234, %v1220
      %v1515 = vpack.c.b16 %v1249, %v1235
      %v1516 = vpack.c.b16 %v1250, %v1236
      %v1517 = vpack.c.b16 %v1251, %v1237
      %v1518 = vpack.c.b16 %v1252, %v1238
      %v1519 = vpack.c.b16 %v1253, %v1239
      %v1520 = vpack.c.b16 %v1254, %v1240
      %v1521 = vpack.c.b16 %v1255, %v1241
      %v1522 = vpack.c.b16 %v1256, %v1242
      %v1523 = vpack.c.b16 %v1257, %v1243
      %v1524 = vpack.c.b16 %v1258, %v1244
      %v1525 = vpack.c.b16 %v1259, %v1245
      %v1526 = vpack.c.b16 %v1260, %v1246
      %v1527 = vpack.c.b16 %v1261, %v1247
      %v1528 = vpack.c.b16 %v1262, %v1248
      %v1529 = vpack.c.b16 %v1277, %v1263
      %v1530 = vpack.c.b16 %v1278, %v1264
      %v1531 = vpack.c.b16 %v1279, %v1265
      %v1532 = vpack.c.b16 %v1280, %v1266
      %v1533 = vpack.c.b16 %v1281, %v1267
      %v1534 = vpack.c.b16 %v1282, %v1268
      %v1535 = vpack.c.b16 %v1283, %v1269
      %v1536 = vpack.c.b16 %v1284, %v1270
      %v1537 = vpack.c.b16 %v1285, %v1271
      %v1538 = vpack.c.b16 %v1286, %v1272
      %v1539 = vpack.c.b16 %v1287, %v1273
      %v1540 = vpack.c.b16 %v1288, %v1274
      %v1541 = vpack.c.b16 %v1289, %v1275
      %v1542 = vpack.c.b16 %v1290, %v1276
      %v1543 = vpack.c.b16 %v1305, %v1291
      %v1544 = vpack.c.b16 %v1306, %v1292
      %v1545 = vpack.c.b16 %v1307, %v1293
      %v1546 = vpack.c.b16 %v1308, %v1294
      %v1547 = vpack.c.b16 %v1309, %v1295
      %v1548 = vpack.c.b16 %v1310, %v1296
      %v1549 = vpack.c.b16 %v1311, %v1297
      %v1550 = vpack.c.b16 %v1312, %v1298
      %v1551 = vpack.c.b16 %v1313, %v1299
      %v1552 = vpack.c.b16 %v1314, %v1300
      %v1553 = vpack.c.b16 %v1315, %v1301
      %v1554 = vpack.c.b16 %v1316, %v1302
      %v1555 = vpack.c.b16 %v1317, %v1303
      %v1556 = vpack.c.b16 %v1318, %v1304
      %v1557 = vpack.c.b16 %v1333, %v1319
      %v1558 = vpack.c.b16 %v1334, %v1320
      %v1559 = vpack.c.b16 %v1335, %v1321
      %v1560 = vpack.c.b16 %v1336, %v1322
      %v1561 = vpack.c.b16 %v1337, %v1323
      %v1562 = vpack.c.b16 %v1338, %v1324
      %v1563 = vpack.c.b16 %v1339, %v1325
      %v1564 = vpack.c.b16 %v1340, %v1326
      %v1565 = vpack.c.b16 %v1341, %v1327
      %v1566 = vpack.c.b16 %v1342, %v1328
      %v1567 = vpack.c.b16 %v1343, %v1329
      %v1568 = vpack.c.b16 %v1344, %v1330
      %v1569 = vpack.c.b16 %v1345, %v1331
      %v1570 = vpack.c.b16 %v1346, %v1332
      %v1995 = vunpack.c.l.b16 %v228
      %v1996 = vunpack.c.l.b16 %v229
      %v1997 = vunpack.c.l.b16 %v230
      %v1998 = vunpack.c.l.b16 %v231
      %v1999 = vunpack.c.l.b16 %v232
      %v2000 = vunpack.c.l.b16 %v233
      %v2001 = vunpack.c.l.b16 %v234
      %v2002 = vunpack.c.l.b16 %v235
      %v2003 = vunpack.c.l.b16 %v236
      %v2004 = vunpack.c.l.b16 %v237
      %v2005 = vunpack.c.l.b16 %v238
      %v2006 = vunpack.c.l.b16 %v239
      %v2007 = vunpack.c.l.b16 %v240
      %v2008 = vunpack.c.l.b16 %v241
      %v2009 = vunpack.c.l.b16 %v242
      %v2010 = vunpack.c.l.b16 %v243
      %v2011 = vunpack.c.l.b16 %v244
      %v2012 = vunpack.c.l.b16 %v245
      %v2013 = vunpack.c.l.b16 %v246
      %v2014 = vunpack.c.l.b16 %v247
      %v2015 = vunpack.c.l.b16 %v248
      %v2016 = vunpack.c.l.b16 %v249
      %v2017 = vunpack.c.l.b16 %v250
      %v2018 = vunpack.c.l.b16 %v251
      %v2019 = vunpack.c.l.b16 %v252
      %v2020 = vunpack.c.l.b16 %v253
      %v2021 = vunpack.c.l.b16 %v254
      %v2022 = vunpack.c.l.b16 %v255
      %v2023 = vunpack.c.l.b16 %v256
      %v2024 = vunpack.c.l.b16 %v257
      %v2025 = vunpack.c.l.b16 %v258
      %v2026 = vunpack.c.l.b16 %v259
      %v2027 = vunpack.c.l.b16 %v260
      %v2028 = vunpack.c.l.b16 %v261
      %v2029 = vunpack.c.l.b16 %v262
      %v2030 = vunpack.c.l.b16 %v263
      %v2031 = vunpack.c.l.b16 %v264
      %v2032 = vunpack.c.l.b16 %v265
      %v2033 = vunpack.c.l.b16 %v266
      %v2034 = vunpack.c.l.b16 %v267
      %v2035 = vunpack.c.l.b16 %v268
      %v2036 = vunpack.c.l.b16 %v269
      %v2037 = vunpack.c.l.b16 %v270
      %v2038 = vunpack.c.l.b16 %v271
      %v2039 = vunpack.c.l.b16 %v272
      %v2040 = vunpack.c.l.b16 %v273
      %v2041 = vunpack.c.l.b16 %v274
      %v2042 = vunpack.c.l.b16 %v275
      %v2043 = vunpack.c.l.b16 %v276
      %v2044 = vunpack.c.l.b16 %v277
      %v2045 = vunpack.c.l.b16 %v278
      %v2046 = vunpack.c.l.b16 %v279
      %v2047 = vunpack.c.l.b16 %v280
      %v2048 = vunpack.c.l.b16 %v281
      %v2049 = vunpack.c.l.b16 %v282
      %v2050 = vunpack.c.l.b16 %v283
      %v2051 = vunpack.c.l.b16 %v284
      %v2052 = vunpack.c.l.b16 %v285
      %v2053 = vunpack.c.l.b16 %v286
      %v2054 = vunpack.c.l.b16 %v287
      %v2055 = vunpack.c.l.b16 %v288
      %v2056 = vunpack.c.l.b16 %v289
      %v2057 = vunpack.c.l.b16 %v290
      %v2058 = vunpack.c.l.b16 %v291
      %v2059 = vunpack.c.l.b16 %v292
      %v2060 = vunpack.c.l.b16 %v293
      %v2061 = vunpack.c.l.b16 %v294
      %v2062 = vunpack.c.l.b16 %v295
      %v2063 = vunpack.c.l.b16 %v296
      %v2064 = vunpack.c.l.b16 %v297
      %v2065 = vunpack.c.l.b16 %v298
      %v2066 = vunpack.c.l.b16 %v299
      %v2067 = vunpack.c.l.b16 %v300
      %v2068 = vunpack.c.l.b16 %v301
      %v2069 = vunpack.c.l.b16 %v302
      %v2070 = vunpack.c.l.b16 %v303
      %v2071 = vunpack.c.l.b16 %v304
      %v2072 = vunpack.c.l.b16 %v305
      %v2073 = vunpack.c.l.b16 %v306
      %v2074 = vunpack.c.l.b16 %v307
      %v2075 = vunpack.c.l.b16 %v308
      %v2076 = vunpack.c.l.b16 %v309
      %v2077 = vunpack.c.l.b16 %v310
      %v2078 = vunpack.c.l.b16 %v311
      %v2079 = vunpack.c.l.b16 %v312
      %v2080 = vunpack.c.l.b16 %v313
      %v2081 = vunpack.c.l.b16 %v314
      %v2082 = vunpack.c.l.b16 %v315
      %v2083 = vunpack.c.l.b16 %v316
      %v2084 = vunpack.c.l.b16 %v317
      %v2085 = vunpack.c.l.b16 %v318
      %v2086 = vunpack.c.l.b16 %v319
      %v2087 = vunpack.c.l.b16 %v320
      %v2088 = vunpack.c.l.b16 %v321
      %v2089 = vunpack.c.l.b16 %v322
      %v2090 = vunpack.c.l.b16 %v323
      %v2091 = vunpack.c.l.b16 %v324
      %v2092 = vunpack.c.l.b16 %v325
      %v2093 = vunpack.c.l.b16 %v326
      %v2094 = vunpack.c.l.b16 %v327
      %v2095 = vunpack.c.l.b16 %v328
      %v2096 = vunpack.c.l.b16 %v329
      %v2097 = vunpack.c.l.b16 %v330
      %v2098 = vunpack.c.l.b16 %v331
      %v2099 = vunpack.c.l.b16 %v332
      %v2100 = vunpack.c.l.b16 %v333
      %v2101 = vunpack.c.l.b16 %v334
      %v2102 = vunpack.c.l.b16 %v335
      %v2103 = vunpack.c.l.b16 %v336
      %v2104 = vunpack.c.l.b16 %v337
      %v2105 = vunpack.c.l.b16 %v338
      %v2106 = vunpack.c.l.b16 %v339
      %v2107 = vunpack.c.l.b16 %v340
      %v2108 = vunpack.c.l.b16 %v341
      %v2109 = vunpack.c.l.b16 %v342
      %v2110 = vunpack.c.l.b16 %v343
      %v2111 = vunpack.c.l.b16 %v344
      %v2112 = vunpack.c.l.b16 %v345
      %v2113 = vunpack.c.l.b16 %v346
      %v2114 = vunpack.c.l.b16 %v347
      %v2115 = vunpack.c.l.b16 %v348
      %v2116 = vunpack.c.l.b16 %v349
      %v2117 = vunpack.c.l.b16 %v350
      %v2118 = vunpack.c.l.b16 %v351
      %v2119 = vunpack.c.l.b16 %v352
      %v2120 = vunpack.c.l.b16 %v353
      %v2121 = vunpack.c.l.b16 %v354
      %v2122 = vunpack.c.l.b16 %v355
      %v2123 = vunpack.c.l.b16 %v356
      %v2124 = vunpack.c.l.b16 %v357
      %v2125 = vunpack.c.l.b16 %v358
      %v2126 = vunpack.c.l.b16 %v359
      %v2127 = vunpack.c.l.b16 %v360
      %v2128 = vunpack.c.l.b16 %v361
      %v2129 = vunpack.c.l.b16 %v362
      %v2130 = vunpack.c.l.b16 %v363
      %v2131 = vunpack.c.l.b16 %v364
      %v2132 = vunpack.c.l.b16 %v365
      %v2133 = vunpack.c.l.b16 %v366
      %v2134 = vunpack.c.l.b16 %v367
      %v2135 = vunpack.c.l.b16 %v368
      %v2136 = vunpack.c.l.b16 %v369
      %v2137 = vunpack.c.l.b16 %v370
      %v2138 = vunpack.c.l.b16 %v371
      %v2139 = vunpack.c.l.b16 %v372
      %v2140 = vunpack.c.l.b16 %v373
      %v2141 = vunpack.c.l.b16 %v374
      %v2142 = vunpack.c.l.b16 %v375
      %v2143 = vunpack.c.l.b16 %v376
      %v2144 = vunpack.c.l.b16 %v377
      %v2145 = vunpack.c.l.b16 %v378
      %v2146 = vunpack.c.l.b16 %v379
      %v2147 = vunpack.c.l.b16 %v380
      %v2148 = vunpack.c.l.b16 %v381
      %v2149 = vunpack.c.l.b16 %v382
      %v2150 = vunpack.c.l.b16 %v383
      %v2151 = vunpack.c.l.b16 %v384
      %v2152 = vunpack.c.l.b16 %v385
      %v2153 = vunpack.c.l.b16 %v386
      %v2154 = vunpack.c.l.b16 %v387
      %v2155 = vunpack.c.l.b16 %v388
      %v2156 = vunpack.c.l.b16 %v389
      %v2157 = vunpack.c.l.b16 %v390
      %v2158 = vunpack.c.l.b16 %v391
      %v2159 = vunpack.c.l.b16 %v392
      %v2160 = vunpack.c.l.b16 %v393
      %v2161 = vunpack.c.l.b16 %v394
      %v2162 = vunpack.c.l.b16 %v395
      %v2163 = vunpack.c.l.b16 %v396
      %v2164 = vunpack.c.l.b16 %v397
      %v2165 = vunpack.c.l.b16 %v398
      %v2166 = vunpack.c.l.b16 %v399
      %v2167 = vunpack.c.l.b16 %v400
      %v2168 = vunpack.c.l.b16 %v401
      %v2169 = vunpack.c.l.b16 %v402
      %v2170 = vunpack.c.l.b16 %v403
      %v2171 = vunpack.c.l.b16 %v404
      %v2172 = vunpack.c.l.b16 %v405
      %v2173 = vunpack.c.l.b16 %v406
      %v2174 = vunpack.c.l.b16 %v407
      %v2175 = vunpack.c.l.b16 %v408
      %v2176 = vunpack.c.l.b16 %v409
      %v2177 = vunpack.c.l.b16 %v410
      %v2178 = vunpack.c.l.b16 %v411
      %v2179 = vunpack.c.l.b16 %v412
      %v2180 = vunpack.c.l.b16 %v413
      %v2181 = vunpack.c.l.b16 %v414
      %v2182 = vunpack.c.l.b16 %v415
      %v2183 = vunpack.c.l.b16 %v416
      %v2184 = vunpack.c.l.b16 %v417
      %v2185 = vunpack.c.l.b16 %v418
      %v2186 = vunpack.c.l.b16 %v419
      %v2187 = vunpack.c.l.b16 %v420
      %v2188 = vunpack.c.l.b16 %v421
      %v2189 = vunpack.c.l.b16 %v422
      %v2190 = vunpack.c.l.b16 %v423
      %v2191 = vunpack.c.l.b16 %v424
      %v2192 = vunpack.c.l.b16 %v425
      %v2193 = vunpack.c.l.b16 %v426
      %v2194 = vunpack.c.l.b16 %v427
      %v2195 = vunpack.c.l.b16 %v428
      %v2196 = vunpack.c.l.b16 %v429
      %v2197 = vunpack.c.l.b16 %v430
      %v2198 = vunpack.c.l.b16 %v431
      %v2199 = vunpack.c.l.b16 %v432
      %v2200 = vunpack.c.l.b16 %v433
      %v2201 = vunpack.c.l.b16 %v434
      %v2202 = vunpack.c.l.b16 %v435
      %v2203 = vunpack.c.l.b16 %v436
      %v2204 = vunpack.c.l.b16 %v437
      %v2205 = vunpack.c.l.b16 %v438
      %v2206 = vunpack.c.l.b16 %v439
      %v2207 = vunpack.c.l.b16 %v440
      %v2208 = vunpack.c.l.b16 %v441
      %v2209 = vunpack.c.l.b16 %v442
      %v2210 = vunpack.c.l.b16 %v443
      %v2211 = vpack.c.b16 %v1996, %v1995
      %v2212 = vpack.c.b16 %v1998, %v1997
      %v2213 = vpack.c.b16 %v2000, %v1999
      %v2214 = vpack.c.b16 %v2002, %v2001
      %v2215 = vpack.c.b16 %v2004, %v2003
      %v2216 = vpack.c.b16 %v2006, %v2005
      %v2217 = vpack.c.b16 %v2008, %v2007
      %v2218 = vpack.c.b16 %v2010, %v2009
      %v2219 = vpack.c.b16 %v2012, %v2011
      %v2220 = vpack.c.b16 %v2014, %v2013
      %v2221 = vpack.c.b16 %v2016, %v2015
      %v2222 = vpack.c.b16 %v2018, %v2017
      %v2223 = vpack.c.b16 %v2020, %v2019
      %v2224 = vpack.c.b16 %v2022, %v2021
      %v2225 = vpack.c.b16 %v2024, %v2023
      %v2226 = vpack.c.b16 %v2026, %v2025
      %v2227 = vpack.c.b16 %v2028, %v2027
      %v2228 = vpack.c.b16 %v2030, %v2029
      %v2229 = vpack.c.b16 %v2032, %v2031
      %v2230 = vpack.c.b16 %v2034, %v2033
      %v2231 = vpack.c.b16 %v2036, %v2035
      %v2232 = vpack.c.b16 %v2038, %v2037
      %v2233 = vpack.c.b16 %v2040, %v2039
      %v2234 = vpack.c.b16 %v2042, %v2041
      %v2235 = vpack.c.b16 %v2044, %v2043
      %v2236 = vpack.c.b16 %v2046, %v2045
      %v2237 = vpack.c.b16 %v2048, %v2047
      %v2238 = vpack.c.b16 %v2050, %v2049
      %v2239 = vpack.c.b16 %v2052, %v2051
      %v2240 = vpack.c.b16 %v2054, %v2053
      %v2241 = vpack.c.b16 %v2056, %v2055
      %v2242 = vpack.c.b16 %v2058, %v2057
      %v2243 = vpack.c.b16 %v2060, %v2059
      %v2244 = vpack.c.b16 %v2062, %v2061
      %v2245 = vpack.c.b16 %v2064, %v2063
      %v2246 = vpack.c.b16 %v2066, %v2065
      %v2247 = vpack.c.b16 %v2068, %v2067
      %v2248 = vpack.c.b16 %v2070, %v2069
      %v2249 = vpack.c.b16 %v2072, %v2071
      %v2250 = vpack.c.b16 %v2074, %v2073
      %v2251 = vpack.c.b16 %v2076, %v2075
      %v2252 = vpack.c.b16 %v2078, %v2077
      %v2253 = vpack.c.b16 %v2080, %v2079
      %v2254 = vpack.c.b16 %v2082, %v2081
      %v2255 = vpack.c.b16 %v2084, %v2083
      %v2256 = vpack.c.b16 %v2086, %v2085
      %v2257 = vpack.c.b16 %v2088, %v2087
      %v2258 = vpack.c.b16 %v2090, %v2089
      %v2259 = vpack.c.b16 %v2092, %v2091
      %v2260 = vpack.c.b16 %v2094, %v2093
      %v2261 = vpack.c.b16 %v2096, %v2095
      %v2262 = vpack.c.b16 %v2098, %v2097
      %v2263 = vpack.c.b16 %v2100, %v2099
      %v2264 = vpack.c.b16 %v2102, %v2101
      %v2265 = vpack.c.b16 %v2104, %v2103
      %v2266 = vpack.c.b16 %v2106, %v2105
      %v2267 = vpack.c.b16 %v2108, %v2107
      %v2268 = vpack.c.b16 %v2110, %v2109
      %v2269 = vpack.c.b16 %v2112, %v2111
      %v2270 = vpack.c.b16 %v2114, %v2113
      %v2271 = vpack.c.b16 %v2116, %v2115
      %v2272 = vpack.c.b16 %v2118, %v2117
      %v2273 = vpack.c.b16 %v2120, %v2119
      %v2274 = vpack.c.b16 %v2122, %v2121
      %v2275 = vpack.c.b16 %v2124, %v2123
      %v2276 = vpack.c.b16 %v2126, %v2125
      %v2277 = vpack.c.b16 %v2128, %v2127
      %v2278 = vpack.c.b16 %v2130, %v2129
      %v2279 = vpack.c.b16 %v2132, %v2131
      %v2280 = vpack.c.b16 %v2134, %v2133
      %v2281 = vpack.c.b16 %v2136, %v2135
      %v2282 = vpack.c.b16 %v2138, %v2137
      %v2283 = vpack.c.b16 %v2140, %v2139
      %v2284 = vpack.c.b16 %v2142, %v2141
      %v2285 = vpack.c.b16 %v2144, %v2143
      %v2286 = vpack.c.b16 %v2146, %v2145
      %v2287 = vpack.c.b16 %v2148, %v2147
      %v2288 = vpack.c.b16 %v2150, %v2149
      %v2289 = vpack.c.b16 %v2152, %v2151
      %v2290 = vpack.c.b16 %v2154, %v2153
      %v2291 = vpack.c.b16 %v2156, %v2155
      %v2292 = vpack.c.b16 %v2158, %v2157
      %v2293 = vpack.c.b16 %v2160, %v2159
      %v2294 = vpack.c.b16 %v2162, %v2161
      %v2295 = vpack.c.b16 %v2164, %v2163
      %v2296 = vpack.c.b16 %v2166, %v2165
      %v2297 = vpack.c.b16 %v2168, %v2167
      %v2298 = vpack.c.b16 %v2170, %v2169
      %v2299 = vpack.c.b16 %v2172, %v2171
      %v2300 = vpack.c.b16 %v2174, %v2173
      %v2301 = vpack.c.b16 %v2176, %v2175
      %v2302 = vpack.c.b16 %v2178, %v2177
      %v2303 = vpack.c.b16 %v2180, %v2179
      %v2304 = vpack.c.b16 %v2182, %v2181
      %v2305 = vpack.c.b16 %v2184, %v2183
      %v2306 = vpack.c.b16 %v2186, %v2185
      %v2307 = vpack.c.b16 %v2188, %v2187
      %v2308 = vpack.c.b16 %v2190, %v2189
      %v2309 = vpack.c.b16 %v2192, %v2191
      %v2310 = vpack.c.b16 %v2194, %v2193
      %v2311 = vpack.c.b16 %v2196, %v2195
      %v2312 = vpack.c.b16 %v2198, %v2197
      %v2313 = vpack.c.b16 %v2200, %v2199
      %v2314 = vpack.c.b16 %v2202, %v2201
      %v2315 = vpack.c.b16 %v2204, %v2203
      %v2316 = vpack.c.b16 %v2206, %v2205
      %v2317 = vpack.c.b16 %v2208, %v2207
      %v2318 = vpack.c.b16 %v2210, %v2209
      %vm2427 = vcmask 523264
      %v2429 = vsel %vm2427, %v1360, 0
      %v2432 = vsel %vm2427, %v1374, 0
      %v2435 = vsel %vm2427, %v1388, 0
      %v2438 = vsel %vm2427, %v1402, 0
      %v2441 = vsel %vm2427, %v1416, 0
      %v2444 = vsel %vm2427, %v1430, 0
      %v2447 = vsel %vm2427, %v1444, 0
      %v2450 = vsel %vm2427, %v1458, 0
      %v2453 = vsel %vm2427, %v1472, 0
      %v2456 = vsel %vm2427, %v1486, 0
      %v2459 = vsel %vm2427, %v1500, 0
      %v2462 = vsel %vm2427, %v1514, 0
      %v2465 = vsel %vm2427, %v1528, 0
      %v2468 = vsel %vm2427, %v1542, 0
      %v2471 = vsel %vm2427, %v1556, 0
      %v2474 = vsel %vm2427, %v1570, 0
      %2476 = vmatprep.subr.bf16.mxu0 0
      %2477 = vmatpush1.bf16.msra.mxu0 %v2211
      %2478 = vmatprep.subr.bf16.mxu0 0
      %2479 = vmatpush1.bf16.msra.mxu0 %v2212
      %2480 = vmatprep.subr.bf16.mxu0 0
      %2481 = vmatpush1.bf16.msra.mxu0 %v2213
      %2482 = vmatprep.subr.bf16.mxu0 0
      %2483 = vmatpush1.bf16.msra.mxu0 %v2214
      %2484 = vmatprep.subr.bf16.mxu0 0
      %2485 = vmatpush1.bf16.msra.mxu0 %v2215
      %2486 = vmatprep.subr.bf16.mxu0 0
      %2487 = vmatpush1.bf16.msra.mxu0 %v2216
      %2488 = vmatprep.subr.bf16.mxu0 0
      %2489 = vmatpush1.bf16.msra.mxu0 %v2217
      %2490 = vmatprep.subr.bf16.mxu0 0
      %2491 = vmatpush1.bf16.msra.mxu0 %v2218
      %2492 = vmatprep.subr.bf16.mxu0 0
      %2493 = vmatpush1.bf16.msra.mxu0 %v2219
      %2494 = vmatprep.subr.bf16.mxu0 0
      %2495 = vmatpush1.bf16.msra.mxu0 %v2220
      %2496 = vmatprep.subr.bf16.mxu0 0
      %2497 = vmatpush1.bf16.msra.mxu0 %v2221
      %2498 = vmatprep.subr.bf16.mxu0 0
      %2499 = vmatpush1.bf16.msra.mxu0 %v2222
      %2500 = vmatprep.subr.bf16.mxu0 0
      %2501 = vmatpush1.bf16.msra.mxu0 %v2223
      %2502 = vmatprep.subr.bf16.mxu0 0
      %2503 = vmatpush1.bf16.msra.mxu0 %v2224
      %2504 = vmatprep.subr.bf16.mxu0 0
      %2505 = vmatpush1.bf16.msra.mxu0 %v2225
      %2506 = vmatprep.subr.bf16.mxu0 0
      %2507 = vmatpush1.bf16.msra.mxu0 %v2226
      %2508 = vmatprep.mubr.bf16.mxu0 %v1348
      %2509 = vmatmul.mubr.bf16.gmra.mrb[0].mxu0 %v1347
      %v2510 = vpop.f32.mrb[0].mxu0
      %v2511 = vadd.f32 %v673, %v2510
      %v2512 = vpop.f32.mrb[0].mxu0
      %v2513 = vpop.f32.mrb[0].mxu0
      %v2514 = vadd.f32 %v673, %v2513
      %v2515 = vpop.f32.mrb[0].mxu0
      %2516 = vmatprep.mubr.bf16.mxu0 %v1362
      %2517 = vmatmul.mubr.bf16.gmra.mrb[0].mxu0 %v1361
      %v2518 = vpop.f32.mrb[0].mxu0
      %v2519 = vadd.f32 %v673, %v2518
      %v2520 = vpop.f32.mrb[0].mxu0
      %v2521 = vpop.f32.mrb[0].mxu0
      %v2522 = vadd.f32 %v673, %v2521
      %v2523 = vpop.f32.mrb[0].mxu0
      %2524 = vmatprep.mubr.bf16.mxu0 %v1376
      %2525 = vmatmul.mubr.bf16.gmra.mrb[0].mxu0 %v1375
      %v2526 = vpop.f32.mrb[0].mxu0
      %v2527 = vadd.f32 %v673, %v2526
      %v2528 = vpop.f32.mrb[0].mxu0
      %v2529 = vpop.f32.mrb[0].mxu0
      %v2530 = vadd.f32 %v673, %v2529
      %v2531 = vpop.f32.mrb[0].mxu0
      %2532 = vmatprep.mubr.bf16.mxu0 %v1390
      %2533 = vmatmul.mubr.bf16.gmra.mrb[0].mxu0 %v1389
      %v2534 = vpop.f32.mrb[0].mxu0
      %v2535 = vadd.f32 %v673, %v2534
      %v2536 = vpop.f32.mrb[0].mxu0
      %v2537 = vpop.f32.mrb[0].mxu0
      %v2538 = vadd.f32 %v673, %v2537
      %v2539 = vpop.f32.mrb[0].mxu0
      %2540 = vmatprep.mubr.bf16.mxu0 %v1404
      %2541 = vmatmul.mubr.bf16.gmra.mrb[0].mxu0 %v1403
      %v2542 = vpop.f32.mrb[0].mxu0
      %v2543 = vadd.f32 %v673, %v2542
      %v2544 = vpop.f32.mrb[0].mxu0
      %v2545 = vpop.f32.mrb[0].mxu0
      %v2546 = vadd.f32 %v673, %v2545
      %v2547 = vpop.f32.mrb[0].mxu0
      %2548 = vmatprep.mubr.bf16.mxu0 %v1418
      %2549 = vmatmul.mubr.bf16.gmra.mrb[0].mxu0 %v1417
      %v2550 = vpop.f32.mrb[0].mxu0
      %v2551 = vadd.f32 %v673, %v2550
      %v2552 = vpop.f32.mrb[0].mxu0
      %v2553 = vpop.f32.mrb[0].mxu0
      %v2554 = vadd.f32 %v673, %v2553
      %v2555 = vpop.f32.mrb[0].mxu0
      %2556 = vmatprep.mubr.bf16.mxu0 %v1432
      %2557 = vmatmul.mubr.bf16.gmra.mrb[0].mxu0 %v1431
      %v2558 = vpop.f32.mrb[0].mxu0
      %v2559 = vadd.f32 %v673, %v2558
      %v2560 = vpop.f32.mrb[0].mxu0
      %v2561 = vpop.f32.mrb[0].mxu0
      %v2562 = vadd.f32 %v673, %v2561
      %v2563 = vpop.f32.mrb[0].mxu0
      %2564 = vmatprep.mubr.bf16.mxu0 %v1446
      %2565 = vmatmul.mubr.bf16.gmra.mrb[0].mxu0 %v1445
      %v2566 = vpop.f32.mrb[0].mxu0
      %v2567 = vadd.f32 %v673, %v2566
      %v2568 = vpop.f32.mrb[0].mxu0
      %v2569 = vpop.f32.mrb[0].mxu0
      %v2570 = vadd.f32 %v673, %v2569
      %v2571 = vpop.f32.mrb[0].mxu0
      %2572 = vmatprep.mubr.bf16.mxu0 %v1460
      %2573 = vmatmul.mubr.bf16.gmra.mrb[0].mxu0 %v1459
      %v2574 = vpop.f32.mrb[0].mxu0
      %v2575 = vadd.f32 %v673, %v2574
      %v2576 = vpop.f32.mrb[0].mxu0
      %v2577 = vpop.f32.mrb[0].mxu0
      %v2578 = vadd.f32 %v673, %v2577
      %v2579 = vpop.f32.mrb[0].mxu0
      %2580 = vmatprep.mubr.bf16.mxu0 %v1474
      %2581 = vmatmul.mubr.bf16.gmra.mrb[0].mxu0 %v1473
      %v2582 = vpop.f32.mrb[0].mxu0
      %v2583 = vadd.f32 %v673, %v2582
      %v2584 = vpop.f32.mrb[0].mxu0
      %v2585 = vpop.f32.mrb[0].mxu0
      %v2586 = vadd.f32 %v673, %v2585
      %v2587 = vpop.f32.mrb[0].mxu0
      %2588 = vmatprep.mubr.bf16.mxu0 %v1488
      %2589 = vmatmul.mubr.bf16.gmra.mrb[0].mxu0 %v1487
      %v2590 = vpop.f32.mrb[0].mxu0
      %v2591 = vadd.f32 %v673, %v2590
      %v2592 = vpop.f32.mrb[0].mxu0
      %v2593 = vpop.f32.mrb[0].mxu0
      %v2594 = vadd.f32 %v673, %v2593
      %v2595 = vpop.f32.mrb[0].mxu0
      %2596 = vmatprep.mubr.bf16.mxu0 %v1502
      %2597 = vmatmul.mubr.bf16.gmra.mrb[0].mxu0 %v1501
      %v2598 = vpop.f32.mrb[0].mxu0
      %v2599 = vadd.f32 %v673, %v2598
      %v2600 = vpop.f32.mrb[0].mxu0
      %v2601 = vpop.f32.mrb[0].mxu0
      %v2602 = vadd.f32 %v673, %v2601
      %v2603 = vpop.f32.mrb[0].mxu0
      %2604 = vmatprep.mubr.bf16.mxu0 %v1516
      %2605 = vmatmul.mubr.bf16.gmra.mrb[0].mxu0 %v1515
      %v2606 = vpop.f32.mrb[0].mxu0
      %v2607 = vadd.f32 %v673, %v2606
      %v2608 = vpop.f32.mrb[0].mxu0
      %v2609 = vpop.f32.mrb[0].mxu0
      %v2610 = vadd.f32 %v673, %v2609
      %v2611 = vpop.f32.mrb[0].mxu0
      %2612 = vmatprep.mubr.bf16.mxu0 %v1530
      %2613 = vmatmul.mubr.bf16.gmra.mrb[0].mxu0 %v1529
      %v2614 = vpop.f32.mrb[0].mxu0
      %v2615 = vadd.f32 %v673, %v2614
      %v2616 = vpop.f32.mrb[0].mxu0
      %v2617 = vpop.f32.mrb[0].mxu0
      %v2618 = vadd.f32 %v673, %v2617
      %v2619 = vpop.f32.mrb[0].mxu0
      %2620 = vmatprep.mubr.bf16.mxu0 %v1544
      %2621 = vmatmul.mubr.bf16.gmra.mrb[0].mxu0 %v1543
      %v2622 = vpop.f32.mrb[0].mxu0
      %v2623 = vadd.f32 %v673, %v2622
      %v2624 = vpop.f32.mrb[0].mxu0
      %v2625 = vpop.f32.mrb[0].mxu0
      %v2626 = vadd.f32 %v673, %v2625
      %v2627 = vpop.f32.mrb[0].mxu0
      %2628 = vmatprep.mubr.bf16.mxu0 %v1558
      %2629 = vmatmul.mubr.bf16.gmra.mrb[0].mxu0 %v1557
      %v2630 = vpop.f32.mrb[0].mxu0
      %v2631 = vadd.f32 %v673, %v2630
      %v2632 = vpop.f32.mrb[0].mxu0
      %v2633 = vpop.f32.mrb[0].mxu0
      %v2634 = vadd.f32 %v673, %v2633
      %v2635 = vpop.f32.mrb[0].mxu0
      %2636 = vdwg.mxu0
      %2637 = vmatprep.subr.bf16.mxu0 0
      %2638 = vmatpush1.bf16.msra.mxu0 %v2227
      %2639 = vmatprep.subr.bf16.mxu0 0
      %2640 = vmatpush1.bf16.msra.mxu0 %v2228
      %2641 = vmatprep.subr.bf16.mxu0 0
      %2642 = vmatpush1.bf16.msra.mxu0 %v2229
      %2643 = vmatprep.subr.bf16.mxu0 0
      %2644 = vmatpush1.bf16.msra.mxu0 %v2230
      %2645 = vmatprep.subr.bf16.mxu0 0
      %2646 = vmatpush1.bf16.msra.mxu0 %v2231
      %2647 = vmatprep.subr.bf16.mxu0 0
      %2648 = vmatpush1.bf16.msra.mxu0 %v2232
      %2649 = vmatprep.subr.bf16.mxu0 0
      %2650 = vmatpush1.bf16.msra.mxu0 %v2233
      %2651 = vmatprep.subr.bf16.mxu0 0
      %2652 = vmatpush1.bf16.msra.mxu0 %v2234
      %2653 = vmatprep.subr.bf16.mxu0 0
      %2654 = vmatpush1.bf16.msra.mxu0 %v2235
      %2655 = vmatprep.subr.bf16.mxu0 0
      %2656 = vmatpush1.bf16.msra.mxu0 %v2236
      %2657 = vmatprep.subr.bf16.mxu0 0
      %2658 = vmatpush1.bf16.msra.mxu0 %v2237
      %2659 = vmatprep.subr.bf16.mxu0 0
      %2660 = vmatpush1.bf16.msra.mxu0 %v2238
      %2661 = vmatprep.subr.bf16.mxu0 0
      %2662 = vmatpush1.bf16.msra.mxu0 %v2239
      %2663 = vmatprep.subr.bf16.mxu0 0
      %2664 = vmatpush1.bf16.msra.mxu0 %v2240
      %2665 = vmatprep.subr.bf16.mxu0 0
      %2666 = vmatpush1.bf16.msra.mxu0 %v2241
      %2667 = vmatprep.subr.bf16.mxu0 0
      %2668 = vmatpush1.bf16.msra.mxu0 %v2242
      %2669 = vmatprep.mubr.bf16.mxu0 %v1350
      %2670 = vmatmul.mubr.bf16.gmra.mrb[0].mxu0 %v1349
      %v2671 = vpop.f32.mrb[0].mxu0
      %v2672 = vadd.f32 %v2511, %v2671
      %v2673 = vpop.f32.mrb[0].mxu0
      %v2674 = vpop.f32.mrb[0].mxu0
      %v2675 = vadd.f32 %v2514, %v2674
      %v2676 = vpop.f32.mrb[0].mxu0
      %2677 = vmatprep.mubr.bf16.mxu0 %v1364
      %2678 = vmatmul.mubr.bf16.gmra.mrb[0].mxu0 %v1363
      %v2679 = vpop.f32.mrb[0].mxu0
      %v2680 = vadd.f32 %v2519, %v2679
      %v2681 = vpop.f32.mrb[0].mxu0
      %v2682 = vpop.f32.mrb[0].mxu0
      %v2683 = vadd.f32 %v2522, %v2682
      %v2684 = vpop.f32.mrb[0].mxu0
      %2685 = vmatprep.mubr.bf16.mxu0 %v1378
      %2686 = vmatmul.mubr.bf16.gmra.mrb[0].mxu0 %v1377
      %v2687 = vpop.f32.mrb[0].mxu0
      %v2688 = vadd.f32 %v2527, %v2687
      %v2689 = vpop.f32.mrb[0].mxu0
      %v2690 = vpop.f32.mrb[0].mxu0
      %v2691 = vadd.f32 %v2530, %v2690
      %v2692 = vpop.f32.mrb[0].mxu0
      %2693 = vmatprep.mubr.bf16.mxu0 %v1392
      %2694 = vmatmul.mubr.bf16.gmra.mrb[0].mxu0 %v1391
      %v2695 = vpop.f32.mrb[0].mxu0
      %v2696 = vadd.f32 %v2535, %v2695
      %v2697 = vpop.f32.mrb[0].mxu0
      %v2698 = vpop.f32.mrb[0].mxu0
      %v2699 = vadd.f32 %v2538, %v2698
      %v2700 = vpop.f32.mrb[0].mxu0
      %2701 = vmatprep.mubr.bf16.mxu0 %v1406
      %2702 = vmatmul.mubr.bf16.gmra.mrb[0].mxu0 %v1405
      %v2703 = vpop.f32.mrb[0].mxu0
      %v2704 = vadd.f32 %v2543, %v2703
      %v2705 = vpop.f32.mrb[0].mxu0
      %v2706 = vpop.f32.mrb[0].mxu0
      %v2707 = vadd.f32 %v2546, %v2706
      %v2708 = vpop.f32.mrb[0].mxu0
      %2709 = vmatprep.mubr.bf16.mxu0 %v1420
      %2710 = vmatmul.mubr.bf16.gmra.mrb[0].mxu0 %v1419
      %v2711 = vpop.f32.mrb[0].mxu0
      %v2712 = vadd.f32 %v2551, %v2711
      %v2713 = vpop.f32.mrb[0].mxu0
      %v2714 = vpop.f32.mrb[0].mxu0
      %v2715 = vadd.f32 %v2554, %v2714
      %v2716 = vpop.f32.mrb[0].mxu0
      %2717 = vmatprep.mubr.bf16.mxu0 %v1434
      %2718 = vmatmul.mubr.bf16.gmra.mrb[0].mxu0 %v1433
      %v2719 = vpop.f32.mrb[0].mxu0
      %v2720 = vadd.f32 %v2559, %v2719
      %v2721 = vpop.f32.mrb[0].mxu0
      %v2722 = vpop.f32.mrb[0].mxu0
      %v2723 = vadd.f32 %v2562, %v2722
      %v2724 = vpop.f32.mrb[0].mxu0
      %2725 = vmatprep.mubr.bf16.mxu0 %v1448
      %2726 = vmatmul.mubr.bf16.gmra.mrb[0].mxu0 %v1447
      %v2727 = vpop.f32.mrb[0].mxu0
      %v2728 = vadd.f32 %v2567, %v2727
      %v2729 = vpop.f32.mrb[0].mxu0
      %v2730 = vpop.f32.mrb[0].mxu0
      %v2731 = vadd.f32 %v2570, %v2730
      %v2732 = vpop.f32.mrb[0].mxu0
      %2733 = vmatprep.mubr.bf16.mxu0 %v1462
      %2734 = vmatmul.mubr.bf16.gmra.mrb[0].mxu0 %v1461
      %v2735 = vpop.f32.mrb[0].mxu0
      %v2736 = vadd.f32 %v2575, %v2735
      %v2737 = vpop.f32.mrb[0].mxu0
      %v2738 = vpop.f32.mrb[0].mxu0
      %v2739 = vadd.f32 %v2578, %v2738
      %v2740 = vpop.f32.mrb[0].mxu0
      %2741 = vmatprep.mubr.bf16.mxu0 %v1476
      %2742 = vmatmul.mubr.bf16.gmra.mrb[0].mxu0 %v1475
      %v2743 = vpop.f32.mrb[0].mxu0
      %v2744 = vadd.f32 %v2583, %v2743
      %v2745 = vpop.f32.mrb[0].mxu0
      %v2746 = vpop.f32.mrb[0].mxu0
      %v2747 = vadd.f32 %v2586, %v2746
      %v2748 = vpop.f32.mrb[0].mxu0
      %2749 = vmatprep.mubr.bf16.mxu0 %v1490
      %2750 = vmatmul.mubr.bf16.gmra.mrb[0].mxu0 %v1489
      %v2751 = vpop.f32.mrb[0].mxu0
      %v2752 = vadd.f32 %v2591, %v2751
      %v2753 = vpop.f32.mrb[0].mxu0
      %v2754 = vpop.f32.mrb[0].mxu0
      %v2755 = vadd.f32 %v2594, %v2754
      %v2756 = vpop.f32.mrb[0].mxu0
      %2757 = vmatprep.mubr.bf16.mxu0 %v1504
      %2758 = vmatmul.mubr.bf16.gmra.mrb[0].mxu0 %v1503
      %v2759 = vpop.f32.mrb[0].mxu0
      %v2760 = vadd.f32 %v2599, %v2759
      %v2761 = vpop.f32.mrb[0].mxu0
      %v2762 = vpop.f32.mrb[0].mxu0
      %v2763 = vadd.f32 %v2602, %v2762
      %v2764 = vpop.f32.mrb[0].mxu0
      %2765 = vmatprep.mubr.bf16.mxu0 %v1518
      %2766 = vmatmul.mubr.bf16.gmra.mrb[0].mxu0 %v1517
      %v2767 = vpop.f32.mrb[0].mxu0
      %v2768 = vadd.f32 %v2607, %v2767
      %v2769 = vpop.f32.mrb[0].mxu0
      %v2770 = vpop.f32.mrb[0].mxu0
      %v2771 = vadd.f32 %v2610, %v2770
      %v2772 = vpop.f32.mrb[0].mxu0
      %2773 = vmatprep.mubr.bf16.mxu0 %v1532
      %2774 = vmatmul.mubr.bf16.gmra.mrb[0].mxu0 %v1531
      %v2775 = vpop.f32.mrb[0].mxu0
      %v2776 = vadd.f32 %v2615, %v2775
      %v2777 = vpop.f32.mrb[0].mxu0
      %v2778 = vpop.f32.mrb[0].mxu0
      %v2779 = vadd.f32 %v2618, %v2778
      %v2780 = vpop.f32.mrb[0].mxu0
      %2781 = vmatprep.mubr.bf16.mxu0 %v1546
      %2782 = vmatmul.mubr.bf16.gmra.mrb[0].mxu0 %v1545
      %v2783 = vpop.f32.mrb[0].mxu0
      %v2784 = vadd.f32 %v2623, %v2783
      %v2785 = vpop.f32.mrb[0].mxu0
      %v2786 = vpop.f32.mrb[0].mxu0
      %v2787 = vadd.f32 %v2626, %v2786
      %v2788 = vpop.f32.mrb[0].mxu0
      %2789 = vmatprep.mubr.bf16.mxu0 %v1560
      %2790 = vmatmul.mubr.bf16.gmra.mrb[0].mxu0 %v1559
      %v2791 = vpop.f32.mrb[0].mxu0
      %v2792 = vadd.f32 %v2631, %v2791
      %v2793 = vpop.f32.mrb[0].mxu0
      %v2794 = vpop.f32.mrb[0].mxu0
      %v2795 = vadd.f32 %v2634, %v2794
      %v2796 = vpop.f32.mrb[0].mxu0
      %2797 = vdwg.mxu0
      %2798 = vmatprep.subr.bf16.mxu0 0
      %2799 = vmatpush1.bf16.msra.mxu0 %v2243
      %2800 = vmatprep.subr.bf16.mxu0 0
      %2801 = vmatpush1.bf16.msra.mxu0 %v2244
      %2802 = vmatprep.subr.bf16.mxu0 0
      %2803 = vmatpush1.bf16.msra.mxu0 %v2245
      %2804 = vmatprep.subr.bf16.mxu0 0
      %2805 = vmatpush1.bf16.msra.mxu0 %v2246
      %2806 = vmatprep.subr.bf16.mxu0 0
      %2807 = vmatpush1.bf16.msra.mxu0 %v2247
      %2808 = vmatprep.subr.bf16.mxu0 0
      %2809 = vmatpush1.bf16.msra.mxu0 %v2248
      %2810 = vmatprep.subr.bf16.mxu0 0
      %2811 = vmatpush1.bf16.msra.mxu0 %v2249
      %2812 = vmatprep.subr.bf16.mxu0 0
      %2813 = vmatpush1.bf16.msra.mxu0 %v2250
      %2814 = vmatprep.subr.bf16.mxu0 0
      %2815 = vmatpush1.bf16.msra.mxu0 %v2251
      %2816 = vmatprep.subr.bf16.mxu0 0
      %2817 = vmatpush1.bf16.msra.mxu0 %v2252
      %2818 = vmatprep.subr.bf16.mxu0 0
      %2819 = vmatpush1.bf16.msra.mxu0 %v2253
      %2820 = vmatprep.subr.bf16.mxu0 0
      %2821 = vmatpush1.bf16.msra.mxu0 %v2254
      %2822 = vmatprep.subr.bf16.mxu0 0
      %2823 = vmatpush1.bf16.msra.mxu0 %v2255
      %2824 = vmatprep.subr.bf16.mxu0 0
      %2825 = vmatpush1.bf16.msra.mxu0 %v2256
      %2826 = vmatprep.subr.bf16.mxu0 0
      %2827 = vmatpush1.bf16.msra.mxu0 %v2257
      %2828 = vmatprep.subr.bf16.mxu0 0
      %2829 = vmatpush1.bf16.msra.mxu0 %v2258
      %2830 = vmatprep.mubr.bf16.mxu0 %v1352
      %2831 = vmatmul.mubr.bf16.gmra.mrb[0].mxu0 %v1351
      %v2832 = vpop.f32.mrb[0].mxu0
      %v2833 = vadd.f32 %v2672, %v2832
      %v2834 = vpop.f32.mrb[0].mxu0
      %v2835 = vpop.f32.mrb[0].mxu0
      %v2836 = vadd.f32 %v2675, %v2835
      %v2837 = vpop.f32.mrb[0].mxu0
      %2838 = vmatprep.mubr.bf16.mxu0 %v1366
      %2839 = vmatmul.mubr.bf16.gmra.mrb[0].mxu0 %v1365
      %v2840 = vpop.f32.mrb[0].mxu0
      %v2841 = vadd.f32 %v2680, %v2840
      %v2842 = vpop.f32.mrb[0].mxu0
      %v2843 = vpop.f32.mrb[0].mxu0
      %v2844 = vadd.f32 %v2683, %v2843
      %v2845 = vpop.f32.mrb[0].mxu0
      %2846 = vmatprep.mubr.bf16.mxu0 %v1380
      %2847 = vmatmul.mubr.bf16.gmra.mrb[0].mxu0 %v1379
      %v2848 = vpop.f32.mrb[0].mxu0
      %v2849 = vadd.f32 %v2688, %v2848
      %v2850 = vpop.f32.mrb[0].mxu0
      %v2851 = vpop.f32.mrb[0].mxu0
      %v2852 = vadd.f32 %v2691, %v2851
      %v2853 = vpop.f32.mrb[0].mxu0
      %2854 = vmatprep.mubr.bf16.mxu0 %v1394
      %2855 = vmatmul.mubr.bf16.gmra.mrb[0].mxu0 %v1393
      %v2856 = vpop.f32.mrb[0].mxu0
      %v2857 = vadd.f32 %v2696, %v2856
      %v2858 = vpop.f32.mrb[0].mxu0
      %v2859 = vpop.f32.mrb[0].mxu0
      %v2860 = vadd.f32 %v2699, %v2859
      %v2861 = vpop.f32.mrb[0].mxu0
      %2862 = vmatprep.mubr.bf16.mxu0 %v1408
      %2863 = vmatmul.mubr.bf16.gmra.mrb[0].mxu0 %v1407
      %v2864 = vpop.f32.mrb[0].mxu0
      %v2865 = vadd.f32 %v2704, %v2864
      %v2866 = vpop.f32.mrb[0].mxu0
      %v2867 = vpop.f32.mrb[0].mxu0
      %v2868 = vadd.f32 %v2707, %v2867
      %v2869 = vpop.f32.mrb[0].mxu0
      %2870 = vmatprep.mubr.bf16.mxu0 %v1422
      %2871 = vmatmul.mubr.bf16.gmra.mrb[0].mxu0 %v1421
      %v2872 = vpop.f32.mrb[0].mxu0
      %v2873 = vadd.f32 %v2712, %v2872
      %v2874 = vpop.f32.mrb[0].mxu0
      %v2875 = vpop.f32.mrb[0].mxu0
      %v2876 = vadd.f32 %v2715, %v2875
      %v2877 = vpop.f32.mrb[0].mxu0
      %2878 = vmatprep.mubr.bf16.mxu0 %v1436
      %2879 = vmatmul.mubr.bf16.gmra.mrb[0].mxu0 %v1435
      %v2880 = vpop.f32.mrb[0].mxu0
      %v2881 = vadd.f32 %v2720, %v2880
      %v2882 = vpop.f32.mrb[0].mxu0
      %v2883 = vpop.f32.mrb[0].mxu0
      %v2884 = vadd.f32 %v2723, %v2883
      %v2885 = vpop.f32.mrb[0].mxu0
      %2886 = vmatprep.mubr.bf16.mxu0 %v1450
      %2887 = vmatmul.mubr.bf16.gmra.mrb[0].mxu0 %v1449
      %v2888 = vpop.f32.mrb[0].mxu0
      %v2889 = vadd.f32 %v2728, %v2888
      %v2890 = vpop.f32.mrb[0].mxu0
      %v2891 = vpop.f32.mrb[0].mxu0
      %v2892 = vadd.f32 %v2731, %v2891
      %v2893 = vpop.f32.mrb[0].mxu0
      %2894 = vmatprep.mubr.bf16.mxu0 %v1464
      %2895 = vmatmul.mubr.bf16.gmra.mrb[0].mxu0 %v1463
      %v2896 = vpop.f32.mrb[0].mxu0
      %v2897 = vadd.f32 %v2736, %v2896
      %v2898 = vpop.f32.mrb[0].mxu0
      %v2899 = vpop.f32.mrb[0].mxu0
      %v2900 = vadd.f32 %v2739, %v2899
      %v2901 = vpop.f32.mrb[0].mxu0
      %2902 = vmatprep.mubr.bf16.mxu0 %v1478
      %2903 = vmatmul.mubr.bf16.gmra.mrb[0].mxu0 %v1477
      %v2904 = vpop.f32.mrb[0].mxu0
      %v2905 = vadd.f32 %v2744, %v2904
      %v2906 = vpop.f32.mrb[0].mxu0
      %v2907 = vpop.f32.mrb[0].mxu0
      %v2908 = vadd.f32 %v2747, %v2907
      %v2909 = vpop.f32.mrb[0].mxu0
      %2910 = vmatprep.mubr.bf16.mxu0 %v1492
      %2911 = vmatmul.mubr.bf16.gmra.mrb[0].mxu0 %v1491
      %v2912 = vpop.f32.mrb[0].mxu0
      %v2913 = vadd.f32 %v2752, %v2912
      %v2914 = vpop.f32.mrb[0].mxu0
      %v2915 = vpop.f32.mrb[0].mxu0
      %v2916 = vadd.f32 %v2755, %v2915
      %v2917 = vpop.f32.mrb[0].mxu0
      %2918 = vmatprep.mubr.bf16.mxu0 %v1506
      %2919 = vmatmul.mubr.bf16.gmra.mrb[0].mxu0 %v1505
      %v2920 = vpop.f32.mrb[0].mxu0
      %v2921 = vadd.f32 %v2760, %v2920
      %v2922 = vpop.f32.mrb[0].mxu0
      %v2923 = vpop.f32.mrb[0].mxu0
      %v2924 = vadd.f32 %v2763, %v2923
      %v2925 = vpop.f32.mrb[0].mxu0
      %2926 = vmatprep.mubr.bf16.mxu0 %v1520
      %2927 = vmatmul.mubr.bf16.gmra.mrb[0].mxu0 %v1519
      %v2928 = vpop.f32.mrb[0].mxu0
      %v2929 = vadd.f32 %v2768, %v2928
      %v2930 = vpop.f32.mrb[0].mxu0
      %v2931 = vpop.f32.mrb[0].mxu0
      %v2932 = vadd.f32 %v2771, %v2931
      %v2933 = vpop.f32.mrb[0].mxu0
      %2934 = vmatprep.mubr.bf16.mxu0 %v1534
      %2935 = vmatmul.mubr.bf16.gmra.mrb[0].mxu0 %v1533
      %v2936 = vpop.f32.mrb[0].mxu0
      %v2937 = vadd.f32 %v2776, %v2936
      %v2938 = vpop.f32.mrb[0].mxu0
      %v2939 = vpop.f32.mrb[0].mxu0
      %v2940 = vadd.f32 %v2779, %v2939
      %v2941 = vpop.f32.mrb[0].mxu0
      %2942 = vmatprep.mubr.bf16.mxu0 %v1548
      %2943 = vmatmul.mubr.bf16.gmra.mrb[0].mxu0 %v1547
      %v2944 = vpop.f32.mrb[0].mxu0
      %v2945 = vadd.f32 %v2784, %v2944
      %v2946 = vpop.f32.mrb[0].mxu0
      %v2947 = vpop.f32.mrb[0].mxu0
      %v2948 = vadd.f32 %v2787, %v2947
      %v2949 = vpop.f32.mrb[0].mxu0
      %2950 = vmatprep.mubr.bf16.mxu0 %v1562
      %2951 = vmatmul.mubr.bf16.gmra.mrb[0].mxu0 %v1561
      %v2952 = vpop.f32.mrb[0].mxu0
      %v2953 = vadd.f32 %v2792, %v2952
      %v2954 = vpop.f32.mrb[0].mxu0
      %v2955 = vpop.f32.mrb[0].mxu0
      %v2956 = vadd.f32 %v2795, %v2955
      %v2957 = vpop.f32.mrb[0].mxu0
      %2958 = vdwg.mxu0
      %2959 = vmatprep.subr.bf16.mxu0 0
      %2960 = vmatpush1.bf16.msra.mxu0 %v2259
      %2961 = vmatprep.subr.bf16.mxu0 0
      %2962 = vmatpush1.bf16.msra.mxu0 %v2260
      %2963 = vmatprep.subr.bf16.mxu0 0
      %2964 = vmatpush1.bf16.msra.mxu0 %v2261
      %2965 = vmatprep.subr.bf16.mxu0 0
      %2966 = vmatpush1.bf16.msra.mxu0 %v2262
      %2967 = vmatprep.subr.bf16.mxu0 0
      %2968 = vmatpush1.bf16.msra.mxu0 %v2263
      %2969 = vmatprep.subr.bf16.mxu0 0
      %2970 = vmatpush1.bf16.msra.mxu0 %v2264
      %2971 = vmatprep.subr.bf16.mxu0 0
      %2972 = vmatpush1.bf16.msra.mxu0 %v2265
      %2973 = vmatprep.subr.bf16.mxu0 0
      %2974 = vmatpush1.bf16.msra.mxu0 %v2266
      %2975 = vmatprep.subr.bf16.mxu0 0
      %2976 = vmatpush1.bf16.msra.mxu0 %v2267
      %2977 = vmatprep.subr.bf16.mxu0 0
      %2978 = vmatpush1.bf16.msra.mxu0 %v2268
      %2979 = vmatprep.subr.bf16.mxu0 0
      %2980 = vmatpush1.bf16.msra.mxu0 %v2269
      %2981 = vmatprep.subr.bf16.mxu0 0
      %2982 = vmatpush1.bf16.msra.mxu0 %v2270
      %2983 = vmatprep.subr.bf16.mxu0 0
      %2984 = vmatpush1.bf16.msra.mxu0 %v2271
      %2985 = vmatprep.subr.bf16.mxu0 0
      %2986 = vmatpush1.bf16.msra.mxu0 %v2272
      %2987 = vmatprep.subr.bf16.mxu0 0
      %2988 = vmatpush1.bf16.msra.mxu0 %v2273
      %2989 = vmatprep.subr.bf16.mxu0 0
      %2990 = vmatpush1.bf16.msra.mxu0 %v2274
      %2991 = vmatprep.mubr.bf16.mxu0 %v1354
      %2992 = vmatmul.mubr.bf16.gmra.mrb[0].mxu0 %v1353
      %v2993 = vpop.f32.mrb[0].mxu0
      %v2994 = vadd.f32 %v2833, %v2993
      %v2995 = vpop.f32.mrb[0].mxu0
      %v2996 = vpop.f32.mrb[0].mxu0
      %v2997 = vadd.f32 %v2836, %v2996
      %v2998 = vpop.f32.mrb[0].mxu0
      %2999 = vmatprep.mubr.bf16.mxu0 %v1368
      %3000 = vmatmul.mubr.bf16.gmra.mrb[0].mxu0 %v1367
      %v3001 = vpop.f32.mrb[0].mxu0
      %v3002 = vadd.f32 %v2841, %v3001
      %v3003 = vpop.f32.mrb[0].mxu0
      %v3004 = vpop.f32.mrb[0].mxu0
      %v3005 = vadd.f32 %v2844, %v3004
      %v3006 = vpop.f32.mrb[0].mxu0
      %3007 = vmatprep.mubr.bf16.mxu0 %v1382
      %3008 = vmatmul.mubr.bf16.gmra.mrb[0].mxu0 %v1381
      %v3009 = vpop.f32.mrb[0].mxu0
      %v3010 = vadd.f32 %v2849, %v3009
      %v3011 = vpop.f32.mrb[0].mxu0
      %v3012 = vpop.f32.mrb[0].mxu0
      %v3013 = vadd.f32 %v2852, %v3012
      %v3014 = vpop.f32.mrb[0].mxu0
      %3015 = vmatprep.mubr.bf16.mxu0 %v1396
      %3016 = vmatmul.mubr.bf16.gmra.mrb[0].mxu0 %v1395
      %v3017 = vpop.f32.mrb[0].mxu0
      %v3018 = vadd.f32 %v2857, %v3017
      %v3019 = vpop.f32.mrb[0].mxu0
      %v3020 = vpop.f32.mrb[0].mxu0
      %v3021 = vadd.f32 %v2860, %v3020
      %v3022 = vpop.f32.mrb[0].mxu0
      %3023 = vmatprep.mubr.bf16.mxu0 %v1410
      %3024 = vmatmul.mubr.bf16.gmra.mrb[0].mxu0 %v1409
      %v3025 = vpop.f32.mrb[0].mxu0
      %v3026 = vadd.f32 %v2865, %v3025
      %v3027 = vpop.f32.mrb[0].mxu0
      %v3028 = vpop.f32.mrb[0].mxu0
      %v3029 = vadd.f32 %v2868, %v3028
      %v3030 = vpop.f32.mrb[0].mxu0
      %3031 = vmatprep.mubr.bf16.mxu0 %v1424
      %3032 = vmatmul.mubr.bf16.gmra.mrb[0].mxu0 %v1423
      %v3033 = vpop.f32.mrb[0].mxu0
      %v3034 = vadd.f32 %v2873, %v3033
      %v3035 = vpop.f32.mrb[0].mxu0
      %v3036 = vpop.f32.mrb[0].mxu0
      %v3037 = vadd.f32 %v2876, %v3036
      %v3038 = vpop.f32.mrb[0].mxu0
      %3039 = vmatprep.mubr.bf16.mxu0 %v1438
      %3040 = vmatmul.mubr.bf16.gmra.mrb[0].mxu0 %v1437
      %v3041 = vpop.f32.mrb[0].mxu0
      %v3042 = vadd.f32 %v2881, %v3041
      %v3043 = vpop.f32.mrb[0].mxu0
      %v3044 = vpop.f32.mrb[0].mxu0
      %v3045 = vadd.f32 %v2884, %v3044
      %v3046 = vpop.f32.mrb[0].mxu0
      %3047 = vmatprep.mubr.bf16.mxu0 %v1452
      %3048 = vmatmul.mubr.bf16.gmra.mrb[0].mxu0 %v1451
      %v3049 = vpop.f32.mrb[0].mxu0
      %v3050 = vadd.f32 %v2889, %v3049
      %v3051 = vpop.f32.mrb[0].mxu0
      %v3052 = vpop.f32.mrb[0].mxu0
      %v3053 = vadd.f32 %v2892, %v3052
      %v3054 = vpop.f32.mrb[0].mxu0
      %3055 = vmatprep.mubr.bf16.mxu0 %v1466
      %3056 = vmatmul.mubr.bf16.gmra.mrb[0].mxu0 %v1465
      %v3057 = vpop.f32.mrb[0].mxu0
      %v3058 = vadd.f32 %v2897, %v3057
      %v3059 = vpop.f32.mrb[0].mxu0
      %v3060 = vpop.f32.mrb[0].mxu0
      %v3061 = vadd.f32 %v2900, %v3060
      %v3062 = vpop.f32.mrb[0].mxu0
      %3063 = vmatprep.mubr.bf16.mxu0 %v1480
      %3064 = vmatmul.mubr.bf16.gmra.mrb[0].mxu0 %v1479
      %v3065 = vpop.f32.mrb[0].mxu0
      %v3066 = vadd.f32 %v2905, %v3065
      %v3067 = vpop.f32.mrb[0].mxu0
      %v3068 = vpop.f32.mrb[0].mxu0
      %v3069 = vadd.f32 %v2908, %v3068
      %v3070 = vpop.f32.mrb[0].mxu0
      %3071 = vmatprep.mubr.bf16.mxu0 %v1494
      %3072 = vmatmul.mubr.bf16.gmra.mrb[0].mxu0 %v1493
      %v3073 = vpop.f32.mrb[0].mxu0
      %v3074 = vadd.f32 %v2913, %v3073
      %v3075 = vpop.f32.mrb[0].mxu0
      %v3076 = vpop.f32.mrb[0].mxu0
      %v3077 = vadd.f32 %v2916, %v3076
      %v3078 = vpop.f32.mrb[0].mxu0
      %3079 = vmatprep.mubr.bf16.mxu0 %v1508
      %3080 = vmatmul.mubr.bf16.gmra.mrb[0].mxu0 %v1507
      %v3081 = vpop.f32.mrb[0].mxu0
      %v3082 = vadd.f32 %v2921, %v3081
      %v3083 = vpop.f32.mrb[0].mxu0
      %v3084 = vpop.f32.mrb[0].mxu0
      %v3085 = vadd.f32 %v2924, %v3084
      %v3086 = vpop.f32.mrb[0].mxu0
      %3087 = vmatprep.mubr.bf16.mxu0 %v1522
      %3088 = vmatmul.mubr.bf16.gmra.mrb[0].mxu0 %v1521
      %v3089 = vpop.f32.mrb[0].mxu0
      %v3090 = vadd.f32 %v2929, %v3089
      %v3091 = vpop.f32.mrb[0].mxu0
      %v3092 = vpop.f32.mrb[0].mxu0
      %v3093 = vadd.f32 %v2932, %v3092
      %v3094 = vpop.f32.mrb[0].mxu0
      %3095 = vmatprep.mubr.bf16.mxu0 %v1536
      %3096 = vmatmul.mubr.bf16.gmra.mrb[0].mxu0 %v1535
      %v3097 = vpop.f32.mrb[0].mxu0
      %v3098 = vadd.f32 %v2937, %v3097
      %v3099 = vpop.f32.mrb[0].mxu0
      %v3100 = vpop.f32.mrb[0].mxu0
      %v3101 = vadd.f32 %v2940, %v3100
      %v3102 = vpop.f32.mrb[0].mxu0
      %3103 = vmatprep.mubr.bf16.mxu0 %v1550
      %3104 = vmatmul.mubr.bf16.gmra.mrb[0].mxu0 %v1549
      %v3105 = vpop.f32.mrb[0].mxu0
      %v3106 = vadd.f32 %v2945, %v3105
      %v3107 = vpop.f32.mrb[0].mxu0
      %v3108 = vpop.f32.mrb[0].mxu0
      %v3109 = vadd.f32 %v2948, %v3108
      %v3110 = vpop.f32.mrb[0].mxu0
      %3111 = vmatprep.mubr.bf16.mxu0 %v1564
      %3112 = vmatmul.mubr.bf16.gmra.mrb[0].mxu0 %v1563
      %v3113 = vpop.f32.mrb[0].mxu0
      %v3114 = vadd.f32 %v2953, %v3113
      %v3115 = vpop.f32.mrb[0].mxu0
      %v3116 = vpop.f32.mrb[0].mxu0
      %v3117 = vadd.f32 %v2956, %v3116
      %v3118 = vpop.f32.mrb[0].mxu0
      %3119 = vdwg.mxu0
      %3120 = vmatprep.subr.bf16.mxu0 0
      %3121 = vmatpush1.bf16.msra.mxu0 %v2275
      %3122 = vmatprep.subr.bf16.mxu0 0
      %3123 = vmatpush1.bf16.msra.mxu0 %v2276
      %3124 = vmatprep.subr.bf16.mxu0 0
      %3125 = vmatpush1.bf16.msra.mxu0 %v2277
      %3126 = vmatprep.subr.bf16.mxu0 0
      %3127 = vmatpush1.bf16.msra.mxu0 %v2278
      %3128 = vmatprep.subr.bf16.mxu0 0
      %3129 = vmatpush1.bf16.msra.mxu0 %v2279
      %3130 = vmatprep.subr.bf16.mxu0 0
      %3131 = vmatpush1.bf16.msra.mxu0 %v2280
      %3132 = vmatprep.subr.bf16.mxu0 0
      %3133 = vmatpush1.bf16.msra.mxu0 %v2281
      %3134 = vmatprep.subr.bf16.mxu0 0
      %3135 = vmatpush1.bf16.msra.mxu0 %v2282
      %3136 = vmatprep.subr.bf16.mxu0 0
      %3137 = vmatpush1.bf16.msra.mxu0 %v2283
      %3138 = vmatprep.subr.bf16.mxu0 0
      %3139 = vmatpush1.bf16.msra.mxu0 %v2284
      %3140 = vmatprep.subr.bf16.mxu0 0
      %3141 = vmatpush1.bf16.msra.mxu0 %v2285
      %3142 = vmatprep.subr.bf16.mxu0 0
      %3143 = vmatpush1.bf16.msra.mxu0 %v2286
      %3144 = vmatprep.subr.bf16.mxu0 0
      %3145 = vmatpush1.bf16.msra.mxu0 %v2287
      %3146 = vmatprep.subr.bf16.mxu0 0
      %3147 = vmatpush1.bf16.msra.mxu0 %v2288
      %3148 = vmatprep.subr.bf16.mxu0 0
      %3149 = vmatpush1.bf16.msra.mxu0 %v2289
      %3150 = vmatprep.subr.bf16.mxu0 0
      %3151 = vmatpush1.bf16.msra.mxu0 %v2290
      %3152 = vmatprep.mubr.bf16.mxu0 %v1356
      %3153 = vmatmul.mubr.bf16.gmra.mrb[0].mxu0 %v1355
      %v3154 = vpop.f32.mrb[0].mxu0
      %v3155 = vadd.f32 %v2994, %v3154
      %v3156 = vpop.f32.mrb[0].mxu0
      %v3157 = vpop.f32.mrb[0].mxu0
      %v3158 = vadd.f32 %v2997, %v3157
      %v3159 = vpop.f32.mrb[0].mxu0
      %3160 = vmatprep.mubr.bf16.mxu0 %v1370
      %3161 = vmatmul.mubr.bf16.gmra.mrb[0].mxu0 %v1369
      %v3162 = vpop.f32.mrb[0].mxu0
      %v3163 = vadd.f32 %v3002, %v3162
      %v3164 = vpop.f32.mrb[0].mxu0
      %v3165 = vpop.f32.mrb[0].mxu0
      %v3166 = vadd.f32 %v3005, %v3165
      %v3167 = vpop.f32.mrb[0].mxu0
      %3168 = vmatprep.mubr.bf16.mxu0 %v1384
      %3169 = vmatmul.mubr.bf16.gmra.mrb[0].mxu0 %v1383
      %v3170 = vpop.f32.mrb[0].mxu0
      %v3171 = vadd.f32 %v3010, %v3170
      %v3172 = vpop.f32.mrb[0].mxu0
      %v3173 = vpop.f32.mrb[0].mxu0
      %v3174 = vadd.f32 %v3013, %v3173
      %v3175 = vpop.f32.mrb[0].mxu0
      %3176 = vmatprep.mubr.bf16.mxu0 %v1398
      %3177 = vmatmul.mubr.bf16.gmra.mrb[0].mxu0 %v1397
      %v3178 = vpop.f32.mrb[0].mxu0
      %v3179 = vadd.f32 %v3018, %v3178
      %v3180 = vpop.f32.mrb[0].mxu0
      %v3181 = vpop.f32.mrb[0].mxu0
      %v3182 = vadd.f32 %v3021, %v3181
      %v3183 = vpop.f32.mrb[0].mxu0
      %3184 = vmatprep.mubr.bf16.mxu0 %v1412
      %3185 = vmatmul.mubr.bf16.gmra.mrb[0].mxu0 %v1411
      %v3186 = vpop.f32.mrb[0].mxu0
      %v3187 = vadd.f32 %v3026, %v3186
      %v3188 = vpop.f32.mrb[0].mxu0
      %v3189 = vpop.f32.mrb[0].mxu0
      %v3190 = vadd.f32 %v3029, %v3189
      %v3191 = vpop.f32.mrb[0].mxu0
      %3192 = vmatprep.mubr.bf16.mxu0 %v1426
      %3193 = vmatmul.mubr.bf16.gmra.mrb[0].mxu0 %v1425
      %v3194 = vpop.f32.mrb[0].mxu0
      %v3195 = vadd.f32 %v3034, %v3194
      %v3196 = vpop.f32.mrb[0].mxu0
      %v3197 = vpop.f32.mrb[0].mxu0
      %v3198 = vadd.f32 %v3037, %v3197
      %v3199 = vpop.f32.mrb[0].mxu0
      %3200 = vmatprep.mubr.bf16.mxu0 %v1440
      %3201 = vmatmul.mubr.bf16.gmra.mrb[0].mxu0 %v1439
      %v3202 = vpop.f32.mrb[0].mxu0
      %v3203 = vadd.f32 %v3042, %v3202
      %v3204 = vpop.f32.mrb[0].mxu0
      %v3205 = vpop.f32.mrb[0].mxu0
      %v3206 = vadd.f32 %v3045, %v3205
      %v3207 = vpop.f32.mrb[0].mxu0
      %3208 = vmatprep.mubr.bf16.mxu0 %v1454
      %3209 = vmatmul.mubr.bf16.gmra.mrb[0].mxu0 %v1453
      %v3210 = vpop.f32.mrb[0].mxu0
      %v3211 = vadd.f32 %v3050, %v3210
      %v3212 = vpop.f32.mrb[0].mxu0
      %v3213 = vpop.f32.mrb[0].mxu0
      %v3214 = vadd.f32 %v3053, %v3213
      %v3215 = vpop.f32.mrb[0].mxu0
      %3216 = vmatprep.mubr.bf16.mxu0 %v1468
      %3217 = vmatmul.mubr.bf16.gmra.mrb[0].mxu0 %v1467
      %v3218 = vpop.f32.mrb[0].mxu0
      %v3219 = vadd.f32 %v3058, %v3218
      %v3220 = vpop.f32.mrb[0].mxu0
      %v3221 = vpop.f32.mrb[0].mxu0
      %v3222 = vadd.f32 %v3061, %v3221
      %v3223 = vpop.f32.mrb[0].mxu0
      %3224 = vmatprep.mubr.bf16.mxu0 %v1482
      %3225 = vmatmul.mubr.bf16.gmra.mrb[0].mxu0 %v1481
      %v3226 = vpop.f32.mrb[0].mxu0
      %v3227 = vadd.f32 %v3066, %v3226
      %v3228 = vpop.f32.mrb[0].mxu0
      %v3229 = vpop.f32.mrb[0].mxu0
      %v3230 = vadd.f32 %v3069, %v3229
      %v3231 = vpop.f32.mrb[0].mxu0
      %3232 = vmatprep.mubr.bf16.mxu0 %v1496
      %3233 = vmatmul.mubr.bf16.gmra.mrb[0].mxu0 %v1495
      %v3234 = vpop.f32.mrb[0].mxu0
      %v3235 = vadd.f32 %v3074, %v3234
      %v3236 = vpop.f32.mrb[0].mxu0
      %v3237 = vpop.f32.mrb[0].mxu0
      %v3238 = vadd.f32 %v3077, %v3237
      %v3239 = vpop.f32.mrb[0].mxu0
      %3240 = vmatprep.mubr.bf16.mxu0 %v1510
      %3241 = vmatmul.mubr.bf16.gmra.mrb[0].mxu0 %v1509
      %v3242 = vpop.f32.mrb[0].mxu0
      %v3243 = vadd.f32 %v3082, %v3242
      %v3244 = vpop.f32.mrb[0].mxu0
      %v3245 = vpop.f32.mrb[0].mxu0
      %v3246 = vadd.f32 %v3085, %v3245
      %v3247 = vpop.f32.mrb[0].mxu0
      %3248 = vmatprep.mubr.bf16.mxu0 %v1524
      %3249 = vmatmul.mubr.bf16.gmra.mrb[0].mxu0 %v1523
      %v3250 = vpop.f32.mrb[0].mxu0
      %v3251 = vadd.f32 %v3090, %v3250
      %v3252 = vpop.f32.mrb[0].mxu0
      %v3253 = vpop.f32.mrb[0].mxu0
      %v3254 = vadd.f32 %v3093, %v3253
      %v3255 = vpop.f32.mrb[0].mxu0
      %3256 = vmatprep.mubr.bf16.mxu0 %v1538
      %3257 = vmatmul.mubr.bf16.gmra.mrb[0].mxu0 %v1537
      %v3258 = vpop.f32.mrb[0].mxu0
      %v3259 = vadd.f32 %v3098, %v3258
      %v3260 = vpop.f32.mrb[0].mxu0
      %v3261 = vpop.f32.mrb[0].mxu0
      %v3262 = vadd.f32 %v3101, %v3261
      %v3263 = vpop.f32.mrb[0].mxu0
      %3264 = vmatprep.mubr.bf16.mxu0 %v1552
      %3265 = vmatmul.mubr.bf16.gmra.mrb[0].mxu0 %v1551
      %v3266 = vpop.f32.mrb[0].mxu0
      %v3267 = vadd.f32 %v3106, %v3266
      %v3268 = vpop.f32.mrb[0].mxu0
      %v3269 = vpop.f32.mrb[0].mxu0
      %v3270 = vadd.f32 %v3109, %v3269
      %v3271 = vpop.f32.mrb[0].mxu0
      %3272 = vmatprep.mubr.bf16.mxu0 %v1566
      %3273 = vmatmul.mubr.bf16.gmra.mrb[0].mxu0 %v1565
      %v3274 = vpop.f32.mrb[0].mxu0
      %v3275 = vadd.f32 %v3114, %v3274
      %v3276 = vpop.f32.mrb[0].mxu0
      %v3277 = vpop.f32.mrb[0].mxu0
      %v3278 = vadd.f32 %v3117, %v3277
      %v3279 = vpop.f32.mrb[0].mxu0
      %3280 = vdwg.mxu0
      %3281 = vmatprep.subr.bf16.mxu0 0
      %3282 = vmatpush1.bf16.msra.mxu0 %v2291
      %3283 = vmatprep.subr.bf16.mxu0 0
      %3284 = vmatpush1.bf16.msra.mxu0 %v2292
      %3285 = vmatprep.subr.bf16.mxu0 0
      %3286 = vmatpush1.bf16.msra.mxu0 %v2293
      %3287 = vmatprep.subr.bf16.mxu0 0
      %3288 = vmatpush1.bf16.msra.mxu0 %v2294
      %3289 = vmatprep.subr.bf16.mxu0 0
      %3290 = vmatpush1.bf16.msra.mxu0 %v2295
      %3291 = vmatprep.subr.bf16.mxu0 0
      %3292 = vmatpush1.bf16.msra.mxu0 %v2296
      %3293 = vmatprep.subr.bf16.mxu0 0
      %3294 = vmatpush1.bf16.msra.mxu0 %v2297
      %3295 = vmatprep.subr.bf16.mxu0 0
      %3296 = vmatpush1.bf16.msra.mxu0 %v2298
      %3297 = vmatprep.subr.bf16.mxu0 0
      %3298 = vmatpush1.bf16.msra.mxu0 %v2299
      %3299 = vmatprep.subr.bf16.mxu0 0
      %3300 = vmatpush1.bf16.msra.mxu0 %v2300
      %3301 = vmatprep.subr.bf16.mxu0 0
      %3302 = vmatpush1.bf16.msra.mxu0 %v2301
      %3303 = vmatprep.subr.bf16.mxu0 0
      %3304 = vmatpush1.bf16.msra.mxu0 %v2302
      %3305 = vmatprep.subr.bf16.mxu0 0
      %3306 = vmatpush1.bf16.msra.mxu0 %v2303
      %3307 = vmatprep.subr.bf16.mxu0 0
      %3308 = vmatpush1.bf16.msra.mxu0 %v2304
      %3309 = vmatprep.subr.bf16.mxu0 0
      %3310 = vmatpush1.bf16.msra.mxu0 %v2305
      %3311 = vmatprep.subr.bf16.mxu0 0
      %3312 = vmatpush1.bf16.msra.mxu0 %v2306
      %3313 = vmatprep.mubr.bf16.mxu0 %v1358
      %3314 = vmatmul.mubr.bf16.gmra.mrb[0].mxu0 %v1357
      %v3315 = vpop.f32.mrb[0].mxu0
      %v3316 = vadd.f32 %v3155, %v3315
      %v3317 = vpop.f32.mrb[0].mxu0
      %v3318 = vpop.f32.mrb[0].mxu0
      %v3319 = vadd.f32 %v3158, %v3318
      %v3320 = vpop.f32.mrb[0].mxu0
      %3321 = vmatprep.mubr.bf16.mxu0 %v1372
      %3322 = vmatmul.mubr.bf16.gmra.mrb[0].mxu0 %v1371
      %v3323 = vpop.f32.mrb[0].mxu0
      %v3324 = vadd.f32 %v3163, %v3323
      %v3325 = vpop.f32.mrb[0].mxu0
      %v3326 = vpop.f32.mrb[0].mxu0
      %v3327 = vadd.f32 %v3166, %v3326
      %v3328 = vpop.f32.mrb[0].mxu0
      %3329 = vmatprep.mubr.bf16.mxu0 %v1386
      %3330 = vmatmul.mubr.bf16.gmra.mrb[0].mxu0 %v1385
      %v3331 = vpop.f32.mrb[0].mxu0
      %v3332 = vadd.f32 %v3171, %v3331
      %v3333 = vpop.f32.mrb[0].mxu0
      %v3334 = vpop.f32.mrb[0].mxu0
      %v3335 = vadd.f32 %v3174, %v3334
      %v3336 = vpop.f32.mrb[0].mxu0
      %3337 = vmatprep.mubr.bf16.mxu0 %v1400
      %3338 = vmatmul.mubr.bf16.gmra.mrb[0].mxu0 %v1399
      %v3339 = vpop.f32.mrb[0].mxu0
      %v3340 = vadd.f32 %v3179, %v3339
      %v3341 = vpop.f32.mrb[0].mxu0
      %v3342 = vpop.f32.mrb[0].mxu0
      %v3343 = vadd.f32 %v3182, %v3342
      %v3344 = vpop.f32.mrb[0].mxu0
      %3345 = vmatprep.mubr.bf16.mxu0 %v1414
      %3346 = vmatmul.mubr.bf16.gmra.mrb[0].mxu0 %v1413
      %v3347 = vpop.f32.mrb[0].mxu0
      %v3348 = vadd.f32 %v3187, %v3347
      %v3349 = vpop.f32.mrb[0].mxu0
      %v3350 = vpop.f32.mrb[0].mxu0
      %v3351 = vadd.f32 %v3190, %v3350
      %v3352 = vpop.f32.mrb[0].mxu0
      %3353 = vmatprep.mubr.bf16.mxu0 %v1428
      %3354 = vmatmul.mubr.bf16.gmra.mrb[0].mxu0 %v1427
      %v3355 = vpop.f32.mrb[0].mxu0
      %v3356 = vadd.f32 %v3195, %v3355
      %v3357 = vpop.f32.mrb[0].mxu0
      %v3358 = vpop.f32.mrb[0].mxu0
      %v3359 = vadd.f32 %v3198, %v3358
      %v3360 = vpop.f32.mrb[0].mxu0
      %3361 = vmatprep.mubr.bf16.mxu0 %v1442
      %3362 = vmatmul.mubr.bf16.gmra.mrb[0].mxu0 %v1441
      %v3363 = vpop.f32.mrb[0].mxu0
      %v3364 = vadd.f32 %v3203, %v3363
      %v3365 = vpop.f32.mrb[0].mxu0
      %v3366 = vpop.f32.mrb[0].mxu0
      %v3367 = vadd.f32 %v3206, %v3366
      %v3368 = vpop.f32.mrb[0].mxu0
      %3369 = vmatprep.mubr.bf16.mxu0 %v1456
      %3370 = vmatmul.mubr.bf16.gmra.mrb[0].mxu0 %v1455
      %v3371 = vpop.f32.mrb[0].mxu0
      %v3372 = vadd.f32 %v3211, %v3371
      %v3373 = vpop.f32.mrb[0].mxu0
      %v3374 = vpop.f32.mrb[0].mxu0
      %v3375 = vadd.f32 %v3214, %v3374
      %v3376 = vpop.f32.mrb[0].mxu0
      %3377 = vmatprep.mubr.bf16.mxu0 %v1470
      %3378 = vmatmul.mubr.bf16.gmra.mrb[0].mxu0 %v1469
      %v3379 = vpop.f32.mrb[0].mxu0
      %v3380 = vadd.f32 %v3219, %v3379
      %v3381 = vpop.f32.mrb[0].mxu0
      %v3382 = vpop.f32.mrb[0].mxu0
      %v3383 = vadd.f32 %v3222, %v3382
      %v3384 = vpop.f32.mrb[0].mxu0
      %3385 = vmatprep.mubr.bf16.mxu0 %v1484
      %3386 = vmatmul.mubr.bf16.gmra.mrb[0].mxu0 %v1483
      %v3387 = vpop.f32.mrb[0].mxu0
      %v3388 = vadd.f32 %v3227, %v3387
      %v3389 = vpop.f32.mrb[0].mxu0
      %v3390 = vpop.f32.mrb[0].mxu0
      %v3391 = vadd.f32 %v3230, %v3390
      %v3392 = vpop.f32.mrb[0].mxu0
      %3393 = vmatprep.mubr.bf16.mxu0 %v1498
      %3394 = vmatmul.mubr.bf16.gmra.mrb[0].mxu0 %v1497
      %v3395 = vpop.f32.mrb[0].mxu0
      %v3396 = vadd.f32 %v3235, %v3395
      %v3397 = vpop.f32.mrb[0].mxu0
      %v3398 = vpop.f32.mrb[0].mxu0
      %v3399 = vadd.f32 %v3238, %v3398
      %v3400 = vpop.f32.mrb[0].mxu0
      %3401 = vmatprep.mubr.bf16.mxu0 %v1512
      %3402 = vmatmul.mubr.bf16.gmra.mrb[0].mxu0 %v1511
      %v3403 = vpop.f32.mrb[0].mxu0
      %v3404 = vadd.f32 %v3243, %v3403
      %v3405 = vpop.f32.mrb[0].mxu0
      %v3406 = vpop.f32.mrb[0].mxu0
      %v3407 = vadd.f32 %v3246, %v3406
      %v3408 = vpop.f32.mrb[0].mxu0
      %3409 = vmatprep.mubr.bf16.mxu0 %v1526
      %3410 = vmatmul.mubr.bf16.gmra.mrb[0].mxu0 %v1525
      %v3411 = vpop.f32.mrb[0].mxu0
      %v3412 = vadd.f32 %v3251, %v3411
      %v3413 = vpop.f32.mrb[0].mxu0
      %v3414 = vpop.f32.mrb[0].mxu0
      %v3415 = vadd.f32 %v3254, %v3414
      %v3416 = vpop.f32.mrb[0].mxu0
      %3417 = vmatprep.mubr.bf16.mxu0 %v1540
      %3418 = vmatmul.mubr.bf16.gmra.mrb[0].mxu0 %v1539
      %v3419 = vpop.f32.mrb[0].mxu0
      %v3420 = vadd.f32 %v3259, %v3419
      %v3421 = vpop.f32.mrb[0].mxu0
      %v3422 = vpop.f32.mrb[0].mxu0
      %v3423 = vadd.f32 %v3262, %v3422
      %v3424 = vpop.f32.mrb[0].mxu0
      %3425 = vmatprep.mubr.bf16.mxu0 %v1554
      %3426 = vmatmul.mubr.bf16.gmra.mrb[0].mxu0 %v1553
      %v3427 = vpop.f32.mrb[0].mxu0
      %v3428 = vadd.f32 %v3267, %v3427
      %v3429 = vpop.f32.mrb[0].mxu0
      %v3430 = vpop.f32.mrb[0].mxu0
      %v3431 = vadd.f32 %v3270, %v3430
      %v3432 = vpop.f32.mrb[0].mxu0
      %3433 = vmatprep.mubr.bf16.mxu0 %v1568
      %3434 = vmatmul.mubr.bf16.gmra.mrb[0].mxu0 %v1567
      %v3435 = vpop.f32.mrb[0].mxu0
      %v3436 = vadd.f32 %v3275, %v3435
      %v3437 = vpop.f32.mrb[0].mxu0
      %v3438 = vpop.f32.mrb[0].mxu0
      %v3439 = vadd.f32 %v3278, %v3438
      %v3440 = vpop.f32.mrb[0].mxu0
      %3441 = vdwg.mxu0
      %3442 = vmatprep.subr.bf16.mxu0 0
      %3443 = vmatpush1.bf16.msra.mxu0 %v2307
      %3444 = vmatprep.subr.bf16.mxu0 0
      %3445 = vmatpush1.bf16.msra.mxu0 %v2308
      %3446 = vmatprep.subr.bf16.mxu0 0
      %3447 = vmatpush1.bf16.msra.mxu0 %v2309
      %3448 = vmatprep.subr.bf16.mxu0 0
      %3449 = vmatpush1.bf16.msra.mxu0 %v2310
      %3450 = vmatprep.subr.bf16.mxu0 0
      %3451 = vmatpush1.bf16.msra.mxu0 %v2311
      %3452 = vmatprep.subr.bf16.mxu0 0
      %3453 = vmatpush1.bf16.msra.mxu0 %v2312
      %3454 = vmatprep.subr.bf16.mxu0 0
      %3455 = vmatpush1.bf16.msra.mxu0 %v2313
      %3456 = vmatprep.subr.bf16.mxu0 0
      %3457 = vmatpush1.bf16.msra.mxu0 %v2314
      %3458 = vmatprep.subr.bf16.mxu0 0
      %3459 = vmatpush1.bf16.msra.mxu0 %v2315
      %3460 = vmatprep.subr.bf16.mxu0 0
      %3461 = vmatpush1.bf16.msra.mxu0 %v2316
      %3462 = vmatprep.subr.bf16.mxu0 0
      %3463 = vmatpush1.bf16.msra.mxu0 %v2317
      %3464 = vmatprep.subr.bf16.mxu0 0
      %3465 = vmatpush1.bf16.msra.mxu0 %v2318
      %3466 = vmatprep.subr.bf16.mxu0 0
      %3467 = vmatpush1.bf16.msra.mxu0 0
      %3468 = vmatprep.subr.bf16.mxu0 0
      %3469 = vmatpush1.bf16.msra.mxu0 0
      %3470 = vmatprep.subr.bf16.mxu0 0
      %3471 = vmatpush1.bf16.msra.mxu0 0
      %3472 = vmatprep.subr.bf16.mxu0 0
      %3473 = vmatpush1.bf16.msra.mxu0 0
      %3474 = vmatprep.mubr.bf16.mxu0 %v2429
      %3475 = vmatmul.mubr.bf16.gmra.mrb[0].mxu0 %v1359
      %v3476 = vpop.f32.mrb[0].mxu0
      %v3477 = vadd.f32 %v3316, %v3476
      %v3478 = vpop.f32.mrb[0].mxu0
      %v3479 = vpop.f32.mrb[0].mxu0
      %v3480 = vadd.f32 %v3319, %v3479
      %v3481 = vpop.f32.mrb[0].mxu0
      %3482 = vmatprep.mubr.bf16.mxu0 %v2432
      %3483 = vmatmul.mubr.bf16.gmra.mrb[0].mxu0 %v1373
      %v3484 = vpop.f32.mrb[0].mxu0
      %v3485 = vadd.f32 %v3324, %v3484
      %v3486 = vpop.f32.mrb[0].mxu0
      %v3487 = vpop.f32.mrb[0].mxu0
      %v3488 = vadd.f32 %v3327, %v3487
      %v3489 = vpop.f32.mrb[0].mxu0
      %3490 = vmatprep.mubr.bf16.mxu0 %v2435
      %3491 = vmatmul.mubr.bf16.gmra.mrb[0].mxu0 %v1387
      %v3492 = vpop.f32.mrb[0].mxu0
      %v3493 = vadd.f32 %v3332, %v3492
      %v3494 = vpop.f32.mrb[0].mxu0
      %v3495 = vpop.f32.mrb[0].mxu0
      %v3496 = vadd.f32 %v3335, %v3495
      %v3497 = vpop.f32.mrb[0].mxu0
      %3498 = vmatprep.mubr.bf16.mxu0 %v2438
      %3499 = vmatmul.mubr.bf16.gmra.mrb[0].mxu0 %v1401
      %v3500 = vpop.f32.mrb[0].mxu0
      %v3501 = vadd.f32 %v3340, %v3500
      %v3502 = vpop.f32.mrb[0].mxu0
      %v3503 = vpop.f32.mrb[0].mxu0
      %v3504 = vadd.f32 %v3343, %v3503
      %v3505 = vpop.f32.mrb[0].mxu0
      %3506 = vmatprep.mubr.bf16.mxu0 %v2441
      %3507 = vmatmul.mubr.bf16.gmra.mrb[0].mxu0 %v1415
      %v3508 = vpop.f32.mrb[0].mxu0
      %v3509 = vadd.f32 %v3348, %v3508
      %v3510 = vpop.f32.mrb[0].mxu0
      %v3511 = vpop.f32.mrb[0].mxu0
      %v3512 = vadd.f32 %v3351, %v3511
      %v3513 = vpop.f32.mrb[0].mxu0
      %3514 = vmatprep.mubr.bf16.mxu0 %v2444
      %3515 = vmatmul.mubr.bf16.gmra.mrb[0].mxu0 %v1429
      %v3516 = vpop.f32.mrb[0].mxu0
      %v3517 = vadd.f32 %v3356, %v3516
      %v3518 = vpop.f32.mrb[0].mxu0
      %v3519 = vpop.f32.mrb[0].mxu0
      %v3520 = vadd.f32 %v3359, %v3519
      %v3521 = vpop.f32.mrb[0].mxu0
      %3522 = vmatprep.mubr.bf16.mxu0 %v2447
      %3523 = vmatmul.mubr.bf16.gmra.mrb[0].mxu0 %v1443
      %v3524 = vpop.f32.mrb[0].mxu0
      %v3525 = vadd.f32 %v3364, %v3524
      %v3526 = vpop.f32.mrb[0].mxu0
      %v3527 = vpop.f32.mrb[0].mxu0
      %v3528 = vadd.f32 %v3367, %v3527
      %v3529 = vpop.f32.mrb[0].mxu0
      %3530 = vmatprep.mubr.bf16.mxu0 %v2450
      %3531 = vmatmul.mubr.bf16.gmra.mrb[0].mxu0 %v1457
      %v3532 = vpop.f32.mrb[0].mxu0
      %v3533 = vadd.f32 %v3372, %v3532
      %v3534 = vpop.f32.mrb[0].mxu0
      %v3535 = vpop.f32.mrb[0].mxu0
      %v3536 = vadd.f32 %v3375, %v3535
      %v3537 = vpop.f32.mrb[0].mxu0
      %3538 = vmatprep.mubr.bf16.mxu0 %v2453
      %3539 = vmatmul.mubr.bf16.gmra.mrb[0].mxu0 %v1471
      %v3540 = vpop.f32.mrb[0].mxu0
      %v3541 = vadd.f32 %v3380, %v3540
      %v3542 = vpop.f32.mrb[0].mxu0
      %v3543 = vpop.f32.mrb[0].mxu0
      %v3544 = vadd.f32 %v3383, %v3543
      %v3545 = vpop.f32.mrb[0].mxu0
      %3546 = vmatprep.mubr.bf16.mxu0 %v2456
      %3547 = vmatmul.mubr.bf16.gmra.mrb[0].mxu0 %v1485
      %v3548 = vpop.f32.mrb[0].mxu0
      %v3549 = vadd.f32 %v3388, %v3548
      %v3550 = vpop.f32.mrb[0].mxu0
      %v3551 = vpop.f32.mrb[0].mxu0
      %v3552 = vadd.f32 %v3391, %v3551
      %v3553 = vpop.f32.mrb[0].mxu0
      %3554 = vmatprep.mubr.bf16.mxu0 %v2459
      %3555 = vmatmul.mubr.bf16.gmra.mrb[0].mxu0 %v1499
      %v3556 = vpop.f32.mrb[0].mxu0
      %v3557 = vadd.f32 %v3396, %v3556
      %v3558 = vpop.f32.mrb[0].mxu0
      %v3559 = vpop.f32.mrb[0].mxu0
      %v3560 = vadd.f32 %v3399, %v3559
      %v3561 = vpop.f32.mrb[0].mxu0
      %3562 = vmatprep.mubr.bf16.mxu0 %v2462
      %3563 = vmatmul.mubr.bf16.gmra.mrb[0].mxu0 %v1513
      %v3564 = vpop.f32.mrb[0].mxu0
      %v3565 = vadd.f32 %v3404, %v3564
      %v3566 = vpop.f32.mrb[0].mxu0
      %v3567 = vpop.f32.mrb[0].mxu0
      %v3568 = vadd.f32 %v3407, %v3567
      %v3569 = vpop.f32.mrb[0].mxu0
      %3570 = vmatprep.mubr.bf16.mxu0 %v2465
      %3571 = vmatmul.mubr.bf16.gmra.mrb[0].mxu0 %v1527
      %v3572 = vpop.f32.mrb[0].mxu0
      %v3573 = vadd.f32 %v3412, %v3572
      %v3574 = vpop.f32.mrb[0].mxu0
      %v3575 = vpop.f32.mrb[0].mxu0
      %v3576 = vadd.f32 %v3415, %v3575
      %v3577 = vpop.f32.mrb[0].mxu0
      %3578 = vmatprep.mubr.bf16.mxu0 %v2468
      %3579 = vmatmul.mubr.bf16.gmra.mrb[0].mxu0 %v1541
      %v3580 = vpop.f32.mrb[0].mxu0
      %v3581 = vadd.f32 %v3420, %v3580
      %v3582 = vpop.f32.mrb[0].mxu0
      %v3583 = vpop.f32.mrb[0].mxu0
      %v3584 = vadd.f32 %v3423, %v3583
      %v3585 = vpop.f32.mrb[0].mxu0
      %3586 = vmatprep.mubr.bf16.mxu0 %v2471
      %3587 = vmatmul.mubr.bf16.gmra.mrb[0].mxu0 %v1555
      %v3588 = vpop.f32.mrb[0].mxu0
      %v3589 = vadd.f32 %v3428, %v3588
      %v3590 = vpop.f32.mrb[0].mxu0
      %v3591 = vpop.f32.mrb[0].mxu0
      %v3592 = vadd.f32 %v3431, %v3591
      %v3593 = vpop.f32.mrb[0].mxu0
      %3594 = vmatprep.mubr.bf16.mxu0 %v2474
      %3595 = vmatmul.mubr.bf16.gmra.mrb[0].mxu0 %v1569
      %v3596 = vpop.f32.mrb[0].mxu0
      %v3597 = vadd.f32 %v3436, %v3596
      %v3598 = vpop.f32.mrb[0].mxu0
      %v3599 = vpop.f32.mrb[0].mxu0
      %v3600 = vadd.f32 %v3439, %v3599
      %v3601 = vpop.f32.mrb[0].mxu0
      %3602 = vdwg.mxu0
      %v3603 = vxor.u32 %v3477, 2147483648
      %v3604 = vxor.u32 %v3480, 2147483648
      %v3605 = vxor.u32 %v3485, 2147483648
      %v3606 = vxor.u32 %v3488, 2147483648
      %v3607 = vxor.u32 %v3493, 2147483648
      %v3608 = vxor.u32 %v3496, 2147483648
      %v3609 = vxor.u32 %v3501, 2147483648
      %v3610 = vxor.u32 %v3504, 2147483648
      %v3611 = vxor.u32 %v3509, 2147483648
      %v3612 = vxor.u32 %v3512, 2147483648
      %v3613 = vxor.u32 %v3517, 2147483648
      %v3614 = vxor.u32 %v3520, 2147483648
      %v3615 = vxor.u32 %v3525, 2147483648
      %v3616 = vxor.u32 %v3528, 2147483648
      %v3617 = vxor.u32 %v3533, 2147483648
      %v3618 = vxor.u32 %v3536, 2147483648
      %v3619 = vxor.u32 %v3541, 2147483648
      %v3620 = vxor.u32 %v3544, 2147483648
      %v3621 = vxor.u32 %v3549, 2147483648
      %v3622 = vxor.u32 %v3552, 2147483648
      %v3623 = vxor.u32 %v3557, 2147483648
      %v3624 = vxor.u32 %v3560, 2147483648
      %v3625 = vxor.u32 %v3565, 2147483648
      %v3626 = vxor.u32 %v3568, 2147483648
      %v3627 = vxor.u32 %v3573, 2147483648
      %v3628 = vxor.u32 %v3576, 2147483648
      %v3629 = vxor.u32 %v3581, 2147483648
      %v3630 = vxor.u32 %v3584, 2147483648
      %v3631 = vxor.u32 %v3589, 2147483648
      %v3632 = vxor.u32 %v3592, 2147483648
      %v3633 = vxor.u32 %v3597, 2147483648
      %v3634 = vxor.u32 %v3600, 2147483648
      %v3635 = vmul.f32 %v3603, 1.442695
      %v3636 = vpow.pop %v3635
      %v3637 = vmul.f32 %v3604, 1.442695
      %v3638 = vpow.pop %v3637
      %v3639 = vmul.f32 %v3605, 1.442695
      %v3640 = vpow.pop %v3639
      %v3641 = vmul.f32 %v3606, 1.442695
      %v3642 = vpow.pop %v3641
      %v3643 = vmul.f32 %v3607, 1.442695
      %v3644 = vpow.pop %v3643
      %v3645 = vmul.f32 %v3608, 1.442695
      %v3646 = vpow.pop %v3645
      %v3647 = vmul.f32 %v3609, 1.442695
      %v3648 = vpow.pop %v3647
      %v3649 = vmul.f32 %v3610, 1.442695
      %v3650 = vpow.pop %v3649
      %v3651 = vmul.f32 %v3611, 1.442695
      %v3652 = vpow.pop %v3651
      %v3653 = vmul.f32 %v3612, 1.442695
      %v3654 = vpow.pop %v3653
      %v3655 = vmul.f32 %v3613, 1.442695
      %v3656 = vpow.pop %v3655
      %v3657 = vmul.f32 %v3614, 1.442695
      %v3658 = vpow.pop %v3657
      %v3659 = vmul.f32 %v3615, 1.442695
      %v3660 = vpow.pop %v3659
      %v3661 = vmul.f32 %v3616, 1.442695
      %v3662 = vpow.pop %v3661
      %v3663 = vmul.f32 %v3617, 1.442695
      %v3664 = vpow.pop %v3663
      %v3665 = vmul.f32 %v3618, 1.442695
      %v3666 = vpow.pop %v3665
      %v3667 = vmul.f32 %v3619, 1.442695
      %v3668 = vpow.pop %v3667
      %v3669 = vmul.f32 %v3620, 1.442695
      %v3670 = vpow.pop %v3669
      %v3671 = vmul.f32 %v3621, 1.442695
      %v3672 = vpow.pop %v3671
      %v3673 = vmul.f32 %v3622, 1.442695
      %v3674 = vpow.pop %v3673
      %v3675 = vmul.f32 %v3623, 1.442695
      %v3676 = vpow.pop %v3675
      %v3677 = vmul.f32 %v3624, 1.442695
      %v3678 = vpow.pop %v3677
      %v3679 = vmul.f32 %v3625, 1.442695
      %v3680 = vpow.pop %v3679
      %v3681 = vmul.f32 %v3626, 1.442695
      %v3682 = vpow.pop %v3681
      %v3683 = vmul.f32 %v3627, 1.442695
      %v3684 = vpow.pop %v3683
      %v3685 = vmul.f32 %v3628, 1.442695
      %v3686 = vpow.pop %v3685
      %v3687 = vmul.f32 %v3629, 1.442695
      %v3688 = vpow.pop %v3687
      %v3689 = vmul.f32 %v3630, 1.442695
      %v3690 = vpow.pop %v3689
      %v3691 = vmul.f32 %v3631, 1.442695
      %v3692 = vpow.pop %v3691
      %v3693 = vmul.f32 %v3632, 1.442695
      %v3694 = vpow.pop %v3693
      %v3695 = vmul.f32 %v3633, 1.442695
      %v3696 = vpow.pop %v3695
      %v3697 = vmul.f32 %v3634, 1.442695
      %v3698 = vpow.pop %v3697
      %v3699 = vadd.f32 %v3636, 1.0
      %v3700 = vadd.f32 %v3638, 1.0
      %v3701 = vadd.f32 %v3640, 1.0
      %v3702 = vadd.f32 %v3642, 1.0
      %v3703 = vadd.f32 %v3644, 1.0
      %v3704 = vadd.f32 %v3646, 1.0
      %v3705 = vadd.f32 %v3648, 1.0
      %v3706 = vadd.f32 %v3650, 1.0
      %v3707 = vadd.f32 %v3652, 1.0
      %v3708 = vadd.f32 %v3654, 1.0
      %v3709 = vadd.f32 %v3656, 1.0
      %v3710 = vadd.f32 %v3658, 1.0
      %v3711 = vadd.f32 %v3660, 1.0
      %v3712 = vadd.f32 %v3662, 1.0
      %v3713 = vadd.f32 %v3664, 1.0
      %v3714 = vadd.f32 %v3666, 1.0
      %v3715 = vadd.f32 %v3668, 1.0
      %v3716 = vadd.f32 %v3670, 1.0
      %v3717 = vadd.f32 %v3672, 1.0
      %v3718 = vadd.f32 %v3674, 1.0
      %v3719 = vadd.f32 %v3676, 1.0
      %v3720 = vadd.f32 %v3678, 1.0
      %v3721 = vadd.f32 %v3680, 1.0
      %v3722 = vadd.f32 %v3682, 1.0
      %v3723 = vadd.f32 %v3684, 1.0
      %v3724 = vadd.f32 %v3686, 1.0
      %v3725 = vadd.f32 %v3688, 1.0
      %v3726 = vadd.f32 %v3690, 1.0
      %v3727 = vadd.f32 %v3692, 1.0
      %v3728 = vadd.f32 %v3694, 1.0
      %v3729 = vadd.f32 %v3696, 1.0
      %v3730 = vadd.f32 %v3698, 1.0
      %v3731 = vrcp.pop %v3699
      %v3732 = vmul.f32 1.0, %v3731
      %v3733 = vrcp.pop %v3700
      %v3734 = vmul.f32 1.0, %v3733
      %v3735 = vrcp.pop %v3701
      %v3736 = vmul.f32 1.0, %v3735
      %v3737 = vrcp.pop %v3702
      %v3738 = vmul.f32 1.0, %v3737
      %v3739 = vrcp.pop %v3703
      %v3740 = vmul.f32 1.0, %v3739
      %v3741 = vrcp.pop %v3704
      %v3742 = vmul.f32 1.0, %v3741
      %v3743 = vrcp.pop %v3705
      %v3744 = vmul.f32 1.0, %v3743
      %v3745 = vrcp.pop %v3706
      %v3746 = vmul.f32 1.0, %v3745
      %v3747 = vrcp.pop %v3707
      %v3748 = vmul.f32 1.0, %v3747
      %v3749 = vrcp.pop %v3708
      %v3750 = vmul.f32 1.0, %v3749
      %v3751 = vrcp.pop %v3709
      %v3752 = vmul.f32 1.0, %v3751
      %v3753 = vrcp.pop %v3710
      %v3754 = vmul.f32 1.0, %v3753
      %v3755 = vrcp.pop %v3711
      %v3756 = vmul.f32 1.0, %v3755
      %v3757 = vrcp.pop %v3712
      %v3758 = vmul.f32 1.0, %v3757
      %v3759 = vrcp.pop %v3713
      %v3760 = vmul.f32 1.0, %v3759
      %v3761 = vrcp.pop %v3714
      %v3762 = vmul.f32 1.0, %v3761
      %v3763 = vrcp.pop %v3715
      %v3764 = vmul.f32 1.0, %v3763
      %v3765 = vrcp.pop %v3716
      %v3766 = vmul.f32 1.0, %v3765
      %v3767 = vrcp.pop %v3717
      %v3768 = vmul.f32 1.0, %v3767
      %v3769 = vrcp.pop %v3718
      %v3770 = vmul.f32 1.0, %v3769
      %v3771 = vrcp.pop %v3719
      %v3772 = vmul.f32 1.0, %v3771
      %v3773 = vrcp.pop %v3720
      %v3774 = vmul.f32 1.0, %v3773
      %v3775 = vrcp.pop %v3721
      %v3776 = vmul.f32 1.0, %v3775
      %v3777 = vrcp.pop %v3722
      %v3778 = vmul.f32 1.0, %v3777
      %v3779 = vrcp.pop %v3723
      %v3780 = vmul.f32 1.0, %v3779
      %v3781 = vrcp.pop %v3724
      %v3782 = vmul.f32 1.0, %v3781
      %v3783 = vrcp.pop %v3725
      %v3784 = vmul.f32 1.0, %v3783
      %v3785 = vrcp.pop %v3726
      %v3786 = vmul.f32 1.0, %v3785
      %v3787 = vrcp.pop %v3727
      %v3788 = vmul.f32 1.0, %v3787
      %v3789 = vrcp.pop %v3728
      %v3790 = vmul.f32 1.0, %v3789
      %v3791 = vrcp.pop %v3729
      %v3792 = vmul.f32 1.0, %v3791
      %v3793 = vrcp.pop %v3730
      %v3794 = vmul.f32 1.0, %v3793
      %v3795 = vmul.f32 %v3477, %v3732
      %v3796 = vmul.f32 %v3480, %v3734
      %v3797 = vmul.f32 %v3485, %v3736
      %v3798 = vmul.f32 %v3488, %v3738
      %v3799 = vmul.f32 %v3493, %v3740
      %v3800 = vmul.f32 %v3496, %v3742
      %v3801 = vmul.f32 %v3501, %v3744
      %v3802 = vmul.f32 %v3504, %v3746
      %v3803 = vmul.f32 %v3509, %v3748
      %v3804 = vmul.f32 %v3512, %v3750
      %v3805 = vmul.f32 %v3517, %v3752
      %v3806 = vmul.f32 %v3520, %v3754
      %v3807 = vmul.f32 %v3525, %v3756
      %v3808 = vmul.f32 %v3528, %v3758
      %v3809 = vmul.f32 %v3533, %v3760
      %v3810 = vmul.f32 %v3536, %v3762
      %v3811 = vmul.f32 %v3541, %v3764
      %v3812 = vmul.f32 %v3544, %v3766
      %v3813 = vmul.f32 %v3549, %v3768
      %v3814 = vmul.f32 %v3552, %v3770
      %v3815 = vmul.f32 %v3557, %v3772
      %v3816 = vmul.f32 %v3560, %v3774
      %v3817 = vmul.f32 %v3565, %v3776
      %v3818 = vmul.f32 %v3568, %v3778
      %v3819 = vmul.f32 %v3573, %v3780
      %v3820 = vmul.f32 %v3576, %v3782
      %v3821 = vmul.f32 %v3581, %v3784
      %v3822 = vmul.f32 %v3584, %v3786
      %v3823 = vmul.f32 %v3589, %v3788
      %v3824 = vmul.f32 %v3592, %v3790
      %v3825 = vmul.f32 %v3597, %v3792
      %v3826 = vmul.f32 %v3600, %v3794
      %v3827 = vpack.c.bf16 %v3796, %v3795
      %v3828 = vpack.c.bf16 %v3798, %v3797
      %v3829 = vpack.c.bf16 %v3800, %v3799
      %v3830 = vpack.c.bf16 %v3802, %v3801
      %v3831 = vpack.c.bf16 %v3804, %v3803
      %v3832 = vpack.c.bf16 %v3806, %v3805
      %v3833 = vpack.c.bf16 %v3808, %v3807
      %v3834 = vpack.c.bf16 %v3810, %v3809
      %v3835 = vpack.c.bf16 %v3812, %v3811
      %v3836 = vpack.c.bf16 %v3814, %v3813
      %v3837 = vpack.c.bf16 %v3816, %v3815
      %v3838 = vpack.c.bf16 %v3818, %v3817
      %v3839 = vpack.c.bf16 %v3820, %v3819
      %v3840 = vpack.c.bf16 %v3822, %v3821
      %v3841 = vpack.c.bf16 %v3824, %v3823
      %v3842 = vpack.c.bf16 %v3826, %v3825
      %v3859 = vunpack.c.l.b16 %v3827
      %v3860 = vunpack.c.h.b16 %v3827
      %v3861 = vunpack.c.l.b16 %v3828
      %v3862 = vunpack.c.h.b16 %v3828
      %v3863 = vunpack.c.l.b16 %v3829
      %v3864 = vunpack.c.h.b16 %v3829
      %v3865 = vunpack.c.l.b16 %v3830
      %v3866 = vunpack.c.h.b16 %v3830
      %v3867 = vunpack.c.l.b16 %v3831
      %v3868 = vunpack.c.h.b16 %v3831
      %v3869 = vunpack.c.l.b16 %v3832
      %v3870 = vunpack.c.h.b16 %v3832
      %v3871 = vunpack.c.l.b16 %v3833
      %v3872 = vunpack.c.h.b16 %v3833
      %v3873 = vunpack.c.l.b16 %v3834
      %v3874 = vunpack.c.h.b16 %v3834
      %v3875 = vunpack.c.l.b16 %v3835
      %v3876 = vunpack.c.h.b16 %v3835
      %v3877 = vunpack.c.l.b16 %v3836
      %v3878 = vunpack.c.h.b16 %v3836
      %v3879 = vunpack.c.l.b16 %v3837
      %v3880 = vunpack.c.h.b16 %v3837
      %v3881 = vunpack.c.l.b16 %v3838
      %v3882 = vunpack.c.h.b16 %v3838
      %v3883 = vunpack.c.l.b16 %v3839
      %v3884 = vunpack.c.h.b16 %v3839
      %v3885 = vunpack.c.l.b16 %v3840
      %v3886 = vunpack.c.h.b16 %v3840
      %v3887 = vunpack.c.l.b16 %v3841
      %v3888 = vunpack.c.h.b16 %v3841
      %v3889 = vunpack.c.l.b16 %v3842
      %v3890 = vunpack.c.h.b16 %v3842
      %v3891 = vpack.c.b16 %v3859, %v3859
      %v3892 = vpack.c.b16 %v3860, %v3860
      %v3893 = vpack.c.b16 %v3861, %v3861
      %v3894 = vpack.c.b16 %v3862, %v3862
      %v3895 = vpack.c.b16 %v3863, %v3863
      %v3896 = vpack.c.b16 %v3864, %v3864
      %v3897 = vpack.c.b16 %v3865, %v3865
      %v3898 = vpack.c.b16 %v3866, %v3866
      %v3899 = vpack.c.b16 %v3867, %v3867
      %v3900 = vpack.c.b16 %v3868, %v3868
      %v3901 = vpack.c.b16 %v3869, %v3869
      %v3902 = vpack.c.b16 %v3870, %v3870
      %v3903 = vpack.c.b16 %v3871, %v3871
      %v3904 = vpack.c.b16 %v3872, %v3872
      %v3905 = vpack.c.b16 %v3873, %v3873
      %v3906 = vpack.c.b16 %v3874, %v3874
      %v3907 = vpack.c.b16 %v3875, %v3875
      %v3908 = vpack.c.b16 %v3876, %v3876
      %v3909 = vpack.c.b16 %v3877, %v3877
      %v3910 = vpack.c.b16 %v3878, %v3878
      %v3911 = vpack.c.b16 %v3879, %v3879
      %v3912 = vpack.c.b16 %v3880, %v3880
      %v3913 = vpack.c.b16 %v3881, %v3881
      %v3914 = vpack.c.b16 %v3882, %v3882
      %v3915 = vpack.c.b16 %v3883, %v3883
      %v3916 = vpack.c.b16 %v3884, %v3884
      %v3917 = vpack.c.b16 %v3885, %v3885
      %v3918 = vpack.c.b16 %v3886, %v3886
      %v3919 = vpack.c.b16 %v3887, %v3887
      %v3920 = vpack.c.b16 %v3888, %v3888
      %v3921 = vpack.c.b16 %v3889, %v3889
      %v3922 = vpack.c.b16 %v3890, %v3890
      %3955 = vst [vmem:[%s225] sm:$0xf] %v3891
      %3956 = vst [vmem:[%s225 + $0x4] sm:$0xf] %v3892
      %3957 = vst [vmem:[%s225 + $0x8] sm:$0xf] %v3893
      %3958 = vst [vmem:[%s225 + $0xc] sm:$0xf] %v3894
      %3959 = vst [vmem:[%s225 + $0x10] sm:$0xf] %v3895
      %3960 = vst [vmem:[%s225 + $0x14] sm:$0xf] %v3896
      %3961 = vst [vmem:[%s225 + $0x18] sm:$0xf] %v3897
      %3962 = vst [vmem:[%s225 + $0x1c] sm:$0xf] %v3898
      %3963 = vst [vmem:[%s225 + $0x20] sm:$0xf] %v3899
      %3964 = vst [vmem:[%s225 + $0x24] sm:$0xf] %v3900
      %3965 = vst [vmem:[%s225 + $0x28] sm:$0xf] %v3901
      %3966 = vst [vmem:[%s225 + $0x2c] sm:$0xf] %v3902
      %3967 = vst [vmem:[%s225 + $0x30] sm:$0xf] %v3903
      %3968 = vst [vmem:[%s225 + $0x34] sm:$0xf] %v3904
      %3969 = vst [vmem:[%s225 + $0x38] sm:$0xf] %v3905
      %3970 = vst [vmem:[%s225 + $0x3c] sm:$0xf] %v3906
      %3971 = vst [vmem:[%s225 + $0x40] sm:$0xf] %v3907
      %3972 = vst [vmem:[%s225 + $0x44] sm:$0xf] %v3908
      %3973 = vst [vmem:[%s225 + $0x48] sm:$0xf] %v3909
      %3974 = vst [vmem:[%s225 + $0x4c] sm:$0xf] %v3910
      %3975 = vst [vmem:[%s225 + $0x50] sm:$0xf] %v3911
      %3976 = vst [vmem:[%s225 + $0x54] sm:$0xf] %v3912
      %3977 = vst [vmem:[%s225 + $0x58] sm:$0xf] %v3913
      %3978 = vst [vmem:[%s225 + $0x5c] sm:$0xf] %v3914
      %3979 = vst [vmem:[%s225 + $0x60] sm:$0xf] %v3915
      %3980 = vst [vmem:[%s225 + $0x64] sm:$0xf] %v3916
      %3981 = vst [vmem:[%s225 + $0x68] sm:$0xf] %v3917
      %3982 = vst [vmem:[%s225 + $0x6c] sm:$0xf] %v3918
      %3983 = vst [vmem:[%s225 + $0x70] sm:$0xf] %v3919
      %3984 = vst [vmem:[%s225 + $0x74] sm:$0xf] %v3920
      %3985 = vst [vmem:[%s225 + $0x78] sm:$0xf] %v3921
      %3986 = vst [vmem:[%s225 + $0x7c] sm:$0xf] %v3922
      %s3987 = smul.u32 32, %s19
      %p3988 = scmp.lt.s32.totalorder %s18, 0
      %s3989 = scalar_select %p3988, %s18, 0
      %p3990 = scmp.lt.s32.totalorder %s3987, 63
      %s3991 = scalar_select %p3990, %s3987, 63
      %s3992 = smul.addr %s3989, 64
      %s3993 = sadd.s32 %s3991, %s3992
      %s3994 = smul.addr %s3993, 4
      %s3995 = scalar_lea.vmem %s3, %s3994
      // Predicated region
      $region33: #{simple_video_unet_forward.12} parent=31 // pred_check
        %p3996 = pneg %p121
      $region34: #{simple_video_unet_forward.12} parent=31 // pred_check_branch
        %3998 = sbr.rel (%p3996) target = $region36
      $region35: #{simple_video_unet_forward.12} parent=31 // pred_region
        %s3999 = smul.u32 32, %s19
      $region36: #{simple_video_unet_forward.12} parent=31 // pred_fallthru
        _
    $region32: #{simple_video_unet_forward.12} parent=5 // pred_fallthru
      _
    %p4000 = scmp.le.s32.totalorder 2, %s9
    // Predicated region
    $region37: #{simple_video_unet_forward.12} parent=5 // pred_check
      %p4001 = pneg %p4000
    $region38: #{simple_video_unet_forward.12} parent=5 // pred_check_branch
      %4003 = sbr.rel (%p4001) target = $region40
    $region39: #{simple_video_unet_forward.12} parent=5 // pred_region
      %s4004 = ssub.s32 %s9, 2
      // Predicated region
      $region41: #{simple_video_unet_forward.12} parent=39 // pred_check
        %p4005 = pneg %p127
      $region42: #{simple_video_unet_forward.12} parent=39 // pred_check_branch
        %4007 = sbr.rel (%p4005) target = $region44
      $region43: #{simple_video_unet_forward.12} parent=39 // pred_region
        %s4008 = smul.u32 32, %s21
        %p4009 = scmp.lt.s32.totalorder %s20, 0
        %s4010 = scalar_select %p4009, %s20, 0
        %p4011 = scmp.lt.s32.totalorder %s4008, 63
        %s4012 = scalar_select %p4011, %s4008, 63
        %s4013 = smul.addr %s4010, 64
        %s4014 = sadd.s32 %s4012, %s4013
        %s4015 = smul.addr %s4014, 4
        %s4016 = scalar_lea.vmem %s3, %s4015
      $region44: #{simple_video_unet_forward.12} parent=39 // pred_fallthru
        _
    $region40: #{simple_video_unet_forward.12} parent=5 // pred_fallthru
      _
  $region6: #{simple_video_unet_forward.12} parent=0 // loop_footer
    %s13 = sadd.s32 1, %s9
  $region7: #{simple_video_unet_forward.12} parent=0 // loop_footer_branch
    %8 = sbr.rel target = $region3
  $region8: #{simple_video_unet_forward.12} parent=0 // loop_exit
    _

// kernel: simple_video_unet_forward.13
$region0: #{simple_video_unet_forward.13}
  #allocation0 [shape = 'u32[]', space=smem, size = 0x4, offset = 0x4, fixed_abs, tag = 'smem constant byte address 0x4 - core index']
  #allocation1 [shape = 'u32[144,128]{1,0:T(1,128)}', space=vmem, size = 0x12000, scoped, tag = 'internal scratch']
  %s0 = inlined_call_operand.vmem [shape: bf16[1,512,864], index: 0, kind: input, shape index: {}]
  %s1 = inlined_call_operand.vmem [shape: bf16[864,128], index: 1, kind: input, shape index: {}]
  %s2 = inlined_call_operand.vmem [shape: f32[1,1,128], index: 2, kind: input, shape index: {}]
  %s3 = inlined_call_operand.vmem [shape: f32[1,512,128], index: 3, kind: output, shape index: {}]
  %s4 = sld [smem:[#allocation0]]
  $region45: #{simple_video_unet_forward.13} parent=0
    _
  %s6 = ssub.s32 1, %s4
  %s7 = scalar_select 0, %s6, %s4
  loop: start=0, step=1, limit=4
  $region2: #{simple_video_unet_forward.13} parent=0 // loop_pre_header
    _
  $region3: #{simple_video_unet_forward.13} parent=0 // loop_header
    %s9 = sphi 0, %s13
    %p10 = scmp.ge.s32.totalorder %s9, 4
    %s16 = sphi 0, %s28
    %s17 = sphi 0, %s24
    %s18 = sphi 0, %s16
    %s19 = sphi 0, %s17
    %s20 = sphi 0, %s18
    %s21 = sphi 0, %s19
    %s33 = sphi 0, %s35
    %s36 = sphi 0, %s33
    %s37 = sphi 0, %s36
    %s53 = sphi 0, %s37
    %s57 = sphi 0, %s57
    %s59 = sphi 0, %s57
    %s60 = sphi 0, %s59
    %s74 = sphi 0, %s60
    %s80 = sphi 0, %s82
    %s83 = sphi 0, %s80
    %s84 = sphi 0, %s83
    %s100 = sphi 0, %s84
    %s108 = sphi 0, %s110
    %s111 = sphi 0, %s108
    %s112 = sphi 0, %s111
    %s128 = sphi 0, %s112
  $region4: #{simple_video_unet_forward.13} parent=0 // loop_header_branch
    %12 = sbr.rel (%p10) target = $region8
  $region5: #{simple_video_unet_forward.13} parent=0 // loop_body
    %s14 = ssub.s32 %s9, 1
    %s15 = ssub.s32 %s9, 2
    %s22 = sadd.s32 1, %s17
    %p23 = scmp.ge.s32.totalorder %s22, 2
    %s24 = scalar_select %p23, 0, %s22
    %s25 = sadd.s32 1, %s16
    %s26 = scalar_select %p23, %s25, %s16
    %p27 = scmp.ge.s32.totalorder %s26, 1
    %s28 = scalar_select %p27, 0, %s26
    %s29 = ssub.s32 %s16, %s28
    %s30 = ssub.s32 %s17, %s24
    %s31 = sor.u32 %s29, %s30
    %p32 = scmp.eq.s32.totalorder %s31, 0
    %s34 = sadd.s32 %s33, 1
    %s35 = scalar_select %p32, %s33, %s34
    %p38 = pneg %p32
    %p39 = scmp.eq.s32.totalorder %s9, 1
    %p40 = por %p38, %p39
    %p41 = scmp.ne.s32.totalorder %s33, %s36
    %p42 = scmp.eq.s32.totalorder %s9, 0
    %p43 = por %p41, %p42
    %p44 = scmp.ne.s32.totalorder %s33, %s36
    %p45 = scmp.eq.s32.totalorder %s14, 1
    %p46 = por %p44, %p45
    %p47 = scmp.ne.s32.totalorder %s36, %s37
    %p48 = scmp.eq.s32.totalorder %s14, 0
    %p49 = por %p47, %p48
    %p50 = scmp.ne.s32.totalorder %s36, %s37
    %p51 = scmp.eq.s32.totalorder %s15, 1
    %p52 = por %p50, %p51
    %p54 = scmp.ne.s32.totalorder %s37, %s53
    %p55 = scmp.eq.s32.totalorder %s15, 0
    %p56 = por %p54, %p55
    %s58 = sadd.s32 %s57, 1
    %p61 = scmp.eq.s32.totalorder %s9, 1
    %p62 = scmp.ne.s32.totalorder %s57, %s59
    %p63 = scmp.eq.s32.totalorder %s9, 0
    %p64 = por %p62, %p63
    %p65 = scmp.ne.s32.totalorder %s57, %s59
    %p66 = scmp.eq.s32.totalorder %s14, 1
    %p67 = por %p65, %p66
    %p68 = scmp.ne.s32.totalorder %s59, %s60
    %p69 = scmp.eq.s32.totalorder %s14, 0
    %p70 = por %p68, %p69
    %p71 = scmp.ne.s32.totalorder %s59, %s60
    %p72 = scmp.eq.s32.totalorder %s15, 1
    %p73 = por %p71, %p72
    %p75 = scmp.ne.s32.totalorder %s60, %s74
    %p76 = scmp.eq.s32.totalorder %s15, 0
    %p77 = por %p75, %p76
    %s78 = ssub.s32 %s16, %s28
    %p79 = scmp.eq.s32.totalorder %s78, 0
    %s81 = sadd.s32 %s80, 1
    %s82 = scalar_select %p79, %s80, %s81
    %p85 = pneg %p79
    %p86 = scmp.eq.s32.totalorder %s9, 1
    %p87 = por %p85, %p86
    %p88 = scmp.ne.s32.totalorder %s80, %s83
    %p89 = scmp.eq.s32.totalorder %s9, 0
    %p90 = por %p88, %p89
    %p91 = scmp.ne.s32.totalorder %s80, %s83
    %p92 = scmp.eq.s32.totalorder %s14, 1
    %p93 = por %p91, %p92
    %p94 = scmp.ne.s32.totalorder %s83, %s84
    %p95 = scmp.eq.s32.totalorder %s14, 0
    %p96 = por %p94, %p95
    %p97 = scmp.ne.s32.totalorder %s83, %s84
    %p98 = scmp.eq.s32.totalorder %s15, 1
    %p99 = por %p97, %p98
    %p101 = scmp.ne.s32.totalorder %s84, %s100
    %p102 = scmp.eq.s32.totalorder %s15, 0
    %p103 = por %p101, %p102
    %s104 = ssub.s32 %s16, %s28
    %s105 = ssub.s32 %s17, %s24
    %s106 = sor.u32 %s104, %s105
    %p107 = scmp.eq.s32.totalorder %s106, 0
    %s109 = sadd.s32 %s108, 1
    %s110 = scalar_select %p107, %s108, %s109
    %p113 = pneg %p107
    %p114 = scmp.eq.s32.totalorder %s9, 1
    %p115 = por %p113, %p114
    %p116 = scmp.ne.s32.totalorder %s108, %s111
    %p117 = scmp.eq.s32.totalorder %s9, 0
    %p118 = por %p116, %p117
    %p119 = scmp.ne.s32.totalorder %s108, %s111
    %p120 = scmp.eq.s32.totalorder %s14, 1
    %p121 = por %p119, %p120
    %p122 = scmp.ne.s32.totalorder %s111, %s112
    %p123 = scmp.eq.s32.totalorder %s14, 0
    %p124 = por %p122, %p123
    %p125 = scmp.ne.s32.totalorder %s111, %s112
    %p126 = scmp.eq.s32.totalorder %s15, 1
    %p127 = por %p125, %p126
    %p129 = scmp.ne.s32.totalorder %s112, %s128
    %p130 = scmp.eq.s32.totalorder %s15, 0
    %p131 = por %p129, %p130
    %p132 = scmp.le.s32.totalorder 1, %s9
    %p133 = scmp.lt.s32.totalorder %s9, 3
    %p134 = pnand %p132, %p133
    %p135 = pneg %p134
    // Predicated region
    $region9: #{simple_video_unet_forward.13} parent=5 // pred_check
      _
    $region10: #{simple_video_unet_forward.13} parent=5 // pred_check_branch
      %137 = sbr.rel (%p134) target = $region12
    $region11: #{simple_video_unet_forward.13} parent=5 // pred_region
      %s138 = ssub.s32 %s9, 1
      // Predicated region
      $region13: #{simple_video_unet_forward.13} parent=11 // pred_check
        %p139 = pneg %p70
      $region14: #{simple_video_unet_forward.13} parent=11 // pred_check_branch
        %141 = sbr.rel (%p139) target = $region16
      $region15: #{simple_video_unet_forward.13} parent=11 // pred_region
        _
      $region16: #{simple_video_unet_forward.13} parent=11 // pred_fallthru
        _
      // Predicated region
      $region17: #{simple_video_unet_forward.13} parent=11 // pred_check
        %p142 = pneg %p96
      $region18: #{simple_video_unet_forward.13} parent=11 // pred_check_branch
        %144 = sbr.rel (%p142) target = $region20
      $region19: #{simple_video_unet_forward.13} parent=11 // pred_region
        %p145 = scmp.lt.s32.totalorder %s18, 0
        %s146 = scalar_select %p145, %s18, 0
        %s147 = scalar_lea.vmem %s2, %s146
      $region20: #{simple_video_unet_forward.13} parent=11 // pred_fallthru
        _
    $region12: #{simple_video_unet_forward.13} parent=5 // pred_fallthru
      _
    %p148 = scmp.lt.s32.totalorder %s9, 2
    // Predicated region
    $region21: #{simple_video_unet_forward.13} parent=5 // pred_check
      %p149 = pneg %p148
    $region22: #{simple_video_unet_forward.13} parent=5 // pred_check_branch
      %151 = sbr.rel (%p149) target = $region24
    $region23: #{simple_video_unet_forward.13} parent=5 // pred_region
      // Predicated region
      $region25: #{simple_video_unet_forward.13} parent=23 // pred_check
        %p152 = pneg %p43
      $region26: #{simple_video_unet_forward.13} parent=23 // pred_check_branch
        %154 = sbr.rel (%p152) target = $region28
      $region27: #{simple_video_unet_forward.13} parent=23 // pred_region
        %s155 = smul.u32 32, %s17
        %p156 = scmp.lt.s32.totalorder %s16, 0
        %s157 = scalar_select %p156, %s16, 0
        %p158 = scmp.lt.s32.totalorder %s155, 63
        %s159 = scalar_select %p158, %s155, 63
        %s160 = smul.addr %s159, 7
        %s161 = smul.addr %s157, 448
        %s162 = sadd.s32 %s160, %s161
        %s163 = smul.addr %s162, 4
        %s164 = scalar_lea.vmem %s0, %s163
        %s165 = smul.u32 32, %s17
      $region28: #{simple_video_unet_forward.13} parent=23 // pred_fallthru
        _
    $region24: #{simple_video_unet_forward.13} parent=5 // pred_fallthru
      _
    %p166 = scmp.le.s32.totalorder 1, %s9
    %p167 = scmp.lt.s32.totalorder %s9, 3
    %p168 = pnand %p166, %p167
    %p169 = pneg %p168
    // Predicated region
    $region29: #{simple_video_unet_forward.13} parent=5 // pred_check
      _
    $region30: #{simple_video_unet_forward.13} parent=5 // pred_check_branch
      %171 = sbr.rel (%p168) target = $region32
    $region31: #{simple_video_unet_forward.13} parent=5 // pred_region
      %s172 = ssub.s32 %s9, 1
      %s173 = smul.u32 32, %s19
      %p174 = scmp.lt.s32.totalorder %s18, 0
      %s175 = scalar_select %p174, %s18, 0
      %p176 = scmp.lt.s32.totalorder %s173, 63
      %s177 = scalar_select %p176, %s173, 63
      %s178 = smul.addr %s177, 7
      %s179 = smul.addr %s175, 448
      %s180 = sadd.s32 %s178, %s179
      %s181 = smul.addr %s180, 4
      %s182 = scalar_lea.vmem %s0, %s181
      %p183 = pneg %p49
      %p184 = pneg %p46
      %p185 = pneg %p70
      %p186 = pneg %p67
      %p187 = scmp.lt.s32.totalorder %s18, 0
      %s188 = scalar_select %p187, %s18, 0
      %s189 = scalar_lea.vmem %s2, %s188
      %p190 = pneg %p96
      %p191 = pneg %p93
      %p192 = pneg %p124
      %p193 = pneg %p121
      %s194 = smul.u32 32, %s19
      %p195 = scmp.lt.s32.totalorder %s18, 0
      %s196 = scalar_select %p195, %s18, 0
      %p197 = scmp.lt.s32.totalorder %s194, 63
      %s198 = scalar_select %p197, %s194, 63
      %s199 = smul.addr %s196, 64
      %s200 = sadd.s32 %s198, %s199
      %s201 = smul.addr %s200, 8
      %s202 = scalar_lea.vmem %s3, %s201
      %s203 = smul.u32 32, %s19
      %p204 = scmp.lt.s32.totalorder %s18, 0
      %s205 = scalar_select %p204, %s18, 0
      %p206 = scmp.lt.s32.totalorder %s203, 63
      %s207 = scalar_select %p206, %s203, 63
      %s208 = smul.addr %s207, 7
      %s209 = smul.addr %s205, 448
      %s210 = sadd.s32 %s208, %s209
      %s211 = smul.addr %s210, 4
      %s212 = scalar_lea.vmem %s0, %s211
      %s213 = smul.u32 32, %s19
      %p214 = scmp.lt.s32.totalorder %s18, 0
      %s215 = scalar_select %p214, %s18, 0
      %s216 = scalar_lea.vmem %s2, %s215
      %s217 = smul.u32 32, %s19
      %p218 = scmp.lt.s32.totalorder %s18, 0
      %s219 = scalar_select %p218, %s18, 0
      %p220 = scmp.lt.s32.totalorder %s217, 63
      %s221 = scalar_select %p220, %s217, 63
      %s222 = smul.addr %s219, 64
      %s223 = sadd.s32 %s221, %s222
      %s224 = smul.addr %s223, 8
      %s225 = scalar_lea.vmem %s3, %s224
      %s226 = smul.u32 32, %s19
      %v228 = vld [vmem:[%s1] sm:$0xf]
      %v229 = vld [vmem:[%s1 + $0x4] sm:$0xf]
      %v230 = vld [vmem:[%s1 + $0x8] sm:$0xf]
      %v231 = vld [vmem:[%s1 + $0xc] sm:$0xf]
      %v232 = vld [vmem:[%s1 + $0x10] sm:$0xf]
      %v233 = vld [vmem:[%s1 + $0x14] sm:$0xf]
      %v234 = vld [vmem:[%s1 + $0x18] sm:$0xf]
      %v235 = vld [vmem:[%s1 + $0x1c] sm:$0xf]
      %v236 = vld [vmem:[%s1 + $0x20] sm:$0xf]
      %v237 = vld [vmem:[%s1 + $0x24] sm:$0xf]
      %v238 = vld [vmem:[%s1 + $0x28] sm:$0xf]
      %v239 = vld [vmem:[%s1 + $0x2c] sm:$0xf]
      %v240 = vld [vmem:[%s1 + $0x30] sm:$0xf]
      %v241 = vld [vmem:[%s1 + $0x34] sm:$0xf]
      %v242 = vld [vmem:[%s1 + $0x38] sm:$0xf]
      %v243 = vld [vmem:[%s1 + $0x3c] sm:$0xf]
      %v244 = vld [vmem:[%s1 + $0x40] sm:$0xf]
      %v245 = vld [vmem:[%s1 + $0x44] sm:$0xf]
      %v246 = vld [vmem:[%s1 + $0x48] sm:$0xf]
      %v247 = vld [vmem:[%s1 + $0x4c] sm:$0xf]
      %v248 = vld [vmem:[%s1 + $0x50] sm:$0xf]
      %v249 = vld [vmem:[%s1 + $0x54] sm:$0xf]
      %v250 = vld [vmem:[%s1 + $0x58] sm:$0xf]
      %v251 = vld [vmem:[%s1 + $0x5c] sm:$0xf]
      %v252 = vld [vmem:[%s1 + $0x60] sm:$0xf]
      %v253 = vld [vmem:[%s1 + $0x64] sm:$0xf]
      %v254 = vld [vmem:[%s1 + $0x68] sm:$0xf]
      %v255 = vld [vmem:[%s1 + $0x6c] sm:$0xf]
      %v256 = vld [vmem:[%s1 + $0x70] sm:$0xf]
      %v257 = vld [vmem:[%s1 + $0x74] sm:$0xf]
      %v258 = vld [vmem:[%s1 + $0x78] sm:$0xf]
      %v259 = vld [vmem:[%s1 + $0x7c] sm:$0xf]
      %v260 = vld [vmem:[%s1 + $0x80] sm:$0xf]
      %v261 = vld [vmem:[%s1 + $0x84] sm:$0xf]
      %v262 = vld [vmem:[%s1 + $0x88] sm:$0xf]
      %v263 = vld [vmem:[%s1 + $0x8c] sm:$0xf]
      %v264 = vld [vmem:[%s1 + $0x90] sm:$0xf]
      %v265 = vld [vmem:[%s1 + $0x94] sm:$0xf]
      %v266 = vld [vmem:[%s1 + $0x98] sm:$0xf]
      %v267 = vld [vmem:[%s1 + $0x9c] sm:$0xf]
      %v268 = vld [vmem:[%s1 + $0xa0] sm:$0xf]
      %v269 = vld [vmem:[%s1 + $0xa4] sm:$0xf]
      %v270 = vld [vmem:[%s1 + $0xa8] sm:$0xf]
      %v271 = vld [vmem:[%s1 + $0xac] sm:$0xf]
      %v272 = vld [vmem:[%s1 + $0xb0] sm:$0xf]
      %v273 = vld [vmem:[%s1 + $0xb4] sm:$0xf]
      %v274 = vld [vmem:[%s1 + $0xb8] sm:$0xf]
      %v275 = vld [vmem:[%s1 + $0xbc] sm:$0xf]
      %v276 = vld [vmem:[%s1 + $0xc0] sm:$0xf]
      %v277 = vld [vmem:[%s1 + $0xc4] sm:$0xf]
      %v278 = vld [vmem:[%s1 + $0xc8] sm:$0xf]
      %v279 = vld [vmem:[%s1 + $0xcc] sm:$0xf]
      %v280 = vld [vmem:[%s1 + $0xd0] sm:$0xf]
      %v281 = vld [vmem:[%s1 + $0xd4] sm:$0xf]
      %v282 = vld [vmem:[%s1 + $0xd8] sm:$0xf]
      %v283 = vld [vmem:[%s1 + $0xdc] sm:$0xf]
      %v284 = vld [vmem:[%s1 + $0xe0] sm:$0xf]
      %v285 = vld [vmem:[%s1 + $0xe4] sm:$0xf]
      %v286 = vld [vmem:[%s1 + $0xe8] sm:$0xf]
      %v287 = vld [vmem:[%s1 + $0xec] sm:$0xf]
      %v288 = vld [vmem:[%s1 + $0xf0] sm:$0xf]
      %v289 = vld [vmem:[%s1 + $0xf4] sm:$0xf]
      %v290 = vld [vmem:[%s1 + $0xf8] sm:$0xf]
      %v291 = vld [vmem:[%s1 + $0xfc] sm:$0xf]
      %v292 = vld [vmem:[%s1 + $0x100] sm:$0xf]
      %v293 = vld [vmem:[%s1 + $0x104] sm:$0xf]
      %v294 = vld [vmem:[%s1 + $0x108] sm:$0xf]
      %v295 = vld [vmem:[%s1 + $0x10c] sm:$0xf]
      %v296 = vld [vmem:[%s1 + $0x110] sm:$0xf]
      %v297 = vld [vmem:[%s1 + $0x114] sm:$0xf]
      %v298 = vld [vmem:[%s1 + $0x118] sm:$0xf]
      %v299 = vld [vmem:[%s1 + $0x11c] sm:$0xf]
      %v300 = vld [vmem:[%s1 + $0x120] sm:$0xf]
      %v301 = vld [vmem:[%s1 + $0x124] sm:$0xf]
      %v302 = vld [vmem:[%s1 + $0x128] sm:$0xf]
      %v303 = vld [vmem:[%s1 + $0x12c] sm:$0xf]
      %v304 = vld [vmem:[%s1 + $0x130] sm:$0xf]
      %v305 = vld [vmem:[%s1 + $0x134] sm:$0xf]
      %v306 = vld [vmem:[%s1 + $0x138] sm:$0xf]
      %v307 = vld [vmem:[%s1 + $0x13c] sm:$0xf]
      %v308 = vld [vmem:[%s1 + $0x140] sm:$0xf]
      %v309 = vld [vmem:[%s1 + $0x144] sm:$0xf]
      %v310 = vld [vmem:[%s1 + $0x148] sm:$0xf]
      %v311 = vld [vmem:[%s1 + $0x14c] sm:$0xf]
      %v312 = vld [vmem:[%s1 + $0x150] sm:$0xf]
      %v313 = vld [vmem:[%s1 + $0x154] sm:$0xf]
      %v314 = vld [vmem:[%s1 + $0x158] sm:$0xf]
      %v315 = vld [vmem:[%s1 + $0x15c] sm:$0xf]
      %v316 = vld [vmem:[%s1 + $0x160] sm:$0xf]
      %v317 = vld [vmem:[%s1 + $0x164] sm:$0xf]
      %v318 = vld [vmem:[%s1 + $0x168] sm:$0xf]
      %v319 = vld [vmem:[%s1 + $0x16c] sm:$0xf]
      %v320 = vld [vmem:[%s1 + $0x170] sm:$0xf]
      %v321 = vld [vmem:[%s1 + $0x174] sm:$0xf]
      %v322 = vld [vmem:[%s1 + $0x178] sm:$0xf]
      %v323 = vld [vmem:[%s1 + $0x17c] sm:$0xf]
      %v324 = vld [vmem:[%s1 + $0x180] sm:$0xf]
      %v325 = vld [vmem:[%s1 + $0x184] sm:$0xf]
      %v326 = vld [vmem:[%s1 + $0x188] sm:$0xf]
      %v327 = vld [vmem:[%s1 + $0x18c] sm:$0xf]
      %v328 = vld [vmem:[%s1 + $0x190] sm:$0xf]
      %v329 = vld [vmem:[%s1 + $0x194] sm:$0xf]
      %v330 = vld [vmem:[%s1 + $0x198] sm:$0xf]
      %v331 = vld [vmem:[%s1 + $0x19c] sm:$0xf]
      %v332 = vld [vmem:[%s1 + $0x1a0] sm:$0xf]
      %v333 = vld [vmem:[%s1 + $0x1a4] sm:$0xf]
      %v334 = vld [vmem:[%s1 + $0x1a8] sm:$0xf]
      %v335 = vld [vmem:[%s1 + $0x1ac] sm:$0xf]
      %v336 = vld [vmem:[%s212] sm:$0xff]
      %v337 = vld [vmem:[%s212 + $0x8] sm:$0xff]
      %v338 = vld [vmem:[%s212 + $0x10] sm:$0xff]
      %v339 = vld [vmem:[%s212 + $0x18] sm:$0xf]
      %v340 = vld [vmem:[%s212 + $0x1c] sm:$0xff]
      %v341 = vld [vmem:[%s212 + $0x24] sm:$0xff]
      %v342 = vld [vmem:[%s212 + $0x2c] sm:$0xff]
      %v343 = vld [vmem:[%s212 + $0x34] sm:$0xf]
      %v344 = vld [vmem:[%s212 + $0x38] sm:$0xff]
      %v345 = vld [vmem:[%s212 + $0x40] sm:$0xff]
      %v346 = vld [vmem:[%s212 + $0x48] sm:$0xff]
      %v347 = vld [vmem:[%s212 + $0x50] sm:$0xf]
      %v348 = vld [vmem:[%s212 + $0x54] sm:$0xff]
      %v349 = vld [vmem:[%s212 + $0x5c] sm:$0xff]
      %v350 = vld [vmem:[%s212 + $0x64] sm:$0xff]
      %v351 = vld [vmem:[%s212 + $0x6c] sm:$0xf]
      %v352 = vld [vmem:[%s212 + $0x70] sm:$0xff]
      %v353 = vld [vmem:[%s212 + $0x78] sm:$0xff]
      %v354 = vld [vmem:[%s212 + $0x80] sm:$0xff]
      %v355 = vld [vmem:[%s212 + $0x88] sm:$0xf]
      %v356 = vld [vmem:[%s212 + $0x8c] sm:$0xff]
      %v357 = vld [vmem:[%s212 + $0x94] sm:$0xff]
      %v358 = vld [vmem:[%s212 + $0x9c] sm:$0xff]
      %v359 = vld [vmem:[%s212 + $0xa4] sm:$0xf]
      %v360 = vld [vmem:[%s212 + $0xa8] sm:$0xff]
      %v361 = vld [vmem:[%s212 + $0xb0] sm:$0xff]
      %v362 = vld [vmem:[%s212 + $0xb8] sm:$0xff]
      %v363 = vld [vmem:[%s212 + $0xc0] sm:$0xf]
      %v364 = vld [vmem:[%s212 + $0xc4] sm:$0xff]
      %v365 = vld [vmem:[%s212 + $0xcc] sm:$0xff]
      %v366 = vld [vmem:[%s212 + $0xd4] sm:$0xff]
      %v367 = vld [vmem:[%s212 + $0xdc] sm:$0xf]
      %v368 = vld [vmem:[%s212 + $0xe0] sm:$0xff]
      %v369 = vld [vmem:[%s212 + $0xe8] sm:$0xff]
      %v370 = vld [vmem:[%s212 + $0xf0] sm:$0xff]
      %v371 = vld [vmem:[%s212 + $0xf8] sm:$0xf]
      %v372 = vld [vmem:[%s212 + $0xfc] sm:$0xff]
      %v373 = vld [vmem:[%s212 + $0x104] sm:$0xff]
      %v374 = vld [vmem:[%s212 + $0x10c] sm:$0xff]
      %v375 = vld [vmem:[%s212 + $0x114] sm:$0xf]
      %v376 = vld [vmem:[%s212 + $0x118] sm:$0xff]
      %v377 = vld [vmem:[%s212 + $0x120] sm:$0xff]
      %v378 = vld [vmem:[%s212 + $0x128] sm:$0xff]
      %v379 = vld [vmem:[%s212 + $0x130] sm:$0xf]
      %v380 = vld [vmem:[%s212 + $0x134] sm:$0xff]
      %v381 = vld [vmem:[%s212 + $0x13c] sm:$0xff]
      %v382 = vld [vmem:[%s212 + $0x144] sm:$0xff]
      %v383 = vld [vmem:[%s212 + $0x14c] sm:$0xf]
      %v384 = vld [vmem:[%s212 + $0x150] sm:$0xff]
      %v385 = vld [vmem:[%s212 + $0x158] sm:$0xff]
      %v386 = vld [vmem:[%s212 + $0x160] sm:$0xff]
      %v387 = vld [vmem:[%s212 + $0x168] sm:$0xf]
      %v388 = vld [vmem:[%s212 + $0x16c] sm:$0xff]
      %v389 = vld [vmem:[%s212 + $0x174] sm:$0xff]
      %v390 = vld [vmem:[%s212 + $0x17c] sm:$0xff]
      %v391 = vld [vmem:[%s212 + $0x184] sm:$0xf]
      %v392 = vld [vmem:[%s212 + $0x188] sm:$0xff]
      %v393 = vld [vmem:[%s212 + $0x190] sm:$0xff]
      %v394 = vld [vmem:[%s212 + $0x198] sm:$0xff]
      %v395 = vld [vmem:[%s212 + $0x1a0] sm:$0xf]
      %v396 = vld [vmem:[%s212 + $0x1a4] sm:$0xff]
      %v397 = vld [vmem:[%s212 + $0x1ac] sm:$0xff]
      %v398 = vld [vmem:[%s212 + $0x1b4] sm:$0xff]
      %v399 = vld [vmem:[%s212 + $0x1bc] sm:$0xf]
      %v400 = vld [vmem:[%s212 + $0x1c0] sm:$0xff]
      %v401 = vld [vmem:[%s212 + $0x1c8] sm:$0xff]
      %v402 = vld [vmem:[%s212 + $0x1d0] sm:$0xff]
      %v403 = vld [vmem:[%s212 + $0x1d8] sm:$0xf]
      %v404 = vld [vmem:[%s212 + $0x1dc] sm:$0xff]
      %v405 = vld [vmem:[%s212 + $0x1e4] sm:$0xff]
      %v406 = vld [vmem:[%s212 + $0x1ec] sm:$0xff]
      %v407 = vld [vmem:[%s212 + $0x1f4] sm:$0xf]
      %v408 = vld [vmem:[%s212 + $0x1f8] sm:$0xff]
      %v409 = vld [vmem:[%s212 + $0x200] sm:$0xff]
      %v410 = vld [vmem:[%s212 + $0x208] sm:$0xff]
      %v411 = vld [vmem:[%s212 + $0x210] sm:$0xf]
      %v412 = vld [vmem:[%s212 + $0x214] sm:$0xff]
      %v413 = vld [vmem:[%s212 + $0x21c] sm:$0xff]
      %v414 = vld [vmem:[%s212 + $0x224] sm:$0xff]
      %v415 = vld [vmem:[%s212 + $0x22c] sm:$0xf]
      %v416 = vld [vmem:[%s212 + $0x230] sm:$0xff]
      %v417 = vld [vmem:[%s212 + $0x238] sm:$0xff]
      %v418 = vld [vmem:[%s212 + $0x240] sm:$0xff]
      %v419 = vld [vmem:[%s212 + $0x248] sm:$0xf]
      %v420 = vld [vmem:[%s212 + $0x24c] sm:$0xff]
      %v421 = vld [vmem:[%s212 + $0x254] sm:$0xff]
      %v422 = vld [vmem:[%s212 + $0x25c] sm:$0xff]
      %v423 = vld [vmem:[%s212 + $0x264] sm:$0xf]
      %v424 = vld [vmem:[%s212 + $0x268] sm:$0xff]
      %v425 = vld [vmem:[%s212 + $0x270] sm:$0xff]
      %v426 = vld [vmem:[%s212 + $0x278] sm:$0xff]
      %v427 = vld [vmem:[%s212 + $0x280] sm:$0xf]
      %v428 = vld [vmem:[%s212 + $0x284] sm:$0xff]
      %v429 = vld [vmem:[%s212 + $0x28c] sm:$0xff]
      %v430 = vld [vmem:[%s212 + $0x294] sm:$0xff]
      %v431 = vld [vmem:[%s212 + $0x29c] sm:$0xf]
      %v432 = vld [vmem:[%s212 + $0x2a0] sm:$0xff]
      %v433 = vld [vmem:[%s212 + $0x2a8] sm:$0xff]
      %v434 = vld [vmem:[%s212 + $0x2b0] sm:$0xff]
      %v435 = vld [vmem:[%s212 + $0x2b8] sm:$0xf]
      %v436 = vld [vmem:[%s212 + $0x2bc] sm:$0xff]
      %v437 = vld [vmem:[%s212 + $0x2c4] sm:$0xff]
      %v438 = vld [vmem:[%s212 + $0x2cc] sm:$0xff]
      %v439 = vld [vmem:[%s212 + $0x2d4] sm:$0xf]
      %v440 = vld [vmem:[%s212 + $0x2d8] sm:$0xff]
      %v441 = vld [vmem:[%s212 + $0x2e0] sm:$0xff]
      %v442 = vld [vmem:[%s212 + $0x2e8] sm:$0xff]
      %v443 = vld [vmem:[%s212 + $0x2f0] sm:$0xf]
      %v444 = vld [vmem:[%s212 + $0x2f4] sm:$0xff]
      %v445 = vld [vmem:[%s212 + $0x2fc] sm:$0xff]
      %v446 = vld [vmem:[%s212 + $0x304] sm:$0xff]
      %v447 = vld [vmem:[%s212 + $0x30c] sm:$0xf]
      %v448 = vld [vmem:[%s212 + $0x310] sm:$0xff]
      %v449 = vld [vmem:[%s212 + $0x318] sm:$0xff]
      %v450 = vld [vmem:[%s212 + $0x320] sm:$0xff]
      %v451 = vld [vmem:[%s212 + $0x328] sm:$0xf]
      %v452 = vld [vmem:[%s212 + $0x32c] sm:$0xff]
      %v453 = vld [vmem:[%s212 + $0x334] sm:$0xff]
      %v454 = vld [vmem:[%s212 + $0x33c] sm:$0xff]
      %v455 = vld [vmem:[%s212 + $0x344] sm:$0xf]
      %v456 = vld [vmem:[%s212 + $0x348] sm:$0xff]
      %v457 = vld [vmem:[%s212 + $0x350] sm:$0xff]
      %v458 = vld [vmem:[%s212 + $0x358] sm:$0xff]
      %v459 = vld [vmem:[%s212 + $0x360] sm:$0xf]
      %v460 = vld [vmem:[%s212 + $0x364] sm:$0xff]
      %v461 = vld [vmem:[%s212 + $0x36c] sm:$0xff]
      %v462 = vld [vmem:[%s212 + $0x374] sm:$0xff]
      %v463 = vld [vmem:[%s212 + $0x37c] sm:$0xf]
      %v464 = vld [vmem:[%s216] sm:$0x1]
      %v466 = vlaneseq
      %v467 = vshrl.u32 %v466, 7
      %v468 = vsub.s32 0, %v467
      %v469 = vrot.slane %v464, %v468
      %v599 = vunpack.c.l.b16 %v336
      %v600 = vunpack.c.h.b16 %v336
      %v601 = vunpack.c.l.b16 %v337
      %v602 = vunpack.c.h.b16 %v337
      %v603 = vunpack.c.l.b16 %v338
      %v604 = vunpack.c.h.b16 %v338
      %v605 = vunpack.c.l.b16 %v339
      %v606 = vunpack.c.l.b16 %v340
      %v607 = vunpack.c.h.b16 %v340
      %v608 = vunpack.c.l.b16 %v341
      %v609 = vunpack.c.h.b16 %v341
      %v610 = vunpack.c.l.b16 %v342
      %v611 = vunpack.c.h.b16 %v342
      %v612 = vunpack.c.l.b16 %v343
      %v613 = vunpack.c.l.b16 %v344
      %v614 = vunpack.c.h.b16 %v344
      %v615 = vunpack.c.l.b16 %v345
      %v616 = vunpack.c.h.b16 %v345
      %v617 = vunpack.c.l.b16 %v346
      %v618 = vunpack.c.h.b16 %v346
      %v619 = vunpack.c.l.b16 %v347
      %v620 = vunpack.c.l.b16 %v348
      %v621 = vunpack.c.h.b16 %v348
      %v622 = vunpack.c.l.b16 %v349
      %v623 = vunpack.c.h.b16 %v349
      %v624 = vunpack.c.l.b16 %v350
      %v625 = vunpack.c.h.b16 %v350
      %v626 = vunpack.c.l.b16 %v351
      %v627 = vunpack.c.l.b16 %v352
      %v628 = vunpack.c.h.b16 %v352
      %v629 = vunpack.c.l.b16 %v353
      %v630 = vunpack.c.h.b16 %v353
      %v631 = vunpack.c.l.b16 %v354
      %v632 = vunpack.c.h.b16 %v354
      %v633 = vunpack.c.l.b16 %v355
      %v634 = vunpack.c.l.b16 %v356
      %v635 = vunpack.c.h.b16 %v356
      %v636 = vunpack.c.l.b16 %v357
      %v637 = vunpack.c.h.b16 %v357
      %v638 = vunpack.c.l.b16 %v358
      %v639 = vunpack.c.h.b16 %v358
      %v640 = vunpack.c.l.b16 %v359
      %v641 = vunpack.c.l.b16 %v360
      %v642 = vunpack.c.h.b16 %v360
      %v643 = vunpack.c.l.b16 %v361
      %v644 = vunpack.c.h.b16 %v361
      %v645 = vunpack.c.l.b16 %v362
      %v646 = vunpack.c.h.b16 %v362
      %v647 = vunpack.c.l.b16 %v363
      %v648 = vunpack.c.l.b16 %v364
      %v649 = vunpack.c.h.b16 %v364
      %v650 = vunpack.c.l.b16 %v365
      %v651 = vunpack.c.h.b16 %v365
      %v652 = vunpack.c.l.b16 %v366
      %v653 = vunpack.c.h.b16 %v366
      %v654 = vunpack.c.l.b16 %v367
      %v655 = vunpack.c.l.b16 %v368
      %v656 = vunpack.c.h.b16 %v368
      %v657 = vunpack.c.l.b16 %v369
      %v658 = vunpack.c.h.b16 %v369
      %v659 = vunpack.c.l.b16 %v370
      %v660 = vunpack.c.h.b16 %v370
      %v661 = vunpack.c.l.b16 %v371
      %v662 = vunpack.c.l.b16 %v372
      %v663 = vunpack.c.h.b16 %v372
      %v664 = vunpack.c.l.b16 %v373
      %v665 = vunpack.c.h.b16 %v373
      %v666 = vunpack.c.l.b16 %v374
      %v667 = vunpack.c.h.b16 %v374
      %v668 = vunpack.c.l.b16 %v375
      %v669 = vunpack.c.l.b16 %v376
      %v670 = vunpack.c.h.b16 %v376
      %v671 = vunpack.c.l.b16 %v377
      %v672 = vunpack.c.h.b16 %v377
      %v673 = vunpack.c.l.b16 %v378
      %v674 = vunpack.c.h.b16 %v378
      %v675 = vunpack.c.l.b16 %v379
      %v676 = vunpack.c.l.b16 %v380
      %v677 = vunpack.c.h.b16 %v380
      %v678 = vunpack.c.l.b16 %v381
      %v679 = vunpack.c.h.b16 %v381
      %v680 = vunpack.c.l.b16 %v382
      %v681 = vunpack.c.h.b16 %v382
      %v682 = vunpack.c.l.b16 %v383
      %v683 = vunpack.c.l.b16 %v384
      %v684 = vunpack.c.h.b16 %v384
      %v685 = vunpack.c.l.b16 %v385
      %v686 = vunpack.c.h.b16 %v385
      %v687 = vunpack.c.l.b16 %v386
      %v688 = vunpack.c.h.b16 %v386
      %v689 = vunpack.c.l.b16 %v387
      %v690 = vunpack.c.l.b16 %v388
      %v691 = vunpack.c.h.b16 %v388
      %v692 = vunpack.c.l.b16 %v389
      %v693 = vunpack.c.h.b16 %v389
      %v694 = vunpack.c.l.b16 %v390
      %v695 = vunpack.c.h.b16 %v390
      %v696 = vunpack.c.l.b16 %v391
      %v697 = vunpack.c.l.b16 %v392
      %v698 = vunpack.c.h.b16 %v392
      %v699 = vunpack.c.l.b16 %v393
      %v700 = vunpack.c.h.b16 %v393
      %v701 = vunpack.c.l.b16 %v394
      %v702 = vunpack.c.h.b16 %v394
      %v703 = vunpack.c.l.b16 %v395
      %v704 = vunpack.c.l.b16 %v396
      %v705 = vunpack.c.h.b16 %v396
      %v706 = vunpack.c.l.b16 %v397
      %v707 = vunpack.c.h.b16 %v397
      %v708 = vunpack.c.l.b16 %v398
      %v709 = vunpack.c.h.b16 %v398
      %v710 = vunpack.c.l.b16 %v399
      %v711 = vunpack.c.l.b16 %v400
      %v712 = vunpack.c.h.b16 %v400
      %v713 = vunpack.c.l.b16 %v401
      %v714 = vunpack.c.h.b16 %v401
      %v715 = vunpack.c.l.b16 %v402
      %v716 = vunpack.c.h.b16 %v402
      %v717 = vunpack.c.l.b16 %v403
      %v718 = vunpack.c.l.b16 %v404
      %v719 = vunpack.c.h.b16 %v404
      %v720 = vunpack.c.l.b16 %v405
      %v721 = vunpack.c.h.b16 %v405
      %v722 = vunpack.c.l.b16 %v406
      %v723 = vunpack.c.h.b16 %v406
      %v724 = vunpack.c.l.b16 %v407
      %v725 = vunpack.c.l.b16 %v408
      %v726 = vunpack.c.h.b16 %v408
      %v727 = vunpack.c.l.b16 %v409
      %v728 = vunpack.c.h.b16 %v409
      %v729 = vunpack.c.l.b16 %v410
      %v730 = vunpack.c.h.b16 %v410
      %v731 = vunpack.c.l.b16 %v411
      %v732 = vunpack.c.l.b16 %v412
      %v733 = vunpack.c.h.b16 %v412
      %v734 = vunpack.c.l.b16 %v413
      %v735 = vunpack.c.h.b16 %v413
      %v736 = vunpack.c.l.b16 %v414
      %v737 = vunpack.c.h.b16 %v414
      %v738 = vunpack.c.l.b16 %v415
      %v739 = vunpack.c.l.b16 %v416
      %v740 = vunpack.c.h.b16 %v416
      %v741 = vunpack.c.l.b16 %v417
      %v742 = vunpack.c.h.b16 %v417
      %v743 = vunpack.c.l.b16 %v418
      %v744 = vunpack.c.h.b16 %v418
      %v745 = vunpack.c.l.b16 %v419
      %v746 = vunpack.c.l.b16 %v420
      %v747 = vunpack.c.h.b16 %v420
      %v748 = vunpack.c.l.b16 %v421
      %v749 = vunpack.c.h.b16 %v421
      %v750 = vunpack.c.l.b16 %v422
      %v751 = vunpack.c.h.b16 %v422
      %v752 = vunpack.c.l.b16 %v423
      %v753 = vunpack.c.l.b16 %v424
      %v754 = vunpack.c.h.b16 %v424
      %v755 = vunpack.c.l.b16 %v425
      %v756 = vunpack.c.h.b16 %v425
      %v757 = vunpack.c.l.b16 %v426
      %v758 = vunpack.c.h.b16 %v426
      %v759 = vunpack.c.l.b16 %v427
      %v760 = vunpack.c.l.b16 %v428
      %v761 = vunpack.c.h.b16 %v428
      %v762 = vunpack.c.l.b16 %v429
      %v763 = vunpack.c.h.b16 %v429
      %v764 = vunpack.c.l.b16 %v430
      %v765 = vunpack.c.h.b16 %v430
      %v766 = vunpack.c.l.b16 %v431
      %v767 = vunpack.c.l.b16 %v432
      %v768 = vunpack.c.h.b16 %v432
      %v769 = vunpack.c.l.b16 %v433
      %v770 = vunpack.c.h.b16 %v433
      %v771 = vunpack.c.l.b16 %v434
      %v772 = vunpack.c.h.b16 %v434
      %v773 = vunpack.c.l.b16 %v435
      %v774 = vunpack.c.l.b16 %v436
      %v775 = vunpack.c.h.b16 %v436
      %v776 = vunpack.c.l.b16 %v437
      %v777 = vunpack.c.h.b16 %v437
      %v778 = vunpack.c.l.b16 %v438
      %v779 = vunpack.c.h.b16 %v438
      %v780 = vunpack.c.l.b16 %v439
      %v781 = vunpack.c.l.b16 %v440
      %v782 = vunpack.c.h.b16 %v440
      %v783 = vunpack.c.l.b16 %v441
      %v784 = vunpack.c.h.b16 %v441
      %v785 = vunpack.c.l.b16 %v442
      %v786 = vunpack.c.h.b16 %v442
      %v787 = vunpack.c.l.b16 %v443
      %v788 = vunpack.c.l.b16 %v444
      %v789 = vunpack.c.h.b16 %v444
      %v790 = vunpack.c.l.b16 %v445
      %v791 = vunpack.c.h.b16 %v445
      %v792 = vunpack.c.l.b16 %v446
      %v793 = vunpack.c.h.b16 %v446
      %v794 = vunpack.c.l.b16 %v447
      %v795 = vunpack.c.l.b16 %v448
      %v796 = vunpack.c.h.b16 %v448
      %v797 = vunpack.c.l.b16 %v449
      %v798 = vunpack.c.h.b16 %v449
      %v799 = vunpack.c.l.b16 %v450
      %v800 = vunpack.c.h.b16 %v450
      %v801 = vunpack.c.l.b16 %v451
      %v802 = vunpack.c.l.b16 %v452
      %v803 = vunpack.c.h.b16 %v452
      %v804 = vunpack.c.l.b16 %v453
      %v805 = vunpack.c.h.b16 %v453
      %v806 = vunpack.c.l.b16 %v454
      %v807 = vunpack.c.h.b16 %v454
      %v808 = vunpack.c.l.b16 %v455
      %v809 = vunpack.c.l.b16 %v456
      %v810 = vunpack.c.h.b16 %v456
      %v811 = vunpack.c.l.b16 %v457
      %v812 = vunpack.c.h.b16 %v457
      %v813 = vunpack.c.l.b16 %v458
      %v814 = vunpack.c.h.b16 %v458
      %v815 = vunpack.c.l.b16 %v459
      %v816 = vunpack.c.l.b16 %v460
      %v817 = vunpack.c.h.b16 %v460
      %v818 = vunpack.c.l.b16 %v461
      %v819 = vunpack.c.h.b16 %v461
      %v820 = vunpack.c.l.b16 %v462
      %v821 = vunpack.c.h.b16 %v462
      %v822 = vunpack.c.l.b16 %v463
      %v823 = vpack.c.b16 %v606, %v599
      %v824 = vpack.c.b16 %v607, %v600
      %v825 = vpack.c.b16 %v608, %v601
      %v826 = vpack.c.b16 %v609, %v602
      %v827 = vpack.c.b16 %v610, %v603
      %v828 = vpack.c.b16 %v611, %v604
      %v829 = vpack.c.b16 %v612, %v605
      %v830 = vpack.c.b16 %v620, %v613
      %v831 = vpack.c.b16 %v621, %v614
      %v832 = vpack.c.b16 %v622, %v615
      %v833 = vpack.c.b16 %v623, %v616
      %v834 = vpack.c.b16 %v624, %v617
      %v835 = vpack.c.b16 %v625, %v618
      %v836 = vpack.c.b16 %v626, %v619
      %v837 = vpack.c.b16 %v634, %v627
      %v838 = vpack.c.b16 %v635, %v628
      %v839 = vpack.c.b16 %v636, %v629
      %v840 = vpack.c.b16 %v637, %v630
      %v841 = vpack.c.b16 %v638, %v631
      %v842 = vpack.c.b16 %v639, %v632
      %v843 = vpack.c.b16 %v640, %v633
      %v844 = vpack.c.b16 %v648, %v641
      %v845 = vpack.c.b16 %v649, %v642
      %v846 = vpack.c.b16 %v650, %v643
      %v847 = vpack.c.b16 %v651, %v644
      %v848 = vpack.c.b16 %v652, %v645
      %v849 = vpack.c.b16 %v653, %v646
      %v850 = vpack.c.b16 %v654, %v647
      %v851 = vpack.c.b16 %v662, %v655
      %v852 = vpack.c.b16 %v663, %v656
      %v853 = vpack.c.b16 %v664, %v657
      %v854 = vpack.c.b16 %v665, %v658
      %v855 = vpack.c.b16 %v666, %v659
      %v856 = vpack.c.b16 %v667, %v660
      %v857 = vpack.c.b16 %v668, %v661
      %v858 = vpack.c.b16 %v676, %v669
      %v859 = vpack.c.b16 %v677, %v670
      %v860 = vpack.c.b16 %v678, %v671
      %v861 = vpack.c.b16 %v679, %v672
      %v862 = vpack.c.b16 %v680, %v673
      %v863 = vpack.c.b16 %v681, %v674
      %v864 = vpack.c.b16 %v682, %v675
      %v865 = vpack.c.b16 %v690, %v683
      %v866 = vpack.c.b16 %v691, %v684
      %v867 = vpack.c.b16 %v692, %v685
      %v868 = vpack.c.b16 %v693, %v686
      %v869 = vpack.c.b16 %v694, %v687
      %v870 = vpack.c.b16 %v695, %v688
      %v871 = vpack.c.b16 %v696, %v689
      %v872 = vpack.c.b16 %v704, %v697
      %v873 = vpack.c.b16 %v705, %v698
      %v874 = vpack.c.b16 %v706, %v699
      %v875 = vpack.c.b16 %v707, %v700
      %v876 = vpack.c.b16 %v708, %v701
      %v877 = vpack.c.b16 %v709, %v702
      %v878 = vpack.c.b16 %v710, %v703
      %v879 = vpack.c.b16 %v718, %v711
      %v880 = vpack.c.b16 %v719, %v712
      %v881 = vpack.c.b16 %v720, %v713
      %v882 = vpack.c.b16 %v721, %v714
      %v883 = vpack.c.b16 %v722, %v715
      %v884 = vpack.c.b16 %v723, %v716
      %v885 = vpack.c.b16 %v724, %v717
      %v886 = vpack.c.b16 %v732, %v725
      %v887 = vpack.c.b16 %v733, %v726
      %v888 = vpack.c.b16 %v734, %v727
      %v889 = vpack.c.b16 %v735, %v728
      %v890 = vpack.c.b16 %v736, %v729
      %v891 = vpack.c.b16 %v737, %v730
      %v892 = vpack.c.b16 %v738, %v731
      %v893 = vpack.c.b16 %v746, %v739
      %v894 = vpack.c.b16 %v747, %v740
      %v895 = vpack.c.b16 %v748, %v741
      %v896 = vpack.c.b16 %v749, %v742
      %v897 = vpack.c.b16 %v750, %v743
      %v898 = vpack.c.b16 %v751, %v744
      %v899 = vpack.c.b16 %v752, %v745
      %v900 = vpack.c.b16 %v760, %v753
      %v901 = vpack.c.b16 %v761, %v754
      %v902 = vpack.c.b16 %v762, %v755
      %v903 = vpack.c.b16 %v763, %v756
      %v904 = vpack.c.b16 %v764, %v757
      %v905 = vpack.c.b16 %v765, %v758
      %v906 = vpack.c.b16 %v766, %v759
      %v907 = vpack.c.b16 %v774, %v767
      %v908 = vpack.c.b16 %v775, %v768
      %v909 = vpack.c.b16 %v776, %v769
      %v910 = vpack.c.b16 %v777, %v770
      %v911 = vpack.c.b16 %v778, %v771
      %v912 = vpack.c.b16 %v779, %v772
      %v913 = vpack.c.b16 %v780, %v773
      %v914 = vpack.c.b16 %v788, %v781
      %v915 = vpack.c.b16 %v789, %v782
      %v916 = vpack.c.b16 %v790, %v783
      %v917 = vpack.c.b16 %v791, %v784
      %v918 = vpack.c.b16 %v792, %v785
      %v919 = vpack.c.b16 %v793, %v786
      %v920 = vpack.c.b16 %v794, %v787
      %v921 = vpack.c.b16 %v802, %v795
      %v922 = vpack.c.b16 %v803, %v796
      %v923 = vpack.c.b16 %v804, %v797
      %v924 = vpack.c.b16 %v805, %v798
      %v925 = vpack.c.b16 %v806, %v799
      %v926 = vpack.c.b16 %v807, %v800
      %v927 = vpack.c.b16 %v808, %v801
      %v928 = vpack.c.b16 %v816, %v809
      %v929 = vpack.c.b16 %v817, %v810
      %v930 = vpack.c.b16 %v818, %v811
      %v931 = vpack.c.b16 %v819, %v812
      %v932 = vpack.c.b16 %v820, %v813
      %v933 = vpack.c.b16 %v821, %v814
      %v934 = vpack.c.b16 %v822, %v815
      %v1139 = vunpack.c.l.b16 %v228
      %v1140 = vunpack.c.l.b16 %v229
      %v1141 = vunpack.c.l.b16 %v230
      %v1142 = vunpack.c.l.b16 %v231
      %v1143 = vunpack.c.l.b16 %v232
      %v1144 = vunpack.c.l.b16 %v233
      %v1145 = vunpack.c.l.b16 %v234
      %v1146 = vunpack.c.l.b16 %v235
      %v1147 = vunpack.c.l.b16 %v236
      %v1148 = vunpack.c.l.b16 %v237
      %v1149 = vunpack.c.l.b16 %v238
      %v1150 = vunpack.c.l.b16 %v239
      %v1151 = vunpack.c.l.b16 %v240
      %v1152 = vunpack.c.l.b16 %v241
      %v1153 = vunpack.c.l.b16 %v242
      %v1154 = vunpack.c.l.b16 %v243
      %v1155 = vunpack.c.l.b16 %v244
      %v1156 = vunpack.c.l.b16 %v245
      %v1157 = vunpack.c.l.b16 %v246
      %v1158 = vunpack.c.l.b16 %v247
      %v1159 = vunpack.c.l.b16 %v248
      %v1160 = vunpack.c.l.b16 %v249
      %v1161 = vunpack.c.l.b16 %v250
      %v1162 = vunpack.c.l.b16 %v251
      %v1163 = vunpack.c.l.b16 %v252
      %v1164 = vunpack.c.l.b16 %v253
      %v1165 = vunpack.c.l.b16 %v254
      %v1166 = vunpack.c.l.b16 %v255
      %v1167 = vunpack.c.l.b16 %v256
      %v1168 = vunpack.c.l.b16 %v257
      %v1169 = vunpack.c.l.b16 %v258
      %v1170 = vunpack.c.l.b16 %v259
      %v1171 = vunpack.c.l.b16 %v260
      %v1172 = vunpack.c.l.b16 %v261
      %v1173 = vunpack.c.l.b16 %v262
      %v1174 = vunpack.c.l.b16 %v263
      %v1175 = vunpack.c.l.b16 %v264
      %v1176 = vunpack.c.l.b16 %v265
      %v1177 = vunpack.c.l.b16 %v266
      %v1178 = vunpack.c.l.b16 %v267
      %v1179 = vunpack.c.l.b16 %v268
      %v1180 = vunpack.c.l.b16 %v269
      %v1181 = vunpack.c.l.b16 %v270
      %v1182 = vunpack.c.l.b16 %v271
      %v1183 = vunpack.c.l.b16 %v272
      %v1184 = vunpack.c.l.b16 %v273
      %v1185 = vunpack.c.l.b16 %v274
      %v1186 = vunpack.c.l.b16 %v275
      %v1187 = vunpack.c.l.b16 %v276
      %v1188 = vunpack.c.l.b16 %v277
      %v1189 = vunpack.c.l.b16 %v278
      %v1190 = vunpack.c.l.b16 %v279
      %v1191 = vunpack.c.l.b16 %v280
      %v1192 = vunpack.c.l.b16 %v281
      %v1193 = vunpack.c.l.b16 %v282
      %v1194 = vunpack.c.l.b16 %v283
      %v1195 = vunpack.c.l.b16 %v284
      %v1196 = vunpack.c.l.b16 %v285
      %v1197 = vunpack.c.l.b16 %v286
      %v1198 = vunpack.c.l.b16 %v287
      %v1199 = vunpack.c.l.b16 %v288
      %v1200 = vunpack.c.l.b16 %v289
      %v1201 = vunpack.c.l.b16 %v290
      %v1202 = vunpack.c.l.b16 %v291
      %v1203 = vunpack.c.l.b16 %v292
      %v1204 = vunpack.c.l.b16 %v293
      %v1205 = vunpack.c.l.b16 %v294
      %v1206 = vunpack.c.l.b16 %v295
      %v1207 = vunpack.c.l.b16 %v296
      %v1208 = vunpack.c.l.b16 %v297
      %v1209 = vunpack.c.l.b16 %v298
      %v1210 = vunpack.c.l.b16 %v299
      %v1211 = vunpack.c.l.b16 %v300
      %v1212 = vunpack.c.l.b16 %v301
      %v1213 = vunpack.c.l.b16 %v302
      %v1214 = vunpack.c.l.b16 %v303
      %v1215 = vunpack.c.l.b16 %v304
      %v1216 = vunpack.c.l.b16 %v305
      %v1217 = vunpack.c.l.b16 %v306
      %v1218 = vunpack.c.l.b16 %v307
      %v1219 = vunpack.c.l.b16 %v308
      %v1220 = vunpack.c.l.b16 %v309
      %v1221 = vunpack.c.l.b16 %v310
      %v1222 = vunpack.c.l.b16 %v311
      %v1223 = vunpack.c.l.b16 %v312
      %v1224 = vunpack.c.l.b16 %v313
      %v1225 = vunpack.c.l.b16 %v314
      %v1226 = vunpack.c.l.b16 %v315
      %v1227 = vunpack.c.l.b16 %v316
      %v1228 = vunpack.c.l.b16 %v317
      %v1229 = vunpack.c.l.b16 %v318
      %v1230 = vunpack.c.l.b16 %v319
      %v1231 = vunpack.c.l.b16 %v320
      %v1232 = vunpack.c.l.b16 %v321
      %v1233 = vunpack.c.l.b16 %v322
      %v1234 = vunpack.c.l.b16 %v323
      %v1235 = vunpack.c.l.b16 %v324
      %v1236 = vunpack.c.l.b16 %v325
      %v1237 = vunpack.c.l.b16 %v326
      %v1238 = vunpack.c.l.b16 %v327
      %v1239 = vunpack.c.l.b16 %v328
      %v1240 = vunpack.c.l.b16 %v329
      %v1241 = vunpack.c.l.b16 %v330
      %v1242 = vunpack.c.l.b16 %v331
      %v1243 = vunpack.c.l.b16 %v332
      %v1244 = vunpack.c.l.b16 %v333
      %v1245 = vunpack.c.l.b16 %v334
      %v1246 = vunpack.c.l.b16 %v335
      %v1247 = vpack.c.b16 %v1140, %v1139
      %v1248 = vpack.c.b16 %v1142, %v1141
      %v1249 = vpack.c.b16 %v1144, %v1143
      %v1250 = vpack.c.b16 %v1146, %v1145
      %v1251 = vpack.c.b16 %v1148, %v1147
      %v1252 = vpack.c.b16 %v1150, %v1149
      %v1253 = vpack.c.b16 %v1152, %v1151
      %v1254 = vpack.c.b16 %v1154, %v1153
      %v1255 = vpack.c.b16 %v1156, %v1155
      %v1256 = vpack.c.b16 %v1158, %v1157
      %v1257 = vpack.c.b16 %v1160, %v1159
      %v1258 = vpack.c.b16 %v1162, %v1161
      %v1259 = vpack.c.b16 %v1164, %v1163
      %v1260 = vpack.c.b16 %v1166, %v1165
      %v1261 = vpack.c.b16 %v1168, %v1167
      %v1262 = vpack.c.b16 %v1170, %v1169
      %v1263 = vpack.c.b16 %v1172, %v1171
      %v1264 = vpack.c.b16 %v1174, %v1173
      %v1265 = vpack.c.b16 %v1176, %v1175
      %v1266 = vpack.c.b16 %v1178, %v1177
      %v1267 = vpack.c.b16 %v1180, %v1179
      %v1268 = vpack.c.b16 %v1182, %v1181
      %v1269 = vpack.c.b16 %v1184, %v1183
      %v1270 = vpack.c.b16 %v1186, %v1185
      %v1271 = vpack.c.b16 %v1188, %v1187
      %v1272 = vpack.c.b16 %v1190, %v1189
      %v1273 = vpack.c.b16 %v1192, %v1191
      %v1274 = vpack.c.b16 %v1194, %v1193
      %v1275 = vpack.c.b16 %v1196, %v1195
      %v1276 = vpack.c.b16 %v1198, %v1197
      %v1277 = vpack.c.b16 %v1200, %v1199
      %v1278 = vpack.c.b16 %v1202, %v1201
      %v1279 = vpack.c.b16 %v1204, %v1203
      %v1280 = vpack.c.b16 %v1206, %v1205
      %v1281 = vpack.c.b16 %v1208, %v1207
      %v1282 = vpack.c.b16 %v1210, %v1209
      %v1283 = vpack.c.b16 %v1212, %v1211
      %v1284 = vpack.c.b16 %v1214, %v1213
      %v1285 = vpack.c.b16 %v1216, %v1215
      %v1286 = vpack.c.b16 %v1218, %v1217
      %v1287 = vpack.c.b16 %v1220, %v1219
      %v1288 = vpack.c.b16 %v1222, %v1221
      %v1289 = vpack.c.b16 %v1224, %v1223
      %v1290 = vpack.c.b16 %v1226, %v1225
      %v1291 = vpack.c.b16 %v1228, %v1227
      %v1292 = vpack.c.b16 %v1230, %v1229
      %v1293 = vpack.c.b16 %v1232, %v1231
      %v1294 = vpack.c.b16 %v1234, %v1233
      %v1295 = vpack.c.b16 %v1236, %v1235
      %v1296 = vpack.c.b16 %v1238, %v1237
      %v1297 = vpack.c.b16 %v1240, %v1239
      %v1298 = vpack.c.b16 %v1242, %v1241
      %v1299 = vpack.c.b16 %v1244, %v1243
      %v1300 = vpack.c.b16 %v1246, %v1245
      %vm1355 = vcmask 785408
      %v1357 = vsel %vm1355, %v829, 0
      %v1360 = vsel %vm1355, %v836, 0
      %v1363 = vsel %vm1355, %v843, 0
      %v1366 = vsel %vm1355, %v850, 0
      %v1369 = vsel %vm1355, %v857, 0
      %v1372 = vsel %vm1355, %v864, 0
      %v1375 = vsel %vm1355, %v871, 0
      %v1378 = vsel %vm1355, %v878, 0
      %v1381 = vsel %vm1355, %v885, 0
      %v1384 = vsel %vm1355, %v892, 0
      %v1387 = vsel %vm1355, %v899, 0
      %v1390 = vsel %vm1355, %v906, 0
      %v1393 = vsel %vm1355, %v913, 0
      %v1396 = vsel %vm1355, %v920, 0
      %v1399 = vsel %vm1355, %v927, 0
      %v1402 = vsel %vm1355, %v934, 0
      %1404 = vmatprep.subr.bf16.mxu0 0
      %1405 = vmatpush1.bf16.msra.mxu0 %v1247
      %1406 = vmatprep.subr.bf16.mxu0 0
      %1407 = vmatpush1.bf16.msra.mxu0 %v1248
      %1408 = vmatprep.subr.bf16.mxu0 0
      %1409 = vmatpush1.bf16.msra.mxu0 %v1249
      %1410 = vmatprep.subr.bf16.mxu0 0
      %1411 = vmatpush1.bf16.msra.mxu0 %v1250
      %1412 = vmatprep.subr.bf16.mxu0 0
      %1413 = vmatpush1.bf16.msra.mxu0 %v1251
      %1414 = vmatprep.subr.bf16.mxu0 0
      %1415 = vmatpush1.bf16.msra.mxu0 %v1252
      %1416 = vmatprep.subr.bf16.mxu0 0
      %1417 = vmatpush1.bf16.msra.mxu0 %v1253
      %1418 = vmatprep.subr.bf16.mxu0 0
      %1419 = vmatpush1.bf16.msra.mxu0 %v1254
      %1420 = vmatprep.subr.bf16.mxu0 0
      %1421 = vmatpush1.bf16.msra.mxu0 %v1255
      %1422 = vmatprep.subr.bf16.mxu0 0
      %1423 = vmatpush1.bf16.msra.mxu0 %v1256
      %1424 = vmatprep.subr.bf16.mxu0 0
      %1425 = vmatpush1.bf16.msra.mxu0 %v1257
      %1426 = vmatprep.subr.bf16.mxu0 0
      %1427 = vmatpush1.bf16.msra.mxu0 %v1258
      %1428 = vmatprep.subr.bf16.mxu0 0
      %1429 = vmatpush1.bf16.msra.mxu0 %v1259
      %1430 = vmatprep.subr.bf16.mxu0 0
      %1431 = vmatpush1.bf16.msra.mxu0 %v1260
      %1432 = vmatprep.subr.bf16.mxu0 0
      %1433 = vmatpush1.bf16.msra.mxu0 %v1261
      %1434 = vmatprep.subr.bf16.mxu0 0
      %1435 = vmatpush1.bf16.msra.mxu0 %v1262
      %1436 = vmatprep.mubr.bf16.mxu0 %v824
      %1437 = vmatmul.mubr.bf16.gmra.mrb[0].mxu0 %v823
      %v1438 = vpop.f32.mrb[0].mxu0
      %v1439 = vadd.f32 %v469, %v1438
      %v1440 = vpop.f32.mrb[0].mxu0
      %v1441 = vpop.f32.mrb[0].mxu0
      %v1442 = vadd.f32 %v469, %v1441
      %v1443 = vpop.f32.mrb[0].mxu0
      %1444 = vmatprep.mubr.bf16.mxu0 %v831
      %1445 = vmatmul.mubr.bf16.gmra.mrb[0].mxu0 %v830
      %v1446 = vpop.f32.mrb[0].mxu0
      %v1447 = vadd.f32 %v469, %v1446
      %v1448 = vpop.f32.mrb[0].mxu0
      %v1449 = vpop.f32.mrb[0].mxu0
      %v1450 = vadd.f32 %v469, %v1449
      %v1451 = vpop.f32.mrb[0].mxu0
      %1452 = vmatprep.mubr.bf16.mxu0 %v838
      %1453 = vmatmul.mubr.bf16.gmra.mrb[0].mxu0 %v837
      %v1454 = vpop.f32.mrb[0].mxu0
      %v1455 = vadd.f32 %v469, %v1454
      %v1456 = vpop.f32.mrb[0].mxu0
      %v1457 = vpop.f32.mrb[0].mxu0
      %v1458 = vadd.f32 %v469, %v1457
      %v1459 = vpop.f32.mrb[0].mxu0
      %1460 = vmatprep.mubr.bf16.mxu0 %v845
      %1461 = vmatmul.mubr.bf16.gmra.mrb[0].mxu0 %v844
      %v1462 = vpop.f32.mrb[0].mxu0
      %v1463 = vadd.f32 %v469, %v1462
      %v1464 = vpop.f32.mrb[0].mxu0
      %v1465 = vpop.f32.mrb[0].mxu0
      %v1466 = vadd.f32 %v469, %v1465
      %v1467 = vpop.f32.mrb[0].mxu0
      %1468 = vmatprep.mubr.bf16.mxu0 %v852
      %1469 = vmatmul.mubr.bf16.gmra.mrb[0].mxu0 %v851
      %v1470 = vpop.f32.mrb[0].mxu0
      %v1471 = vadd.f32 %v469, %v1470
      %v1472 = vpop.f32.mrb[0].mxu0
      %v1473 = vpop.f32.mrb[0].mxu0
      %v1474 = vadd.f32 %v469, %v1473
      %v1475 = vpop.f32.mrb[0].mxu0
      %1476 = vmatprep.mubr.bf16.mxu0 %v859
      %1477 = vmatmul.mubr.bf16.gmra.mrb[0].mxu0 %v858
      %v1478 = vpop.f32.mrb[0].mxu0
      %v1479 = vadd.f32 %v469, %v1478
      %v1480 = vpop.f32.mrb[0].mxu0
      %v1481 = vpop.f32.mrb[0].mxu0
      %v1482 = vadd.f32 %v469, %v1481
      %v1483 = vpop.f32.mrb[0].mxu0
      %1484 = vmatprep.mubr.bf16.mxu0 %v866
      %1485 = vmatmul.mubr.bf16.gmra.mrb[0].mxu0 %v865
      %v1486 = vpop.f32.mrb[0].mxu0
      %v1487 = vadd.f32 %v469, %v1486
      %v1488 = vpop.f32.mrb[0].mxu0
      %v1489 = vpop.f32.mrb[0].mxu0
      %v1490 = vadd.f32 %v469, %v1489
      %v1491 = vpop.f32.mrb[0].mxu0
      %1492 = vmatprep.mubr.bf16.mxu0 %v873
      %1493 = vmatmul.mubr.bf16.gmra.mrb[0].mxu0 %v872
      %v1494 = vpop.f32.mrb[0].mxu0
      %v1495 = vadd.f32 %v469, %v1494
      %v1496 = vpop.f32.mrb[0].mxu0
      %v1497 = vpop.f32.mrb[0].mxu0
      %v1498 = vadd.f32 %v469, %v1497
      %v1499 = vpop.f32.mrb[0].mxu0
      %1500 = vmatprep.mubr.bf16.mxu0 %v880
      %1501 = vmatmul.mubr.bf16.gmra.mrb[0].mxu0 %v879
      %v1502 = vpop.f32.mrb[0].mxu0
      %v1503 = vadd.f32 %v469, %v1502
      %v1504 = vpop.f32.mrb[0].mxu0
      %v1505 = vpop.f32.mrb[0].mxu0
      %v1506 = vadd.f32 %v469, %v1505
      %v1507 = vpop.f32.mrb[0].mxu0
      %1508 = vmatprep.mubr.bf16.mxu0 %v887
      %1509 = vmatmul.mubr.bf16.gmra.mrb[0].mxu0 %v886
      %v1510 = vpop.f32.mrb[0].mxu0
      %v1511 = vadd.f32 %v469, %v1510
      %v1512 = vpop.f32.mrb[0].mxu0
      %v1513 = vpop.f32.mrb[0].mxu0
      %v1514 = vadd.f32 %v469, %v1513
      %v1515 = vpop.f32.mrb[0].mxu0
      %1516 = vmatprep.mubr.bf16.mxu0 %v894
      %1517 = vmatmul.mubr.bf16.gmra.mrb[0].mxu0 %v893
      %v1518 = vpop.f32.mrb[0].mxu0
      %v1519 = vadd.f32 %v469, %v1518
      %v1520 = vpop.f32.mrb[0].mxu0
      %v1521 = vpop.f32.mrb[0].mxu0
      %v1522 = vadd.f32 %v469, %v1521
      %v1523 = vpop.f32.mrb[0].mxu0
      %1524 = vmatprep.mubr.bf16.mxu0 %v901
      %1525 = vmatmul.mubr.bf16.gmra.mrb[0].mxu0 %v900
      %v1526 = vpop.f32.mrb[0].mxu0
      %v1527 = vadd.f32 %v469, %v1526
      %v1528 = vpop.f32.mrb[0].mxu0
      %v1529 = vpop.f32.mrb[0].mxu0
      %v1530 = vadd.f32 %v469, %v1529
      %v1531 = vpop.f32.mrb[0].mxu0
      %1532 = vmatprep.mubr.bf16.mxu0 %v908
      %1533 = vmatmul.mubr.bf16.gmra.mrb[0].mxu0 %v907
      %v1534 = vpop.f32.mrb[0].mxu0
      %v1535 = vadd.f32 %v469, %v1534
      %v1536 = vpop.f32.mrb[0].mxu0
      %v1537 = vpop.f32.mrb[0].mxu0
      %v1538 = vadd.f32 %v469, %v1537
      %v1539 = vpop.f32.mrb[0].mxu0
      %1540 = vmatprep.mubr.bf16.mxu0 %v915
      %1541 = vmatmul.mubr.bf16.gmra.mrb[0].mxu0 %v914
      %v1542 = vpop.f32.mrb[0].mxu0
      %v1543 = vadd.f32 %v469, %v1542
      %v1544 = vpop.f32.mrb[0].mxu0
      %v1545 = vpop.f32.mrb[0].mxu0
      %v1546 = vadd.f32 %v469, %v1545
      %v1547 = vpop.f32.mrb[0].mxu0
      %1548 = vmatprep.mubr.bf16.mxu0 %v922
      %1549 = vmatmul.mubr.bf16.gmra.mrb[0].mxu0 %v921
      %v1550 = vpop.f32.mrb[0].mxu0
      %v1551 = vadd.f32 %v469, %v1550
      %v1552 = vpop.f32.mrb[0].mxu0
      %v1553 = vpop.f32.mrb[0].mxu0
      %v1554 = vadd.f32 %v469, %v1553
      %v1555 = vpop.f32.mrb[0].mxu0
      %1556 = vmatprep.mubr.bf16.mxu0 %v929
      %1557 = vmatmul.mubr.bf16.gmra.mrb[0].mxu0 %v928
      %v1558 = vpop.f32.mrb[0].mxu0
      %v1559 = vadd.f32 %v469, %v1558
      %v1560 = vpop.f32.mrb[0].mxu0
      %v1561 = vpop.f32.mrb[0].mxu0
      %v1562 = vadd.f32 %v469, %v1561
      %v1563 = vpop.f32.mrb[0].mxu0
      %1564 = vdwg.mxu0
      %1565 = vmatprep.subr.bf16.mxu0 0
      %1566 = vmatpush1.bf16.msra.mxu0 %v1263
      %1567 = vmatprep.subr.bf16.mxu0 0
      %1568 = vmatpush1.bf16.msra.mxu0 %v1264
      %1569 = vmatprep.subr.bf16.mxu0 0
      %1570 = vmatpush1.bf16.msra.mxu0 %v1265
      %1571 = vmatprep.subr.bf16.mxu0 0
      %1572 = vmatpush1.bf16.msra.mxu0 %v1266
      %1573 = vmatprep.subr.bf16.mxu0 0
      %1574 = vmatpush1.bf16.msra.mxu0 %v1267
      %1575 = vmatprep.subr.bf16.mxu0 0
      %1576 = vmatpush1.bf16.msra.mxu0 %v1268
      %1577 = vmatprep.subr.bf16.mxu0 0
      %1578 = vmatpush1.bf16.msra.mxu0 %v1269
      %1579 = vmatprep.subr.bf16.mxu0 0
      %1580 = vmatpush1.bf16.msra.mxu0 %v1270
      %1581 = vmatprep.subr.bf16.mxu0 0
      %1582 = vmatpush1.bf16.msra.mxu0 %v1271
      %1583 = vmatprep.subr.bf16.mxu0 0
      %1584 = vmatpush1.bf16.msra.mxu0 %v1272
      %1585 = vmatprep.subr.bf16.mxu0 0
      %1586 = vmatpush1.bf16.msra.mxu0 %v1273
      %1587 = vmatprep.subr.bf16.mxu0 0
      %1588 = vmatpush1.bf16.msra.mxu0 %v1274
      %1589 = vmatprep.subr.bf16.mxu0 0
      %1590 = vmatpush1.bf16.msra.mxu0 %v1275
      %1591 = vmatprep.subr.bf16.mxu0 0
      %1592 = vmatpush1.bf16.msra.mxu0 %v1276
      %1593 = vmatprep.subr.bf16.mxu0 0
      %1594 = vmatpush1.bf16.msra.mxu0 %v1277
      %1595 = vmatprep.subr.bf16.mxu0 0
      %1596 = vmatpush1.bf16.msra.mxu0 %v1278
      %1597 = vmatprep.mubr.bf16.mxu0 %v826
      %1598 = vmatmul.mubr.bf16.gmra.mrb[0].mxu0 %v825
      %v1599 = vpop.f32.mrb[0].mxu0
      %v1600 = vadd.f32 %v1439, %v1599
      %v1601 = vpop.f32.mrb[0].mxu0
      %v1602 = vpop.f32.mrb[0].mxu0
      %v1603 = vadd.f32 %v1442, %v1602
      %v1604 = vpop.f32.mrb[0].mxu0
      %1605 = vmatprep.mubr.bf16.mxu0 %v833
      %1606 = vmatmul.mubr.bf16.gmra.mrb[0].mxu0 %v832
      %v1607 = vpop.f32.mrb[0].mxu0
      %v1608 = vadd.f32 %v1447, %v1607
      %v1609 = vpop.f32.mrb[0].mxu0
      %v1610 = vpop.f32.mrb[0].mxu0
      %v1611 = vadd.f32 %v1450, %v1610
      %v1612 = vpop.f32.mrb[0].mxu0
      %1613 = vmatprep.mubr.bf16.mxu0 %v840
      %1614 = vmatmul.mubr.bf16.gmra.mrb[0].mxu0 %v839
      %v1615 = vpop.f32.mrb[0].mxu0
      %v1616 = vadd.f32 %v1455, %v1615
      %v1617 = vpop.f32.mrb[0].mxu0
      %v1618 = vpop.f32.mrb[0].mxu0
      %v1619 = vadd.f32 %v1458, %v1618
      %v1620 = vpop.f32.mrb[0].mxu0
      %1621 = vmatprep.mubr.bf16.mxu0 %v847
      %1622 = vmatmul.mubr.bf16.gmra.mrb[0].mxu0 %v846
      %v1623 = vpop.f32.mrb[0].mxu0
      %v1624 = vadd.f32 %v1463, %v1623
      %v1625 = vpop.f32.mrb[0].mxu0
      %v1626 = vpop.f32.mrb[0].mxu0
      %v1627 = vadd.f32 %v1466, %v1626
      %v1628 = vpop.f32.mrb[0].mxu0
      %1629 = vmatprep.mubr.bf16.mxu0 %v854
      %1630 = vmatmul.mubr.bf16.gmra.mrb[0].mxu0 %v853
      %v1631 = vpop.f32.mrb[0].mxu0
      %v1632 = vadd.f32 %v1471, %v1631
      %v1633 = vpop.f32.mrb[0].mxu0
      %v1634 = vpop.f32.mrb[0].mxu0
      %v1635 = vadd.f32 %v1474, %v1634
      %v1636 = vpop.f32.mrb[0].mxu0
      %1637 = vmatprep.mubr.bf16.mxu0 %v861
      %1638 = vmatmul.mubr.bf16.gmra.mrb[0].mxu0 %v860
      %v1639 = vpop.f32.mrb[0].mxu0
      %v1640 = vadd.f32 %v1479, %v1639
      %v1641 = vpop.f32.mrb[0].mxu0
      %v1642 = vpop.f32.mrb[0].mxu0
      %v1643 = vadd.f32 %v1482, %v1642
      %v1644 = vpop.f32.mrb[0].mxu0
      %1645 = vmatprep.mubr.bf16.mxu0 %v868
      %1646 = vmatmul.mubr.bf16.gmra.mrb[0].mxu0 %v867
      %v1647 = vpop.f32.mrb[0].mxu0
      %v1648 = vadd.f32 %v1487, %v1647
      %v1649 = vpop.f32.mrb[0].mxu0
      %v1650 = vpop.f32.mrb[0].mxu0
      %v1651 = vadd.f32 %v1490, %v1650
      %v1652 = vpop.f32.mrb[0].mxu0
      %1653 = vmatprep.mubr.bf16.mxu0 %v875
      %1654 = vmatmul.mubr.bf16.gmra.mrb[0].mxu0 %v874
      %v1655 = vpop.f32.mrb[0].mxu0
      %v1656 = vadd.f32 %v1495, %v1655
      %v1657 = vpop.f32.mrb[0].mxu0
      %v1658 = vpop.f32.mrb[0].mxu0
      %v1659 = vadd.f32 %v1498, %v1658
      %v1660 = vpop.f32.mrb[0].mxu0
      %1661 = vmatprep.mubr.bf16.mxu0 %v882
      %1662 = vmatmul.mubr.bf16.gmra.mrb[0].mxu0 %v881
      %v1663 = vpop.f32.mrb[0].mxu0
      %v1664 = vadd.f32 %v1503, %v1663
      %v1665 = vpop.f32.mrb[0].mxu0
      %v1666 = vpop.f32.mrb[0].mxu0
      %v1667 = vadd.f32 %v1506, %v1666
      %v1668 = vpop.f32.mrb[0].mxu0
      %1669 = vmatprep.mubr.bf16.mxu0 %v889
      %1670 = vmatmul.mubr.bf16.gmra.mrb[0].mxu0 %v888
      %v1671 = vpop.f32.mrb[0].mxu0
      %v1672 = vadd.f32 %v1511, %v1671
      %v1673 = vpop.f32.mrb[0].mxu0
      %v1674 = vpop.f32.mrb[0].mxu0
      %v1675 = vadd.f32 %v1514, %v1674
      %v1676 = vpop.f32.mrb[0].mxu0
      %1677 = vmatprep.mubr.bf16.mxu0 %v896
      %1678 = vmatmul.mubr.bf16.gmra.mrb[0].mxu0 %v895
      %v1679 = vpop.f32.mrb[0].mxu0
      %v1680 = vadd.f32 %v1519, %v1679
      %v1681 = vpop.f32.mrb[0].mxu0
      %v1682 = vpop.f32.mrb[0].mxu0
      %v1683 = vadd.f32 %v1522, %v1682
      %v1684 = vpop.f32.mrb[0].mxu0
      %1685 = vmatprep.mubr.bf16.mxu0 %v903
      %1686 = vmatmul.mubr.bf16.gmra.mrb[0].mxu0 %v902
      %v1687 = vpop.f32.mrb[0].mxu0
      %v1688 = vadd.f32 %v1527, %v1687
      %v1689 = vpop.f32.mrb[0].mxu0
      %v1690 = vpop.f32.mrb[0].mxu0
      %v1691 = vadd.f32 %v1530, %v1690
      %v1692 = vpop.f32.mrb[0].mxu0
      %1693 = vmatprep.mubr.bf16.mxu0 %v910
      %1694 = vmatmul.mubr.bf16.gmra.mrb[0].mxu0 %v909
      %v1695 = vpop.f32.mrb[0].mxu0
      %v1696 = vadd.f32 %v1535, %v1695
      %v1697 = vpop.f32.mrb[0].mxu0
      %v1698 = vpop.f32.mrb[0].mxu0
      %v1699 = vadd.f32 %v1538, %v1698
      %v1700 = vpop.f32.mrb[0].mxu0
      %1701 = vmatprep.mubr.bf16.mxu0 %v917
      %1702 = vmatmul.mubr.bf16.gmra.mrb[0].mxu0 %v916
      %v1703 = vpop.f32.mrb[0].mxu0
      %v1704 = vadd.f32 %v1543, %v1703
      %v1705 = vpop.f32.mrb[0].mxu0
      %v1706 = vpop.f32.mrb[0].mxu0
      %v1707 = vadd.f32 %v1546, %v1706
      %v1708 = vpop.f32.mrb[0].mxu0
      %1709 = vmatprep.mubr.bf16.mxu0 %v924
      %1710 = vmatmul.mubr.bf16.gmra.mrb[0].mxu0 %v923
      %v1711 = vpop.f32.mrb[0].mxu0
      %v1712 = vadd.f32 %v1551, %v1711
      %v1713 = vpop.f32.mrb[0].mxu0
      %v1714 = vpop.f32.mrb[0].mxu0
      %v1715 = vadd.f32 %v1554, %v1714
      %v1716 = vpop.f32.mrb[0].mxu0
      %1717 = vmatprep.mubr.bf16.mxu0 %v931
      %1718 = vmatmul.mubr.bf16.gmra.mrb[0].mxu0 %v930
      %v1719 = vpop.f32.mrb[0].mxu0
      %v1720 = vadd.f32 %v1559, %v1719
      %v1721 = vpop.f32.mrb[0].mxu0
      %v1722 = vpop.f32.mrb[0].mxu0
      %v1723 = vadd.f32 %v1562, %v1722
      %v1724 = vpop.f32.mrb[0].mxu0
      %1725 = vdwg.mxu0
      %1726 = vmatprep.subr.bf16.mxu0 0
      %1727 = vmatpush1.bf16.msra.mxu0 %v1279
      %1728 = vmatprep.subr.bf16.mxu0 0
      %1729 = vmatpush1.bf16.msra.mxu0 %v1280
      %1730 = vmatprep.subr.bf16.mxu0 0
      %1731 = vmatpush1.bf16.msra.mxu0 %v1281
      %1732 = vmatprep.subr.bf16.mxu0 0
      %1733 = vmatpush1.bf16.msra.mxu0 %v1282
      %1734 = vmatprep.subr.bf16.mxu0 0
      %1735 = vmatpush1.bf16.msra.mxu0 %v1283
      %1736 = vmatprep.subr.bf16.mxu0 0
      %1737 = vmatpush1.bf16.msra.mxu0 %v1284
      %1738 = vmatprep.subr.bf16.mxu0 0
      %1739 = vmatpush1.bf16.msra.mxu0 %v1285
      %1740 = vmatprep.subr.bf16.mxu0 0
      %1741 = vmatpush1.bf16.msra.mxu0 %v1286
      %1742 = vmatprep.subr.bf16.mxu0 0
      %1743 = vmatpush1.bf16.msra.mxu0 %v1287
      %1744 = vmatprep.subr.bf16.mxu0 0
      %1745 = vmatpush1.bf16.msra.mxu0 %v1288
      %1746 = vmatprep.subr.bf16.mxu0 0
      %1747 = vmatpush1.bf16.msra.mxu0 %v1289
      %1748 = vmatprep.subr.bf16.mxu0 0
      %1749 = vmatpush1.bf16.msra.mxu0 %v1290
      %1750 = vmatprep.subr.bf16.mxu0 0
      %1751 = vmatpush1.bf16.msra.mxu0 %v1291
      %1752 = vmatprep.subr.bf16.mxu0 0
      %1753 = vmatpush1.bf16.msra.mxu0 %v1292
      %1754 = vmatprep.subr.bf16.mxu0 0
      %1755 = vmatpush1.bf16.msra.mxu0 %v1293
      %1756 = vmatprep.subr.bf16.mxu0 0
      %1757 = vmatpush1.bf16.msra.mxu0 %v1294
      %1758 = vmatprep.mubr.bf16.mxu0 %v828
      %1759 = vmatmul.mubr.bf16.gmra.mrb[0].mxu0 %v827
      %v1760 = vpop.f32.mrb[0].mxu0
      %v1761 = vadd.f32 %v1600, %v1760
      %v1762 = vpop.f32.mrb[0].mxu0
      %v1763 = vpop.f32.mrb[0].mxu0
      %v1764 = vadd.f32 %v1603, %v1763
      %v1765 = vpop.f32.mrb[0].mxu0
      %1766 = vmatprep.mubr.bf16.mxu0 %v835
      %1767 = vmatmul.mubr.bf16.gmra.mrb[0].mxu0 %v834
      %v1768 = vpop.f32.mrb[0].mxu0
      %v1769 = vadd.f32 %v1608, %v1768
      %v1770 = vpop.f32.mrb[0].mxu0
      %v1771 = vpop.f32.mrb[0].mxu0
      %v1772 = vadd.f32 %v1611, %v1771
      %v1773 = vpop.f32.mrb[0].mxu0
      %1774 = vmatprep.mubr.bf16.mxu0 %v842
      %1775 = vmatmul.mubr.bf16.gmra.mrb[0].mxu0 %v841
      %v1776 = vpop.f32.mrb[0].mxu0
      %v1777 = vadd.f32 %v1616, %v1776
      %v1778 = vpop.f32.mrb[0].mxu0
      %v1779 = vpop.f32.mrb[0].mxu0
      %v1780 = vadd.f32 %v1619, %v1779
      %v1781 = vpop.f32.mrb[0].mxu0
      %1782 = vmatprep.mubr.bf16.mxu0 %v849
      %1783 = vmatmul.mubr.bf16.gmra.mrb[0].mxu0 %v848
      %v1784 = vpop.f32.mrb[0].mxu0
      %v1785 = vadd.f32 %v1624, %v1784
      %v1786 = vpop.f32.mrb[0].mxu0
      %v1787 = vpop.f32.mrb[0].mxu0
      %v1788 = vadd.f32 %v1627, %v1787
      %v1789 = vpop.f32.mrb[0].mxu0
      %1790 = vmatprep.mubr.bf16.mxu0 %v856
      %1791 = vmatmul.mubr.bf16.gmra.mrb[0].mxu0 %v855
      %v1792 = vpop.f32.mrb[0].mxu0
      %v1793 = vadd.f32 %v1632, %v1792
      %v1794 = vpop.f32.mrb[0].mxu0
      %v1795 = vpop.f32.mrb[0].mxu0
      %v1796 = vadd.f32 %v1635, %v1795
      %v1797 = vpop.f32.mrb[0].mxu0
      %1798 = vmatprep.mubr.bf16.mxu0 %v863
      %1799 = vmatmul.mubr.bf16.gmra.mrb[0].mxu0 %v862
      %v1800 = vpop.f32.mrb[0].mxu0
      %v1801 = vadd.f32 %v1640, %v1800
      %v1802 = vpop.f32.mrb[0].mxu0
      %v1803 = vpop.f32.mrb[0].mxu0
      %v1804 = vadd.f32 %v1643, %v1803
      %v1805 = vpop.f32.mrb[0].mxu0
      %1806 = vmatprep.mubr.bf16.mxu0 %v870
      %1807 = vmatmul.mubr.bf16.gmra.mrb[0].mxu0 %v869
      %v1808 = vpop.f32.mrb[0].mxu0
      %v1809 = vadd.f32 %v1648, %v1808
      %v1810 = vpop.f32.mrb[0].mxu0
      %v1811 = vpop.f32.mrb[0].mxu0
      %v1812 = vadd.f32 %v1651, %v1811
      %v1813 = vpop.f32.mrb[0].mxu0
      %1814 = vmatprep.mubr.bf16.mxu0 %v877
      %1815 = vmatmul.mubr.bf16.gmra.mrb[0].mxu0 %v876
      %v1816 = vpop.f32.mrb[0].mxu0
      %v1817 = vadd.f32 %v1656, %v1816
      %v1818 = vpop.f32.mrb[0].mxu0
      %v1819 = vpop.f32.mrb[0].mxu0
      %v1820 = vadd.f32 %v1659, %v1819
      %v1821 = vpop.f32.mrb[0].mxu0
      %1822 = vmatprep.mubr.bf16.mxu0 %v884
      %1823 = vmatmul.mubr.bf16.gmra.mrb[0].mxu0 %v883
      %v1824 = vpop.f32.mrb[0].mxu0
      %v1825 = vadd.f32 %v1664, %v1824
      %v1826 = vpop.f32.mrb[0].mxu0
      %v1827 = vpop.f32.mrb[0].mxu0
      %v1828 = vadd.f32 %v1667, %v1827
      %v1829 = vpop.f32.mrb[0].mxu0
      %1830 = vmatprep.mubr.bf16.mxu0 %v891
      %1831 = vmatmul.mubr.bf16.gmra.mrb[0].mxu0 %v890
      %v1832 = vpop.f32.mrb[0].mxu0
      %v1833 = vadd.f32 %v1672, %v1832
      %v1834 = vpop.f32.mrb[0].mxu0
      %v1835 = vpop.f32.mrb[0].mxu0
      %v1836 = vadd.f32 %v1675, %v1835
      %v1837 = vpop.f32.mrb[0].mxu0
      %1838 = vmatprep.mubr.bf16.mxu0 %v898
      %1839 = vmatmul.mubr.bf16.gmra.mrb[0].mxu0 %v897
      %v1840 = vpop.f32.mrb[0].mxu0
      %v1841 = vadd.f32 %v1680, %v1840
      %v1842 = vpop.f32.mrb[0].mxu0
      %v1843 = vpop.f32.mrb[0].mxu0
      %v1844 = vadd.f32 %v1683, %v1843
      %v1845 = vpop.f32.mrb[0].mxu0
      %1846 = vmatprep.mubr.bf16.mxu0 %v905
      %1847 = vmatmul.mubr.bf16.gmra.mrb[0].mxu0 %v904
      %v1848 = vpop.f32.mrb[0].mxu0
      %v1849 = vadd.f32 %v1688, %v1848
      %v1850 = vpop.f32.mrb[0].mxu0
      %v1851 = vpop.f32.mrb[0].mxu0
      %v1852 = vadd.f32 %v1691, %v1851
      %v1853 = vpop.f32.mrb[0].mxu0
      %1854 = vmatprep.mubr.bf16.mxu0 %v912
      %1855 = vmatmul.mubr.bf16.gmra.mrb[0].mxu0 %v911
      %v1856 = vpop.f32.mrb[0].mxu0
      %v1857 = vadd.f32 %v1696, %v1856
      %v1858 = vpop.f32.mrb[0].mxu0
      %v1859 = vpop.f32.mrb[0].mxu0
      %v1860 = vadd.f32 %v1699, %v1859
      %v1861 = vpop.f32.mrb[0].mxu0
      %1862 = vmatprep.mubr.bf16.mxu0 %v919
      %1863 = vmatmul.mubr.bf16.gmra.mrb[0].mxu0 %v918
      %v1864 = vpop.f32.mrb[0].mxu0
      %v1865 = vadd.f32 %v1704, %v1864
      %v1866 = vpop.f32.mrb[0].mxu0
      %v1867 = vpop.f32.mrb[0].mxu0
      %v1868 = vadd.f32 %v1707, %v1867
      %v1869 = vpop.f32.mrb[0].mxu0
      %1870 = vmatprep.mubr.bf16.mxu0 %v926
      %1871 = vmatmul.mubr.bf16.gmra.mrb[0].mxu0 %v925
      %v1872 = vpop.f32.mrb[0].mxu0
      %v1873 = vadd.f32 %v1712, %v1872
      %v1874 = vpop.f32.mrb[0].mxu0
      %v1875 = vpop.f32.mrb[0].mxu0
      %v1876 = vadd.f32 %v1715, %v1875
      %v1877 = vpop.f32.mrb[0].mxu0
      %1878 = vmatprep.mubr.bf16.mxu0 %v933
      %1879 = vmatmul.mubr.bf16.gmra.mrb[0].mxu0 %v932
      %v1880 = vpop.f32.mrb[0].mxu0
      %v1881 = vadd.f32 %v1720, %v1880
      %v1882 = vpop.f32.mrb[0].mxu0
      %v1883 = vpop.f32.mrb[0].mxu0
      %v1884 = vadd.f32 %v1723, %v1883
      %v1885 = vpop.f32.mrb[0].mxu0
      %1886 = vdwg.mxu0
      %1887 = vmatprep.subr.bf16.mxu0 0
      %1888 = vmatpush1.bf16.msra.mxu0 %v1295
      %1889 = vmatprep.subr.bf16.mxu0 0
      %1890 = vmatpush1.bf16.msra.mxu0 %v1296
      %1891 = vmatprep.subr.bf16.mxu0 0
      %1892 = vmatpush1.bf16.msra.mxu0 %v1297
      %1893 = vmatprep.subr.bf16.mxu0 0
      %1894 = vmatpush1.bf16.msra.mxu0 %v1298
      %1895 = vmatprep.subr.bf16.mxu0 0
      %1896 = vmatpush1.bf16.msra.mxu0 %v1299
      %1897 = vmatprep.subr.bf16.mxu0 0
      %1898 = vmatpush1.bf16.msra.mxu0 %v1300
      %1899 = vmatprep.subr.bf16.mxu0 0
      %1900 = vmatpush1.bf16.msra.mxu0 0
      %1901 = vmatprep.subr.bf16.mxu0 0
      %1902 = vmatpush1.bf16.msra.mxu0 0
      %1903 = vmatprep.subr.bf16.mxu0 0
      %1904 = vmatpush1.bf16.msra.mxu0 0
      %1905 = vmatprep.subr.bf16.mxu0 0
      %1906 = vmatpush1.bf16.msra.mxu0 0
      %1907 = vmatprep.subr.bf16.mxu0 0
      %1908 = vmatpush1.bf16.msra.mxu0 0
      %1909 = vmatprep.subr.bf16.mxu0 0
      %1910 = vmatpush1.bf16.msra.mxu0 0
      %1911 = vmatprep.subr.bf16.mxu0 0
      %1912 = vmatpush1.bf16.msra.mxu0 0
      %1913 = vmatprep.subr.bf16.mxu0 0
      %1914 = vmatpush1.bf16.msra.mxu0 0
      %1915 = vmatprep.subr.bf16.mxu0 0
      %1916 = vmatpush1.bf16.msra.mxu0 0
      %1917 = vmatprep.subr.bf16.mxu0 0
      %1918 = vmatpush1.bf16.msra.mxu0 0
      %1919 = vmatprep.mubr.bf16.mxu0 0
      %1920 = vmatmul.mubr.bf16.gmra.mrb[0].mxu0 %v1357
      %v1921 = vpop.f32.mrb[0].mxu0
      %v1922 = vadd.f32 %v1761, %v1921
      %v1923 = vpop.f32.mrb[0].mxu0
      %v1924 = vpop.f32.mrb[0].mxu0
      %v1925 = vadd.f32 %v1764, %v1924
      %v1926 = vpop.f32.mrb[0].mxu0
      %1927 = vmatprep.mubr.bf16.mxu0 0
      %1928 = vmatmul.mubr.bf16.gmra.mrb[0].mxu0 %v1360
      %v1929 = vpop.f32.mrb[0].mxu0
      %v1930 = vadd.f32 %v1769, %v1929
      %v1931 = vpop.f32.mrb[0].mxu0
      %v1932 = vpop.f32.mrb[0].mxu0
      %v1933 = vadd.f32 %v1772, %v1932
      %v1934 = vpop.f32.mrb[0].mxu0
      %1935 = vmatprep.mubr.bf16.mxu0 0
      %1936 = vmatmul.mubr.bf16.gmra.mrb[0].mxu0 %v1363
      %v1937 = vpop.f32.mrb[0].mxu0
      %v1938 = vadd.f32 %v1777, %v1937
      %v1939 = vpop.f32.mrb[0].mxu0
      %v1940 = vpop.f32.mrb[0].mxu0
      %v1941 = vadd.f32 %v1780, %v1940
      %v1942 = vpop.f32.mrb[0].mxu0
      %1943 = vmatprep.mubr.bf16.mxu0 0
      %1944 = vmatmul.mubr.bf16.gmra.mrb[0].mxu0 %v1366
      %v1945 = vpop.f32.mrb[0].mxu0
      %v1946 = vadd.f32 %v1785, %v1945
      %v1947 = vpop.f32.mrb[0].mxu0
      %v1948 = vpop.f32.mrb[0].mxu0
      %v1949 = vadd.f32 %v1788, %v1948
      %v1950 = vpop.f32.mrb[0].mxu0
      %1951 = vmatprep.mubr.bf16.mxu0 0
      %1952 = vmatmul.mubr.bf16.gmra.mrb[0].mxu0 %v1369
      %v1953 = vpop.f32.mrb[0].mxu0
      %v1954 = vadd.f32 %v1793, %v1953
      %v1955 = vpop.f32.mrb[0].mxu0
      %v1956 = vpop.f32.mrb[0].mxu0
      %v1957 = vadd.f32 %v1796, %v1956
      %v1958 = vpop.f32.mrb[0].mxu0
      %1959 = vmatprep.mubr.bf16.mxu0 0
      %1960 = vmatmul.mubr.bf16.gmra.mrb[0].mxu0 %v1372
      %v1961 = vpop.f32.mrb[0].mxu0
      %v1962 = vadd.f32 %v1801, %v1961
      %v1963 = vpop.f32.mrb[0].mxu0
      %v1964 = vpop.f32.mrb[0].mxu0
      %v1965 = vadd.f32 %v1804, %v1964
      %v1966 = vpop.f32.mrb[0].mxu0
      %1967 = vmatprep.mubr.bf16.mxu0 0
      %1968 = vmatmul.mubr.bf16.gmra.mrb[0].mxu0 %v1375
      %v1969 = vpop.f32.mrb[0].mxu0
      %v1970 = vadd.f32 %v1809, %v1969
      %v1971 = vpop.f32.mrb[0].mxu0
      %v1972 = vpop.f32.mrb[0].mxu0
      %v1973 = vadd.f32 %v1812, %v1972
      %v1974 = vpop.f32.mrb[0].mxu0
      %1975 = vmatprep.mubr.bf16.mxu0 0
      %1976 = vmatmul.mubr.bf16.gmra.mrb[0].mxu0 %v1378
      %v1977 = vpop.f32.mrb[0].mxu0
      %v1978 = vadd.f32 %v1817, %v1977
      %v1979 = vpop.f32.mrb[0].mxu0
      %v1980 = vpop.f32.mrb[0].mxu0
      %v1981 = vadd.f32 %v1820, %v1980
      %v1982 = vpop.f32.mrb[0].mxu0
      %1983 = vmatprep.mubr.bf16.mxu0 0
      %1984 = vmatmul.mubr.bf16.gmra.mrb[0].mxu0 %v1381
      %v1985 = vpop.f32.mrb[0].mxu0
      %v1986 = vadd.f32 %v1825, %v1985
      %v1987 = vpop.f32.mrb[0].mxu0
      %v1988 = vpop.f32.mrb[0].mxu0
      %v1989 = vadd.f32 %v1828, %v1988
      %v1990 = vpop.f32.mrb[0].mxu0
      %1991 = vmatprep.mubr.bf16.mxu0 0
      %1992 = vmatmul.mubr.bf16.gmra.mrb[0].mxu0 %v1384
      %v1993 = vpop.f32.mrb[0].mxu0
      %v1994 = vadd.f32 %v1833, %v1993
      %v1995 = vpop.f32.mrb[0].mxu0
      %v1996 = vpop.f32.mrb[0].mxu0
      %v1997 = vadd.f32 %v1836, %v1996
      %v1998 = vpop.f32.mrb[0].mxu0
      %1999 = vmatprep.mubr.bf16.mxu0 0
      %2000 = vmatmul.mubr.bf16.gmra.mrb[0].mxu0 %v1387
      %v2001 = vpop.f32.mrb[0].mxu0
      %v2002 = vadd.f32 %v1841, %v2001
      %v2003 = vpop.f32.mrb[0].mxu0
      %v2004 = vpop.f32.mrb[0].mxu0
      %v2005 = vadd.f32 %v1844, %v2004
      %v2006 = vpop.f32.mrb[0].mxu0
      %2007 = vmatprep.mubr.bf16.mxu0 0
      %2008 = vmatmul.mubr.bf16.gmra.mrb[0].mxu0 %v1390
      %v2009 = vpop.f32.mrb[0].mxu0
      %v2010 = vadd.f32 %v1849, %v2009
      %v2011 = vpop.f32.mrb[0].mxu0
      %v2012 = vpop.f32.mrb[0].mxu0
      %v2013 = vadd.f32 %v1852, %v2012
      %v2014 = vpop.f32.mrb[0].mxu0
      %2015 = vmatprep.mubr.bf16.mxu0 0
      %2016 = vmatmul.mubr.bf16.gmra.mrb[0].mxu0 %v1393
      %v2017 = vpop.f32.mrb[0].mxu0
      %v2018 = vadd.f32 %v1857, %v2017
      %v2019 = vpop.f32.mrb[0].mxu0
      %v2020 = vpop.f32.mrb[0].mxu0
      %v2021 = vadd.f32 %v1860, %v2020
      %v2022 = vpop.f32.mrb[0].mxu0
      %2023 = vmatprep.mubr.bf16.mxu0 0
      %2024 = vmatmul.mubr.bf16.gmra.mrb[0].mxu0 %v1396
      %v2025 = vpop.f32.mrb[0].mxu0
      %v2026 = vadd.f32 %v1865, %v2025
      %v2027 = vpop.f32.mrb[0].mxu0
      %v2028 = vpop.f32.mrb[0].mxu0
      %v2029 = vadd.f32 %v1868, %v2028
      %v2030 = vpop.f32.mrb[0].mxu0
      %2031 = vmatprep.mubr.bf16.mxu0 0
      %2032 = vmatmul.mubr.bf16.gmra.mrb[0].mxu0 %v1399
      %v2033 = vpop.f32.mrb[0].mxu0
      %v2034 = vadd.f32 %v1873, %v2033
      %v2035 = vpop.f32.mrb[0].mxu0
      %v2036 = vpop.f32.mrb[0].mxu0
      %v2037 = vadd.f32 %v1876, %v2036
      %v2038 = vpop.f32.mrb[0].mxu0
      %2039 = vmatprep.mubr.bf16.mxu0 0
      %2040 = vmatmul.mubr.bf16.gmra.mrb[0].mxu0 %v1402
      %v2041 = vpop.f32.mrb[0].mxu0
      %v2042 = vadd.f32 %v1881, %v2041
      %v2043 = vpop.f32.mrb[0].mxu0
      %v2044 = vpop.f32.mrb[0].mxu0
      %v2045 = vadd.f32 %v1884, %v2044
      %v2046 = vpop.f32.mrb[0].mxu0
      %2047 = vdwg.mxu0
      %2048 = vst [vmem:[%s225] sm:$0xff] %v1922
      %2049 = vst [vmem:[%s225 + $0x8] sm:$0xff] %v1925
      %2050 = vst [vmem:[%s225 + $0x10] sm:$0xff] %v1930
      %2051 = vst [vmem:[%s225 + $0x18] sm:$0xff] %v1933
      %2052 = vst [vmem:[%s225 + $0x20] sm:$0xff] %v1938
      %2053 = vst [vmem:[%s225 + $0x28] sm:$0xff] %v1941
      %2054 = vst [vmem:[%s225 + $0x30] sm:$0xff] %v1946
      %2055 = vst [vmem:[%s225 + $0x38] sm:$0xff] %v1949
      %2056 = vst [vmem:[%s225 + $0x40] sm:$0xff] %v1954
      %2057 = vst [vmem:[%s225 + $0x48] sm:$0xff] %v1957
      %2058 = vst [vmem:[%s225 + $0x50] sm:$0xff] %v1962
      %2059 = vst [vmem:[%s225 + $0x58] sm:$0xff] %v1965
      %2060 = vst [vmem:[%s225 + $0x60] sm:$0xff] %v1970
      %2061 = vst [vmem:[%s225 + $0x68] sm:$0xff] %v1973
      %2062 = vst [vmem:[%s225 + $0x70] sm:$0xff] %v1978
      %2063 = vst [vmem:[%s225 + $0x78] sm:$0xff] %v1981
      %2064 = vst [vmem:[%s225 + $0x80] sm:$0xff] %v1986
      %2065 = vst [vmem:[%s225 + $0x88] sm:$0xff] %v1989
      %2066 = vst [vmem:[%s225 + $0x90] sm:$0xff] %v1994
      %2067 = vst [vmem:[%s225 + $0x98] sm:$0xff] %v1997
      %2068 = vst [vmem:[%s225 + $0xa0] sm:$0xff] %v2002
      %2069 = vst [vmem:[%s225 + $0xa8] sm:$0xff] %v2005
      %2070 = vst [vmem:[%s225 + $0xb0] sm:$0xff] %v2010
      %2071 = vst [vmem:[%s225 + $0xb8] sm:$0xff] %v2013
      %2072 = vst [vmem:[%s225 + $0xc0] sm:$0xff] %v2018
      %2073 = vst [vmem:[%s225 + $0xc8] sm:$0xff] %v2021
      %2074 = vst [vmem:[%s225 + $0xd0] sm:$0xff] %v2026
      %2075 = vst [vmem:[%s225 + $0xd8] sm:$0xff] %v2029
      %2076 = vst [vmem:[%s225 + $0xe0] sm:$0xff] %v2034
      %2077 = vst [vmem:[%s225 + $0xe8] sm:$0xff] %v2037
      %2078 = vst [vmem:[%s225 + $0xf0] sm:$0xff] %v2042
      %2079 = vst [vmem:[%s225 + $0xf8] sm:$0xff] %v2045
      %s2080 = smul.u32 32, %s19
      %p2081 = scmp.lt.s32.totalorder %s18, 0
      %s2082 = scalar_select %p2081, %s18, 0
      %p2083 = scmp.lt.s32.totalorder %s2080, 63
      %s2084 = scalar_select %p2083, %s2080, 63
      %s2085 = smul.addr %s2082, 64
      %s2086 = sadd.s32 %s2084, %s2085
      %s2087 = smul.addr %s2086, 8
      %s2088 = scalar_lea.vmem %s3, %s2087
      // Predicated region
      $region33: #{simple_video_unet_forward.13} parent=31 // pred_check
        %p2089 = pneg %p121
      $region34: #{simple_video_unet_forward.13} parent=31 // pred_check_branch
        %2091 = sbr.rel (%p2089) target = $region36
      $region35: #{simple_video_unet_forward.13} parent=31 // pred_region
        %s2092 = smul.u32 32, %s19
      $region36: #{simple_video_unet_forward.13} parent=31 // pred_fallthru
        _
    $region32: #{simple_video_unet_forward.13} parent=5 // pred_fallthru
      _
    %p2093 = scmp.le.s32.totalorder 2, %s9
    // Predicated region
    $region37: #{simple_video_unet_forward.13} parent=5 // pred_check
      %p2094 = pneg %p2093
    $region38: #{simple_video_unet_forward.13} parent=5 // pred_check_branch
      %2096 = sbr.rel (%p2094) target = $region40
    $region39: #{simple_video_unet_forward.13} parent=5 // pred_region
      %s2097 = ssub.s32 %s9, 2
      // Predicated region
      $region41: #{simple_video_unet_forward.13} parent=39 // pred_check
        %p2098 = pneg %p127
      $region42: #{simple_video_unet_forward.13} parent=39 // pred_check_branch
        %2100 = sbr.rel (%p2098) target = $region44
      $region43: #{simple_video_unet_forward.13} parent=39 // pred_region
        %s2101 = smul.u32 32, %s21
        %p2102 = scmp.lt.s32.totalorder %s20, 0
        %s2103 = scalar_select %p2102, %s20, 0
        %p2104 = scmp.lt.s32.totalorder %s2101, 63
        %s2105 = scalar_select %p2104, %s2101, 63
        %s2106 = smul.addr %s2103, 64
        %s2107 = sadd.s32 %s2105, %s2106
        %s2108 = smul.addr %s2107, 8
        %s2109 = scalar_lea.vmem %s3, %s2108
      $region44: #{simple_video_unet_forward.13} parent=39 // pred_fallthru
        _
    $region40: #{simple_video_unet_forward.13} parent=5 // pred_fallthru
      _
  $region6: #{simple_video_unet_forward.13} parent=0 // loop_footer
    %s13 = sadd.s32 1, %s9
  $region7: #{simple_video_unet_forward.13} parent=0 // loop_footer_branch
    %8 = sbr.rel target = $region3
  $region8: #{simple_video_unet_forward.13} parent=0 // loop_exit
    _

</llo_original>
